<compile_context>
chip_gen: v5e
topology: v5e:2x2
jax: 0.10.0
libtpu: 0.0.40
codegen_flags: <defaults>
</compile_context>

<pallas_src>
import functools

import jax
import jax.numpy as jnp
from jax.experimental import pallas as pl
from jax.experimental.pallas import tpu as pltpu

_VMEM = pl.BlockSpec(memory_space=pltpu.MemorySpace.VMEM)
_COMPUTE = jnp.bfloat16          # MXU-native dtype for activations / weights
_TM_CAP = 256                    # output-row tile cap
_TN_CAP = 256                    # output-channel tile cap


# ----------------------------------------------------------------------------
# Pallas kernels
# ----------------------------------------------------------------------------
def _conv_kernel(x_ref, w_ref, s_ref, b_ref, o_ref, acc_ref, *, relu):
    # Grid = (M tiles, O tiles, kh*kw).  Accumulate one kernel position per
    # k-step; BN affine (+ReLU) applied once in the finalize step.
    k = pl.program_id(2)

    @pl.when(k == 0)
    def _():
        acc_ref[...] = jnp.zeros_like(acc_ref)

    acc_ref[...] += jnp.dot(x_ref[0], w_ref[0],
                            preferred_element_type=jnp.float32)

    @pl.when(k == pl.num_programs(2) - 1)
    def _():
        out = acc_ref[...] * s_ref[...] + b_ref[...]
        if relu:
            out = jnp.maximum(out, 0.0)
        o_ref[...] = out.astype(o_ref.dtype)


def _conv_res_kernel(x_ref, w_ref, s_ref, b_ref, r_ref, o_ref, acc_ref, *, relu):
    # Same as above + residual add fused into the finalize epilogue.
    k = pl.program_id(2)

    @pl.when(k == 0)
    def _():
        acc_ref[...] = jnp.zeros_like(acc_ref)

    acc_ref[...] += jnp.dot(x_ref[0], w_ref[0],
                            preferred_element_type=jnp.float32)

    @pl.when(k == pl.num_programs(2) - 1)
    def _():
        out = acc_ref[...] * s_ref[...] + b_ref[...] + r_ref[...].astype(jnp.float32)
        if relu:
            out = jnp.maximum(out, 0.0)
        o_ref[...] = out.astype(o_ref.dtype)


def _maxpool_kernel(p_ref, o_ref):
    # p: (k*k, N*Ho, Wo*C) -> elementwise max over the k*k window slices.
    # Last dim is Wo*C (lane-dense), so stores are full-width.
    o_ref[...] = jnp.max(p_ref[...], axis=0)


def _avgpool_fc_kernel(x_ref, w_ref, b_ref, o_ref):
    # x: (N, H*W, C) -> mean over spatial, then (N, C) @ (C, classes) + b.
    pooled = jnp.mean(x_ref[...].astype(jnp.float32), axis=1)
    acc = jnp.dot(pooled, w_ref[...], preferred_element_type=jnp.float32)
    o_ref[...] = (acc + b_ref[...]).astype(o_ref.dtype)


# ----------------------------------------------------------------------------
# JAX glue: shifted-slab construction + tiled pallas_call wrappers
# ----------------------------------------------------------------------------
def _pick_tile(n, cap):
    """Largest tile <= cap that divides n and respects sublane granularity."""
    if n <= cap:
        return n
    for t in range(cap, 7, -1):
        if n % t == 0 and t % 8 == 0:
            return t
    return n


def _shifted_slabs(x, kh, kw, stride, padding, pad_value=0.0):
    """x: (N, H, W, C) NHWC -> (kh*kw, N*Ho*Wo, C) shifted slabs, plus Ho, Wo.

    kh/kw/stride/padding must be static Python ints.
    """
    n, h, w, c = x.shape
    ho = (h + 2 * padding - kh) // stride + 1
    wo = (w + 2 * padding - kw) // stride + 1
    xp = jnp.pad(x, ((0, 0), (padding, padding), (padding, padding), (0, 0)),
                 constant_values=pad_value)
    slabs = [
        xp[:, i:i + stride * ho:stride, j:j + stride * wo:stride, :]
        .reshape(n * ho * wo, c)
        for i in range(kh) for j in range(kw)
    ]
    return jnp.stack(slabs, axis=0), ho, wo


def conv_bn(x, w_mat, scale, bias, *, kh, kw, stride, padding, relu,
            residual=None):
    """Conv2d(no bias) + folded BN (+ residual) (+ ReLU).

    x:     (N, H, W, C)        NHWC, bf16
    w_mat: (kh*kw, C, O)       bf16 (PyTorch (O,C,kh,kw) pre-transposed)
    out:   (N, Ho, Wo, O)      bf16
    """
    n, h, w, c = x.shape
    kk, c2, o_ch = w_mat.shape
    assert kk == kh * kw and c2 == c

    slabs, ho, wo = _shifted_slabs(x, kh, kw, stride, padding)   # (KK, M, C)
    m = n * ho * wo

    tm = _pick_tile(m, _TM_CAP)
    tn = _pick_tile(o_ch, _TN_CAP)
    grid = (m // tm, o_ch // tn, kk)

    s = scale.reshape(1, o_ch).astype(jnp.float32)
    b = bias.reshape(1, o_ch).astype(jnp.float32)

    x_spec = pl.BlockSpec((1, tm, c), lambda i, j, k: (k, i, 0))
    w_spec = pl.BlockSpec((1, c, tn), lambda i, j, k: (k, 0, j))
    sb_spec = pl.BlockSpec((1, tn), lambda i, j, k: (0, j))       # k-invariant
    io_spec = pl.BlockSpec((tm, tn), lambda i, j, k: (i, j))      # k-invariant
    cparams = pltpu.CompilerParams(
        dimension_semantics=("parallel", "parallel", "arbitrary"))

    if residual is not None:
        r = residual.reshape(m, o_ch)
        out = pl.pallas_call(
            functools.partial(_conv_res_kernel, relu=relu),
            out_shape=jax.ShapeDtypeStruct((m, o_ch), _COMPUTE),
            grid=grid,
            in_specs=[x_spec, w_spec, sb_spec, sb_spec, io_spec],
            out_specs=io_spec,
            scratch_shapes=[pltpu.VMEM((tm, tn), jnp.float32)],
            compiler_params=cparams,
        )(slabs, w_mat, s, b, r)
    else:
        out = pl.pallas_call(
            functools.partial(_conv_kernel, relu=relu),
            out_shape=jax.ShapeDtypeStruct((m, o_ch), _COMPUTE),
            grid=grid,
            in_specs=[x_spec, w_spec, sb_spec, sb_spec],
            out_specs=io_spec,
            scratch_shapes=[pltpu.VMEM((tm, tn), jnp.float32)],
            compiler_params=cparams,
        )(slabs, w_mat, s, b)
    return out.reshape(n, ho, wo, o_ch)


def maxpool2d(x, *, kernel=3, stride=2, padding=1):
    """3x3/s2 max pool, NHWC, lane-dense (last dim = Wo*C)."""
    n, h, w, c = x.shape
    ho = (h + 2 * padding - kernel) // stride + 1
    wo = (w + 2 * padding - kernel) // stride + 1
    neg = float(jnp.finfo(x.dtype).min)
    xp = jnp.pad(x, ((0, 0), (padding, padding), (padding, padding), (0, 0)),
                 constant_values=neg)
    slabs = jnp.stack(
        [xp[:, i:i + stride * ho:stride, j:j + stride * wo:stride, :]
         .reshape(n * ho, wo * c)
         for i in range(kernel) for j in range(kernel)], axis=0)
    out = pl.pallas_call(
        _maxpool_kernel,
        out_shape=jax.ShapeDtypeStruct((n * ho, wo * c), x.dtype),
        in_specs=[_VMEM], out_specs=_VMEM,
    )(slabs)
    return out.reshape(n, ho, wo, c)


def avgpool_fc(x, fc_w, fc_b):
    """AdaptiveAvgPool2d((1,1)) + flatten + Linear, fused. x: (N,H,W,C) NHWC."""
    n, h, w, c = x.shape
    num_classes = fc_w.shape[0]
    xm = x.reshape(n, h * w, c)
    wm = fc_w.T.astype(jnp.float32)                 # (C, num_classes)
    bm = fc_b.reshape(1, num_classes).astype(jnp.float32)
    return pl.pallas_call(
        _avgpool_fc_kernel,
        out_shape=jax.ShapeDtypeStruct((n, num_classes), jnp.float32),
        in_specs=[_VMEM] * 3, out_specs=_VMEM,
    )(xm, wm, bm)


# ----------------------------------------------------------------------------
# ResNet (BasicBlock) forward
# ----------------------------------------------------------------------------
def basic_block(x, blk, stride):
    # `stride` is a static Python int (architecture config, NOT a pytree leaf).
    s1, b1 = blk['bn1']
    s2, b2 = blk['bn2']
    out = conv_bn(x, blk['conv1_w'], s1, b1, kh=3, kw=3, stride=stride,
                  padding=1, relu=True)
    if 'down_w' in blk:                 # dict keys are static pytree structure
        ds, db = blk['down_bn']
        identity = conv_bn(x, blk['down_w'], ds, db, kh=1, kw=1, stride=stride,
                           padding=0, relu=False)
    else:
        identity = x
    # second conv: BN + residual add + ReLU all fused in the kernel epilogue
    return conv_bn(out, blk['conv2_w'], s2, b2, kh=3, kw=3, stride=1,
                   padding=1, relu=True, residual=identity)


def resnet_forward(params, x_nchw):
    # One layout change + cast at the boundary; everything else stays NHWC bf16.
    x = jnp.transpose(x_nchw, (0, 2, 3, 1)).astype(_COMPUTE)
    s, b = params['bn1']
    x = conv_bn(x, params['conv1_w'], s, b, kh=7, kw=7, stride=2, padding=3,
                relu=True)
    x = maxpool2d(x, kernel=3, stride=2, padding=1)
    for si, blocks in enumerate(params['stages']):
        stage_stride = 1 if si == 0 else 2
        for bi, blk in enumerate(blocks):
            stride = stage_stride if bi == 0 else 1     # static int
            x = basic_block(x, blk, stride)
    return avgpool_fc(x, params['fc_w'], params['fc_b'])


# ----------------------------------------------------------------------------
# Deterministic parameter init (shapes of ResNet(BasicBlock, [1,1,1,1]))
# ----------------------------------------------------------------------------
def _bn_fold(c, eps=1e-5):
    # PyTorch defaults: gamma=1, beta=0, running_mean=0, running_var=1 (eval).
    gamma = jnp.ones((c,), jnp.float32)
    beta = jnp.zeros((c,), jnp.float32)
    mean = jnp.zeros((c,), jnp.float32)
    var = jnp.ones((c,), jnp.float32)
    scale = gamma / jnp.sqrt(var + eps)
    bias = beta - mean * scale
    return scale, bias


def _conv_w_to_mm(w):
    # PyTorch (O, C, kh, kw) -> (kh*kw, C, O), bf16 for the MXU.
    o, c, kh, kw = w.shape
    return jnp.transpose(w, (2, 3, 1, 0)).reshape(kh * kw, c, o).astype(_COMPUTE)


def init_params(key, layers=(1, 1, 1, 1), num_classes=10):
    keys = iter(jax.random.split(key, 128))

    def conv_w(shape):
        return jax.random.normal(next(keys), shape, jnp.float32) * 0.05

    params = {
        'conv1_w': _conv_w_to_mm(conv_w((64, 3, 7, 7))),
        'bn1': _bn_fold(64),
    }
    in_c = 64
    stage_defs = [(64, layers[0], 1), (128, layers[1], 2),
                  (256, layers[2], 2), (512, layers[3], 2)]
    stages = []
    for out_c, nblocks, stage_stride in stage_defs:
        blocks = []
        for bi in range(nblocks):
            s = stage_stride if bi == 0 else 1
            blk = {
                'conv1_w': _conv_w_to_mm(conv_w((out_c, in_c, 3, 3))),
                'bn1': _bn_fold(out_c),
                'conv2_w': _conv_w_to_mm(conv_w((out_c, out_c, 3, 3))),
                'bn2': _bn_fold(out_c),
                # NOTE: stride is intentionally NOT stored here (it would
                # become a traced value under jit); it is re-derived statically
                # from (stage, block) indices in resnet_forward.
            }
            if s != 1 or in_c != out_c:
                blk['down_w'] = _conv_w_to_mm(conv_w((out_c, in_c, 1, 1)))
                blk['down_bn'] = _bn_fold(out_c)
            blocks.append(blk)
            in_c = out_c
        stages.append(blocks)
    params['stages'] = stages
    params['fc_w'] = conv_w((num_classes, 512 * 1))   # BasicBlock.expansion == 1
    params['fc_b'] = jnp.zeros((num_classes,), jnp.float32)
    return params


if __name__ == "__main__":
    key = jax.random.PRNGKey(0)
    pkey, xkey = jax.random.split(key)
    params = init_params(pkey, layers=(1, 1, 1, 1), num_classes=10)
    x = jax.random.normal(xkey, (2, 3, 32, 32), jnp.float32)  # NCHW, like PyTorch
    fwd = jax.jit(resnet_forward)
    out = fwd(params, x)
    jax.block_until_ready(out)
    assert out.shape == (2, 10), out.shape
    assert jnp.all(jnp.isfinite(out))
    print("KERNEL_OK")
</pallas_src>

<mosaic_0001>
module attributes {stable_mosaic.version = 11 : i64} {
  func.func @_conv_kernel(%arg0: i32, %arg1: i32, %arg2: i32, %arg3: memref<1x256x3xbf16, #tpu.memory_space<vmem>>, %arg4: memref<1x3x64xbf16, #tpu.memory_space<vmem>>, %arg5: memref<1x64xf32, #tpu.memory_space<vmem>>, %arg6: memref<1x64xf32, #tpu.memory_space<vmem>>, %arg7: memref<256x64xbf16, #tpu.memory_space<vmem>>, %arg8: memref<256x64xf32, #tpu.memory_space<vmem>>) attributes {dimension_semantics = [#tpu.dimension_semantics<parallel>, #tpu.dimension_semantics<parallel>, #tpu.dimension_semantics<arbitrary>], iteration_bounds = array<i64: 2, 1, 49>, scalar_prefetch = 0 : i64, scratch_operands = 1 : i64, tpu.core_type = #tpu.core_type<tc>, window_params = [{transform_indices = @transform_0, window_bounds = array<i64: 1, 256, 3>}, {transform_indices = @transform_1, window_bounds = array<i64: 1, 3, 64>}, {transform_indices = @transform_2, window_bounds = array<i64: 1, 64>}, {transform_indices = @transform_3, window_bounds = array<i64: 1, 64>}, {transform_indices = @transform_4, window_bounds = array<i64: 256, 64>}]} {
    %c0_i32 = arith.constant 0 : i32
    %0 = arith.cmpi eq, %arg2, %c0_i32 : i32
    %1 = arith.extui %0 : i1 to i32
    %c0_i32_0 = arith.constant 0 : i32
    %2 = arith.cmpi ne, %1, %c0_i32_0 : i32
    scf.if %2 {
      %cst_11 = arith.constant 0.000000e+00 : f32
      %14 = vector.broadcast %cst_11 : f32 to vector<256x64xf32>
      %c0_12 = arith.constant 0 : index
      %c0_13 = arith.constant 0 : index
      %15 = vector.load %arg8[%c0_12, %c0_13] : memref<256x64xf32, #tpu.memory_space<vmem>>, vector<256x64xf32>
      tpu.vector_store %arg8[%c0_12, %c0_13], %14 {strides = array<i32>} : memref<256x64xf32, #tpu.memory_space<vmem>>, vector<256x64xf32>,
    } else {
    }
    %c0 = arith.constant 0 : index
    %c0_1 = arith.constant 0 : index
    %3 = vector.load %arg8[%c0, %c0_1] : memref<256x64xf32, #tpu.memory_space<vmem>>, vector<256x64xf32>
    %c0_2 = arith.constant 0 : index
    %c0_3 = arith.constant 0 : index
    %c0_4 = arith.constant 0 : index
    %4 = vector.load %arg3[%c0_2, %c0_3, %c0_4] : memref<1x256x3xbf16, #tpu.memory_space<vmem>>, vector<1x256x3xbf16>
    %5 = vector.shape_cast %4 : vector<1x256x3xbf16> to vector<256x3xbf16>
    %c0_5 = arith.constant 0 : index
    %c0_6 = arith.constant 0 : index
    %c0_7 = arith.constant 0 : index
    %6 = vector.load %arg4[%c0_5, %c0_6, %c0_7] : memref<1x3x64xbf16, #tpu.memory_space<vmem>>, vector<1x3x64xbf16>
    %7 = vector.shape_cast %6 : vector<1x3x64xbf16> to vector<3x64xbf16>
    %cst = arith.constant dense<0.000000e+00> : vector<256x64xf32>
    %8 = tpu.matmul %5, %7, %cst {dimension_numbers = #tpu.dot_dimension_numbers<[1], [0], [0], [1], [0, 0, 1, 1], [], []>} : vector<256x3xbf16>, vector<3x64xbf16>, vector<256x64xf32> -> vector<256x64xf32>
    %9 = arith.addf %3, %8 : vector<256x64xf32>
    %c0_8 = arith.constant 0 : index
    %c0_9 = arith.constant 0 : index
    %10 = vector.load %arg8[%c0_8, %c0_9] : memref<256x64xf32, #tpu.memory_space<vmem>>, vector<256x64xf32>
    tpu.vector_store %arg8[%c0_8, %c0_9], %9 {strides = array<i32>} : memref<256x64xf32, #tpu.memory_space<vmem>>, vector<256x64xf32>,
    %c48_i32 = arith.constant 48 : i32
    %11 = arith.cmpi eq, %arg2, %c48_i32 : i32
    %12 = arith.extui %11 : i1 to i32
    %c0_i32_10 = arith.constant 0 : i32
    %13 = arith.cmpi ne, %12, %c0_i32_10 : i32
    scf.if %13 {
      %c0_11 = arith.constant 0 : index
      %c0_12 = arith.constant 0 : index
      %14 = vector.load %arg8[%c0_11, %c0_12] : memref<256x64xf32, #tpu.memory_space<vmem>>, vector<256x64xf32>
      %c0_13 = arith.constant 0 : index
      %c0_14 = arith.constant 0 : index
      %15 = vector.load %arg5[%c0_13, %c0_14] : memref<1x64xf32, #tpu.memory_space<vmem>>, vector<1x64xf32>
      %16 = vector.broadcast %15 : vector<1x64xf32> to vector<256x64xf32>
      %17 = arith.mulf %14, %16 : vector<256x64xf32>
      %c0_15 = arith.constant 0 : index
      %c0_16 = arith.constant 0 : index
      %18 = vector.load %arg6[%c0_15, %c0_16] : memref<1x64xf32, #tpu.memory_space<vmem>>, vector<1x64xf32>
      %19 = vector.broadcast %18 : vector<1x64xf32> to vector<256x64xf32>
      %20 = arith.addf %17, %19 : vector<256x64xf32>
      %cst_17 = arith.constant 0.000000e+00 : f32
      %21 = vector.broadcast %cst_17 : f32 to vector<256x64xf32>
      %22 = arith.maximumf %20, %21 : vector<256x64xf32>
      %23 = arith.truncf %22 : vector<256x64xf32> to vector<256x64xbf16>
      %c0_18 = arith.constant 0 : index
      %c0_19 = arith.constant 0 : index
      %24 = vector.load %arg7[%c0_18, %c0_19] : memref<256x64xbf16, #tpu.memory_space<vmem>>, vector<256x64xbf16>
      tpu.vector_store %arg7[%c0_18, %c0_19], %23 {strides = array<i32>} : memref<256x64xbf16, #tpu.memory_space<vmem>>, vector<256x64xbf16>,
    } else {
    }
    return
  }
  func.func @transform_0(%arg0: i32, %arg1: i32, %arg2: i32) -> (i32, i32, i32) {
    %c0_i32 = arith.constant 0 : i32
    %c0_i32_0 = arith.constant 0 : i32
    return %arg2, %arg0, %c0_i32 : i32, i32, i32
  }
  func.func @transform_1(%arg0: i32, %arg1: i32, %arg2: i32) -> (i32, i32, i32) {
    %c0_i32 = arith.constant 0 : i32
    %c0_i32_0 = arith.constant 0 : i32
    return %arg2, %c0_i32, %arg1 : i32, i32, i32
  }
  func.func @transform_2(%arg0: i32, %arg1: i32, %arg2: i32) -> (i32, i32) {
    %c0_i32 = arith.constant 0 : i32
    %c0_i32_0 = arith.constant 0 : i32
    return %c0_i32, %arg1 : i32, i32
  }
  func.func @transform_3(%arg0: i32, %arg1: i32, %arg2: i32) -> (i32, i32) {
    %c0_i32 = arith.constant 0 : i32
    %c0_i32_0 = arith.constant 0 : i32
    return %c0_i32, %arg1 : i32, i32
  }
  func.func @transform_4(%arg0: i32, %arg1: i32, %arg2: i32) -> (i32, i32) {
    %c0_i32 = arith.constant 0 : i32
    return %arg0, %arg1 : i32, i32
  }
}

module attributes {stable_mosaic.version = 11 : i64} {
  func.func @_maxpool_kernel(%arg0: memref<9x16x512xbf16, #tpu.memory_space<vmem>>, %arg1: memref<16x512xbf16, #tpu.memory_space<vmem>>) attributes {dimension_semantics = [], scalar_prefetch = 0 : i64, scratch_operands = 0 : i64, tpu.core_type = #tpu.core_type<tc>} {
    %c0 = arith.constant 0 : index
    %c0_0 = arith.constant 0 : index
    %c0_1 = arith.constant 0 : index
    %0 = vector.load %arg0[%c0, %c0_0, %c0_1] : memref<9x16x512xbf16, #tpu.memory_space<vmem>>, vector<9x16x512xbf16>
    %cst = arith.constant dense<0xFF80> : vector<16x512xbf16>
    %1 = vector.multi_reduction <maximumf>, %0, %cst [0] : vector<9x16x512xbf16> to vector<16x512xbf16>
    %c0_2 = arith.constant 0 : index
    %c0_3 = arith.constant 0 : index
    %2 = vector.load %arg1[%c0_2, %c0_3] : memref<16x512xbf16, #tpu.memory_space<vmem>>, vector<16x512xbf16>
    tpu.vector_store %arg1[%c0_2, %c0_3], %1 {strides = array<i32>} : memref<16x512xbf16, #tpu.memory_space<vmem>>, vector<16x512xbf16>,
    return
  }
}

module attributes {stable_mosaic.version = 11 : i64} {
  func.func @_conv_kernel(%arg0: i32, %arg1: i32, %arg2: i32, %arg3: memref<1x128x64xbf16, #tpu.memory_space<vmem>>, %arg4: memref<1x64x64xbf16, #tpu.memory_space<vmem>>, %arg5: memref<1x64xf32, #tpu.memory_space<vmem>>, %arg6: memref<1x64xf32, #tpu.memory_space<vmem>>, %arg7: memref<128x64xbf16, #tpu.memory_space<vmem>>, %arg8: memref<128x64xf32, #tpu.memory_space<vmem>>) attributes {dimension_semantics = [#tpu.dimension_semantics<parallel>, #tpu.dimension_semantics<parallel>, #tpu.dimension_semantics<arbitrary>], iteration_bounds = array<i64: 1, 1, 9>, scalar_prefetch = 0 : i64, scratch_operands = 1 : i64, tpu.core_type = #tpu.core_type<tc>, window_params = [{transform_indices = @transform_0, window_bounds = array<i64: 1, 128, 64>}, {transform_indices = @transform_1, window_bounds = array<i64: 1, 64, 64>}, {transform_indices = @transform_2, window_bounds = array<i64: 1, 64>}, {transform_indices = @transform_3, window_bounds = array<i64: 1, 64>}, {transform_indices = @transform_4, window_bounds = array<i64: 128, 64>}]} {
    %c0_i32 = arith.constant 0 : i32
    %0 = arith.cmpi eq, %arg2, %c0_i32 : i32
    %1 = arith.extui %0 : i1 to i32
    %c0_i32_0 = arith.constant 0 : i32
    %2 = arith.cmpi ne, %1, %c0_i32_0 : i32
    scf.if %2 {
      %cst_11 = arith.constant 0.000000e+00 : f32
      %14 = vector.broadcast %cst_11 : f32 to vector<128x64xf32>
      %c0_12 = arith.constant 0 : index
      %c0_13 = arith.constant 0 : index
      %15 = vector.load %arg8[%c0_12, %c0_13] : memref<128x64xf32, #tpu.memory_space<vmem>>, vector<128x64xf32>
      tpu.vector_store %arg8[%c0_12, %c0_13], %14 {strides = array<i32>} : memref<128x64xf32, #tpu.memory_space<vmem>>, vector<128x64xf32>,
    } else {
    }
    %c0 = arith.constant 0 : index
    %c0_1 = arith.constant 0 : index
    %3 = vector.load %arg8[%c0, %c0_1] : memref<128x64xf32, #tpu.memory_space<vmem>>, vector<128x64xf32>
    %c0_2 = arith.constant 0 : index
    %c0_3 = arith.constant 0 : index
    %c0_4 = arith.constant 0 : index
    %4 = vector.load %arg3[%c0_2, %c0_3, %c0_4] : memref<1x128x64xbf16, #tpu.memory_space<vmem>>, vector<1x128x64xbf16>
    %5 = vector.shape_cast %4 : vector<1x128x64xbf16> to vector<128x64xbf16>
    %c0_5 = arith.constant 0 : index
    %c0_6 = arith.constant 0 : index
    %c0_7 = arith.constant 0 : index
    %6 = vector.load %arg4[%c0_5, %c0_6, %c0_7] : memref<1x64x64xbf16, #tpu.memory_space<vmem>>, vector<1x64x64xbf16>
    %7 = vector.shape_cast %6 : vector<1x64x64xbf16> to vector<64x64xbf16>
    %cst = arith.constant dense<0.000000e+00> : vector<128x64xf32>
    %8 = tpu.matmul %5, %7, %cst {dimension_numbers = #tpu.dot_dimension_numbers<[1], [0], [0], [1], [0, 0, 1, 1], [], []>} : vector<128x64xbf16>, vector<64x64xbf16>, vector<128x64xf32> -> vector<128x64xf32>
    %9 = arith.addf %3, %8 : vector<128x64xf32>
    %c0_8 = arith.constant 0 : index
    %c0_9 = arith.constant 0 : index
    %10 = vector.load %arg8[%c0_8, %c0_9] : memref<128x64xf32, #tpu.memory_space<vmem>>, vector<128x64xf32>
    tpu.vector_store %arg8[%c0_8, %c0_9], %9 {strides = array<i32>} : memref<128x64xf32, #tpu.memory_space<vmem>>, vector<128x64xf32>,
    %c8_i32 = arith.constant 8 : i32
    %11 = arith.cmpi eq, %arg2, %c8_i32 : i32
    %12 = arith.extui %11 : i1 to i32
    %c0_i32_10 = arith.constant 0 : i32
    %13 = arith.cmpi ne, %12, %c0_i32_10 : i32
    scf.if %13 {
      %c0_11 = arith.constant 0 : index
      %c0_12 = arith.constant 0 : index
      %14 = vector.load %arg8[%c0_11, %c0_12] : memref<128x64xf32, #tpu.memory_space<vmem>>, vector<128x64xf32>
      %c0_13 = arith.constant 0 : index
      %c0_14 = arith.constant 0 : index
      %15 = vector.load %arg5[%c0_13, %c0_14] : memref<1x64xf32, #tpu.memory_space<vmem>>, vector<1x64xf32>
      %16 = vector.broadcast %15 : vector<1x64xf32> to vector<128x64xf32>
      %17 = arith.mulf %14, %16 : vector<128x64xf32>
      %c0_15 = arith.constant 0 : index
      %c0_16 = arith.constant 0 : index
      %18 = vector.load %arg6[%c0_15, %c0_16] : memref<1x64xf32, #tpu.memory_space<vmem>>, vector<1x64xf32>
      %19 = vector.broadcast %18 : vector<1x64xf32> to vector<128x64xf32>
      %20 = arith.addf %17, %19 : vector<128x64xf32>
      %cst_17 = arith.constant 0.000000e+00 : f32
      %21 = vector.broadcast %cst_17 : f32 to vector<128x64xf32>
      %22 = arith.maximumf %20, %21 : vector<128x64xf32>
      %23 = arith.truncf %22 : vector<128x64xf32> to vector<128x64xbf16>
      %c0_18 = arith.constant 0 : index
      %c0_19 = arith.constant 0 : index
      %24 = vector.load %arg7[%c0_18, %c0_19] : memref<128x64xbf16, #tpu.memory_space<vmem>>, vector<128x64xbf16>
      tpu.vector_store %arg7[%c0_18, %c0_19], %23 {strides = array<i32>} : memref<128x64xbf16, #tpu.memory_space<vmem>>, vector<128x64xbf16>,
    } else {
    }
    return
  }
  func.func @transform_0(%arg0: i32, %arg1: i32, %arg2: i32) -> (i32, i32, i32) {
    %c0_i32 = arith.constant 0 : i32
    %c0_i32_0 = arith.constant 0 : i32
    return %arg2, %arg0, %c0_i32 : i32, i32, i32
  }
  func.func @transform_1(%arg0: i32, %arg1: i32, %arg2: i32) -> (i32, i32, i32) {
    %c0_i32 = arith.constant 0 : i32
    %c0_i32_0 = arith.constant 0 : i32
    return %arg2, %c0_i32, %arg1 : i32, i32, i32
  }
  func.func @transform_2(%arg0: i32, %arg1: i32, %arg2: i32) -> (i32, i32) {
    %c0_i32 = arith.constant 0 : i32
    %c0_i32_0 = arith.constant 0 : i32
    return %c0_i32, %arg1 : i32, i32
  }
  func.func @transform_3(%arg0: i32, %arg1: i32, %arg2: i32) -> (i32, i32) {
    %c0_i32 = arith.constant 0 : i32
    %c0_i32_0 = arith.constant 0 : i32
    return %c0_i32, %arg1 : i32, i32
  }
  func.func @transform_4(%arg0: i32, %arg1: i32, %arg2: i32) -> (i32, i32) {
    %c0_i32 = arith.constant 0 : i32
    return %arg0, %arg1 : i32, i32
  }
}

module attributes {stable_mosaic.version = 11 : i64} {
  func.func @_conv_res_kernel(%arg0: i32, %arg1: i32, %arg2: i32, %arg3: memref<1x128x64xbf16, #tpu.memory_space<vmem>>, %arg4: memref<1x64x64xbf16, #tpu.memory_space<vmem>>, %arg5: memref<1x64xf32, #tpu.memory_space<vmem>>, %arg6: memref<1x64xf32, #tpu.memory_space<vmem>>, %arg7: memref<128x64xbf16, #tpu.memory_space<vmem>>, %arg8: memref<128x64xbf16, #tpu.memory_space<vmem>>, %arg9: memref<128x64xf32, #tpu.memory_space<vmem>>) attributes {dimension_semantics = [#tpu.dimension_semantics<parallel>, #tpu.dimension_semantics<parallel>, #tpu.dimension_semantics<arbitrary>], iteration_bounds = array<i64: 1, 1, 9>, scalar_prefetch = 0 : i64, scratch_operands = 1 : i64, tpu.core_type = #tpu.core_type<tc>, window_params = [{transform_indices = @transform_0, window_bounds = array<i64: 1, 128, 64>}, {transform_indices = @transform_1, window_bounds = array<i64: 1, 64, 64>}, {transform_indices = @transform_2, window_bounds = array<i64: 1, 64>}, {transform_indices = @transform_3, window_bounds = array<i64: 1, 64>}, {transform_indices = @transform_4, window_bounds = array<i64: 128, 64>}, {transform_indices = @transform_5, window_bounds = array<i64: 128, 64>}]} {
    %c0_i32 = arith.constant 0 : i32
    %0 = arith.cmpi eq, %arg2, %c0_i32 : i32
    %1 = arith.extui %0 : i1 to i32
    %c0_i32_0 = arith.constant 0 : i32
    %2 = arith.cmpi ne, %1, %c0_i32_0 : i32
    scf.if %2 {
      %cst_11 = arith.constant 0.000000e+00 : f32
      %14 = vector.broadcast %cst_11 : f32 to vector<128x64xf32>
      %c0_12 = arith.constant 0 : index
      %c0_13 = arith.constant 0 : index
      %15 = vector.load %arg9[%c0_12, %c0_13] : memref<128x64xf32, #tpu.memory_space<vmem>>, vector<128x64xf32>
      tpu.vector_store %arg9[%c0_12, %c0_13], %14 {strides = array<i32>} : memref<128x64xf32, #tpu.memory_space<vmem>>, vector<128x64xf32>,
    } else {
    }
    %c0 = arith.constant 0 : index
    %c0_1 = arith.constant 0 : index
    %3 = vector.load %arg9[%c0, %c0_1] : memref<128x64xf32, #tpu.memory_space<vmem>>, vector<128x64xf32>
    %c0_2 = arith.constant 0 : index
    %c0_3 = arith.constant 0 : index
    %c0_4 = arith.constant 0 : index
    %4 = vector.load %arg3[%c0_2, %c0_3, %c0_4] : memref<1x128x64xbf16, #tpu.memory_space<vmem>>, vector<1x128x64xbf16>
    %5 = vector.shape_cast %4 : vector<1x128x64xbf16> to vector<128x64xbf16>
    %c0_5 = arith.constant 0 : index
    %c0_6 = arith.constant 0 : index
    %c0_7 = arith.constant 0 : index
    %6 = vector.load %arg4[%c0_5, %c0_6, %c0_7] : memref<1x64x64xbf16, #tpu.memory_space<vmem>>, vector<1x64x64xbf16>
    %7 = vector.shape_cast %6 : vector<1x64x64xbf16> to vector<64x64xbf16>
    %cst = arith.constant dense<0.000000e+00> : vector<128x64xf32>
    %8 = tpu.matmul %5, %7, %cst {dimension_numbers = #tpu.dot_dimension_numbers<[1], [0], [0], [1], [0, 0, 1, 1], [], []>} : vector<128x64xbf16>, vector<64x64xbf16>, vector<128x64xf32> -> vector<128x64xf32>
    %9 = arith.addf %3, %8 : vector<128x64xf32>
    %c0_8 = arith.constant 0 : index
    %c0_9 = arith.constant 0 : index
    %10 = vector.load %arg9[%c0_8, %c0_9] : memref<128x64xf32, #tpu.memory_space<vmem>>, vector<128x64xf32>
    tpu.vector_store %arg9[%c0_8, %c0_9], %9 {strides = array<i32>} : memref<128x64xf32, #tpu.memory_space<vmem>>, vector<128x64xf32>,
    %c8_i32 = arith.constant 8 : i32
    %11 = arith.cmpi eq, %arg2, %c8_i32 : i32
    %12 = arith.extui %11 : i1 to i32
    %c0_i32_10 = arith.constant 0 : i32
    %13 = arith.cmpi ne, %12, %c0_i32_10 : i32
    scf.if %13 {
      %c0_11 = arith.constant 0 : index
      %c0_12 = arith.constant 0 : index
      %14 = vector.load %arg9[%c0_11, %c0_12] : memref<128x64xf32, #tpu.memory_space<vmem>>, vector<128x64xf32>
      %c0_13 = arith.constant 0 : index
      %c0_14 = arith.constant 0 : index
      %15 = vector.load %arg5[%c0_13, %c0_14] : memref<1x64xf32, #tpu.memory_space<vmem>>, vector<1x64xf32>
      %16 = vector.broadcast %15 : vector<1x64xf32> to vector<128x64xf32>
      %17 = arith.mulf %14, %16 : vector<128x64xf32>
      %c0_15 = arith.constant 0 : index
      %c0_16 = arith.constant 0 : index
      %18 = vector.load %arg6[%c0_15, %c0_16] : memref<1x64xf32, #tpu.memory_space<vmem>>, vector<1x64xf32>
      %19 = vector.broadcast %18 : vector<1x64xf32> to vector<128x64xf32>
      %20 = arith.addf %17, %19 : vector<128x64xf32>
      %c0_17 = arith.constant 0 : index
      %c0_18 = arith.constant 0 : index
      %21 = vector.load %arg7[%c0_17, %c0_18] : memref<128x64xbf16, #tpu.memory_space<vmem>>, vector<128x64xbf16>
      %22 = arith.extf %21 : vector<128x64xbf16> to vector<128x64xf32>
      %23 = arith.addf %20, %22 : vector<128x64xf32>
      %cst_19 = arith.constant 0.000000e+00 : f32
      %24 = vector.broadcast %cst_19 : f32 to vector<128x64xf32>
      %25 = arith.maximumf %23, %24 : vector<128x64xf32>
      %26 = arith.truncf %25 : vector<128x64xf32> to vector<128x64xbf16>
      %c0_20 = arith.constant 0 : index
      %c0_21 = arith.constant 0 : index
      %27 = vector.load %arg8[%c0_20, %c0_21] : memref<128x64xbf16, #tpu.memory_space<vmem>>, vector<128x64xbf16>
      tpu.vector_store %arg8[%c0_20, %c0_21], %26 {strides = array<i32>} : memref<128x64xbf16, #tpu.memory_space<vmem>>, vector<128x64xbf16>,
    } else {
    }
    return
  }
  func.func @transform_0(%arg0: i32, %arg1: i32, %arg2: i32) -> (i32, i32, i32) {
    %c0_i32 = arith.constant 0 : i32
    %c0_i32_0 = arith.constant 0 : i32
    return %arg2, %arg0, %c0_i32 : i32, i32, i32
  }
  func.func @transform_1(%arg0: i32, %arg1: i32, %arg2: i32) -> (i32, i32, i32) {
    %c0_i32 = arith.constant 0 : i32
    %c0_i32_0 = arith.constant 0 : i32
    return %arg2, %c0_i32, %arg1 : i32, i32, i32
  }
  func.func @transform_2(%arg0: i32, %arg1: i32, %arg2: i32) -> (i32, i32) {
    %c0_i32 = arith.constant 0 : i32
    %c0_i32_0 = arith.constant 0 : i32
    return %c0_i32, %arg1 : i32, i32
  }
  func.func @transform_3(%arg0: i32, %arg1: i32, %arg2: i32) -> (i32, i32) {
    %c0_i32 = arith.constant 0 : i32
    %c0_i32_0 = arith.constant 0 : i32
    return %c0_i32, %arg1 : i32, i32
  }
  func.func @transform_4(%arg0: i32, %arg1: i32, %arg2: i32) -> (i32, i32) {
    %c0_i32 = arith.constant 0 : i32
    return %arg0, %arg1 : i32, i32
  }
  func.func @transform_5(%arg0: i32, %arg1: i32, %arg2: i32) -> (i32, i32) {
    %c0_i32 = arith.constant 0 : i32
    return %arg0, %arg1 : i32, i32
  }
}

module attributes {stable_mosaic.version = 11 : i64} {
  func.func @_conv_kernel(%arg0: i32, %arg1: i32, %arg2: i32, %arg3: memref<1x32x64xbf16, #tpu.memory_space<vmem>>, %arg4: memref<1x64x128xbf16, #tpu.memory_space<vmem>>, %arg5: memref<1x128xf32, #tpu.memory_space<vmem>>, %arg6: memref<1x128xf32, #tpu.memory_space<vmem>>, %arg7: memref<32x128xbf16, #tpu.memory_space<vmem>>, %arg8: memref<32x128xf32, #tpu.memory_space<vmem>>) attributes {dimension_semantics = [#tpu.dimension_semantics<parallel>, #tpu.dimension_semantics<parallel>, #tpu.dimension_semantics<arbitrary>], iteration_bounds = array<i64: 1, 1, 9>, scalar_prefetch = 0 : i64, scratch_operands = 1 : i64, tpu.core_type = #tpu.core_type<tc>, window_params = [{transform_indices = @transform_0, window_bounds = array<i64: 1, 32, 64>}, {transform_indices = @transform_1, window_bounds = array<i64: 1, 64, 128>}, {transform_indices = @transform_2, window_bounds = array<i64: 1, 128>}, {transform_indices = @transform_3, window_bounds = array<i64: 1, 128>}, {transform_indices = @transform_4, window_bounds = array<i64: 32, 128>}]} {
    %c0_i32 = arith.constant 0 : i32
    %0 = arith.cmpi eq, %arg2, %c0_i32 : i32
    %1 = arith.extui %0 : i1 to i32
    %c0_i32_0 = arith.constant 0 : i32
    %2 = arith.cmpi ne, %1, %c0_i32_0 : i32
    scf.if %2 {
      %cst_11 = arith.constant 0.000000e+00 : f32
      %14 = vector.broadcast %cst_11 : f32 to vector<32x128xf32>
      %c0_12 = arith.constant 0 : index
      %c0_13 = arith.constant 0 : index
      %15 = vector.load %arg8[%c0_12, %c0_13] : memref<32x128xf32, #tpu.memory_space<vmem>>, vector<32x128xf32>
      tpu.vector_store %arg8[%c0_12, %c0_13], %14 {strides = array<i32>} : memref<32x128xf32, #tpu.memory_space<vmem>>, vector<32x128xf32>,
    } else {
    }
    %c0 = arith.constant 0 : index
    %c0_1 = arith.constant 0 : index
    %3 = vector.load %arg8[%c0, %c0_1] : memref<32x128xf32, #tpu.memory_space<vmem>>, vector<32x128xf32>
    %c0_2 = arith.constant 0 : index
    %c0_3 = arith.constant 0 : index
    %c0_4 = arith.constant 0 : index
    %4 = vector.load %arg3[%c0_2, %c0_3, %c0_4] : memref<1x32x64xbf16, #tpu.memory_space<vmem>>, vector<1x32x64xbf16>
    %5 = vector.shape_cast %4 : vector<1x32x64xbf16> to vector<32x64xbf16>
    %c0_5 = arith.constant 0 : index
    %c0_6 = arith.constant 0 : index
    %c0_7 = arith.constant 0 : index
    %6 = vector.load %arg4[%c0_5, %c0_6, %c0_7] : memref<1x64x128xbf16, #tpu.memory_space<vmem>>, vector<1x64x128xbf16>
    %7 = vector.shape_cast %6 : vector<1x64x128xbf16> to vector<64x128xbf16>
    %cst = arith.constant dense<0.000000e+00> : vector<32x128xf32>
    %8 = tpu.matmul %5, %7, %cst {dimension_numbers = #tpu.dot_dimension_numbers<[1], [0], [0], [1], [0, 0, 1, 1], [], []>} : vector<32x64xbf16>, vector<64x128xbf16>, vector<32x128xf32> -> vector<32x128xf32>
    %9 = arith.addf %3, %8 : vector<32x128xf32>
    %c0_8 = arith.constant 0 : index
    %c0_9 = arith.constant 0 : index
    %10 = vector.load %arg8[%c0_8, %c0_9] : memref<32x128xf32, #tpu.memory_space<vmem>>, vector<32x128xf32>
    tpu.vector_store %arg8[%c0_8, %c0_9], %9 {strides = array<i32>} : memref<32x128xf32, #tpu.memory_space<vmem>>, vector<32x128xf32>,
    %c8_i32 = arith.constant 8 : i32
    %11 = arith.cmpi eq, %arg2, %c8_i32 : i32
    %12 = arith.extui %11 : i1 to i32
    %c0_i32_10 = arith.constant 0 : i32
    %13 = arith.cmpi ne, %12, %c0_i32_10 : i32
    scf.if %13 {
      %c0_11 = arith.constant 0 : index
      %c0_12 = arith.constant 0 : index
      %14 = vector.load %arg8[%c0_11, %c0_12] : memref<32x128xf32, #tpu.memory_space<vmem>>, vector<32x128xf32>
      %c0_13 = arith.constant 0 : index
      %c0_14 = arith.constant 0 : index
      %15 = vector.load %arg5[%c0_13, %c0_14] : memref<1x128xf32, #tpu.memory_space<vmem>>, vector<1x128xf32>
      %16 = vector.broadcast %15 : vector<1x128xf32> to vector<32x128xf32>
      %17 = arith.mulf %14, %16 : vector<32x128xf32>
      %c0_15 = arith.constant 0 : index
      %c0_16 = arith.constant 0 : index
      %18 = vector.load %arg6[%c0_15, %c0_16] : memref<1x128xf32, #tpu.memory_space<vmem>>, vector<1x128xf32>
      %19 = vector.broadcast %18 : vector<1x128xf32> to vector<32x128xf32>
      %20 = arith.addf %17, %19 : vector<32x128xf32>
      %cst_17 = arith.constant 0.000000e+00 : f32
      %21 = vector.broadcast %cst_17 : f32 to vector<32x128xf32>
      %22 = arith.maximumf %20, %21 : vector<32x128xf32>
      %23 = arith.truncf %22 : vector<32x128xf32> to vector<32x128xbf16>
      %c0_18 = arith.constant 0 : index
      %c0_19 = arith.constant 0 : index
      %24 = vector.load %arg7[%c0_18, %c0_19] : memref<32x128xbf16, #tpu.memory_space<vmem>>, vector<32x128xbf16>
      tpu.vector_store %arg7[%c0_18, %c0_19], %23 {strides = array<i32>} : memref<32x128xbf16, #tpu.memory_space<vmem>>, vector<32x128xbf16>,
    } else {
    }
    return
  }
  func.func @transform_0(%arg0: i32, %arg1: i32, %arg2: i32) -> (i32, i32, i32) {
    %c0_i32 = arith.constant 0 : i32
    %c0_i32_0 = arith.constant 0 : i32
    return %arg2, %arg0, %c0_i32 : i32, i32, i32
  }
  func.func @transform_1(%arg0: i32, %arg1: i32, %arg2: i32) -> (i32, i32, i32) {
    %c0_i32 = arith.constant 0 : i32
    %c0_i32_0 = arith.constant 0 : i32
    return %arg2, %c0_i32, %arg1 : i32, i32, i32
  }
  func.func @transform_2(%arg0: i32, %arg1: i32, %arg2: i32) -> (i32, i32) {
    %c0_i32 = arith.constant 0 : i32
    %c0_i32_0 = arith.constant 0 : i32
    return %c0_i32, %arg1 : i32, i32
  }
  func.func @transform_3(%arg0: i32, %arg1: i32, %arg2: i32) -> (i32, i32) {
    %c0_i32 = arith.constant 0 : i32
    %c0_i32_0 = arith.constant 0 : i32
    return %c0_i32, %arg1 : i32, i32
  }
  func.func @transform_4(%arg0: i32, %arg1: i32, %arg2: i32) -> (i32, i32) {
    %c0_i32 = arith.constant 0 : i32
    return %arg0, %arg1 : i32, i32
  }
}

module attributes {stable_mosaic.version = 11 : i64} {
  func.func @_conv_res_kernel(%arg0: i32, %arg1: i32, %arg2: i32, %arg3: memref<1x32x128xbf16, #tpu.memory_space<vmem>>, %arg4: memref<1x128x128xbf16, #tpu.memory_space<vmem>>, %arg5: memref<1x128xf32, #tpu.memory_space<vmem>>, %arg6: memref<1x128xf32, #tpu.memory_space<vmem>>, %arg7: memref<32x128xbf16, #tpu.memory_space<vmem>>, %arg8: memref<32x128xbf16, #tpu.memory_space<vmem>>, %arg9: memref<32x128xf32, #tpu.memory_space<vmem>>) attributes {dimension_semantics = [#tpu.dimension_semantics<parallel>, #tpu.dimension_semantics<parallel>, #tpu.dimension_semantics<arbitrary>], iteration_bounds = array<i64: 1, 1, 9>, scalar_prefetch = 0 : i64, scratch_operands = 1 : i64, tpu.core_type = #tpu.core_type<tc>, window_params = [{transform_indices = @transform_0, window_bounds = array<i64: 1, 32, 128>}, {transform_indices = @transform_1, window_bounds = array<i64: 1, 128, 128>}, {transform_indices = @transform_2, window_bounds = array<i64: 1, 128>}, {transform_indices = @transform_3, window_bounds = array<i64: 1, 128>}, {transform_indices = @transform_4, window_bounds = array<i64: 32, 128>}, {transform_indices = @transform_5, window_bounds = array<i64: 32, 128>}]} {
    %c0_i32 = arith.constant 0 : i32
    %0 = arith.cmpi eq, %arg2, %c0_i32 : i32
    %1 = arith.extui %0 : i1 to i32
    %c0_i32_0 = arith.constant 0 : i32
    %2 = arith.cmpi ne, %1, %c0_i32_0 : i32
    scf.if %2 {
      %cst_11 = arith.constant 0.000000e+00 : f32
      %14 = vector.broadcast %cst_11 : f32 to vector<32x128xf32>
      %c0_12 = arith.constant 0 : index
      %c0_13 = arith.constant 0 : index
      %15 = vector.load %arg9[%c0_12, %c0_13] : memref<32x128xf32, #tpu.memory_space<vmem>>, vector<32x128xf32>
      tpu.vector_store %arg9[%c0_12, %c0_13], %14 {strides = array<i32>} : memref<32x128xf32, #tpu.memory_space<vmem>>, vector<32x128xf32>,
    } else {
    }
    %c0 = arith.constant 0 : index
    %c0_1 = arith.constant 0 : index
    %3 = vector.load %arg9[%c0, %c0_1] : memref<32x128xf32, #tpu.memory_space<vmem>>, vector<32x128xf32>
    %c0_2 = arith.constant 0 : index
    %c0_3 = arith.constant 0 : index
    %c0_4 = arith.constant 0 : index
    %4 = vector.load %arg3[%c0_2, %c0_3, %c0_4] : memref<1x32x128xbf16, #tpu.memory_space<vmem>>, vector<1x32x128xbf16>
    %5 = vector.shape_cast %4 : vector<1x32x128xbf16> to vector<32x128xbf16>
    %c0_5 = arith.constant 0 : index
    %c0_6 = arith.constant 0 : index
    %c0_7 = arith.constant 0 : index
    %6 = vector.load %arg4[%c0_5, %c0_6, %c0_7] : memref<1x128x128xbf16, #tpu.memory_space<vmem>>, vector<1x128x128xbf16>
    %7 = vector.shape_cast %6 : vector<1x128x128xbf16> to vector<128x128xbf16>
    %cst = arith.constant dense<0.000000e+00> : vector<32x128xf32>
    %8 = tpu.matmul %5, %7, %cst {dimension_numbers = #tpu.dot_dimension_numbers<[1], [0], [0], [1], [0, 0, 1, 1], [], []>} : vector<32x128xbf16>, vector<128x128xbf16>, vector<32x128xf32> -> vector<32x128xf32>
    %9 = arith.addf %3, %8 : vector<32x128xf32>
    %c0_8 = arith.constant 0 : index
    %c0_9 = arith.constant 0 : index
    %10 = vector.load %arg9[%c0_8, %c0_9] : memref<32x128xf32, #tpu.memory_space<vmem>>, vector<32x128xf32>
    tpu.vector_store %arg9[%c0_8, %c0_9], %9 {strides = array<i32>} : memref<32x128xf32, #tpu.memory_space<vmem>>, vector<32x128xf32>,
    %c8_i32 = arith.constant 8 : i32
    %11 = arith.cmpi eq, %arg2, %c8_i32 : i32
    %12 = arith.extui %11 : i1 to i32
    %c0_i32_10 = arith.constant 0 : i32
    %13 = arith.cmpi ne, %12, %c0_i32_10 : i32
    scf.if %13 {
      %c0_11 = arith.constant 0 : index
      %c0_12 = arith.constant 0 : index
      %14 = vector.load %arg9[%c0_11, %c0_12] : memref<32x128xf32, #tpu.memory_space<vmem>>, vector<32x128xf32>
      %c0_13 = arith.constant 0 : index
      %c0_14 = arith.constant 0 : index
      %15 = vector.load %arg5[%c0_13, %c0_14] : memref<1x128xf32, #tpu.memory_space<vmem>>, vector<1x128xf32>
      %16 = vector.broadcast %15 : vector<1x128xf32> to vector<32x128xf32>
      %17 = arith.mulf %14, %16 : vector<32x128xf32>
      %c0_15 = arith.constant 0 : index
      %c0_16 = arith.constant 0 : index
      %18 = vector.load %arg6[%c0_15, %c0_16] : memref<1x128xf32, #tpu.memory_space<vmem>>, vector<1x128xf32>
      %19 = vector.broadcast %18 : vector<1x128xf32> to vector<32x128xf32>
      %20 = arith.addf %17, %19 : vector<32x128xf32>
      %c0_17 = arith.constant 0 : index
      %c0_18 = arith.constant 0 : index
      %21 = vector.load %arg7[%c0_17, %c0_18] : memref<32x128xbf16, #tpu.memory_space<vmem>>, vector<32x128xbf16>
      %22 = arith.extf %21 : vector<32x128xbf16> to vector<32x128xf32>
      %23 = arith.addf %20, %22 : vector<32x128xf32>
      %cst_19 = arith.constant 0.000000e+00 : f32
      %24 = vector.broadcast %cst_19 : f32 to vector<32x128xf32>
      %25 = arith.maximumf %23, %24 : vector<32x128xf32>
      %26 = arith.truncf %25 : vector<32x128xf32> to vector<32x128xbf16>
      %c0_20 = arith.constant 0 : index
      %c0_21 = arith.constant 0 : index
      %27 = vector.load %arg8[%c0_20, %c0_21] : memref<32x128xbf16, #tpu.memory_space<vmem>>, vector<32x128xbf16>
      tpu.vector_store %arg8[%c0_20, %c0_21], %26 {strides = array<i32>} : memref<32x128xbf16, #tpu.memory_space<vmem>>, vector<32x128xbf16>,
    } else {
    }
    return
  }
  func.func @transform_0(%arg0: i32, %arg1: i32, %arg2: i32) -> (i32, i32, i32) {
    %c0_i32 = arith.constant 0 : i32
    %c0_i32_0 = arith.constant 0 : i32
    return %arg2, %arg0, %c0_i32 : i32, i32, i32
  }
  func.func @transform_1(%arg0: i32, %arg1: i32, %arg2: i32) -> (i32, i32, i32) {
    %c0_i32 = arith.constant 0 : i32
    %c0_i32_0 = arith.constant 0 : i32
    return %arg2, %c0_i32, %arg1 : i32, i32, i32
  }
  func.func @transform_2(%arg0: i32, %arg1: i32, %arg2: i32) -> (i32, i32) {
    %c0_i32 = arith.constant 0 : i32
    %c0_i32_0 = arith.constant 0 : i32
    return %c0_i32, %arg1 : i32, i32
  }
  func.func @transform_3(%arg0: i32, %arg1: i32, %arg2: i32) -> (i32, i32) {
    %c0_i32 = arith.constant 0 : i32
    %c0_i32_0 = arith.constant 0 : i32
    return %c0_i32, %arg1 : i32, i32
  }
  func.func @transform_4(%arg0: i32, %arg1: i32, %arg2: i32) -> (i32, i32) {
    %c0_i32 = arith.constant 0 : i32
    return %arg0, %arg1 : i32, i32
  }
  func.func @transform_5(%arg0: i32, %arg1: i32, %arg2: i32) -> (i32, i32) {
    %c0_i32 = arith.constant 0 : i32
    return %arg0, %arg1 : i32, i32
  }
}

module attributes {stable_mosaic.version = 11 : i64} {
  func.func @_conv_kernel(%arg0: i32, %arg1: i32, %arg2: i32, %arg3: memref<1x32x64xbf16, #tpu.memory_space<vmem>>, %arg4: memref<1x64x128xbf16, #tpu.memory_space<vmem>>, %arg5: memref<1x128xf32, #tpu.memory_space<vmem>>, %arg6: memref<1x128xf32, #tpu.memory_space<vmem>>, %arg7: memref<32x128xbf16, #tpu.memory_space<vmem>>, %arg8: memref<32x128xf32, #tpu.memory_space<vmem>>) attributes {dimension_semantics = [#tpu.dimension_semantics<parallel>, #tpu.dimension_semantics<parallel>, #tpu.dimension_semantics<arbitrary>], iteration_bounds = array<i64: 1, 1, 1>, scalar_prefetch = 0 : i64, scratch_operands = 1 : i64, tpu.core_type = #tpu.core_type<tc>, window_params = [{transform_indices = @transform_0, window_bounds = array<i64: 1, 32, 64>}, {transform_indices = @transform_1, window_bounds = array<i64: 1, 64, 128>}, {transform_indices = @transform_2, window_bounds = array<i64: 1, 128>}, {transform_indices = @transform_3, window_bounds = array<i64: 1, 128>}, {transform_indices = @transform_4, window_bounds = array<i64: 32, 128>}]} {
    %c0_i32 = arith.constant 0 : i32
    %0 = arith.cmpi eq, %arg2, %c0_i32 : i32
    %1 = arith.extui %0 : i1 to i32
    %c0_i32_0 = arith.constant 0 : i32
    %2 = arith.cmpi ne, %1, %c0_i32_0 : i32
    scf.if %2 {
      %cst_12 = arith.constant 0.000000e+00 : f32
      %14 = vector.broadcast %cst_12 : f32 to vector<32x128xf32>
      %c0_13 = arith.constant 0 : index
      %c0_14 = arith.constant 0 : index
      %15 = vector.load %arg8[%c0_13, %c0_14] : memref<32x128xf32, #tpu.memory_space<vmem>>, vector<32x128xf32>
      tpu.vector_store %arg8[%c0_13, %c0_14], %14 {strides = array<i32>} : memref<32x128xf32, #tpu.memory_space<vmem>>, vector<32x128xf32>,
    } else {
    }
    %c0 = arith.constant 0 : index
    %c0_1 = arith.constant 0 : index
    %3 = vector.load %arg8[%c0, %c0_1] : memref<32x128xf32, #tpu.memory_space<vmem>>, vector<32x128xf32>
    %c0_2 = arith.constant 0 : index
    %c0_3 = arith.constant 0 : index
    %c0_4 = arith.constant 0 : index
    %4 = vector.load %arg3[%c0_2, %c0_3, %c0_4] : memref<1x32x64xbf16, #tpu.memory_space<vmem>>, vector<1x32x64xbf16>
    %5 = vector.shape_cast %4 : vector<1x32x64xbf16> to vector<32x64xbf16>
    %c0_5 = arith.constant 0 : index
    %c0_6 = arith.constant 0 : index
    %c0_7 = arith.constant 0 : index
    %6 = vector.load %arg4[%c0_5, %c0_6, %c0_7] : memref<1x64x128xbf16, #tpu.memory_space<vmem>>, vector<1x64x128xbf16>
    %7 = vector.shape_cast %6 : vector<1x64x128xbf16> to vector<64x128xbf16>
    %cst = arith.constant dense<0.000000e+00> : vector<32x128xf32>
    %8 = tpu.matmul %5, %7, %cst {dimension_numbers = #tpu.dot_dimension_numbers<[1], [0], [0], [1], [0, 0, 1, 1], [], []>} : vector<32x64xbf16>, vector<64x128xbf16>, vector<32x128xf32> -> vector<32x128xf32>
    %9 = arith.addf %3, %8 : vector<32x128xf32>
    %c0_8 = arith.constant 0 : index
    %c0_9 = arith.constant 0 : index
    %10 = vector.load %arg8[%c0_8, %c0_9] : memref<32x128xf32, #tpu.memory_space<vmem>>, vector<32x128xf32>
    tpu.vector_store %arg8[%c0_8, %c0_9], %9 {strides = array<i32>} : memref<32x128xf32, #tpu.memory_space<vmem>>, vector<32x128xf32>,
    %c0_i32_10 = arith.constant 0 : i32
    %11 = arith.cmpi eq, %arg2, %c0_i32_10 : i32
    %12 = arith.extui %11 : i1 to i32
    %c0_i32_11 = arith.constant 0 : i32
    %13 = arith.cmpi ne, %12, %c0_i32_11 : i32
    scf.if %13 {
      %c0_12 = arith.constant 0 : index
      %c0_13 = arith.constant 0 : index
      %14 = vector.load %arg8[%c0_12, %c0_13] : memref<32x128xf32, #tpu.memory_space<vmem>>, vector<32x128xf32>
      %c0_14 = arith.constant 0 : index
      %c0_15 = arith.constant 0 : index
      %15 = vector.load %arg5[%c0_14, %c0_15] : memref<1x128xf32, #tpu.memory_space<vmem>>, vector<1x128xf32>
      %16 = vector.broadcast %15 : vector<1x128xf32> to vector<32x128xf32>
      %17 = arith.mulf %14, %16 : vector<32x128xf32>
      %c0_16 = arith.constant 0 : index
      %c0_17 = arith.constant 0 : index
      %18 = vector.load %arg6[%c0_16, %c0_17] : memref<1x128xf32, #tpu.memory_space<vmem>>, vector<1x128xf32>
      %19 = vector.broadcast %18 : vector<1x128xf32> to vector<32x128xf32>
      %20 = arith.addf %17, %19 : vector<32x128xf32>
      %21 = arith.truncf %20 : vector<32x128xf32> to vector<32x128xbf16>
      %c0_18 = arith.constant 0 : index
      %c0_19 = arith.constant 0 : index
      %22 = vector.load %arg7[%c0_18, %c0_19] : memref<32x128xbf16, #tpu.memory_space<vmem>>, vector<32x128xbf16>
      tpu.vector_store %arg7[%c0_18, %c0_19], %21 {strides = array<i32>} : memref<32x128xbf16, #tpu.memory_space<vmem>>, vector<32x128xbf16>,
    } else {
    }
    return
  }
  func.func @transform_0(%arg0: i32, %arg1: i32, %arg2: i32) -> (i32, i32, i32) {
    %c0_i32 = arith.constant 0 : i32
    %c0_i32_0 = arith.constant 0 : i32
    return %arg2, %arg0, %c0_i32 : i32, i32, i32
  }
  func.func @transform_1(%arg0: i32, %arg1: i32, %arg2: i32) -> (i32, i32, i32) {
    %c0_i32 = arith.constant 0 : i32
    %c0_i32_0 = arith.constant 0 : i32
    return %arg2, %c0_i32, %arg1 : i32, i32, i32
  }
  func.func @transform_2(%arg0: i32, %arg1: i32, %arg2: i32) -> (i32, i32) {
    %c0_i32 = arith.constant 0 : i32
    %c0_i32_0 = arith.constant 0 : i32
    return %c0_i32, %arg1 : i32, i32
  }
  func.func @transform_3(%arg0: i32, %arg1: i32, %arg2: i32) -> (i32, i32) {
    %c0_i32 = arith.constant 0 : i32
    %c0_i32_0 = arith.constant 0 : i32
    return %c0_i32, %arg1 : i32, i32
  }
  func.func @transform_4(%arg0: i32, %arg1: i32, %arg2: i32) -> (i32, i32) {
    %c0_i32 = arith.constant 0 : i32
    return %arg0, %arg1 : i32, i32
  }
}

module attributes {stable_mosaic.version = 11 : i64} {
  func.func @_conv_kernel(%arg0: i32, %arg1: i32, %arg2: i32, %arg3: memref<1x8x128xbf16, #tpu.memory_space<vmem>>, %arg4: memref<1x128x256xbf16, #tpu.memory_space<vmem>>, %arg5: memref<1x256xf32, #tpu.memory_space<vmem>>, %arg6: memref<1x256xf32, #tpu.memory_space<vmem>>, %arg7: memref<8x256xbf16, #tpu.memory_space<vmem>>, %arg8: memref<8x256xf32, #tpu.memory_space<vmem>>) attributes {dimension_semantics = [#tpu.dimension_semantics<parallel>, #tpu.dimension_semantics<parallel>, #tpu.dimension_semantics<arbitrary>], iteration_bounds = array<i64: 1, 1, 9>, scalar_prefetch = 0 : i64, scratch_operands = 1 : i64, tpu.core_type = #tpu.core_type<tc>, window_params = [{transform_indices = @transform_0, window_bounds = array<i64: 1, 8, 128>}, {transform_indices = @transform_1, window_bounds = array<i64: 1, 128, 256>}, {transform_indices = @transform_2, window_bounds = array<i64: 1, 256>}, {transform_indices = @transform_3, window_bounds = array<i64: 1, 256>}, {transform_indices = @transform_4, window_bounds = array<i64: 8, 256>}]} {
    %c0_i32 = arith.constant 0 : i32
    %0 = arith.cmpi eq, %arg2, %c0_i32 : i32
    %1 = arith.extui %0 : i1 to i32
    %c0_i32_0 = arith.constant 0 : i32
    %2 = arith.cmpi ne, %1, %c0_i32_0 : i32
    scf.if %2 {
      %cst_11 = arith.constant 0.000000e+00 : f32
      %14 = vector.broadcast %cst_11 : f32 to vector<8x256xf32>
      %c0_12 = arith.constant 0 : index
      %c0_13 = arith.constant 0 : index
      %15 = vector.load %arg8[%c0_12, %c0_13] : memref<8x256xf32, #tpu.memory_space<vmem>>, vector<8x256xf32>
      tpu.vector_store %arg8[%c0_12, %c0_13], %14 {strides = array<i32>} : memref<8x256xf32, #tpu.memory_space<vmem>>, vector<8x256xf32>,
    } else {
    }
    %c0 = arith.constant 0 : index
    %c0_1 = arith.constant 0 : index
    %3 = vector.load %arg8[%c0, %c0_1] : memref<8x256xf32, #tpu.memory_space<vmem>>, vector<8x256xf32>
    %c0_2 = arith.constant 0 : index
    %c0_3 = arith.constant 0 : index
    %c0_4 = arith.constant 0 : index
    %4 = vector.load %arg3[%c0_2, %c0_3, %c0_4] : memref<1x8x128xbf16, #tpu.memory_space<vmem>>, vector<1x8x128xbf16>
    %5 = vector.shape_cast %4 : vector<1x8x128xbf16> to vector<8x128xbf16>
    %c0_5 = arith.constant 0 : index
    %c0_6 = arith.constant 0 : index
    %c0_7 = arith.constant 0 : index
    %6 = vector.load %arg4[%c0_5, %c0_6, %c0_7] : memref<1x128x256xbf16, #tpu.memory_space<vmem>>, vector<1x128x256xbf16>
    %7 = vector.shape_cast %6 : vector<1x128x256xbf16> to vector<128x256xbf16>
    %cst = arith.constant dense<0.000000e+00> : vector<8x256xf32>
    %8 = tpu.matmul %5, %7, %cst {dimension_numbers = #tpu.dot_dimension_numbers<[1], [0], [0], [1], [0, 0, 1, 1], [], []>} : vector<8x128xbf16>, vector<128x256xbf16>, vector<8x256xf32> -> vector<8x256xf32>
    %9 = arith.addf %3, %8 : vector<8x256xf32>
    %c0_8 = arith.constant 0 : index
    %c0_9 = arith.constant 0 : index
    %10 = vector.load %arg8[%c0_8, %c0_9] : memref<8x256xf32, #tpu.memory_space<vmem>>, vector<8x256xf32>
    tpu.vector_store %arg8[%c0_8, %c0_9], %9 {strides = array<i32>} : memref<8x256xf32, #tpu.memory_space<vmem>>, vector<8x256xf32>,
    %c8_i32 = arith.constant 8 : i32
    %11 = arith.cmpi eq, %arg2, %c8_i32 : i32
    %12 = arith.extui %11 : i1 to i32
    %c0_i32_10 = arith.constant 0 : i32
    %13 = arith.cmpi ne, %12, %c0_i32_10 : i32
    scf.if %13 {
      %c0_11 = arith.constant 0 : index
      %c0_12 = arith.constant 0 : index
      %14 = vector.load %arg8[%c0_11, %c0_12] : memref<8x256xf32, #tpu.memory_space<vmem>>, vector<8x256xf32>
      %c0_13 = arith.constant 0 : index
      %c0_14 = arith.constant 0 : index
      %15 = vector.load %arg5[%c0_13, %c0_14] : memref<1x256xf32, #tpu.memory_space<vmem>>, vector<1x256xf32>
      %16 = vector.broadcast %15 : vector<1x256xf32> to vector<8x256xf32>
      %17 = arith.mulf %14, %16 : vector<8x256xf32>
      %c0_15 = arith.constant 0 : index
      %c0_16 = arith.constant 0 : index
      %18 = vector.load %arg6[%c0_15, %c0_16] : memref<1x256xf32, #tpu.memory_space<vmem>>, vector<1x256xf32>
      %19 = vector.broadcast %18 : vector<1x256xf32> to vector<8x256xf32>
      %20 = arith.addf %17, %19 : vector<8x256xf32>
      %cst_17 = arith.constant 0.000000e+00 : f32
      %21 = vector.broadcast %cst_17 : f32 to vector<8x256xf32>
      %22 = arith.maximumf %20, %21 : vector<8x256xf32>
      %23 = arith.truncf %22 : vector<8x256xf32> to vector<8x256xbf16>
      %c0_18 = arith.constant 0 : index
      %c0_19 = arith.constant 0 : index
      %24 = vector.load %arg7[%c0_18, %c0_19] : memref<8x256xbf16, #tpu.memory_space<vmem>>, vector<8x256xbf16>
      tpu.vector_store %arg7[%c0_18, %c0_19], %23 {strides = array<i32>} : memref<8x256xbf16, #tpu.memory_space<vmem>>, vector<8x256xbf16>,
    } else {
    }
    return
  }
  func.func @transform_0(%arg0: i32, %arg1: i32, %arg2: i32) -> (i32, i32, i32) {
    %c0_i32 = arith.constant 0 : i32
    %c0_i32_0 = arith.constant 0 : i32
    return %arg2, %arg0, %c0_i32 : i32, i32, i32
  }
  func.func @transform_1(%arg0: i32, %arg1: i32, %arg2: i32) -> (i32, i32, i32) {
    %c0_i32 = arith.constant 0 : i32
    %c0_i32_0 = arith.constant 0 : i32
    return %arg2, %c0_i32, %arg1 : i32, i32, i32
  }
  func.func @transform_2(%arg0: i32, %arg1: i32, %arg2: i32) -> (i32, i32) {
    %c0_i32 = arith.constant 0 : i32
    %c0_i32_0 = arith.constant 0 : i32
    return %c0_i32, %arg1 : i32, i32
  }
  func.func @transform_3(%arg0: i32, %arg1: i32, %arg2: i32) -> (i32, i32) {
    %c0_i32 = arith.constant 0 : i32
    %c0_i32_0 = arith.constant 0 : i32
    return %c0_i32, %arg1 : i32, i32
  }
  func.func @transform_4(%arg0: i32, %arg1: i32, %arg2: i32) -> (i32, i32) {
    %c0_i32 = arith.constant 0 : i32
    return %arg0, %arg1 : i32, i32
  }
}

module attributes {stable_mosaic.version = 11 : i64} {
  func.func @_conv_res_kernel(%arg0: i32, %arg1: i32, %arg2: i32, %arg3: memref<1x8x256xbf16, #tpu.memory_space<vmem>>, %arg4: memref<1x256x256xbf16, #tpu.memory_space<vmem>>, %arg5: memref<1x256xf32, #tpu.memory_space<vmem>>, %arg6: memref<1x256xf32, #tpu.memory_space<vmem>>, %arg7: memref<8x256xbf16, #tpu.memory_space<vmem>>, %arg8: memref<8x256xbf16, #tpu.memory_space<vmem>>, %arg9: memref<8x256xf32, #tpu.memory_space<vmem>>) attributes {dimension_semantics = [#tpu.dimension_semantics<parallel>, #tpu.dimension_semantics<parallel>, #tpu.dimension_semantics<arbitrary>], iteration_bounds = array<i64: 1, 1, 9>, scalar_prefetch = 0 : i64, scratch_operands = 1 : i64, tpu.core_type = #tpu.core_type<tc>, window_params = [{transform_indices = @transform_0, window_bounds = array<i64: 1, 8, 256>}, {transform_indices = @transform_1, window_bounds = array<i64: 1, 256, 256>}, {transform_indices = @transform_2, window_bounds = array<i64: 1, 256>}, {transform_indices = @transform_3, window_bounds = array<i64: 1, 256>}, {transform_indices = @transform_4, window_bounds = array<i64: 8, 256>}, {transform_indices = @transform_5, window_bounds = array<i64: 8, 256>}]} {
    %c0_i32 = arith.constant 0 : i32
    %0 = arith.cmpi eq, %arg2, %c0_i32 : i32
    %1 = arith.extui %0 : i1 to i32
    %c0_i32_0 = arith.constant 0 : i32
    %2 = arith.cmpi ne, %1, %c0_i32_0 : i32
    scf.if %2 {
      %cst_11 = arith.constant 0.000000e+00 : f32
      %14 = vector.broadcast %cst_11 : f32 to vector<8x256xf32>
      %c0_12 = arith.constant 0 : index
      %c0_13 = arith.constant 0 : index
      %15 = vector.load %arg9[%c0_12, %c0_13] : memref<8x256xf32, #tpu.memory_space<vmem>>, vector<8x256xf32>
      tpu.vector_store %arg9[%c0_12, %c0_13], %14 {strides = array<i32>} : memref<8x256xf32, #tpu.memory_space<vmem>>, vector<8x256xf32>,
    } else {
    }
    %c0 = arith.constant 0 : index
    %c0_1 = arith.constant 0 : index
    %3 = vector.load %arg9[%c0, %c0_1] : memref<8x256xf32, #tpu.memory_space<vmem>>, vector<8x256xf32>
    %c0_2 = arith.constant 0 : index
    %c0_3 = arith.constant 0 : index
    %c0_4 = arith.constant 0 : index
    %4 = vector.load %arg3[%c0_2, %c0_3, %c0_4] : memref<1x8x256xbf16, #tpu.memory_space<vmem>>, vector<1x8x256xbf16>
    %5 = vector.shape_cast %4 : vector<1x8x256xbf16> to vector<8x256xbf16>
    %c0_5 = arith.constant 0 : index
    %c0_6 = arith.constant 0 : index
    %c0_7 = arith.constant 0 : index
    %6 = vector.load %arg4[%c0_5, %c0_6, %c0_7] : memref<1x256x256xbf16, #tpu.memory_space<vmem>>, vector<1x256x256xbf16>
    %7 = vector.shape_cast %6 : vector<1x256x256xbf16> to vector<256x256xbf16>
    %cst = arith.constant dense<0.000000e+00> : vector<8x256xf32>
    %8 = tpu.matmul %5, %7, %cst {dimension_numbers = #tpu.dot_dimension_numbers<[1], [0], [0], [1], [0, 0, 1, 1], [], []>} : vector<8x256xbf16>, vector<256x256xbf16>, vector<8x256xf32> -> vector<8x256xf32>
    %9 = arith.addf %3, %8 : vector<8x256xf32>
    %c0_8 = arith.constant 0 : index
    %c0_9 = arith.constant 0 : index
    %10 = vector.load %arg9[%c0_8, %c0_9] : memref<8x256xf32, #tpu.memory_space<vmem>>, vector<8x256xf32>
    tpu.vector_store %arg9[%c0_8, %c0_9], %9 {strides = array<i32>} : memref<8x256xf32, #tpu.memory_space<vmem>>, vector<8x256xf32>,
    %c8_i32 = arith.constant 8 : i32
    %11 = arith.cmpi eq, %arg2, %c8_i32 : i32
    %12 = arith.extui %11 : i1 to i32
    %c0_i32_10 = arith.constant 0 : i32
    %13 = arith.cmpi ne, %12, %c0_i32_10 : i32
    scf.if %13 {
      %c0_11 = arith.constant 0 : index
      %c0_12 = arith.constant 0 : index
      %14 = vector.load %arg9[%c0_11, %c0_12] : memref<8x256xf32, #tpu.memory_space<vmem>>, vector<8x256xf32>
      %c0_13 = arith.constant 0 : index
      %c0_14 = arith.constant 0 : index
      %15 = vector.load %arg5[%c0_13, %c0_14] : memref<1x256xf32, #tpu.memory_space<vmem>>, vector<1x256xf32>
      %16 = vector.broadcast %15 : vector<1x256xf32> to vector<8x256xf32>
      %17 = arith.mulf %14, %16 : vector<8x256xf32>
      %c0_15 = arith.constant 0 : index
      %c0_16 = arith.constant 0 : index
      %18 = vector.load %arg6[%c0_15, %c0_16] : memref<1x256xf32, #tpu.memory_space<vmem>>, vector<1x256xf32>
      %19 = vector.broadcast %18 : vector<1x256xf32> to vector<8x256xf32>
      %20 = arith.addf %17, %19 : vector<8x256xf32>
      %c0_17 = arith.constant 0 : index
      %c0_18 = arith.constant 0 : index
      %21 = vector.load %arg7[%c0_17, %c0_18] : memref<8x256xbf16, #tpu.memory_space<vmem>>, vector<8x256xbf16>
      %22 = arith.extf %21 : vector<8x256xbf16> to vector<8x256xf32>
      %23 = arith.addf %20, %22 : vector<8x256xf32>
      %cst_19 = arith.constant 0.000000e+00 : f32
      %24 = vector.broadcast %cst_19 : f32 to vector<8x256xf32>
      %25 = arith.maximumf %23, %24 : vector<8x256xf32>
      %26 = arith.truncf %25 : vector<8x256xf32> to vector<8x256xbf16>
      %c0_20 = arith.constant 0 : index
      %c0_21 = arith.constant 0 : index
      %27 = vector.load %arg8[%c0_20, %c0_21] : memref<8x256xbf16, #tpu.memory_space<vmem>>, vector<8x256xbf16>
      tpu.vector_store %arg8[%c0_20, %c0_21], %26 {strides = array<i32>} : memref<8x256xbf16, #tpu.memory_space<vmem>>, vector<8x256xbf16>,
    } else {
    }
    return
  }
  func.func @transform_0(%arg0: i32, %arg1: i32, %arg2: i32) -> (i32, i32, i32) {
    %c0_i32 = arith.constant 0 : i32
    %c0_i32_0 = arith.constant 0 : i32
    return %arg2, %arg0, %c0_i32 : i32, i32, i32
  }
  func.func @transform_1(%arg0: i32, %arg1: i32, %arg2: i32) -> (i32, i32, i32) {
    %c0_i32 = arith.constant 0 : i32
    %c0_i32_0 = arith.constant 0 : i32
    return %arg2, %c0_i32, %arg1 : i32, i32, i32
  }
  func.func @transform_2(%arg0: i32, %arg1: i32, %arg2: i32) -> (i32, i32) {
    %c0_i32 = arith.constant 0 : i32
    %c0_i32_0 = arith.constant 0 : i32
    return %c0_i32, %arg1 : i32, i32
  }
  func.func @transform_3(%arg0: i32, %arg1: i32, %arg2: i32) -> (i32, i32) {
    %c0_i32 = arith.constant 0 : i32
    %c0_i32_0 = arith.constant 0 : i32
    return %c0_i32, %arg1 : i32, i32
  }
  func.func @transform_4(%arg0: i32, %arg1: i32, %arg2: i32) -> (i32, i32) {
    %c0_i32 = arith.constant 0 : i32
    return %arg0, %arg1 : i32, i32
  }
  func.func @transform_5(%arg0: i32, %arg1: i32, %arg2: i32) -> (i32, i32) {
    %c0_i32 = arith.constant 0 : i32
    return %arg0, %arg1 : i32, i32
  }
}

module attributes {stable_mosaic.version = 11 : i64} {
  func.func @_conv_kernel(%arg0: i32, %arg1: i32, %arg2: i32, %arg3: memref<1x8x128xbf16, #tpu.memory_space<vmem>>, %arg4: memref<1x128x256xbf16, #tpu.memory_space<vmem>>, %arg5: memref<1x256xf32, #tpu.memory_space<vmem>>, %arg6: memref<1x256xf32, #tpu.memory_space<vmem>>, %arg7: memref<8x256xbf16, #tpu.memory_space<vmem>>, %arg8: memref<8x256xf32, #tpu.memory_space<vmem>>) attributes {dimension_semantics = [#tpu.dimension_semantics<parallel>, #tpu.dimension_semantics<parallel>, #tpu.dimension_semantics<arbitrary>], iteration_bounds = array<i64: 1, 1, 1>, scalar_prefetch = 0 : i64, scratch_operands = 1 : i64, tpu.core_type = #tpu.core_type<tc>, window_params = [{transform_indices = @transform_0, window_bounds = array<i64: 1, 8, 128>}, {transform_indices = @transform_1, window_bounds = array<i64: 1, 128, 256>}, {transform_indices = @transform_2, window_bounds = array<i64: 1, 256>}, {transform_indices = @transform_3, window_bounds = array<i64: 1, 256>}, {transform_indices = @transform_4, window_bounds = array<i64: 8, 256>}]} {
    %c0_i32 = arith.constant 0 : i32
    %0 = arith.cmpi eq, %arg2, %c0_i32 : i32
    %1 = arith.extui %0 : i1 to i32
    %c0_i32_0 = arith.constant 0 : i32
    %2 = arith.cmpi ne, %1, %c0_i32_0 : i32
    scf.if %2 {
      %cst_12 = arith.constant 0.000000e+00 : f32
      %14 = vector.broadcast %cst_12 : f32 to vector<8x256xf32>
      %c0_13 = arith.constant 0 : index
      %c0_14 = arith.constant 0 : index
      %15 = vector.load %arg8[%c0_13, %c0_14] : memref<8x256xf32, #tpu.memory_space<vmem>>, vector<8x256xf32>
      tpu.vector_store %arg8[%c0_13, %c0_14], %14 {strides = array<i32>} : memref<8x256xf32, #tpu.memory_space<vmem>>, vector<8x256xf32>,
    } else {
    }
    %c0 = arith.constant 0 : index
    %c0_1 = arith.constant 0 : index
    %3 = vector.load %arg8[%c0, %c0_1] : memref<8x256xf32, #tpu.memory_space<vmem>>, vector<8x256xf32>
    %c0_2 = arith.constant 0 : index
    %c0_3 = arith.constant 0 : index
    %c0_4 = arith.constant 0 : index
    %4 = vector.load %arg3[%c0_2, %c0_3, %c0_4] : memref<1x8x128xbf16, #tpu.memory_space<vmem>>, vector<1x8x128xbf16>
    %5 = vector.shape_cast %4 : vector<1x8x128xbf16> to vector<8x128xbf16>
    %c0_5 = arith.constant 0 : index
    %c0_6 = arith.constant 0 : index
    %c0_7 = arith.constant 0 : index
    %6 = vector.load %arg4[%c0_5, %c0_6, %c0_7] : memref<1x128x256xbf16, #tpu.memory_space<vmem>>, vector<1x128x256xbf16>
    %7 = vector.shape_cast %6 : vector<1x128x256xbf16> to vector<128x256xbf16>
    %cst = arith.constant dense<0.000000e+00> : vector<8x256xf32>
    %8 = tpu.matmul %5, %7, %cst {dimension_numbers = #tpu.dot_dimension_numbers<[1], [0], [0], [1], [0, 0, 1, 1], [], []>} : vector<8x128xbf16>, vector<128x256xbf16>, vector<8x256xf32> -> vector<8x256xf32>
    %9 = arith.addf %3, %8 : vector<8x256xf32>
    %c0_8 = arith.constant 0 : index
    %c0_9 = arith.constant 0 : index
    %10 = vector.load %arg8[%c0_8, %c0_9] : memref<8x256xf32, #tpu.memory_space<vmem>>, vector<8x256xf32>
    tpu.vector_store %arg8[%c0_8, %c0_9], %9 {strides = array<i32>} : memref<8x256xf32, #tpu.memory_space<vmem>>, vector<8x256xf32>,
    %c0_i32_10 = arith.constant 0 : i32
    %11 = arith.cmpi eq, %arg2, %c0_i32_10 : i32
    %12 = arith.extui %11 : i1 to i32
    %c0_i32_11 = arith.constant 0 : i32
    %13 = arith.cmpi ne, %12, %c0_i32_11 : i32
    scf.if %13 {
      %c0_12 = arith.constant 0 : index
      %c0_13 = arith.constant 0 : index
      %14 = vector.load %arg8[%c0_12, %c0_13] : memref<8x256xf32, #tpu.memory_space<vmem>>, vector<8x256xf32>
      %c0_14 = arith.constant 0 : index
      %c0_15 = arith.constant 0 : index
      %15 = vector.load %arg5[%c0_14, %c0_15] : memref<1x256xf32, #tpu.memory_space<vmem>>, vector<1x256xf32>
      %16 = vector.broadcast %15 : vector<1x256xf32> to vector<8x256xf32>
      %17 = arith.mulf %14, %16 : vector<8x256xf32>
      %c0_16 = arith.constant 0 : index
      %c0_17 = arith.constant 0 : index
      %18 = vector.load %arg6[%c0_16, %c0_17] : memref<1x256xf32, #tpu.memory_space<vmem>>, vector<1x256xf32>
      %19 = vector.broadcast %18 : vector<1x256xf32> to vector<8x256xf32>
      %20 = arith.addf %17, %19 : vector<8x256xf32>
      %21 = arith.truncf %20 : vector<8x256xf32> to vector<8x256xbf16>
      %c0_18 = arith.constant 0 : index
      %c0_19 = arith.constant 0 : index
      %22 = vector.load %arg7[%c0_18, %c0_19] : memref<8x256xbf16, #tpu.memory_space<vmem>>, vector<8x256xbf16>
      tpu.vector_store %arg7[%c0_18, %c0_19], %21 {strides = array<i32>} : memref<8x256xbf16, #tpu.memory_space<vmem>>, vector<8x256xbf16>,
    } else {
    }
    return
  }
  func.func @transform_0(%arg0: i32, %arg1: i32, %arg2: i32) -> (i32, i32, i32) {
    %c0_i32 = arith.constant 0 : i32
    %c0_i32_0 = arith.constant 0 : i32
    return %arg2, %arg0, %c0_i32 : i32, i32, i32
  }
  func.func @transform_1(%arg0: i32, %arg1: i32, %arg2: i32) -> (i32, i32, i32) {
    %c0_i32 = arith.constant 0 : i32
    %c0_i32_0 = arith.constant 0 : i32
    return %arg2, %c0_i32, %arg1 : i32, i32, i32
  }
  func.func @transform_2(%arg0: i32, %arg1: i32, %arg2: i32) -> (i32, i32) {
    %c0_i32 = arith.constant 0 : i32
    %c0_i32_0 = arith.constant 0 : i32
    return %c0_i32, %arg1 : i32, i32
  }
  func.func @transform_3(%arg0: i32, %arg1: i32, %arg2: i32) -> (i32, i32) {
    %c0_i32 = arith.constant 0 : i32
    %c0_i32_0 = arith.constant 0 : i32
    return %c0_i32, %arg1 : i32, i32
  }
  func.func @transform_4(%arg0: i32, %arg1: i32, %arg2: i32) -> (i32, i32) {
    %c0_i32 = arith.constant 0 : i32
    return %arg0, %arg1 : i32, i32
  }
}

module attributes {stable_mosaic.version = 11 : i64} {
  func.func @_conv_kernel(%arg0: i32, %arg1: i32, %arg2: i32, %arg3: memref<1x2x256xbf16, #tpu.memory_space<vmem>>, %arg4: memref<1x256x256xbf16, #tpu.memory_space<vmem>>, %arg5: memref<1x256xf32, #tpu.memory_space<vmem>>, %arg6: memref<1x256xf32, #tpu.memory_space<vmem>>, %arg7: memref<2x256xbf16, #tpu.memory_space<vmem>>, %arg8: memref<2x256xf32, #tpu.memory_space<vmem>>) attributes {dimension_semantics = [#tpu.dimension_semantics<parallel>, #tpu.dimension_semantics<parallel>, #tpu.dimension_semantics<arbitrary>], iteration_bounds = array<i64: 1, 2, 9>, scalar_prefetch = 0 : i64, scratch_operands = 1 : i64, tpu.core_type = #tpu.core_type<tc>, window_params = [{transform_indices = @transform_0, window_bounds = array<i64: 1, 2, 256>}, {transform_indices = @transform_1, window_bounds = array<i64: 1, 256, 256>}, {transform_indices = @transform_2, window_bounds = array<i64: 1, 256>}, {transform_indices = @transform_3, window_bounds = array<i64: 1, 256>}, {transform_indices = @transform_4, window_bounds = array<i64: 2, 256>}]} {
    %c0_i32 = arith.constant 0 : i32
    %0 = arith.cmpi eq, %arg2, %c0_i32 : i32
    %1 = arith.extui %0 : i1 to i32
    %c0_i32_0 = arith.constant 0 : i32
    %2 = arith.cmpi ne, %1, %c0_i32_0 : i32
    scf.if %2 {
      %cst_11 = arith.constant 0.000000e+00 : f32
      %14 = vector.broadcast %cst_11 : f32 to vector<2x256xf32>
      %c0_12 = arith.constant 0 : index
      %c0_13 = arith.constant 0 : index
      %15 = vector.load %arg8[%c0_12, %c0_13] : memref<2x256xf32, #tpu.memory_space<vmem>>, vector<2x256xf32>
      tpu.vector_store %arg8[%c0_12, %c0_13], %14 {strides = array<i32>} : memref<2x256xf32, #tpu.memory_space<vmem>>, vector<2x256xf32>,
    } else {
    }
    %c0 = arith.constant 0 : index
    %c0_1 = arith.constant 0 : index
    %3 = vector.load %arg8[%c0, %c0_1] : memref<2x256xf32, #tpu.memory_space<vmem>>, vector<2x256xf32>
    %c0_2 = arith.constant 0 : index
    %c0_3 = arith.constant 0 : index
    %c0_4 = arith.constant 0 : index
    %4 = vector.load %arg3[%c0_2, %c0_3, %c0_4] : memref<1x2x256xbf16, #tpu.memory_space<vmem>>, vector<1x2x256xbf16>
    %5 = vector.shape_cast %4 : vector<1x2x256xbf16> to vector<2x256xbf16>
    %c0_5 = arith.constant 0 : index
    %c0_6 = arith.constant 0 : index
    %c0_7 = arith.constant 0 : index
    %6 = vector.load %arg4[%c0_5, %c0_6, %c0_7] : memref<1x256x256xbf16, #tpu.memory_space<vmem>>, vector<1x256x256xbf16>
    %7 = vector.shape_cast %6 : vector<1x256x256xbf16> to vector<256x256xbf16>
    %cst = arith.constant dense<0.000000e+00> : vector<2x256xf32>
    %8 = tpu.matmul %5, %7, %cst {dimension_numbers = #tpu.dot_dimension_numbers<[1], [0], [0], [1], [0, 0, 1, 1], [], []>} : vector<2x256xbf16>, vector<256x256xbf16>, vector<2x256xf32> -> vector<2x256xf32>
    %9 = arith.addf %3, %8 : vector<2x256xf32>
    %c0_8 = arith.constant 0 : index
    %c0_9 = arith.constant 0 : index
    %10 = vector.load %arg8[%c0_8, %c0_9] : memref<2x256xf32, #tpu.memory_space<vmem>>, vector<2x256xf32>
    tpu.vector_store %arg8[%c0_8, %c0_9], %9 {strides = array<i32>} : memref<2x256xf32, #tpu.memory_space<vmem>>, vector<2x256xf32>,
    %c8_i32 = arith.constant 8 : i32
    %11 = arith.cmpi eq, %arg2, %c8_i32 : i32
    %12 = arith.extui %11 : i1 to i32
    %c0_i32_10 = arith.constant 0 : i32
    %13 = arith.cmpi ne, %12, %c0_i32_10 : i32
    scf.if %13 {
      %c0_11 = arith.constant 0 : index
      %c0_12 = arith.constant 0 : index
      %14 = vector.load %arg8[%c0_11, %c0_12] : memref<2x256xf32, #tpu.memory_space<vmem>>, vector<2x256xf32>
      %c0_13 = arith.constant 0 : index
      %c0_14 = arith.constant 0 : index
      %15 = vector.load %arg5[%c0_13, %c0_14] : memref<1x256xf32, #tpu.memory_space<vmem>>, vector<1x256xf32>
      %16 = vector.broadcast %15 : vector<1x256xf32> to vector<2x256xf32>
      %17 = arith.mulf %14, %16 : vector<2x256xf32>
      %c0_15 = arith.constant 0 : index
      %c0_16 = arith.constant 0 : index
      %18 = vector.load %arg6[%c0_15, %c0_16] : memref<1x256xf32, #tpu.memory_space<vmem>>, vector<1x256xf32>
      %19 = vector.broadcast %18 : vector<1x256xf32> to vector<2x256xf32>
      %20 = arith.addf %17, %19 : vector<2x256xf32>
      %cst_17 = arith.constant 0.000000e+00 : f32
      %21 = vector.broadcast %cst_17 : f32 to vector<2x256xf32>
      %22 = arith.maximumf %20, %21 : vector<2x256xf32>
      %23 = arith.truncf %22 : vector<2x256xf32> to vector<2x256xbf16>
      %c0_18 = arith.constant 0 : index
      %c0_19 = arith.constant 0 : index
      %24 = vector.load %arg7[%c0_18, %c0_19] : memref<2x256xbf16, #tpu.memory_space<vmem>>, vector<2x256xbf16>
      tpu.vector_store %arg7[%c0_18, %c0_19], %23 {strides = array<i32>} : memref<2x256xbf16, #tpu.memory_space<vmem>>, vector<2x256xbf16>,
    } else {
    }
    return
  }
  func.func @transform_0(%arg0: i32, %arg1: i32, %arg2: i32) -> (i32, i32, i32) {
    %c0_i32 = arith.constant 0 : i32
    %c0_i32_0 = arith.constant 0 : i32
    return %arg2, %arg0, %c0_i32 : i32, i32, i32
  }
  func.func @transform_1(%arg0: i32, %arg1: i32, %arg2: i32) -> (i32, i32, i32) {
    %c0_i32 = arith.constant 0 : i32
    %c0_i32_0 = arith.constant 0 : i32
    return %arg2, %c0_i32, %arg1 : i32, i32, i32
  }
  func.func @transform_2(%arg0: i32, %arg1: i32, %arg2: i32) -> (i32, i32) {
    %c0_i32 = arith.constant 0 : i32
    %c0_i32_0 = arith.constant 0 : i32
    return %c0_i32, %arg1 : i32, i32
  }
  func.func @transform_3(%arg0: i32, %arg1: i32, %arg2: i32) -> (i32, i32) {
    %c0_i32 = arith.constant 0 : i32
    %c0_i32_0 = arith.constant 0 : i32
    return %c0_i32, %arg1 : i32, i32
  }
  func.func @transform_4(%arg0: i32, %arg1: i32, %arg2: i32) -> (i32, i32) {
    %c0_i32 = arith.constant 0 : i32
    return %arg0, %arg1 : i32, i32
  }
}

module attributes {stable_mosaic.version = 11 : i64} {
  func.func @_conv_kernel(%arg0: i32, %arg1: i32, %arg2: i32, %arg3: memref<1x2x256xbf16, #tpu.memory_space<vmem>>, %arg4: memref<1x256x256xbf16, #tpu.memory_space<vmem>>, %arg5: memref<1x256xf32, #tpu.memory_space<vmem>>, %arg6: memref<1x256xf32, #tpu.memory_space<vmem>>, %arg7: memref<2x256xbf16, #tpu.memory_space<vmem>>, %arg8: memref<2x256xf32, #tpu.memory_space<vmem>>) attributes {dimension_semantics = [#tpu.dimension_semantics<parallel>, #tpu.dimension_semantics<parallel>, #tpu.dimension_semantics<arbitrary>], iteration_bounds = array<i64: 1, 2, 1>, scalar_prefetch = 0 : i64, scratch_operands = 1 : i64, tpu.core_type = #tpu.core_type<tc>, window_params = [{transform_indices = @transform_0, window_bounds = array<i64: 1, 2, 256>}, {transform_indices = @transform_1, window_bounds = array<i64: 1, 256, 256>}, {transform_indices = @transform_2, window_bounds = array<i64: 1, 256>}, {transform_indices = @transform_3, window_bounds = array<i64: 1, 256>}, {transform_indices = @transform_4, window_bounds = array<i64: 2, 256>}]} {
    %c0_i32 = arith.constant 0 : i32
    %0 = arith.cmpi eq, %arg2, %c0_i32 : i32
    %1 = arith.extui %0 : i1 to i32
    %c0_i32_0 = arith.constant 0 : i32
    %2 = arith.cmpi ne, %1, %c0_i32_0 : i32
    scf.if %2 {
      %cst_12 = arith.constant 0.000000e+00 : f32
      %14 = vector.broadcast %cst_12 : f32 to vector<2x256xf32>
      %c0_13 = arith.constant 0 : index
      %c0_14 = arith.constant 0 : index
      %15 = vector.load %arg8[%c0_13, %c0_14] : memref<2x256xf32, #tpu.memory_space<vmem>>, vector<2x256xf32>
      tpu.vector_store %arg8[%c0_13, %c0_14], %14 {strides = array<i32>} : memref<2x256xf32, #tpu.memory_space<vmem>>, vector<2x256xf32>,
    } else {
    }
    %c0 = arith.constant 0 : index
    %c0_1 = arith.constant 0 : index
    %3 = vector.load %arg8[%c0, %c0_1] : memref<2x256xf32, #tpu.memory_space<vmem>>, vector<2x256xf32>
    %c0_2 = arith.constant 0 : index
    %c0_3 = arith.constant 0 : index
    %c0_4 = arith.constant 0 : index
    %4 = vector.load %arg3[%c0_2, %c0_3, %c0_4] : memref<1x2x256xbf16, #tpu.memory_space<vmem>>, vector<1x2x256xbf16>
    %5 = vector.shape_cast %4 : vector<1x2x256xbf16> to vector<2x256xbf16>
    %c0_5 = arith.constant 0 : index
    %c0_6 = arith.constant 0 : index
    %c0_7 = arith.constant 0 : index
    %6 = vector.load %arg4[%c0_5, %c0_6, %c0_7] : memref<1x256x256xbf16, #tpu.memory_space<vmem>>, vector<1x256x256xbf16>
    %7 = vector.shape_cast %6 : vector<1x256x256xbf16> to vector<256x256xbf16>
    %cst = arith.constant dense<0.000000e+00> : vector<2x256xf32>
    %8 = tpu.matmul %5, %7, %cst {dimension_numbers = #tpu.dot_dimension_numbers<[1], [0], [0], [1], [0, 0, 1, 1], [], []>} : vector<2x256xbf16>, vector<256x256xbf16>, vector<2x256xf32> -> vector<2x256xf32>
    %9 = arith.addf %3, %8 : vector<2x256xf32>
    %c0_8 = arith.constant 0 : index
    %c0_9 = arith.constant 0 : index
    %10 = vector.load %arg8[%c0_8, %c0_9] : memref<2x256xf32, #tpu.memory_space<vmem>>, vector<2x256xf32>
    tpu.vector_store %arg8[%c0_8, %c0_9], %9 {strides = array<i32>} : memref<2x256xf32, #tpu.memory_space<vmem>>, vector<2x256xf32>,
    %c0_i32_10 = arith.constant 0 : i32
    %11 = arith.cmpi eq, %arg2, %c0_i32_10 : i32
    %12 = arith.extui %11 : i1 to i32
    %c0_i32_11 = arith.constant 0 : i32
    %13 = arith.cmpi ne, %12, %c0_i32_11 : i32
    scf.if %13 {
      %c0_12 = arith.constant 0 : index
      %c0_13 = arith.constant 0 : index
      %14 = vector.load %arg8[%c0_12, %c0_13] : memref<2x256xf32, #tpu.memory_space<vmem>>, vector<2x256xf32>
      %c0_14 = arith.constant 0 : index
      %c0_15 = arith.constant 0 : index
      %15 = vector.load %arg5[%c0_14, %c0_15] : memref<1x256xf32, #tpu.memory_space<vmem>>, vector<1x256xf32>
      %16 = vector.broadcast %15 : vector<1x256xf32> to vector<2x256xf32>
      %17 = arith.mulf %14, %16 : vector<2x256xf32>
      %c0_16 = arith.constant 0 : index
      %c0_17 = arith.constant 0 : index
      %18 = vector.load %arg6[%c0_16, %c0_17] : memref<1x256xf32, #tpu.memory_space<vmem>>, vector<1x256xf32>
      %19 = vector.broadcast %18 : vector<1x256xf32> to vector<2x256xf32>
      %20 = arith.addf %17, %19 : vector<2x256xf32>
      %21 = arith.truncf %20 : vector<2x256xf32> to vector<2x256xbf16>
      %c0_18 = arith.constant 0 : index
      %c0_19 = arith.constant 0 : index
      %22 = vector.load %arg7[%c0_18, %c0_19] : memref<2x256xbf16, #tpu.memory_space<vmem>>, vector<2x256xbf16>
      tpu.vector_store %arg7[%c0_18, %c0_19], %21 {strides = array<i32>} : memref<2x256xbf16, #tpu.memory_space<vmem>>, vector<2x256xbf16>,
    } else {
    }
    return
  }
  func.func @transform_0(%arg0: i32, %arg1: i32, %arg2: i32) -> (i32, i32, i32) {
    %c0_i32 = arith.constant 0 : i32
    %c0_i32_0 = arith.constant 0 : i32
    return %arg2, %arg0, %c0_i32 : i32, i32, i32
  }
  func.func @transform_1(%arg0: i32, %arg1: i32, %arg2: i32) -> (i32, i32, i32) {
    %c0_i32 = arith.constant 0 : i32
    %c0_i32_0 = arith.constant 0 : i32
    return %arg2, %c0_i32, %arg1 : i32, i32, i32
  }
  func.func @transform_2(%arg0: i32, %arg1: i32, %arg2: i32) -> (i32, i32) {
    %c0_i32 = arith.constant 0 : i32
    %c0_i32_0 = arith.constant 0 : i32
    return %c0_i32, %arg1 : i32, i32
  }
  func.func @transform_3(%arg0: i32, %arg1: i32, %arg2: i32) -> (i32, i32) {
    %c0_i32 = arith.constant 0 : i32
    %c0_i32_0 = arith.constant 0 : i32
    return %c0_i32, %arg1 : i32, i32
  }
  func.func @transform_4(%arg0: i32, %arg1: i32, %arg2: i32) -> (i32, i32) {
    %c0_i32 = arith.constant 0 : i32
    return %arg0, %arg1 : i32, i32
  }
}

module attributes {stable_mosaic.version = 11 : i64} {
  func.func @_conv_res_kernel(%arg0: i32, %arg1: i32, %arg2: i32, %arg3: memref<1x2x512xbf16, #tpu.memory_space<vmem>>, %arg4: memref<1x512x256xbf16, #tpu.memory_space<vmem>>, %arg5: memref<1x256xf32, #tpu.memory_space<vmem>>, %arg6: memref<1x256xf32, #tpu.memory_space<vmem>>, %arg7: memref<2x256xbf16, #tpu.memory_space<vmem>>, %arg8: memref<2x256xbf16, #tpu.memory_space<vmem>>, %arg9: memref<2x256xf32, #tpu.memory_space<vmem>>) attributes {dimension_semantics = [#tpu.dimension_semantics<parallel>, #tpu.dimension_semantics<parallel>, #tpu.dimension_semantics<arbitrary>], iteration_bounds = array<i64: 1, 2, 9>, scalar_prefetch = 0 : i64, scratch_operands = 1 : i64, tpu.core_type = #tpu.core_type<tc>, window_params = [{transform_indices = @transform_0, window_bounds = array<i64: 1, 2, 512>}, {transform_indices = @transform_1, window_bounds = array<i64: 1, 512, 256>}, {transform_indices = @transform_2, window_bounds = array<i64: 1, 256>}, {transform_indices = @transform_3, window_bounds = array<i64: 1, 256>}, {transform_indices = @transform_4, window_bounds = array<i64: 2, 256>}, {transform_indices = @transform_5, window_bounds = array<i64: 2, 256>}]} {
    %c0_i32 = arith.constant 0 : i32
    %0 = arith.cmpi eq, %arg2, %c0_i32 : i32
    %1 = arith.extui %0 : i1 to i32
    %c0_i32_0 = arith.constant 0 : i32
    %2 = arith.cmpi ne, %1, %c0_i32_0 : i32
    scf.if %2 {
      %cst_11 = arith.constant 0.000000e+00 : f32
      %14 = vector.broadcast %cst_11 : f32 to vector<2x256xf32>
      %c0_12 = arith.constant 0 : index
      %c0_13 = arith.constant 0 : index
      %15 = vector.load %arg9[%c0_12, %c0_13] : memref<2x256xf32, #tpu.memory_space<vmem>>, vector<2x256xf32>
      tpu.vector_store %arg9[%c0_12, %c0_13], %14 {strides = array<i32>} : memref<2x256xf32, #tpu.memory_space<vmem>>, vector<2x256xf32>,
    } else {
    }
    %c0 = arith.constant 0 : index
    %c0_1 = arith.constant 0 : index
    %3 = vector.load %arg9[%c0, %c0_1] : memref<2x256xf32, #tpu.memory_space<vmem>>, vector<2x256xf32>
    %c0_2 = arith.constant 0 : index
    %c0_3 = arith.constant 0 : index
    %c0_4 = arith.constant 0 : index
    %4 = vector.load %arg3[%c0_2, %c0_3, %c0_4] : memref<1x2x512xbf16, #tpu.memory_space<vmem>>, vector<1x2x512xbf16>
    %5 = vector.shape_cast %4 : vector<1x2x512xbf16> to vector<2x512xbf16>
    %c0_5 = arith.constant 0 : index
    %c0_6 = arith.constant 0 : index
    %c0_7 = arith.constant 0 : index
    %6 = vector.load %arg4[%c0_5, %c0_6, %c0_7] : memref<1x512x256xbf16, #tpu.memory_space<vmem>>, vector<1x512x256xbf16>
    %7 = vector.shape_cast %6 : vector<1x512x256xbf16> to vector<512x256xbf16>
    %cst = arith.constant dense<0.000000e+00> : vector<2x256xf32>
    %8 = tpu.matmul %5, %7, %cst {dimension_numbers = #tpu.dot_dimension_numbers<[1], [0], [0], [1], [0, 0, 1, 1], [], []>} : vector<2x512xbf16>, vector<512x256xbf16>, vector<2x256xf32> -> vector<2x256xf32>
    %9 = arith.addf %3, %8 : vector<2x256xf32>
    %c0_8 = arith.constant 0 : index
    %c0_9 = arith.constant 0 : index
    %10 = vector.load %arg9[%c0_8, %c0_9] : memref<2x256xf32, #tpu.memory_space<vmem>>, vector<2x256xf32>
    tpu.vector_store %arg9[%c0_8, %c0_9], %9 {strides = array<i32>} : memref<2x256xf32, #tpu.memory_space<vmem>>, vector<2x256xf32>,
    %c8_i32 = arith.constant 8 : i32
    %11 = arith.cmpi eq, %arg2, %c8_i32 : i32
    %12 = arith.extui %11 : i1 to i32
    %c0_i32_10 = arith.constant 0 : i32
    %13 = arith.cmpi ne, %12, %c0_i32_10 : i32
    scf.if %13 {
      %c0_11 = arith.constant 0 : index
      %c0_12 = arith.constant 0 : index
      %14 = vector.load %arg9[%c0_11, %c0_12] : memref<2x256xf32, #tpu.memory_space<vmem>>, vector<2x256xf32>
      %c0_13 = arith.constant 0 : index
      %c0_14 = arith.constant 0 : index
      %15 = vector.load %arg5[%c0_13, %c0_14] : memref<1x256xf32, #tpu.memory_space<vmem>>, vector<1x256xf32>
      %16 = vector.broadcast %15 : vector<1x256xf32> to vector<2x256xf32>
      %17 = arith.mulf %14, %16 : vector<2x256xf32>
      %c0_15 = arith.constant 0 : index
      %c0_16 = arith.constant 0 : index
      %18 = vector.load %arg6[%c0_15, %c0_16] : memref<1x256xf32, #tpu.memory_space<vmem>>, vector<1x256xf32>
      %19 = vector.broadcast %18 : vector<1x256xf32> to vector<2x256xf32>
      %20 = arith.addf %17, %19 : vector<2x256xf32>
      %c0_17 = arith.constant 0 : index
      %c0_18 = arith.constant 0 : index
      %21 = vector.load %arg7[%c0_17, %c0_18] : memref<2x256xbf16, #tpu.memory_space<vmem>>, vector<2x256xbf16>
      %22 = arith.extf %21 : vector<2x256xbf16> to vector<2x256xf32>
      %23 = arith.addf %20, %22 : vector<2x256xf32>
      %cst_19 = arith.constant 0.000000e+00 : f32
      %24 = vector.broadcast %cst_19 : f32 to vector<2x256xf32>
      %25 = arith.maximumf %23, %24 : vector<2x256xf32>
      %26 = arith.truncf %25 : vector<2x256xf32> to vector<2x256xbf16>
      %c0_20 = arith.constant 0 : index
      %c0_21 = arith.constant 0 : index
      %27 = vector.load %arg8[%c0_20, %c0_21] : memref<2x256xbf16, #tpu.memory_space<vmem>>, vector<2x256xbf16>
      tpu.vector_store %arg8[%c0_20, %c0_21], %26 {strides = array<i32>} : memref<2x256xbf16, #tpu.memory_space<vmem>>, vector<2x256xbf16>,
    } else {
    }
    return
  }
  func.func @transform_0(%arg0: i32, %arg1: i32, %arg2: i32) -> (i32, i32, i32) {
    %c0_i32 = arith.constant 0 : i32
    %c0_i32_0 = arith.constant 0 : i32
    return %arg2, %arg0, %c0_i32 : i32, i32, i32
  }
  func.func @transform_1(%arg0: i32, %arg1: i32, %arg2: i32) -> (i32, i32, i32) {
    %c0_i32 = arith.constant 0 : i32
    %c0_i32_0 = arith.constant 0 : i32
    return %arg2, %c0_i32, %arg1 : i32, i32, i32
  }
  func.func @transform_2(%arg0: i32, %arg1: i32, %arg2: i32) -> (i32, i32) {
    %c0_i32 = arith.constant 0 : i32
    %c0_i32_0 = arith.constant 0 : i32
    return %c0_i32, %arg1 : i32, i32
  }
  func.func @transform_3(%arg0: i32, %arg1: i32, %arg2: i32) -> (i32, i32) {
    %c0_i32 = arith.constant 0 : i32
    %c0_i32_0 = arith.constant 0 : i32
    return %c0_i32, %arg1 : i32, i32
  }
  func.func @transform_4(%arg0: i32, %arg1: i32, %arg2: i32) -> (i32, i32) {
    %c0_i32 = arith.constant 0 : i32
    return %arg0, %arg1 : i32, i32
  }
  func.func @transform_5(%arg0: i32, %arg1: i32, %arg2: i32) -> (i32, i32) {
    %c0_i32 = arith.constant 0 : i32
    return %arg0, %arg1 : i32, i32
  }
}

module attributes {stable_mosaic.version = 11 : i64} {
  func.func @_avgpool_fc_kernel(%arg0: memref<2x1x512xbf16, #tpu.memory_space<vmem>>, %arg1: memref<512x10xf32, #tpu.memory_space<vmem>>, %arg2: memref<1x10xf32, #tpu.memory_space<vmem>>, %arg3: memref<2x10xf32, #tpu.memory_space<vmem>>) attributes {dimension_semantics = [], scalar_prefetch = 0 : i64, scratch_operands = 0 : i64, tpu.core_type = #tpu.core_type<tc>} {
    %c0 = arith.constant 0 : index
    %c0_0 = arith.constant 0 : index
    %c0_1 = arith.constant 0 : index
    %0 = vector.load %arg0[%c0, %c0_0, %c0_1] : memref<2x1x512xbf16, #tpu.memory_space<vmem>>, vector<2x1x512xbf16>
    %1 = arith.extf %0 : vector<2x1x512xbf16> to vector<2x1x512xf32>
    %cst = arith.constant dense<0.000000e+00> : vector<2x512xf32>
    %2 = vector.multi_reduction <add>, %1, %cst [1] : vector<2x1x512xf32> to vector<2x512xf32>
    %cst_2 = arith.constant 1.000000e+00 : f32
    %3 = vector.broadcast %cst_2 : f32 to vector<2x512xf32>
    %4 = arith.divf %2, %3 : vector<2x512xf32>
    %c0_3 = arith.constant 0 : index
    %c0_4 = arith.constant 0 : index
    %5 = vector.load %arg1[%c0_3, %c0_4] : memref<512x10xf32, #tpu.memory_space<vmem>>, vector<512x10xf32>
    %cst_5 = arith.constant dense<0.000000e+00> : vector<2x10xf32>
    %6 = tpu.matmul %4, %5, %cst_5 {dimension_numbers = #tpu.dot_dimension_numbers<[1], [0], [0], [1], [0, 0, 1, 1], [], []>} : vector<2x512xf32>, vector<512x10xf32>, vector<2x10xf32> -> vector<2x10xf32>
    %c0_6 = arith.constant 0 : index
    %c0_7 = arith.constant 0 : index
    %7 = vector.load %arg2[%c0_6, %c0_7] : memref<1x10xf32, #tpu.memory_space<vmem>>, vector<1x10xf32>
    %8 = vector.broadcast %7 : vector<1x10xf32> to vector<2x10xf32>
    %9 = arith.addf %6, %8 : vector<2x10xf32>
    %c0_8 = arith.constant 0 : index
    %c0_9 = arith.constant 0 : index
    %10 = vector.load %arg3[%c0_8, %c0_9] : memref<2x10xf32, #tpu.memory_space<vmem>>, vector<2x10xf32>
    tpu.vector_store %arg3[%c0_8, %c0_9], %9 {strides = array<i32>} : memref<2x10xf32, #tpu.memory_space<vmem>>, vector<2x10xf32>,
    return
  }
}

</mosaic_0001>

<llo_original>
// kernel: resnet_forward.16
$region0: #{resnet_forward.16}
  #allocation0 [shape = 'u32[]', space=smem, size = 0x4, offset = 0x4, fixed_abs, tag = 'smem constant byte address 0x4 - core index']
  #allocation1 [shape = 'u32[72,128]{1,0:T(1,128)}', space=vmem, size = 0x9000, scoped, tag = 'internal scratch']
  %s0 = inlined_call_operand.vmem [shape: bf16[9,16,512], index: 0, kind: input, shape index: {}]
  %s1 = inlined_call_operand.vmem [shape: bf16[16,512], index: 1, kind: output, shape index: {}]
  %s2 = sld [smem:[#allocation0]]
  $region14: #{resnet_forward.16} parent=0
    _
  %s4 = ssub.s32 1, %s2
  %s5 = scalar_select 0, %s4, %s2
  // Predicated region
  $region2: #{resnet_forward.16} parent=0 // pred_check
    _
  $region3: #{resnet_forward.16} parent=0 // pred_check_branch
    %7 = sbr.rel (0) target = $region5
  $region4: #{resnet_forward.16} parent=0 // pred_region
    _
  $region5: #{resnet_forward.16} parent=0 // pred_fallthru
    _
  %v8 = vld [vmem:[%s0] sm:$0xff]
  %v9 = vld [vmem:[%s0 + $0x8] sm:$0xff]
  %v10 = vld [vmem:[%s0 + $0x10] sm:$0xff]
  %v11 = vld [vmem:[%s0 + $0x18] sm:$0xff]
  %v12 = vld [vmem:[%s0 + $0x20] sm:$0xff]
  %v13 = vld [vmem:[%s0 + $0x28] sm:$0xff]
  %v14 = vld [vmem:[%s0 + $0x30] sm:$0xff]
  %v15 = vld [vmem:[%s0 + $0x38] sm:$0xff]
  %v16 = vld [vmem:[%s0 + $0x40] sm:$0xff]
  %v17 = vld [vmem:[%s0 + $0x48] sm:$0xff]
  %v18 = vld [vmem:[%s0 + $0x50] sm:$0xff]
  %v19 = vld [vmem:[%s0 + $0x58] sm:$0xff]
  %v20 = vld [vmem:[%s0 + $0x60] sm:$0xff]
  %v21 = vld [vmem:[%s0 + $0x68] sm:$0xff]
  %v22 = vld [vmem:[%s0 + $0x70] sm:$0xff]
  %v23 = vld [vmem:[%s0 + $0x78] sm:$0xff]
  %v24 = vld [vmem:[%s0 + $0x80] sm:$0xff]
  %v25 = vld [vmem:[%s0 + $0x88] sm:$0xff]
  %v26 = vld [vmem:[%s0 + $0x90] sm:$0xff]
  %v27 = vld [vmem:[%s0 + $0x98] sm:$0xff]
  %v28 = vld [vmem:[%s0 + $0xa0] sm:$0xff]
  %v29 = vld [vmem:[%s0 + $0xa8] sm:$0xff]
  %v30 = vld [vmem:[%s0 + $0xb0] sm:$0xff]
  %v31 = vld [vmem:[%s0 + $0xb8] sm:$0xff]
  %v32 = vld [vmem:[%s0 + $0xc0] sm:$0xff]
  %v33 = vld [vmem:[%s0 + $0xc8] sm:$0xff]
  %v34 = vld [vmem:[%s0 + $0xd0] sm:$0xff]
  %v35 = vld [vmem:[%s0 + $0xd8] sm:$0xff]
  %v36 = vld [vmem:[%s0 + $0xe0] sm:$0xff]
  %v37 = vld [vmem:[%s0 + $0xe8] sm:$0xff]
  %v38 = vld [vmem:[%s0 + $0xf0] sm:$0xff]
  %v39 = vld [vmem:[%s0 + $0xf8] sm:$0xff]
  %v40 = vld [vmem:[%s0 + $0x100] sm:$0xff]
  %v41 = vld [vmem:[%s0 + $0x108] sm:$0xff]
  %v42 = vld [vmem:[%s0 + $0x110] sm:$0xff]
  %v43 = vld [vmem:[%s0 + $0x118] sm:$0xff]
  %v44 = vunpack.c.l.bf16 %v8
  %v45 = vunpack.c.h.bf16 %v8
  %v46 = vunpack.c.l.bf16 %v9
  %v47 = vunpack.c.h.bf16 %v9
  %v48 = vunpack.c.l.bf16 %v10
  %v49 = vunpack.c.h.bf16 %v10
  %v50 = vunpack.c.l.bf16 %v11
  %v51 = vunpack.c.h.bf16 %v11
  %v52 = vunpack.c.l.bf16 %v12
  %v53 = vunpack.c.h.bf16 %v12
  %v54 = vunpack.c.l.bf16 %v13
  %v55 = vunpack.c.h.bf16 %v13
  %v56 = vunpack.c.l.bf16 %v14
  %v57 = vunpack.c.h.bf16 %v14
  %v58 = vunpack.c.l.bf16 %v15
  %v59 = vunpack.c.h.bf16 %v15
  %v60 = vunpack.c.l.bf16 %v16
  %v61 = vunpack.c.h.bf16 %v16
  %v62 = vunpack.c.l.bf16 %v17
  %v63 = vunpack.c.h.bf16 %v17
  %v64 = vunpack.c.l.bf16 %v18
  %v65 = vunpack.c.h.bf16 %v18
  %v66 = vunpack.c.l.bf16 %v19
  %v67 = vunpack.c.h.bf16 %v19
  %v68 = vunpack.c.l.bf16 %v20
  %v69 = vunpack.c.h.bf16 %v20
  %v70 = vunpack.c.l.bf16 %v21
  %v71 = vunpack.c.h.bf16 %v21
  %v72 = vunpack.c.l.bf16 %v22
  %v73 = vunpack.c.h.bf16 %v22
  %v74 = vunpack.c.l.bf16 %v23
  %v75 = vunpack.c.h.bf16 %v23
  %v76 = vunpack.c.l.bf16 %v24
  %v77 = vunpack.c.h.bf16 %v24
  %v78 = vunpack.c.l.bf16 %v25
  %v79 = vunpack.c.h.bf16 %v25
  %v80 = vunpack.c.l.bf16 %v26
  %v81 = vunpack.c.h.bf16 %v26
  %v82 = vunpack.c.l.bf16 %v27
  %v83 = vunpack.c.h.bf16 %v27
  %v84 = vunpack.c.l.bf16 %v28
  %v85 = vunpack.c.h.bf16 %v28
  %v86 = vunpack.c.l.bf16 %v29
  %v87 = vunpack.c.h.bf16 %v29
  %v88 = vunpack.c.l.bf16 %v30
  %v89 = vunpack.c.h.bf16 %v30
  %v90 = vunpack.c.l.bf16 %v31
  %v91 = vunpack.c.h.bf16 %v31
  %v92 = vunpack.c.l.bf16 %v32
  %v93 = vunpack.c.h.bf16 %v32
  %v94 = vunpack.c.l.bf16 %v33
  %v95 = vunpack.c.h.bf16 %v33
  %v96 = vunpack.c.l.bf16 %v34
  %v97 = vunpack.c.h.bf16 %v34
  %v98 = vunpack.c.l.bf16 %v35
  %v99 = vunpack.c.h.bf16 %v35
  %v100 = vunpack.c.l.bf16 %v36
  %v101 = vunpack.c.h.bf16 %v36
  %v102 = vunpack.c.l.bf16 %v37
  %v103 = vunpack.c.h.bf16 %v37
  %v104 = vunpack.c.l.bf16 %v38
  %v105 = vunpack.c.h.bf16 %v38
  %v106 = vunpack.c.l.bf16 %v39
  %v107 = vunpack.c.h.bf16 %v39
  %v108 = vunpack.c.l.bf16 %v40
  %v109 = vunpack.c.h.bf16 %v40
  %v110 = vunpack.c.l.bf16 %v41
  %v111 = vunpack.c.h.bf16 %v41
  %v112 = vunpack.c.l.bf16 %v42
  %v113 = vunpack.c.h.bf16 %v42
  %v114 = vunpack.c.l.bf16 %v43
  %v115 = vunpack.c.h.bf16 %v43
  %v116 = vmax.f32 %v44, %v52
  %v117 = vmax.f32 %v116, %v60
  %v118 = vmax.f32 %v117, %v68
  %v119 = vmax.f32 %v118, %v76
  %v120 = vmax.f32 %v119, %v84
  %v121 = vmax.f32 %v120, %v92
  %v122 = vmax.f32 %v121, %v100
  %v123 = vmax.f32 %v122, %v108
  %v124 = vmax.f32 %v45, %v53
  %v125 = vmax.f32 %v124, %v61
  %v126 = vmax.f32 %v125, %v69
  %v127 = vmax.f32 %v126, %v77
  %v128 = vmax.f32 %v127, %v85
  %v129 = vmax.f32 %v128, %v93
  %v130 = vmax.f32 %v129, %v101
  %v131 = vmax.f32 %v130, %v109
  %v132 = vmax.f32 %v46, %v54
  %v133 = vmax.f32 %v132, %v62
  %v134 = vmax.f32 %v133, %v70
  %v135 = vmax.f32 %v134, %v78
  %v136 = vmax.f32 %v135, %v86
  %v137 = vmax.f32 %v136, %v94
  %v138 = vmax.f32 %v137, %v102
  %v139 = vmax.f32 %v138, %v110
  %v140 = vmax.f32 %v47, %v55
  %v141 = vmax.f32 %v140, %v63
  %v142 = vmax.f32 %v141, %v71
  %v143 = vmax.f32 %v142, %v79
  %v144 = vmax.f32 %v143, %v87
  %v145 = vmax.f32 %v144, %v95
  %v146 = vmax.f32 %v145, %v103
  %v147 = vmax.f32 %v146, %v111
  %v148 = vmax.f32 %v48, %v56
  %v149 = vmax.f32 %v148, %v64
  %v150 = vmax.f32 %v149, %v72
  %v151 = vmax.f32 %v150, %v80
  %v152 = vmax.f32 %v151, %v88
  %v153 = vmax.f32 %v152, %v96
  %v154 = vmax.f32 %v153, %v104
  %v155 = vmax.f32 %v154, %v112
  %v156 = vmax.f32 %v49, %v57
  %v157 = vmax.f32 %v156, %v65
  %v158 = vmax.f32 %v157, %v73
  %v159 = vmax.f32 %v158, %v81
  %v160 = vmax.f32 %v159, %v89
  %v161 = vmax.f32 %v160, %v97
  %v162 = vmax.f32 %v161, %v105
  %v163 = vmax.f32 %v162, %v113
  %v164 = vmax.f32 %v50, %v58
  %v165 = vmax.f32 %v164, %v66
  %v166 = vmax.f32 %v165, %v74
  %v167 = vmax.f32 %v166, %v82
  %v168 = vmax.f32 %v167, %v90
  %v169 = vmax.f32 %v168, %v98
  %v170 = vmax.f32 %v169, %v106
  %v171 = vmax.f32 %v170, %v114
  %v172 = vmax.f32 %v51, %v59
  %v173 = vmax.f32 %v172, %v67
  %v174 = vmax.f32 %v173, %v75
  %v175 = vmax.f32 %v174, %v83
  %v176 = vmax.f32 %v175, %v91
  %v177 = vmax.f32 %v176, %v99
  %v178 = vmax.f32 %v177, %v107
  %v179 = vmax.f32 %v178, %v115
  %v180 = vpack.c.bf16 %v131, %v123
  %v181 = vpack.c.bf16 %v147, %v139
  %v182 = vpack.c.bf16 %v163, %v155
  %v183 = vpack.c.bf16 %v179, %v171
  %184 = vst [vmem:[%s1] sm:$0xff] %v180
  %185 = vst [vmem:[%s1 + $0x8] sm:$0xff] %v181
  %186 = vst [vmem:[%s1 + $0x10] sm:$0xff] %v182
  %187 = vst [vmem:[%s1 + $0x18] sm:$0xff] %v183
  // Predicated region
  $region6: #{resnet_forward.16} parent=0 // pred_check
    _
  $region7: #{resnet_forward.16} parent=0 // pred_check_branch
    %189 = sbr.rel (0) target = $region9
  $region8: #{resnet_forward.16} parent=0 // pred_region
    _
  $region9: #{resnet_forward.16} parent=0 // pred_fallthru
    _
  // Predicated region
  $region10: #{resnet_forward.16} parent=0 // pred_check
    _
  $region11: #{resnet_forward.16} parent=0 // pred_check_branch
    %191 = sbr.rel (0) target = $region13
  $region12: #{resnet_forward.16} parent=0 // pred_region
    _
  $region13: #{resnet_forward.16} parent=0 // pred_fallthru
    _

// kernel: resnet_forward.15
$region0: #{resnet_forward.15}
  #allocation0 [shape = 'u32[]', space=smem, size = 0x4, offset = 0x4, fixed_abs, tag = 'smem constant byte address 0x4 - core index']
  #allocation1 [shape = 'u32[72,128]{1,0:T(1,128)}', space=vmem, size = 0x9000, scoped, tag = 'internal scratch']
  #allocation2 [shape = 'f32[256,64]{1,0:T(8,128)}', space=vmem, size = 0x20000, scoped, tag = 'scratch operand']
  %s0 = inlined_call_operand.vmem [shape: bf16[49,512,3], index: 0, kind: input, shape index: {}]
  %s1 = inlined_call_operand.vmem [shape: bf16[49,3,64], index: 1, kind: input, shape index: {}]
  %s2 = inlined_call_operand.vmem [shape: f32[1,64], index: 2, kind: input, shape index: {}]
  %s3 = inlined_call_operand.vmem [shape: f32[1,64], index: 3, kind: input, shape index: {}]
  %s4 = inlined_call_operand.vmem [shape: bf16[512,64], index: 4, kind: output, shape index: {}]
  %s5 = sld [smem:[#allocation0]]
  $region57: #{resnet_forward.15} parent=0
    _
  %s7 = ssub.s32 1, %s5
  %s8 = scalar_select 0, %s7, %s5
  loop: start=0, step=1, limit=100
  $region2: #{resnet_forward.15} parent=0 // loop_pre_header
    _
  $region3: #{resnet_forward.15} parent=0 // loop_header
    %s10 = sphi 0, %s14
    %p11 = scmp.ge.s32.totalorder %s10, 100
    %s17 = sphi 0, %s36
    %s18 = sphi 0, %s32
    %s19 = sphi 0, %s28
    %s20 = sphi 0, %s17
    %s21 = sphi 0, %s18
    %s22 = sphi 0, %s19
    %s23 = sphi 0, %s20
    %s24 = sphi 0, %s21
    %s25 = sphi 0, %s22
    %s41 = sphi 0, %s43
    %s44 = sphi 0, %s41
    %s45 = sphi 0, %s44
    %s61 = sphi 0, %s45
    %s69 = sphi 0, %s71
    %s72 = sphi 0, %s69
    %s73 = sphi 0, %s72
    %s89 = sphi 0, %s73
    %s95 = sphi 0, %s97
    %s98 = sphi 0, %s95
    %s99 = sphi 0, %s98
    %s115 = sphi 0, %s99
    %s121 = sphi 0, %s123
    %s124 = sphi 0, %s121
    %s125 = sphi 0, %s124
    %s141 = sphi 0, %s125
    %s149 = sphi 0, %s151
    %s152 = sphi 0, %s149
    %s153 = sphi 0, %s152
    %s169 = sphi 0, %s153
  $region4: #{resnet_forward.15} parent=0 // loop_header_branch
    %13 = sbr.rel (%p11) target = $region8
  $region5: #{resnet_forward.15} parent=0 // loop_body
    %s15 = ssub.s32 %s10, 1
    %s16 = ssub.s32 %s10, 2
    %s26 = sadd.s32 1, %s19
    %p27 = scmp.ge.s32.totalorder %s26, 49
    %s28 = scalar_select %p27, 0, %s26
    %s29 = sadd.s32 1, %s18
    %s30 = scalar_select %p27, %s29, %s18
    %p31 = scmp.ge.s32.totalorder %s30, 1
    %s32 = scalar_select %p31, 0, %s30
    %s33 = sadd.s32 1, %s17
    %s34 = scalar_select %p31, %s33, %s17
    %p35 = scmp.ge.s32.totalorder %s34, 2
    %s36 = scalar_select %p35, 0, %s34
    %s37 = ssub.s32 %s19, %s28
    %s38 = ssub.s32 %s17, %s36
    %s39 = sor.u32 %s37, %s38
    %p40 = scmp.eq.s32.totalorder %s39, 0
    %s42 = sadd.s32 %s41, 1
    %s43 = scalar_select %p40, %s41, %s42
    %p46 = pneg %p40
    %p47 = scmp.eq.s32.totalorder %s10, 97
    %p48 = por %p46, %p47
    %p49 = scmp.ne.s32.totalorder %s41, %s44
    %p50 = scmp.eq.s32.totalorder %s10, 0
    %p51 = por %p49, %p50
    %p52 = scmp.ne.s32.totalorder %s41, %s44
    %p53 = scmp.eq.s32.totalorder %s15, 97
    %p54 = por %p52, %p53
    %p55 = scmp.ne.s32.totalorder %s44, %s45
    %p56 = scmp.eq.s32.totalorder %s15, 0
    %p57 = por %p55, %p56
    %p58 = scmp.ne.s32.totalorder %s44, %s45
    %p59 = scmp.eq.s32.totalorder %s16, 97
    %p60 = por %p58, %p59
    %p62 = scmp.ne.s32.totalorder %s45, %s61
    %p63 = scmp.eq.s32.totalorder %s16, 0
    %p64 = por %p62, %p63
    %s65 = ssub.s32 %s19, %s28
    %s66 = ssub.s32 %s18, %s32
    %s67 = sor.u32 %s65, %s66
    %p68 = scmp.eq.s32.totalorder %s67, 0
    %s70 = sadd.s32 %s69, 1
    %s71 = scalar_select %p68, %s69, %s70
    %p74 = pneg %p68
    %p75 = scmp.eq.s32.totalorder %s10, 97
    %p76 = por %p74, %p75
    %p77 = scmp.ne.s32.totalorder %s69, %s72
    %p78 = scmp.eq.s32.totalorder %s10, 0
    %p79 = por %p77, %p78
    %p80 = scmp.ne.s32.totalorder %s69, %s72
    %p81 = scmp.eq.s32.totalorder %s15, 97
    %p82 = por %p80, %p81
    %p83 = scmp.ne.s32.totalorder %s72, %s73
    %p84 = scmp.eq.s32.totalorder %s15, 0
    %p85 = por %p83, %p84
    %p86 = scmp.ne.s32.totalorder %s72, %s73
    %p87 = scmp.eq.s32.totalorder %s16, 97
    %p88 = por %p86, %p87
    %p90 = scmp.ne.s32.totalorder %s73, %s89
    %p91 = scmp.eq.s32.totalorder %s16, 0
    %p92 = por %p90, %p91
    %s93 = ssub.s32 %s18, %s32
    %p94 = scmp.eq.s32.totalorder %s93, 0
    %s96 = sadd.s32 %s95, 1
    %s97 = scalar_select %p94, %s95, %s96
    %p100 = pneg %p94
    %p101 = scmp.eq.s32.totalorder %s10, 97
    %p102 = por %p100, %p101
    %p103 = scmp.ne.s32.totalorder %s95, %s98
    %p104 = scmp.eq.s32.totalorder %s10, 0
    %p105 = por %p103, %p104
    %p106 = scmp.ne.s32.totalorder %s95, %s98
    %p107 = scmp.eq.s32.totalorder %s15, 97
    %p108 = por %p106, %p107
    %p109 = scmp.ne.s32.totalorder %s98, %s99
    %p110 = scmp.eq.s32.totalorder %s15, 0
    %p111 = por %p109, %p110
    %p112 = scmp.ne.s32.totalorder %s98, %s99
    %p113 = scmp.eq.s32.totalorder %s16, 97
    %p114 = por %p112, %p113
    %p116 = scmp.ne.s32.totalorder %s99, %s115
    %p117 = scmp.eq.s32.totalorder %s16, 0
    %p118 = por %p116, %p117
    %s119 = ssub.s32 %s18, %s32
    %p120 = scmp.eq.s32.totalorder %s119, 0
    %s122 = sadd.s32 %s121, 1
    %s123 = scalar_select %p120, %s121, %s122
    %p126 = pneg %p120
    %p127 = scmp.eq.s32.totalorder %s10, 97
    %p128 = por %p126, %p127
    %p129 = scmp.ne.s32.totalorder %s121, %s124
    %p130 = scmp.eq.s32.totalorder %s10, 0
    %p131 = por %p129, %p130
    %p132 = scmp.ne.s32.totalorder %s121, %s124
    %p133 = scmp.eq.s32.totalorder %s15, 97
    %p134 = por %p132, %p133
    %p135 = scmp.ne.s32.totalorder %s124, %s125
    %p136 = scmp.eq.s32.totalorder %s15, 0
    %p137 = por %p135, %p136
    %p138 = scmp.ne.s32.totalorder %s124, %s125
    %p139 = scmp.eq.s32.totalorder %s16, 97
    %p140 = por %p138, %p139
    %p142 = scmp.ne.s32.totalorder %s125, %s141
    %p143 = scmp.eq.s32.totalorder %s16, 0
    %p144 = por %p142, %p143
    %s145 = ssub.s32 %s17, %s36
    %s146 = ssub.s32 %s18, %s32
    %s147 = sor.u32 %s145, %s146
    %p148 = scmp.eq.s32.totalorder %s147, 0
    %s150 = sadd.s32 %s149, 1
    %s151 = scalar_select %p148, %s149, %s150
    %p154 = pneg %p148
    %p155 = scmp.eq.s32.totalorder %s10, 97
    %p156 = por %p154, %p155
    %p157 = scmp.ne.s32.totalorder %s149, %s152
    %p158 = scmp.eq.s32.totalorder %s10, 0
    %p159 = por %p157, %p158
    %p160 = scmp.ne.s32.totalorder %s149, %s152
    %p161 = scmp.eq.s32.totalorder %s15, 97
    %p162 = por %p160, %p161
    %p163 = scmp.ne.s32.totalorder %s152, %s153
    %p164 = scmp.eq.s32.totalorder %s15, 0
    %p165 = por %p163, %p164
    %p166 = scmp.ne.s32.totalorder %s152, %s153
    %p167 = scmp.eq.s32.totalorder %s16, 97
    %p168 = por %p166, %p167
    %p170 = scmp.ne.s32.totalorder %s153, %s169
    %p171 = scmp.eq.s32.totalorder %s16, 0
    %p172 = por %p170, %p171
    %p173 = scmp.le.s32.totalorder 1, %s10
    %p174 = scmp.lt.s32.totalorder %s10, 99
    %p175 = pnand %p173, %p174
    %p176 = pneg %p175
    // Predicated region
    $region9: #{resnet_forward.15} parent=5 // pred_check
      _
    $region10: #{resnet_forward.15} parent=5 // pred_check_branch
      %178 = sbr.rel (%p175) target = $region12
    $region11: #{resnet_forward.15} parent=5 // pred_region
      %s179 = ssub.s32 %s10, 1
      // Predicated region
      $region13: #{resnet_forward.15} parent=11 // pred_check
        %p180 = pneg %p111
      $region14: #{resnet_forward.15} parent=11 // pred_check_branch
        %182 = sbr.rel (%p180) target = $region16
      $region15: #{resnet_forward.15} parent=11 // pred_region
        %p183 = scmp.lt.s32.totalorder %s21, 0
        %s184 = scalar_select %p183, %s21, 0
        %s185 = scalar_lea.vmem %s2, %s184
      $region16: #{resnet_forward.15} parent=11 // pred_fallthru
        _
      // Predicated region
      $region17: #{resnet_forward.15} parent=11 // pred_check
        %p186 = pneg %p137
      $region18: #{resnet_forward.15} parent=11 // pred_check_branch
        %188 = sbr.rel (%p186) target = $region20
      $region19: #{resnet_forward.15} parent=11 // pred_region
        %p189 = scmp.lt.s32.totalorder %s21, 0
        %s190 = scalar_select %p189, %s21, 0
        %s191 = scalar_lea.vmem %s3, %s190
      $region20: #{resnet_forward.15} parent=11 // pred_fallthru
        _
    $region12: #{resnet_forward.15} parent=5 // pred_fallthru
      _
    %p192 = scmp.lt.s32.totalorder %s10, 98
    // Predicated region
    $region21: #{resnet_forward.15} parent=5 // pred_check
      %p193 = pneg %p192
    $region22: #{resnet_forward.15} parent=5 // pred_check_branch
      %195 = sbr.rel (%p193) target = $region24
    $region23: #{resnet_forward.15} parent=5 // pred_region
      // Predicated region
      $region25: #{resnet_forward.15} parent=23 // pred_check
        %p196 = pneg %p51
      $region26: #{resnet_forward.15} parent=23 // pred_check_branch
        %198 = sbr.rel (%p196) target = $region28
      $region27: #{resnet_forward.15} parent=23 // pred_region
        %s199 = smul.u32 32, %s17
        %p200 = scmp.lt.s32.totalorder %s19, 48
        %s201 = scalar_select %p200, %s19, 48
        %p202 = scmp.lt.s32.totalorder %s199, 63
        %s203 = scalar_select %p202, %s199, 63
        %s204 = smul.addr %s201, 64
        %s205 = sadd.s32 %s203, %s204
        %s206 = smul.addr %s205, 4
        %s207 = scalar_lea.vmem %s0, %s206
        %s208 = smul.u32 32, %s17
      $region28: #{resnet_forward.15} parent=23 // pred_fallthru
        _
      // Predicated region
      $region29: #{resnet_forward.15} parent=23 // pred_check
        %p209 = pneg %p79
      $region30: #{resnet_forward.15} parent=23 // pred_check_branch
        %211 = sbr.rel (%p209) target = $region32
      $region31: #{resnet_forward.15} parent=23 // pred_region
        %p212 = scmp.lt.s32.totalorder %s19, 48
        %s213 = scalar_select %p212, %s19, 48
        %p214 = scmp.lt.s32.totalorder %s18, 0
        %s215 = scalar_select %p214, %s18, 0
        %s216 = sadd.s32 %s215, %s213
        %s217 = smul.addr %s216, 2
        %s218 = scalar_lea.vmem %s1, %s217
      $region32: #{resnet_forward.15} parent=23 // pred_fallthru
        _
    $region24: #{resnet_forward.15} parent=5 // pred_fallthru
      _
    %p219 = scmp.le.s32.totalorder 1, %s10
    %p220 = scmp.lt.s32.totalorder %s10, 99
    %p221 = pnand %p219, %p220
    %p222 = pneg %p221
    // Predicated region
    $region33: #{resnet_forward.15} parent=5 // pred_check
      _
    $region34: #{resnet_forward.15} parent=5 // pred_check_branch
      %224 = sbr.rel (%p221) target = $region36
    $region35: #{resnet_forward.15} parent=5 // pred_region
      %s225 = ssub.s32 %s10, 1
      %s226 = smul.u32 32, %s20
      %p227 = scmp.lt.s32.totalorder %s22, 48
      %s228 = scalar_select %p227, %s22, 48
      %p229 = scmp.lt.s32.totalorder %s226, 63
      %s230 = scalar_select %p229, %s226, 63
      %s231 = smul.addr %s228, 64
      %s232 = sadd.s32 %s230, %s231
      %s233 = smul.addr %s232, 4
      %s234 = scalar_lea.vmem %s0, %s233
      %p235 = pneg %p57
      %p236 = pneg %p54
      %p237 = scmp.lt.s32.totalorder %s22, 48
      %s238 = scalar_select %p237, %s22, 48
      %p239 = scmp.lt.s32.totalorder %s21, 0
      %s240 = scalar_select %p239, %s21, 0
      %s241 = sadd.s32 %s240, %s238
      %s242 = smul.addr %s241, 2
      %s243 = scalar_lea.vmem %s1, %s242
      %p244 = pneg %p85
      %p245 = pneg %p82
      %p246 = scmp.lt.s32.totalorder %s21, 0
      %s247 = scalar_select %p246, %s21, 0
      %s248 = scalar_lea.vmem %s2, %s247
      %p249 = pneg %p111
      %p250 = pneg %p108
      %p251 = scmp.lt.s32.totalorder %s21, 0
      %s252 = scalar_select %p251, %s21, 0
      %s253 = scalar_lea.vmem %s3, %s252
      %p254 = pneg %p137
      %p255 = pneg %p134
      %p256 = pneg %p165
      %p257 = pneg %p162
      %s258 = smul.u32 32, %s20
      %p259 = scmp.lt.s32.totalorder %s258, 63
      %s260 = scalar_select %p259, %s258, 63
      %p261 = scmp.lt.s32.totalorder %s21, 0
      %s262 = scalar_select %p261, %s21, 0
      %s263 = sadd.s32 %s262, %s260
      %s264 = smul.addr %s263, 4
      %s265 = scalar_lea.vmem %s4, %s264
      %s266 = smul.u32 32, %s20
      %p267 = scmp.lt.s32.totalorder %s22, 48
      %s268 = scalar_select %p267, %s22, 48
      %p269 = scmp.lt.s32.totalorder %s266, 63
      %s270 = scalar_select %p269, %s266, 63
      %s271 = smul.addr %s268, 64
      %s272 = sadd.s32 %s270, %s271
      %s273 = smul.addr %s272, 4
      %s274 = scalar_lea.vmem %s0, %s273
      %s275 = smul.u32 32, %s20
      %p276 = scmp.lt.s32.totalorder %s22, 48
      %s277 = scalar_select %p276, %s22, 48
      %p278 = scmp.lt.s32.totalorder %s21, 0
      %s279 = scalar_select %p278, %s21, 0
      %s280 = sadd.s32 %s279, %s277
      %s281 = smul.addr %s280, 2
      %s282 = scalar_lea.vmem %s1, %s281
      %p283 = scmp.lt.s32.totalorder %s21, 0
      %s284 = scalar_select %p283, %s21, 0
      %s285 = scalar_lea.vmem %s2, %s284
      %p286 = scmp.lt.s32.totalorder %s21, 0
      %s287 = scalar_select %p286, %s21, 0
      %s288 = scalar_lea.vmem %s3, %s287
      %s289 = smul.u32 32, %s20
      %p290 = scmp.lt.s32.totalorder %s289, 63
      %s291 = scalar_select %p290, %s289, 63
      %p292 = scmp.lt.s32.totalorder %s21, 0
      %s293 = scalar_select %p292, %s21, 0
      %s294 = sadd.s32 %s293, %s291
      %s295 = smul.addr %s294, 4
      %s296 = scalar_lea.vmem %s4, %s295
      %s297 = smul.u32 32, %s20
      %p299 = scmp.eq.s32.totalorder %s22, 0
      // Predicated region
      $region37: #{resnet_forward.15} parent=35 // pred_check
        %p300 = pneg %p299
      $region38: #{resnet_forward.15} parent=35 // pred_check_branch
        %302 = sbr.rel (%p300) target = $region40
      $region39: #{resnet_forward.15} parent=35 // pred_region
        %vm303 = vcmask 523264
        %304 = vst.msk [vmem:[#allocation2] sm:$0xff] %vm303, 0.0
        %305 = vst.msk [vmem:[#allocation2 + $0x8] sm:$0xff] %vm303, 0.0
        %306 = vst.msk [vmem:[#allocation2 + $0x10] sm:$0xff] %vm303, 0.0
        %307 = vst.msk [vmem:[#allocation2 + $0x18] sm:$0xff] %vm303, 0.0
        %308 = vst.msk [vmem:[#allocation2 + $0x20] sm:$0xff] %vm303, 0.0
        %309 = vst.msk [vmem:[#allocation2 + $0x28] sm:$0xff] %vm303, 0.0
        %310 = vst.msk [vmem:[#allocation2 + $0x30] sm:$0xff] %vm303, 0.0
        %311 = vst.msk [vmem:[#allocation2 + $0x38] sm:$0xff] %vm303, 0.0
        %312 = vst.msk [vmem:[#allocation2 + $0x40] sm:$0xff] %vm303, 0.0
        %313 = vst.msk [vmem:[#allocation2 + $0x48] sm:$0xff] %vm303, 0.0
        %314 = vst.msk [vmem:[#allocation2 + $0x50] sm:$0xff] %vm303, 0.0
        %315 = vst.msk [vmem:[#allocation2 + $0x58] sm:$0xff] %vm303, 0.0
        %316 = vst.msk [vmem:[#allocation2 + $0x60] sm:$0xff] %vm303, 0.0
        %317 = vst.msk [vmem:[#allocation2 + $0x68] sm:$0xff] %vm303, 0.0
        %318 = vst.msk [vmem:[#allocation2 + $0x70] sm:$0xff] %vm303, 0.0
        %319 = vst.msk [vmem:[#allocation2 + $0x78] sm:$0xff] %vm303, 0.0
        %320 = vst.msk [vmem:[#allocation2 + $0x80] sm:$0xff] %vm303, 0.0
        %321 = vst.msk [vmem:[#allocation2 + $0x88] sm:$0xff] %vm303, 0.0
        %322 = vst.msk [vmem:[#allocation2 + $0x90] sm:$0xff] %vm303, 0.0
        %323 = vst.msk [vmem:[#allocation2 + $0x98] sm:$0xff] %vm303, 0.0
        %324 = vst.msk [vmem:[#allocation2 + $0xa0] sm:$0xff] %vm303, 0.0
        %325 = vst.msk [vmem:[#allocation2 + $0xa8] sm:$0xff] %vm303, 0.0
        %326 = vst.msk [vmem:[#allocation2 + $0xb0] sm:$0xff] %vm303, 0.0
        %327 = vst.msk [vmem:[#allocation2 + $0xb8] sm:$0xff] %vm303, 0.0
        %328 = vst.msk [vmem:[#allocation2 + $0xc0] sm:$0xff] %vm303, 0.0
        %329 = vst.msk [vmem:[#allocation2 + $0xc8] sm:$0xff] %vm303, 0.0
        %330 = vst.msk [vmem:[#allocation2 + $0xd0] sm:$0xff] %vm303, 0.0
        %331 = vst.msk [vmem:[#allocation2 + $0xd8] sm:$0xff] %vm303, 0.0
        %332 = vst.msk [vmem:[#allocation2 + $0xe0] sm:$0xff] %vm303, 0.0
        %333 = vst.msk [vmem:[#allocation2 + $0xe8] sm:$0xff] %vm303, 0.0
        %334 = vst.msk [vmem:[#allocation2 + $0xf0] sm:$0xff] %vm303, 0.0
        %335 = vst.msk [vmem:[#allocation2 + $0xf8] sm:$0xff] %vm303, 0.0
      $region40: #{resnet_forward.15} parent=35 // pred_fallthru
        _
      %v336 = vld [vmem:[#allocation2] sm:$0xff]
      %v337 = vld [vmem:[#allocation2 + $0x8] sm:$0xff]
      %v338 = vld [vmem:[#allocation2 + $0x10] sm:$0xff]
      %v339 = vld [vmem:[#allocation2 + $0x18] sm:$0xff]
      %v340 = vld [vmem:[#allocation2 + $0x20] sm:$0xff]
      %v341 = vld [vmem:[#allocation2 + $0x28] sm:$0xff]
      %v342 = vld [vmem:[#allocation2 + $0x30] sm:$0xff]
      %v343 = vld [vmem:[#allocation2 + $0x38] sm:$0xff]
      %v344 = vld [vmem:[#allocation2 + $0x40] sm:$0xff]
      %v345 = vld [vmem:[#allocation2 + $0x48] sm:$0xff]
      %v346 = vld [vmem:[#allocation2 + $0x50] sm:$0xff]
      %v347 = vld [vmem:[#allocation2 + $0x58] sm:$0xff]
      %v348 = vld [vmem:[#allocation2 + $0x60] sm:$0xff]
      %v349 = vld [vmem:[#allocation2 + $0x68] sm:$0xff]
      %v350 = vld [vmem:[#allocation2 + $0x70] sm:$0xff]
      %v351 = vld [vmem:[#allocation2 + $0x78] sm:$0xff]
      %v352 = vld [vmem:[#allocation2 + $0x80] sm:$0xff]
      %v353 = vld [vmem:[#allocation2 + $0x88] sm:$0xff]
      %v354 = vld [vmem:[#allocation2 + $0x90] sm:$0xff]
      %v355 = vld [vmem:[#allocation2 + $0x98] sm:$0xff]
      %v356 = vld [vmem:[#allocation2 + $0xa0] sm:$0xff]
      %v357 = vld [vmem:[#allocation2 + $0xa8] sm:$0xff]
      %v358 = vld [vmem:[#allocation2 + $0xb0] sm:$0xff]
      %v359 = vld [vmem:[#allocation2 + $0xb8] sm:$0xff]
      %v360 = vld [vmem:[#allocation2 + $0xc0] sm:$0xff]
      %v361 = vld [vmem:[#allocation2 + $0xc8] sm:$0xff]
      %v362 = vld [vmem:[#allocation2 + $0xd0] sm:$0xff]
      %v363 = vld [vmem:[#allocation2 + $0xd8] sm:$0xff]
      %v364 = vld [vmem:[#allocation2 + $0xe0] sm:$0xff]
      %v365 = vld [vmem:[#allocation2 + $0xe8] sm:$0xff]
      %v366 = vld [vmem:[#allocation2 + $0xf0] sm:$0xff]
      %v367 = vld [vmem:[#allocation2 + $0xf8] sm:$0xff]
      %v368 = vld [vmem:[%s274] sm:$0xf]
      %v369 = vld [vmem:[%s274 + $0x4] sm:$0xf]
      %v370 = vld [vmem:[%s274 + $0x8] sm:$0xf]
      %v371 = vld [vmem:[%s274 + $0xc] sm:$0xf]
      %v372 = vld [vmem:[%s274 + $0x10] sm:$0xf]
      %v373 = vld [vmem:[%s274 + $0x14] sm:$0xf]
      %v374 = vld [vmem:[%s274 + $0x18] sm:$0xf]
      %v375 = vld [vmem:[%s274 + $0x1c] sm:$0xf]
      %v376 = vld [vmem:[%s274 + $0x20] sm:$0xf]
      %v377 = vld [vmem:[%s274 + $0x24] sm:$0xf]
      %v378 = vld [vmem:[%s274 + $0x28] sm:$0xf]
      %v379 = vld [vmem:[%s274 + $0x2c] sm:$0xf]
      %v380 = vld [vmem:[%s274 + $0x30] sm:$0xf]
      %v381 = vld [vmem:[%s274 + $0x34] sm:$0xf]
      %v382 = vld [vmem:[%s274 + $0x38] sm:$0xf]
      %v383 = vld [vmem:[%s274 + $0x3c] sm:$0xf]
      %v384 = vld [vmem:[%s274 + $0x40] sm:$0xf]
      %v385 = vld [vmem:[%s274 + $0x44] sm:$0xf]
      %v386 = vld [vmem:[%s274 + $0x48] sm:$0xf]
      %v387 = vld [vmem:[%s274 + $0x4c] sm:$0xf]
      %v388 = vld [vmem:[%s274 + $0x50] sm:$0xf]
      %v389 = vld [vmem:[%s274 + $0x54] sm:$0xf]
      %v390 = vld [vmem:[%s274 + $0x58] sm:$0xf]
      %v391 = vld [vmem:[%s274 + $0x5c] sm:$0xf]
      %v392 = vld [vmem:[%s274 + $0x60] sm:$0xf]
      %v393 = vld [vmem:[%s274 + $0x64] sm:$0xf]
      %v394 = vld [vmem:[%s274 + $0x68] sm:$0xf]
      %v395 = vld [vmem:[%s274 + $0x6c] sm:$0xf]
      %v396 = vld [vmem:[%s274 + $0x70] sm:$0xf]
      %v397 = vld [vmem:[%s274 + $0x74] sm:$0xf]
      %v398 = vld [vmem:[%s274 + $0x78] sm:$0xf]
      %v399 = vld [vmem:[%s274 + $0x7c] sm:$0xf]
      %v400 = vld [vmem:[%s282] sm:$0x3]
      %v433 = vunpack.c.l.b16 %v368
      %v434 = vunpack.c.l.b16 %v369
      %v435 = vunpack.c.l.b16 %v370
      %v436 = vunpack.c.l.b16 %v371
      %v437 = vunpack.c.l.b16 %v372
      %v438 = vunpack.c.l.b16 %v373
      %v439 = vunpack.c.l.b16 %v374
      %v440 = vunpack.c.l.b16 %v375
      %v441 = vunpack.c.l.b16 %v376
      %v442 = vunpack.c.l.b16 %v377
      %v443 = vunpack.c.l.b16 %v378
      %v444 = vunpack.c.l.b16 %v379
      %v445 = vunpack.c.l.b16 %v380
      %v446 = vunpack.c.l.b16 %v381
      %v447 = vunpack.c.l.b16 %v382
      %v448 = vunpack.c.l.b16 %v383
      %v449 = vunpack.c.l.b16 %v384
      %v450 = vunpack.c.l.b16 %v385
      %v451 = vunpack.c.l.b16 %v386
      %v452 = vunpack.c.l.b16 %v387
      %v453 = vunpack.c.l.b16 %v388
      %v454 = vunpack.c.l.b16 %v389
      %v455 = vunpack.c.l.b16 %v390
      %v456 = vunpack.c.l.b16 %v391
      %v457 = vunpack.c.l.b16 %v392
      %v458 = vunpack.c.l.b16 %v393
      %v459 = vunpack.c.l.b16 %v394
      %v460 = vunpack.c.l.b16 %v395
      %v461 = vunpack.c.l.b16 %v396
      %v462 = vunpack.c.l.b16 %v397
      %v463 = vunpack.c.l.b16 %v398
      %v464 = vunpack.c.l.b16 %v399
      %v465 = vpack.c.b16 %v434, %v433
      %v466 = vpack.c.b16 %v436, %v435
      %v467 = vpack.c.b16 %v438, %v437
      %v468 = vpack.c.b16 %v440, %v439
      %v469 = vpack.c.b16 %v442, %v441
      %v470 = vpack.c.b16 %v444, %v443
      %v471 = vpack.c.b16 %v446, %v445
      %v472 = vpack.c.b16 %v448, %v447
      %v473 = vpack.c.b16 %v450, %v449
      %v474 = vpack.c.b16 %v452, %v451
      %v475 = vpack.c.b16 %v454, %v453
      %v476 = vpack.c.b16 %v456, %v455
      %v477 = vpack.c.b16 %v458, %v457
      %v478 = vpack.c.b16 %v460, %v459
      %v479 = vpack.c.b16 %v462, %v461
      %v480 = vpack.c.b16 %v464, %v463
      %vm481 = vcmask 23552
      %v483 = vsel %vm481, %v465, 0
      %v486 = vsel %vm481, %v466, 0
      %v489 = vsel %vm481, %v467, 0
      %v492 = vsel %vm481, %v468, 0
      %v495 = vsel %vm481, %v469, 0
      %v498 = vsel %vm481, %v470, 0
      %v501 = vsel %vm481, %v471, 0
      %v504 = vsel %vm481, %v472, 0
      %v507 = vsel %vm481, %v473, 0
      %v510 = vsel %vm481, %v474, 0
      %v513 = vsel %vm481, %v475, 0
      %v516 = vsel %vm481, %v476, 0
      %v519 = vsel %vm481, %v477, 0
      %v522 = vsel %vm481, %v478, 0
      %v525 = vsel %vm481, %v479, 0
      %v528 = vsel %vm481, %v480, 0
      %vm530 = vcmask 1040384
      %vm531 = vcmask 1041408
      %v532 = vsel %vm530, 4294967295, 65535
      %v533 = vsel %vm531, %v532, 0
      %v535 = vand.u32 %v400, %v533
      %537 = vmatpush.bf16.msra.mxu0 0
      %538 = vmatpush.bf16.msra.mxu0 0
      %539 = vmatpush.bf16.msra.mxu0 0
      %540 = vmatpush.bf16.msra.mxu0 0
      %541 = vmatpush.bf16.msra.mxu0 0
      %542 = vmatpush.bf16.msra.mxu0 0
      %543 = vmatpush.bf16.msra.mxu0 0
      %544 = vmatpush.bf16.msra.mxu0 %v535
      %545 = vmatmul.bf16.gmra.mxu0 %v483
      %v546 = vpop.f32.mrf.mxu0
      %v547 = vadd.f32 0.0, %v546
      %v548 = vpop.f32.mrf.mxu0
      %v549 = vadd.f32 0.0, %v548
      %550 = vmatmul.bf16.gmra.mxu0 %v486
      %v551 = vpop.f32.mrf.mxu0
      %v552 = vadd.f32 0.0, %v551
      %v553 = vpop.f32.mrf.mxu0
      %v554 = vadd.f32 0.0, %v553
      %555 = vmatmul.bf16.gmra.mxu0 %v489
      %v556 = vpop.f32.mrf.mxu0
      %v557 = vadd.f32 0.0, %v556
      %v558 = vpop.f32.mrf.mxu0
      %v559 = vadd.f32 0.0, %v558
      %560 = vmatmul.bf16.gmra.mxu0 %v492
      %v561 = vpop.f32.mrf.mxu0
      %v562 = vadd.f32 0.0, %v561
      %v563 = vpop.f32.mrf.mxu0
      %v564 = vadd.f32 0.0, %v563
      %565 = vmatmul.bf16.gmra.mxu0 %v495
      %v566 = vpop.f32.mrf.mxu0
      %v567 = vadd.f32 0.0, %v566
      %v568 = vpop.f32.mrf.mxu0
      %v569 = vadd.f32 0.0, %v568
      %570 = vmatmul.bf16.gmra.mxu0 %v498
      %v571 = vpop.f32.mrf.mxu0
      %v572 = vadd.f32 0.0, %v571
      %v573 = vpop.f32.mrf.mxu0
      %v574 = vadd.f32 0.0, %v573
      %575 = vmatmul.bf16.gmra.mxu0 %v501
      %v576 = vpop.f32.mrf.mxu0
      %v577 = vadd.f32 0.0, %v576
      %v578 = vpop.f32.mrf.mxu0
      %v579 = vadd.f32 0.0, %v578
      %580 = vmatmul.bf16.gmra.mxu0 %v504
      %v581 = vpop.f32.mrf.mxu0
      %v582 = vadd.f32 0.0, %v581
      %v583 = vpop.f32.mrf.mxu0
      %v584 = vadd.f32 0.0, %v583
      %585 = vmatmul.bf16.gmra.mxu0 %v507
      %v586 = vpop.f32.mrf.mxu0
      %v587 = vadd.f32 0.0, %v586
      %v588 = vpop.f32.mrf.mxu0
      %v589 = vadd.f32 0.0, %v588
      %590 = vmatmul.bf16.gmra.mxu0 %v510
      %v591 = vpop.f32.mrf.mxu0
      %v592 = vadd.f32 0.0, %v591
      %v593 = vpop.f32.mrf.mxu0
      %v594 = vadd.f32 0.0, %v593
      %595 = vmatmul.bf16.gmra.mxu0 %v513
      %v596 = vpop.f32.mrf.mxu0
      %v597 = vadd.f32 0.0, %v596
      %v598 = vpop.f32.mrf.mxu0
      %v599 = vadd.f32 0.0, %v598
      %600 = vmatmul.bf16.gmra.mxu0 %v516
      %v601 = vpop.f32.mrf.mxu0
      %v602 = vadd.f32 0.0, %v601
      %v603 = vpop.f32.mrf.mxu0
      %v604 = vadd.f32 0.0, %v603
      %605 = vmatmul.bf16.gmra.mxu0 %v519
      %v606 = vpop.f32.mrf.mxu0
      %v607 = vadd.f32 0.0, %v606
      %v608 = vpop.f32.mrf.mxu0
      %v609 = vadd.f32 0.0, %v608
      %610 = vmatmul.bf16.gmra.mxu0 %v522
      %v611 = vpop.f32.mrf.mxu0
      %v612 = vadd.f32 0.0, %v611
      %v613 = vpop.f32.mrf.mxu0
      %v614 = vadd.f32 0.0, %v613
      %615 = vmatmul.bf16.gmra.mxu0 %v525
      %v616 = vpop.f32.mrf.mxu0
      %v617 = vadd.f32 0.0, %v616
      %v618 = vpop.f32.mrf.mxu0
      %v619 = vadd.f32 0.0, %v618
      %620 = vmatmul.bf16.gmra.mxu0 %v528
      %v621 = vpop.f32.mrf.mxu0
      %v622 = vadd.f32 0.0, %v621
      %v623 = vpop.f32.mrf.mxu0
      %v624 = vadd.f32 0.0, %v623
      %625 = vdwg.mxu0
      %v626 = vadd.f32 %v336, %v547
      %v627 = vadd.f32 %v337, %v549
      %v628 = vadd.f32 %v338, %v552
      %v629 = vadd.f32 %v339, %v554
      %v630 = vadd.f32 %v340, %v557
      %v631 = vadd.f32 %v341, %v559
      %v632 = vadd.f32 %v342, %v562
      %v633 = vadd.f32 %v343, %v564
      %v634 = vadd.f32 %v344, %v567
      %v635 = vadd.f32 %v345, %v569
      %v636 = vadd.f32 %v346, %v572
      %v637 = vadd.f32 %v347, %v574
      %v638 = vadd.f32 %v348, %v577
      %v639 = vadd.f32 %v349, %v579
      %v640 = vadd.f32 %v350, %v582
      %v641 = vadd.f32 %v351, %v584
      %v642 = vadd.f32 %v352, %v587
      %v643 = vadd.f32 %v353, %v589
      %v644 = vadd.f32 %v354, %v592
      %v645 = vadd.f32 %v355, %v594
      %v646 = vadd.f32 %v356, %v597
      %v647 = vadd.f32 %v357, %v599
      %v648 = vadd.f32 %v358, %v602
      %v649 = vadd.f32 %v359, %v604
      %v650 = vadd.f32 %v360, %v607
      %v651 = vadd.f32 %v361, %v609
      %v652 = vadd.f32 %v362, %v612
      %v653 = vadd.f32 %v363, %v614
      %v654 = vadd.f32 %v364, %v617
      %v655 = vadd.f32 %v365, %v619
      %v656 = vadd.f32 %v366, %v622
      %v657 = vadd.f32 %v367, %v624
      %vm658 = vcmask 523264
      %659 = vst.msk [vmem:[#allocation2] sm:$0xff] %vm658, %v626
      %660 = vst.msk [vmem:[#allocation2 + $0x8] sm:$0xff] %vm658, %v627
      %661 = vst.msk [vmem:[#allocation2 + $0x10] sm:$0xff] %vm658, %v628
      %662 = vst.msk [vmem:[#allocation2 + $0x18] sm:$0xff] %vm658, %v629
      %663 = vst.msk [vmem:[#allocation2 + $0x20] sm:$0xff] %vm658, %v630
      %664 = vst.msk [vmem:[#allocation2 + $0x28] sm:$0xff] %vm658, %v631
      %665 = vst.msk [vmem:[#allocation2 + $0x30] sm:$0xff] %vm658, %v632
      %666 = vst.msk [vmem:[#allocation2 + $0x38] sm:$0xff] %vm658, %v633
      %667 = vst.msk [vmem:[#allocation2 + $0x40] sm:$0xff] %vm658, %v634
      %668 = vst.msk [vmem:[#allocation2 + $0x48] sm:$0xff] %vm658, %v635
      %669 = vst.msk [vmem:[#allocation2 + $0x50] sm:$0xff] %vm658, %v636
      %670 = vst.msk [vmem:[#allocation2 + $0x58] sm:$0xff] %vm658, %v637
      %671 = vst.msk [vmem:[#allocation2 + $0x60] sm:$0xff] %vm658, %v638
      %672 = vst.msk [vmem:[#allocation2 + $0x68] sm:$0xff] %vm658, %v639
      %673 = vst.msk [vmem:[#allocation2 + $0x70] sm:$0xff] %vm658, %v640
      %674 = vst.msk [vmem:[#allocation2 + $0x78] sm:$0xff] %vm658, %v641
      %675 = vst.msk [vmem:[#allocation2 + $0x80] sm:$0xff] %vm658, %v642
      %676 = vst.msk [vmem:[#allocation2 + $0x88] sm:$0xff] %vm658, %v643
      %677 = vst.msk [vmem:[#allocation2 + $0x90] sm:$0xff] %vm658, %v644
      %678 = vst.msk [vmem:[#allocation2 + $0x98] sm:$0xff] %vm658, %v645
      %679 = vst.msk [vmem:[#allocation2 + $0xa0] sm:$0xff] %vm658, %v646
      %680 = vst.msk [vmem:[#allocation2 + $0xa8] sm:$0xff] %vm658, %v647
      %681 = vst.msk [vmem:[#allocation2 + $0xb0] sm:$0xff] %vm658, %v648
      %682 = vst.msk [vmem:[#allocation2 + $0xb8] sm:$0xff] %vm658, %v649
      %683 = vst.msk [vmem:[#allocation2 + $0xc0] sm:$0xff] %vm658, %v650
      %684 = vst.msk [vmem:[#allocation2 + $0xc8] sm:$0xff] %vm658, %v651
      %685 = vst.msk [vmem:[#allocation2 + $0xd0] sm:$0xff] %vm658, %v652
      %686 = vst.msk [vmem:[#allocation2 + $0xd8] sm:$0xff] %vm658, %v653
      %687 = vst.msk [vmem:[#allocation2 + $0xe0] sm:$0xff] %vm658, %v654
      %688 = vst.msk [vmem:[#allocation2 + $0xe8] sm:$0xff] %vm658, %v655
      %689 = vst.msk [vmem:[#allocation2 + $0xf0] sm:$0xff] %vm658, %v656
      %690 = vst.msk [vmem:[#allocation2 + $0xf8] sm:$0xff] %vm658, %v657
      %p691 = scmp.eq.s32.totalorder %s22, 48
      // Predicated region
      $region41: #{resnet_forward.15} parent=35 // pred_check
        %p692 = pneg %p691
      $region42: #{resnet_forward.15} parent=35 // pred_check_branch
        %694 = sbr.rel (%p692) target = $region44
      $region43: #{resnet_forward.15} parent=35 // pred_region
        %v695 = vld [vmem:[#allocation2] sm:$0xff]
        %v696 = vld [vmem:[#allocation2 + $0x8] sm:$0xff]
        %v697 = vld [vmem:[#allocation2 + $0x10] sm:$0xff]
        %v698 = vld [vmem:[#allocation2 + $0x18] sm:$0xff]
        %v699 = vld [vmem:[#allocation2 + $0x20] sm:$0xff]
        %v700 = vld [vmem:[#allocation2 + $0x28] sm:$0xff]
        %v701 = vld [vmem:[#allocation2 + $0x30] sm:$0xff]
        %v702 = vld [vmem:[#allocation2 + $0x38] sm:$0xff]
        %v703 = vld [vmem:[#allocation2 + $0x40] sm:$0xff]
        %v704 = vld [vmem:[#allocation2 + $0x48] sm:$0xff]
        %v705 = vld [vmem:[#allocation2 + $0x50] sm:$0xff]
        %v706 = vld [vmem:[#allocation2 + $0x58] sm:$0xff]
        %v707 = vld [vmem:[#allocation2 + $0x60] sm:$0xff]
        %v708 = vld [vmem:[#allocation2 + $0x68] sm:$0xff]
        %v709 = vld [vmem:[#allocation2 + $0x70] sm:$0xff]
        %v710 = vld [vmem:[#allocation2 + $0x78] sm:$0xff]
        %v711 = vld [vmem:[#allocation2 + $0x80] sm:$0xff]
        %v712 = vld [vmem:[#allocation2 + $0x88] sm:$0xff]
        %v713 = vld [vmem:[#allocation2 + $0x90] sm:$0xff]
        %v714 = vld [vmem:[#allocation2 + $0x98] sm:$0xff]
        %v715 = vld [vmem:[#allocation2 + $0xa0] sm:$0xff]
        %v716 = vld [vmem:[#allocation2 + $0xa8] sm:$0xff]
        %v717 = vld [vmem:[#allocation2 + $0xb0] sm:$0xff]
        %v718 = vld [vmem:[#allocation2 + $0xb8] sm:$0xff]
        %v719 = vld [vmem:[#allocation2 + $0xc0] sm:$0xff]
        %v720 = vld [vmem:[#allocation2 + $0xc8] sm:$0xff]
        %v721 = vld [vmem:[#allocation2 + $0xd0] sm:$0xff]
        %v722 = vld [vmem:[#allocation2 + $0xd8] sm:$0xff]
        %v723 = vld [vmem:[#allocation2 + $0xe0] sm:$0xff]
        %v724 = vld [vmem:[#allocation2 + $0xe8] sm:$0xff]
        %v725 = vld [vmem:[#allocation2 + $0xf0] sm:$0xff]
        %v726 = vld [vmem:[#allocation2 + $0xf8] sm:$0xff]
        %v727 = vld [vmem:[%s285] sm:$0x1]
        %v729 = vperm.slane %v727, 0
        %v731 = vmul.f32 %v695, %v729
        %v732 = vmul.f32 %v696, %v729
        %v733 = vmul.f32 %v697, %v729
        %v734 = vmul.f32 %v698, %v729
        %v735 = vmul.f32 %v699, %v729
        %v736 = vmul.f32 %v700, %v729
        %v737 = vmul.f32 %v701, %v729
        %v738 = vmul.f32 %v702, %v729
        %v739 = vmul.f32 %v703, %v729
        %v740 = vmul.f32 %v704, %v729
        %v741 = vmul.f32 %v705, %v729
        %v742 = vmul.f32 %v706, %v729
        %v743 = vmul.f32 %v707, %v729
        %v744 = vmul.f32 %v708, %v729
        %v745 = vmul.f32 %v709, %v729
        %v746 = vmul.f32 %v710, %v729
        %v747 = vmul.f32 %v711, %v729
        %v748 = vmul.f32 %v712, %v729
        %v749 = vmul.f32 %v713, %v729
        %v750 = vmul.f32 %v714, %v729
        %v751 = vmul.f32 %v715, %v729
        %v752 = vmul.f32 %v716, %v729
        %v753 = vmul.f32 %v717, %v729
        %v754 = vmul.f32 %v718, %v729
        %v755 = vmul.f32 %v719, %v729
        %v756 = vmul.f32 %v720, %v729
        %v757 = vmul.f32 %v721, %v729
        %v758 = vmul.f32 %v722, %v729
        %v759 = vmul.f32 %v723, %v729
        %v760 = vmul.f32 %v724, %v729
        %v761 = vmul.f32 %v725, %v729
        %v762 = vmul.f32 %v726, %v729
        %v763 = vld [vmem:[%s288] sm:$0x1]
        %v765 = vperm.slane %v763, 0
        %v767 = vadd.f32 %v731, %v765
        %v768 = vadd.f32 %v732, %v765
        %v769 = vadd.f32 %v733, %v765
        %v770 = vadd.f32 %v734, %v765
        %v771 = vadd.f32 %v735, %v765
        %v772 = vadd.f32 %v736, %v765
        %v773 = vadd.f32 %v737, %v765
        %v774 = vadd.f32 %v738, %v765
        %v775 = vadd.f32 %v739, %v765
        %v776 = vadd.f32 %v740, %v765
        %v777 = vadd.f32 %v741, %v765
        %v778 = vadd.f32 %v742, %v765
        %v779 = vadd.f32 %v743, %v765
        %v780 = vadd.f32 %v744, %v765
        %v781 = vadd.f32 %v745, %v765
        %v782 = vadd.f32 %v746, %v765
        %v783 = vadd.f32 %v747, %v765
        %v784 = vadd.f32 %v748, %v765
        %v785 = vadd.f32 %v749, %v765
        %v786 = vadd.f32 %v750, %v765
        %v787 = vadd.f32 %v751, %v765
        %v788 = vadd.f32 %v752, %v765
        %v789 = vadd.f32 %v753, %v765
        %v790 = vadd.f32 %v754, %v765
        %v791 = vadd.f32 %v755, %v765
        %v792 = vadd.f32 %v756, %v765
        %v793 = vadd.f32 %v757, %v765
        %v794 = vadd.f32 %v758, %v765
        %v795 = vadd.f32 %v759, %v765
        %v796 = vadd.f32 %v760, %v765
        %v797 = vadd.f32 %v761, %v765
        %v798 = vadd.f32 %v762, %v765
        %v799 = vmax.f32 %v767, 0.0
        %v800 = vmax.f32 %v768, 0.0
        %v801 = vmax.f32 %v769, 0.0
        %v802 = vmax.f32 %v770, 0.0
        %v803 = vmax.f32 %v771, 0.0
        %v804 = vmax.f32 %v772, 0.0
        %v805 = vmax.f32 %v773, 0.0
        %v806 = vmax.f32 %v774, 0.0
        %v807 = vmax.f32 %v775, 0.0
        %v808 = vmax.f32 %v776, 0.0
        %v809 = vmax.f32 %v777, 0.0
        %v810 = vmax.f32 %v778, 0.0
        %v811 = vmax.f32 %v779, 0.0
        %v812 = vmax.f32 %v780, 0.0
        %v813 = vmax.f32 %v781, 0.0
        %v814 = vmax.f32 %v782, 0.0
        %v815 = vmax.f32 %v783, 0.0
        %v816 = vmax.f32 %v784, 0.0
        %v817 = vmax.f32 %v785, 0.0
        %v818 = vmax.f32 %v786, 0.0
        %v819 = vmax.f32 %v787, 0.0
        %v820 = vmax.f32 %v788, 0.0
        %v821 = vmax.f32 %v789, 0.0
        %v822 = vmax.f32 %v790, 0.0
        %v823 = vmax.f32 %v791, 0.0
        %v824 = vmax.f32 %v792, 0.0
        %v825 = vmax.f32 %v793, 0.0
        %v826 = vmax.f32 %v794, 0.0
        %v827 = vmax.f32 %v795, 0.0
        %v828 = vmax.f32 %v796, 0.0
        %v829 = vmax.f32 %v797, 0.0
        %v830 = vmax.f32 %v798, 0.0
        %v831 = vpack.c.bf16 %v799, %v799
        %v832 = vpack.c.bf16 %v800, %v800
        %v833 = vpack.c.bf16 %v801, %v801
        %v834 = vpack.c.bf16 %v802, %v802
        %v835 = vpack.c.bf16 %v803, %v803
        %v836 = vpack.c.bf16 %v804, %v804
        %v837 = vpack.c.bf16 %v805, %v805
        %v838 = vpack.c.bf16 %v806, %v806
        %v839 = vpack.c.bf16 %v807, %v807
        %v840 = vpack.c.bf16 %v808, %v808
        %v841 = vpack.c.bf16 %v809, %v809
        %v842 = vpack.c.bf16 %v810, %v810
        %v843 = vpack.c.bf16 %v811, %v811
        %v844 = vpack.c.bf16 %v812, %v812
        %v845 = vpack.c.bf16 %v813, %v813
        %v846 = vpack.c.bf16 %v814, %v814
        %v847 = vpack.c.bf16 %v815, %v815
        %v848 = vpack.c.bf16 %v816, %v816
        %v849 = vpack.c.bf16 %v817, %v817
        %v850 = vpack.c.bf16 %v818, %v818
        %v851 = vpack.c.bf16 %v819, %v819
        %v852 = vpack.c.bf16 %v820, %v820
        %v853 = vpack.c.bf16 %v821, %v821
        %v854 = vpack.c.bf16 %v822, %v822
        %v855 = vpack.c.bf16 %v823, %v823
        %v856 = vpack.c.bf16 %v824, %v824
        %v857 = vpack.c.bf16 %v825, %v825
        %v858 = vpack.c.bf16 %v826, %v826
        %v859 = vpack.c.bf16 %v827, %v827
        %v860 = vpack.c.bf16 %v828, %v828
        %v861 = vpack.c.bf16 %v829, %v829
        %v862 = vpack.c.bf16 %v830, %v830
        %vm863 = vcmask 519168
        %864 = vst.msk [vmem:[%s296] sm:$0xf] %vm863, %v831
        %865 = vst.msk [vmem:[%s296 + $0x4] sm:$0xf] %vm863, %v832
        %866 = vst.msk [vmem:[%s296 + $0x8] sm:$0xf] %vm863, %v833
        %867 = vst.msk [vmem:[%s296 + $0xc] sm:$0xf] %vm863, %v834
        %868 = vst.msk [vmem:[%s296 + $0x10] sm:$0xf] %vm863, %v835
        %869 = vst.msk [vmem:[%s296 + $0x14] sm:$0xf] %vm863, %v836
        %870 = vst.msk [vmem:[%s296 + $0x18] sm:$0xf] %vm863, %v837
        %871 = vst.msk [vmem:[%s296 + $0x1c] sm:$0xf] %vm863, %v838
        %872 = vst.msk [vmem:[%s296 + $0x20] sm:$0xf] %vm863, %v839
        %873 = vst.msk [vmem:[%s296 + $0x24] sm:$0xf] %vm863, %v840
        %874 = vst.msk [vmem:[%s296 + $0x28] sm:$0xf] %vm863, %v841
        %875 = vst.msk [vmem:[%s296 + $0x2c] sm:$0xf] %vm863, %v842
        %876 = vst.msk [vmem:[%s296 + $0x30] sm:$0xf] %vm863, %v843
        %877 = vst.msk [vmem:[%s296 + $0x34] sm:$0xf] %vm863, %v844
        %878 = vst.msk [vmem:[%s296 + $0x38] sm:$0xf] %vm863, %v845
        %879 = vst.msk [vmem:[%s296 + $0x3c] sm:$0xf] %vm863, %v846
        %880 = vst.msk [vmem:[%s296 + $0x40] sm:$0xf] %vm863, %v847
        %881 = vst.msk [vmem:[%s296 + $0x44] sm:$0xf] %vm863, %v848
        %882 = vst.msk [vmem:[%s296 + $0x48] sm:$0xf] %vm863, %v849
        %883 = vst.msk [vmem:[%s296 + $0x4c] sm:$0xf] %vm863, %v850
        %884 = vst.msk [vmem:[%s296 + $0x50] sm:$0xf] %vm863, %v851
        %885 = vst.msk [vmem:[%s296 + $0x54] sm:$0xf] %vm863, %v852
        %886 = vst.msk [vmem:[%s296 + $0x58] sm:$0xf] %vm863, %v853
        %887 = vst.msk [vmem:[%s296 + $0x5c] sm:$0xf] %vm863, %v854
        %888 = vst.msk [vmem:[%s296 + $0x60] sm:$0xf] %vm863, %v855
        %889 = vst.msk [vmem:[%s296 + $0x64] sm:$0xf] %vm863, %v856
        %890 = vst.msk [vmem:[%s296 + $0x68] sm:$0xf] %vm863, %v857
        %891 = vst.msk [vmem:[%s296 + $0x6c] sm:$0xf] %vm863, %v858
        %892 = vst.msk [vmem:[%s296 + $0x70] sm:$0xf] %vm863, %v859
        %893 = vst.msk [vmem:[%s296 + $0x74] sm:$0xf] %vm863, %v860
        %894 = vst.msk [vmem:[%s296 + $0x78] sm:$0xf] %vm863, %v861
        %895 = vst.msk [vmem:[%s296 + $0x7c] sm:$0xf] %vm863, %v862
      $region44: #{resnet_forward.15} parent=35 // pred_fallthru
        _
      %s896 = smul.u32 32, %s20
      %p897 = scmp.lt.s32.totalorder %s896, 63
      %s898 = scalar_select %p897, %s896, 63
      %p899 = scmp.lt.s32.totalorder %s21, 0
      %s900 = scalar_select %p899, %s21, 0
      %s901 = sadd.s32 %s900, %s898
      %s902 = smul.addr %s901, 4
      %s903 = scalar_lea.vmem %s4, %s902
      // Predicated region
      $region45: #{resnet_forward.15} parent=35 // pred_check
        %p904 = pneg %p162
      $region46: #{resnet_forward.15} parent=35 // pred_check_branch
        %906 = sbr.rel (%p904) target = $region48
      $region47: #{resnet_forward.15} parent=35 // pred_region
        %s907 = smul.u32 32, %s20
      $region48: #{resnet_forward.15} parent=35 // pred_fallthru
        _
    $region36: #{resnet_forward.15} parent=5 // pred_fallthru
      _
    %p908 = scmp.le.s32.totalorder 2, %s10
    // Predicated region
    $region49: #{resnet_forward.15} parent=5 // pred_check
      %p909 = pneg %p908
    $region50: #{resnet_forward.15} parent=5 // pred_check_branch
      %911 = sbr.rel (%p909) target = $region52
    $region51: #{resnet_forward.15} parent=5 // pred_region
      %s912 = ssub.s32 %s10, 2
      // Predicated region
      $region53: #{resnet_forward.15} parent=51 // pred_check
        %p913 = pneg %p168
      $region54: #{resnet_forward.15} parent=51 // pred_check_branch
        %915 = sbr.rel (%p913) target = $region56
      $region55: #{resnet_forward.15} parent=51 // pred_region
        %s916 = smul.u32 32, %s23
        %p917 = scmp.lt.s32.totalorder %s916, 63
        %s918 = scalar_select %p917, %s916, 63
        %p919 = scmp.lt.s32.totalorder %s24, 0
        %s920 = scalar_select %p919, %s24, 0
        %s921 = sadd.s32 %s920, %s918
        %s922 = smul.addr %s921, 4
        %s923 = scalar_lea.vmem %s4, %s922
      $region56: #{resnet_forward.15} parent=51 // pred_fallthru
        _
    $region52: #{resnet_forward.15} parent=5 // pred_fallthru
      _
  $region6: #{resnet_forward.15} parent=0 // loop_footer
    %s14 = sadd.s32 1, %s10
  $region7: #{resnet_forward.15} parent=0 // loop_footer_branch
    %9 = sbr.rel target = $region3
  $region8: #{resnet_forward.15} parent=0 // loop_exit
    _

// kernel: resnet_forward.17
$region0: #{resnet_forward.17}
  #allocation0 [shape = 'u32[]', space=smem, size = 0x4, offset = 0x4, fixed_abs, tag = 'smem constant byte address 0x4 - core index']
  #allocation1 [shape = 'u32[72,128]{1,0:T(1,128)}', space=vmem, size = 0x9000, scoped, tag = 'internal scratch']
  #allocation2 [shape = 'f32[128,64]{1,0:T(8,128)}', space=vmem, size = 0x10000, scoped, tag = 'scratch operand']
  %s0 = inlined_call_operand.vmem [shape: bf16[9,128,64], index: 0, kind: input, shape index: {}]
  %s1 = inlined_call_operand.vmem [shape: bf16[9,64,64], index: 1, kind: input, shape index: {}]
  %s2 = inlined_call_operand.vmem [shape: f32[1,64], index: 2, kind: input, shape index: {}]
  %s3 = inlined_call_operand.vmem [shape: f32[1,64], index: 3, kind: input, shape index: {}]
  %s4 = inlined_call_operand.vmem [shape: bf16[128,64], index: 4, kind: output, shape index: {}]
  %s5 = sld [smem:[#allocation0]]
  $region57: #{resnet_forward.17} parent=0
    _
  %s7 = ssub.s32 1, %s5
  %s8 = scalar_select 0, %s7, %s5
  loop: start=0, step=1, limit=11
  $region2: #{resnet_forward.17} parent=0 // loop_pre_header
    _
  $region3: #{resnet_forward.17} parent=0 // loop_header
    %s10 = sphi 0, %s14
    %p11 = scmp.ge.s32.totalorder %s10, 11
    %s17 = sphi 0, %s36
    %s18 = sphi 0, %s32
    %s19 = sphi 0, %s28
    %s20 = sphi 0, %s17
    %s21 = sphi 0, %s18
    %s22 = sphi 0, %s19
    %s23 = sphi 0, %s20
    %s24 = sphi 0, %s21
    %s25 = sphi 0, %s22
    %s41 = sphi 0, %s43
    %s44 = sphi 0, %s41
    %s45 = sphi 0, %s44
    %s61 = sphi 0, %s45
    %s69 = sphi 0, %s71
    %s72 = sphi 0, %s69
    %s73 = sphi 0, %s72
    %s89 = sphi 0, %s73
    %s95 = sphi 0, %s97
    %s98 = sphi 0, %s95
    %s99 = sphi 0, %s98
    %s115 = sphi 0, %s99
    %s121 = sphi 0, %s123
    %s124 = sphi 0, %s121
    %s125 = sphi 0, %s124
    %s141 = sphi 0, %s125
    %s149 = sphi 0, %s151
    %s152 = sphi 0, %s149
    %s153 = sphi 0, %s152
    %s169 = sphi 0, %s153
  $region4: #{resnet_forward.17} parent=0 // loop_header_branch
    %13 = sbr.rel (%p11) target = $region8
  $region5: #{resnet_forward.17} parent=0 // loop_body
    %s15 = ssub.s32 %s10, 1
    %s16 = ssub.s32 %s10, 2
    %s26 = sadd.s32 1, %s19
    %p27 = scmp.ge.s32.totalorder %s26, 9
    %s28 = scalar_select %p27, 0, %s26
    %s29 = sadd.s32 1, %s18
    %s30 = scalar_select %p27, %s29, %s18
    %p31 = scmp.ge.s32.totalorder %s30, 1
    %s32 = scalar_select %p31, 0, %s30
    %s33 = sadd.s32 1, %s17
    %s34 = scalar_select %p31, %s33, %s17
    %p35 = scmp.ge.s32.totalorder %s34, 1
    %s36 = scalar_select %p35, 0, %s34
    %s37 = ssub.s32 %s19, %s28
    %s38 = ssub.s32 %s17, %s36
    %s39 = sor.u32 %s37, %s38
    %p40 = scmp.eq.s32.totalorder %s39, 0
    %s42 = sadd.s32 %s41, 1
    %s43 = scalar_select %p40, %s41, %s42
    %p46 = pneg %p40
    %p47 = scmp.eq.s32.totalorder %s10, 8
    %p48 = por %p46, %p47
    %p49 = scmp.ne.s32.totalorder %s41, %s44
    %p50 = scmp.eq.s32.totalorder %s10, 0
    %p51 = por %p49, %p50
    %p52 = scmp.ne.s32.totalorder %s41, %s44
    %p53 = scmp.eq.s32.totalorder %s15, 8
    %p54 = por %p52, %p53
    %p55 = scmp.ne.s32.totalorder %s44, %s45
    %p56 = scmp.eq.s32.totalorder %s15, 0
    %p57 = por %p55, %p56
    %p58 = scmp.ne.s32.totalorder %s44, %s45
    %p59 = scmp.eq.s32.totalorder %s16, 8
    %p60 = por %p58, %p59
    %p62 = scmp.ne.s32.totalorder %s45, %s61
    %p63 = scmp.eq.s32.totalorder %s16, 0
    %p64 = por %p62, %p63
    %s65 = ssub.s32 %s19, %s28
    %s66 = ssub.s32 %s18, %s32
    %s67 = sor.u32 %s65, %s66
    %p68 = scmp.eq.s32.totalorder %s67, 0
    %s70 = sadd.s32 %s69, 1
    %s71 = scalar_select %p68, %s69, %s70
    %p74 = pneg %p68
    %p75 = scmp.eq.s32.totalorder %s10, 8
    %p76 = por %p74, %p75
    %p77 = scmp.ne.s32.totalorder %s69, %s72
    %p78 = scmp.eq.s32.totalorder %s10, 0
    %p79 = por %p77, %p78
    %p80 = scmp.ne.s32.totalorder %s69, %s72
    %p81 = scmp.eq.s32.totalorder %s15, 8
    %p82 = por %p80, %p81
    %p83 = scmp.ne.s32.totalorder %s72, %s73
    %p84 = scmp.eq.s32.totalorder %s15, 0
    %p85 = por %p83, %p84
    %p86 = scmp.ne.s32.totalorder %s72, %s73
    %p87 = scmp.eq.s32.totalorder %s16, 8
    %p88 = por %p86, %p87
    %p90 = scmp.ne.s32.totalorder %s73, %s89
    %p91 = scmp.eq.s32.totalorder %s16, 0
    %p92 = por %p90, %p91
    %s93 = ssub.s32 %s18, %s32
    %p94 = scmp.eq.s32.totalorder %s93, 0
    %s96 = sadd.s32 %s95, 1
    %s97 = scalar_select %p94, %s95, %s96
    %p100 = pneg %p94
    %p101 = scmp.eq.s32.totalorder %s10, 8
    %p102 = por %p100, %p101
    %p103 = scmp.ne.s32.totalorder %s95, %s98
    %p104 = scmp.eq.s32.totalorder %s10, 0
    %p105 = por %p103, %p104
    %p106 = scmp.ne.s32.totalorder %s95, %s98
    %p107 = scmp.eq.s32.totalorder %s15, 8
    %p108 = por %p106, %p107
    %p109 = scmp.ne.s32.totalorder %s98, %s99
    %p110 = scmp.eq.s32.totalorder %s15, 0
    %p111 = por %p109, %p110
    %p112 = scmp.ne.s32.totalorder %s98, %s99
    %p113 = scmp.eq.s32.totalorder %s16, 8
    %p114 = por %p112, %p113
    %p116 = scmp.ne.s32.totalorder %s99, %s115
    %p117 = scmp.eq.s32.totalorder %s16, 0
    %p118 = por %p116, %p117
    %s119 = ssub.s32 %s18, %s32
    %p120 = scmp.eq.s32.totalorder %s119, 0
    %s122 = sadd.s32 %s121, 1
    %s123 = scalar_select %p120, %s121, %s122
    %p126 = pneg %p120
    %p127 = scmp.eq.s32.totalorder %s10, 8
    %p128 = por %p126, %p127
    %p129 = scmp.ne.s32.totalorder %s121, %s124
    %p130 = scmp.eq.s32.totalorder %s10, 0
    %p131 = por %p129, %p130
    %p132 = scmp.ne.s32.totalorder %s121, %s124
    %p133 = scmp.eq.s32.totalorder %s15, 8
    %p134 = por %p132, %p133
    %p135 = scmp.ne.s32.totalorder %s124, %s125
    %p136 = scmp.eq.s32.totalorder %s15, 0
    %p137 = por %p135, %p136
    %p138 = scmp.ne.s32.totalorder %s124, %s125
    %p139 = scmp.eq.s32.totalorder %s16, 8
    %p140 = por %p138, %p139
    %p142 = scmp.ne.s32.totalorder %s125, %s141
    %p143 = scmp.eq.s32.totalorder %s16, 0
    %p144 = por %p142, %p143
    %s145 = ssub.s32 %s17, %s36
    %s146 = ssub.s32 %s18, %s32
    %s147 = sor.u32 %s145, %s146
    %p148 = scmp.eq.s32.totalorder %s147, 0
    %s150 = sadd.s32 %s149, 1
    %s151 = scalar_select %p148, %s149, %s150
    %p154 = pneg %p148
    %p155 = scmp.eq.s32.totalorder %s10, 8
    %p156 = por %p154, %p155
    %p157 = scmp.ne.s32.totalorder %s149, %s152
    %p158 = scmp.eq.s32.totalorder %s10, 0
    %p159 = por %p157, %p158
    %p160 = scmp.ne.s32.totalorder %s149, %s152
    %p161 = scmp.eq.s32.totalorder %s15, 8
    %p162 = por %p160, %p161
    %p163 = scmp.ne.s32.totalorder %s152, %s153
    %p164 = scmp.eq.s32.totalorder %s15, 0
    %p165 = por %p163, %p164
    %p166 = scmp.ne.s32.totalorder %s152, %s153
    %p167 = scmp.eq.s32.totalorder %s16, 8
    %p168 = por %p166, %p167
    %p170 = scmp.ne.s32.totalorder %s153, %s169
    %p171 = scmp.eq.s32.totalorder %s16, 0
    %p172 = por %p170, %p171
    %p173 = scmp.le.s32.totalorder 1, %s10
    %p174 = scmp.lt.s32.totalorder %s10, 10
    %p175 = pnand %p173, %p174
    %p176 = pneg %p175
    // Predicated region
    $region9: #{resnet_forward.17} parent=5 // pred_check
      _
    $region10: #{resnet_forward.17} parent=5 // pred_check_branch
      %178 = sbr.rel (%p175) target = $region12
    $region11: #{resnet_forward.17} parent=5 // pred_region
      %s179 = ssub.s32 %s10, 1
      // Predicated region
      $region13: #{resnet_forward.17} parent=11 // pred_check
        %p180 = pneg %p111
      $region14: #{resnet_forward.17} parent=11 // pred_check_branch
        %182 = sbr.rel (%p180) target = $region16
      $region15: #{resnet_forward.17} parent=11 // pred_region
        %p183 = scmp.lt.s32.totalorder %s21, 0
        %s184 = scalar_select %p183, %s21, 0
        %s185 = scalar_lea.vmem %s2, %s184
      $region16: #{resnet_forward.17} parent=11 // pred_fallthru
        _
      // Predicated region
      $region17: #{resnet_forward.17} parent=11 // pred_check
        %p186 = pneg %p137
      $region18: #{resnet_forward.17} parent=11 // pred_check_branch
        %188 = sbr.rel (%p186) target = $region20
      $region19: #{resnet_forward.17} parent=11 // pred_region
        %p189 = scmp.lt.s32.totalorder %s21, 0
        %s190 = scalar_select %p189, %s21, 0
        %s191 = scalar_lea.vmem %s3, %s190
      $region20: #{resnet_forward.17} parent=11 // pred_fallthru
        _
    $region12: #{resnet_forward.17} parent=5 // pred_fallthru
      _
    %p192 = scmp.lt.s32.totalorder %s10, 9
    // Predicated region
    $region21: #{resnet_forward.17} parent=5 // pred_check
      %p193 = pneg %p192
    $region22: #{resnet_forward.17} parent=5 // pred_check_branch
      %195 = sbr.rel (%p193) target = $region24
    $region23: #{resnet_forward.17} parent=5 // pred_region
      // Predicated region
      $region25: #{resnet_forward.17} parent=23 // pred_check
        %p196 = pneg %p51
      $region26: #{resnet_forward.17} parent=23 // pred_check_branch
        %198 = sbr.rel (%p196) target = $region28
      $region27: #{resnet_forward.17} parent=23 // pred_region
        %s199 = smul.u32 16, %s17
        %p200 = scmp.lt.s32.totalorder %s19, 8
        %s201 = scalar_select %p200, %s19, 8
        %p202 = scmp.lt.s32.totalorder %s199, 15
        %s203 = scalar_select %p202, %s199, 15
        %s204 = smul.addr %s201, 16
        %s205 = sadd.s32 %s203, %s204
        %s206 = smul.addr %s205, 4
        %s207 = scalar_lea.vmem %s0, %s206
        %s208 = smul.u32 16, %s17
      $region28: #{resnet_forward.17} parent=23 // pred_fallthru
        _
      // Predicated region
      $region29: #{resnet_forward.17} parent=23 // pred_check
        %p209 = pneg %p79
      $region30: #{resnet_forward.17} parent=23 // pred_check_branch
        %211 = sbr.rel (%p209) target = $region32
      $region31: #{resnet_forward.17} parent=23 // pred_region
        %p212 = scmp.lt.s32.totalorder %s19, 8
        %s213 = scalar_select %p212, %s19, 8
        %p214 = scmp.lt.s32.totalorder %s18, 0
        %s215 = scalar_select %p214, %s18, 0
        %s216 = smul.addr %s213, 8
        %s217 = sadd.s32 %s215, %s216
        %s218 = smul.addr %s217, 4
        %s219 = scalar_lea.vmem %s1, %s218
      $region32: #{resnet_forward.17} parent=23 // pred_fallthru
        _
    $region24: #{resnet_forward.17} parent=5 // pred_fallthru
      _
    %p220 = scmp.le.s32.totalorder 1, %s10
    %p221 = scmp.lt.s32.totalorder %s10, 10
    %p222 = pnand %p220, %p221
    %p223 = pneg %p222
    // Predicated region
    $region33: #{resnet_forward.17} parent=5 // pred_check
      _
    $region34: #{resnet_forward.17} parent=5 // pred_check_branch
      %225 = sbr.rel (%p222) target = $region36
    $region35: #{resnet_forward.17} parent=5 // pred_region
      %s226 = ssub.s32 %s10, 1
      %s227 = smul.u32 16, %s20
      %p228 = scmp.lt.s32.totalorder %s22, 8
      %s229 = scalar_select %p228, %s22, 8
      %p230 = scmp.lt.s32.totalorder %s227, 15
      %s231 = scalar_select %p230, %s227, 15
      %s232 = smul.addr %s229, 16
      %s233 = sadd.s32 %s231, %s232
      %s234 = smul.addr %s233, 4
      %s235 = scalar_lea.vmem %s0, %s234
      %p236 = pneg %p57
      %p237 = pneg %p54
      %p238 = scmp.lt.s32.totalorder %s22, 8
      %s239 = scalar_select %p238, %s22, 8
      %p240 = scmp.lt.s32.totalorder %s21, 0
      %s241 = scalar_select %p240, %s21, 0
      %s242 = smul.addr %s239, 8
      %s243 = sadd.s32 %s241, %s242
      %s244 = smul.addr %s243, 4
      %s245 = scalar_lea.vmem %s1, %s244
      %p246 = pneg %p85
      %p247 = pneg %p82
      %p248 = scmp.lt.s32.totalorder %s21, 0
      %s249 = scalar_select %p248, %s21, 0
      %s250 = scalar_lea.vmem %s2, %s249
      %p251 = pneg %p111
      %p252 = pneg %p108
      %p253 = scmp.lt.s32.totalorder %s21, 0
      %s254 = scalar_select %p253, %s21, 0
      %s255 = scalar_lea.vmem %s3, %s254
      %p256 = pneg %p137
      %p257 = pneg %p134
      %p258 = pneg %p165
      %p259 = pneg %p162
      %s260 = smul.u32 16, %s20
      %p261 = scmp.lt.s32.totalorder %s260, 15
      %s262 = scalar_select %p261, %s260, 15
      %p263 = scmp.lt.s32.totalorder %s21, 0
      %s264 = scalar_select %p263, %s21, 0
      %s265 = sadd.s32 %s264, %s262
      %s266 = smul.addr %s265, 4
      %s267 = scalar_lea.vmem %s4, %s266
      %s268 = smul.u32 16, %s20
      %p269 = scmp.lt.s32.totalorder %s22, 8
      %s270 = scalar_select %p269, %s22, 8
      %p271 = scmp.lt.s32.totalorder %s268, 15
      %s272 = scalar_select %p271, %s268, 15
      %s273 = smul.addr %s270, 16
      %s274 = sadd.s32 %s272, %s273
      %s275 = smul.addr %s274, 4
      %s276 = scalar_lea.vmem %s0, %s275
      %s277 = smul.u32 16, %s20
      %p278 = scmp.lt.s32.totalorder %s22, 8
      %s279 = scalar_select %p278, %s22, 8
      %p280 = scmp.lt.s32.totalorder %s21, 0
      %s281 = scalar_select %p280, %s21, 0
      %s282 = smul.addr %s279, 8
      %s283 = sadd.s32 %s281, %s282
      %s284 = smul.addr %s283, 4
      %s285 = scalar_lea.vmem %s1, %s284
      %p286 = scmp.lt.s32.totalorder %s21, 0
      %s287 = scalar_select %p286, %s21, 0
      %s288 = scalar_lea.vmem %s2, %s287
      %p289 = scmp.lt.s32.totalorder %s21, 0
      %s290 = scalar_select %p289, %s21, 0
      %s291 = scalar_lea.vmem %s3, %s290
      %s292 = smul.u32 16, %s20
      %p293 = scmp.lt.s32.totalorder %s292, 15
      %s294 = scalar_select %p293, %s292, 15
      %p295 = scmp.lt.s32.totalorder %s21, 0
      %s296 = scalar_select %p295, %s21, 0
      %s297 = sadd.s32 %s296, %s294
      %s298 = smul.addr %s297, 4
      %s299 = scalar_lea.vmem %s4, %s298
      %s300 = smul.u32 16, %s20
      %p302 = scmp.eq.s32.totalorder %s22, 0
      // Predicated region
      $region37: #{resnet_forward.17} parent=35 // pred_check
        %p303 = pneg %p302
      $region38: #{resnet_forward.17} parent=35 // pred_check_branch
        %305 = sbr.rel (%p303) target = $region40
      $region39: #{resnet_forward.17} parent=35 // pred_region
        %vm306 = vcmask 523264
        %307 = vst.msk [vmem:[#allocation2] sm:$0xff] %vm306, 0.0
        %308 = vst.msk [vmem:[#allocation2 + $0x8] sm:$0xff] %vm306, 0.0
        %309 = vst.msk [vmem:[#allocation2 + $0x10] sm:$0xff] %vm306, 0.0
        %310 = vst.msk [vmem:[#allocation2 + $0x18] sm:$0xff] %vm306, 0.0
        %311 = vst.msk [vmem:[#allocation2 + $0x20] sm:$0xff] %vm306, 0.0
        %312 = vst.msk [vmem:[#allocation2 + $0x28] sm:$0xff] %vm306, 0.0
        %313 = vst.msk [vmem:[#allocation2 + $0x30] sm:$0xff] %vm306, 0.0
        %314 = vst.msk [vmem:[#allocation2 + $0x38] sm:$0xff] %vm306, 0.0
        %315 = vst.msk [vmem:[#allocation2 + $0x40] sm:$0xff] %vm306, 0.0
        %316 = vst.msk [vmem:[#allocation2 + $0x48] sm:$0xff] %vm306, 0.0
        %317 = vst.msk [vmem:[#allocation2 + $0x50] sm:$0xff] %vm306, 0.0
        %318 = vst.msk [vmem:[#allocation2 + $0x58] sm:$0xff] %vm306, 0.0
        %319 = vst.msk [vmem:[#allocation2 + $0x60] sm:$0xff] %vm306, 0.0
        %320 = vst.msk [vmem:[#allocation2 + $0x68] sm:$0xff] %vm306, 0.0
        %321 = vst.msk [vmem:[#allocation2 + $0x70] sm:$0xff] %vm306, 0.0
        %322 = vst.msk [vmem:[#allocation2 + $0x78] sm:$0xff] %vm306, 0.0
      $region40: #{resnet_forward.17} parent=35 // pred_fallthru
        _
      %v323 = vld [vmem:[#allocation2] sm:$0xff]
      %v324 = vld [vmem:[#allocation2 + $0x8] sm:$0xff]
      %v325 = vld [vmem:[#allocation2 + $0x10] sm:$0xff]
      %v326 = vld [vmem:[#allocation2 + $0x18] sm:$0xff]
      %v327 = vld [vmem:[#allocation2 + $0x20] sm:$0xff]
      %v328 = vld [vmem:[#allocation2 + $0x28] sm:$0xff]
      %v329 = vld [vmem:[#allocation2 + $0x30] sm:$0xff]
      %v330 = vld [vmem:[#allocation2 + $0x38] sm:$0xff]
      %v331 = vld [vmem:[#allocation2 + $0x40] sm:$0xff]
      %v332 = vld [vmem:[#allocation2 + $0x48] sm:$0xff]
      %v333 = vld [vmem:[#allocation2 + $0x50] sm:$0xff]
      %v334 = vld [vmem:[#allocation2 + $0x58] sm:$0xff]
      %v335 = vld [vmem:[#allocation2 + $0x60] sm:$0xff]
      %v336 = vld [vmem:[#allocation2 + $0x68] sm:$0xff]
      %v337 = vld [vmem:[#allocation2 + $0x70] sm:$0xff]
      %v338 = vld [vmem:[#allocation2 + $0x78] sm:$0xff]
      %v339 = vld [vmem:[%s276] sm:$0xf]
      %v340 = vld [vmem:[%s276 + $0x4] sm:$0xf]
      %v341 = vld [vmem:[%s276 + $0x8] sm:$0xf]
      %v342 = vld [vmem:[%s276 + $0xc] sm:$0xf]
      %v343 = vld [vmem:[%s276 + $0x10] sm:$0xf]
      %v344 = vld [vmem:[%s276 + $0x14] sm:$0xf]
      %v345 = vld [vmem:[%s276 + $0x18] sm:$0xf]
      %v346 = vld [vmem:[%s276 + $0x1c] sm:$0xf]
      %v347 = vld [vmem:[%s276 + $0x20] sm:$0xf]
      %v348 = vld [vmem:[%s276 + $0x24] sm:$0xf]
      %v349 = vld [vmem:[%s276 + $0x28] sm:$0xf]
      %v350 = vld [vmem:[%s276 + $0x2c] sm:$0xf]
      %v351 = vld [vmem:[%s276 + $0x30] sm:$0xf]
      %v352 = vld [vmem:[%s276 + $0x34] sm:$0xf]
      %v353 = vld [vmem:[%s276 + $0x38] sm:$0xf]
      %v354 = vld [vmem:[%s276 + $0x3c] sm:$0xf]
      %v355 = vld [vmem:[%s285] sm:$0xf]
      %v356 = vld [vmem:[%s285 + $0x4] sm:$0xf]
      %v357 = vld [vmem:[%s285 + $0x8] sm:$0xf]
      %v358 = vld [vmem:[%s285 + $0xc] sm:$0xf]
      %v359 = vld [vmem:[%s285 + $0x10] sm:$0xf]
      %v360 = vld [vmem:[%s285 + $0x14] sm:$0xf]
      %v361 = vld [vmem:[%s285 + $0x18] sm:$0xf]
      %v362 = vld [vmem:[%s285 + $0x1c] sm:$0xf]
      %v379 = vunpack.c.l.b16 %v339
      %v380 = vunpack.c.l.b16 %v340
      %v381 = vunpack.c.l.b16 %v341
      %v382 = vunpack.c.l.b16 %v342
      %v383 = vunpack.c.l.b16 %v343
      %v384 = vunpack.c.l.b16 %v344
      %v385 = vunpack.c.l.b16 %v345
      %v386 = vunpack.c.l.b16 %v346
      %v387 = vunpack.c.l.b16 %v347
      %v388 = vunpack.c.l.b16 %v348
      %v389 = vunpack.c.l.b16 %v349
      %v390 = vunpack.c.l.b16 %v350
      %v391 = vunpack.c.l.b16 %v351
      %v392 = vunpack.c.l.b16 %v352
      %v393 = vunpack.c.l.b16 %v353
      %v394 = vunpack.c.l.b16 %v354
      %v395 = vpack.c.b16 %v380, %v379
      %v396 = vpack.c.b16 %v382, %v381
      %v397 = vpack.c.b16 %v384, %v383
      %v398 = vpack.c.b16 %v386, %v385
      %v399 = vpack.c.b16 %v388, %v387
      %v400 = vpack.c.b16 %v390, %v389
      %v401 = vpack.c.b16 %v392, %v391
      %v402 = vpack.c.b16 %v394, %v393
      %v411 = vunpack.c.l.b16 %v355
      %v412 = vunpack.c.l.b16 %v356
      %v413 = vunpack.c.l.b16 %v357
      %v414 = vunpack.c.l.b16 %v358
      %v415 = vunpack.c.l.b16 %v359
      %v416 = vunpack.c.l.b16 %v360
      %v417 = vunpack.c.l.b16 %v361
      %v418 = vunpack.c.l.b16 %v362
      %v419 = vpack.c.b16 %v412, %v411
      %v420 = vpack.c.b16 %v414, %v413
      %v421 = vpack.c.b16 %v416, %v415
      %v422 = vpack.c.b16 %v418, %v417
      %vm427 = vcmask 523264
      %v429 = vsel %vm427, %v395, 0
      %v432 = vsel %vm427, %v396, 0
      %v435 = vsel %vm427, %v397, 0
      %v438 = vsel %vm427, %v398, 0
      %v441 = vsel %vm427, %v399, 0
      %v444 = vsel %vm427, %v400, 0
      %v447 = vsel %vm427, %v401, 0
      %v450 = vsel %vm427, %v402, 0
      %452 = vmatpush.bf16.msra.mxu0 0
      %453 = vmatpush.bf16.msra.mxu0 0
      %454 = vmatpush.bf16.msra.mxu0 0
      %455 = vmatpush.bf16.msra.mxu0 0
      %456 = vmatpush.bf16.msra.mxu0 %v422
      %457 = vmatpush.bf16.msra.mxu0 %v421
      %458 = vmatpush.bf16.msra.mxu0 %v420
      %459 = vmatpush.bf16.msra.mxu0 %v419
      %460 = vmatmul.bf16.gmra.mxu0 %v429
      %v461 = vpop.f32.mrf.mxu0
      %v462 = vadd.f32 0.0, %v461
      %v463 = vpop.f32.mrf.mxu0
      %v464 = vadd.f32 0.0, %v463
      %465 = vmatmul.bf16.gmra.mxu0 %v432
      %v466 = vpop.f32.mrf.mxu0
      %v467 = vadd.f32 0.0, %v466
      %v468 = vpop.f32.mrf.mxu0
      %v469 = vadd.f32 0.0, %v468
      %470 = vmatmul.bf16.gmra.mxu0 %v435
      %v471 = vpop.f32.mrf.mxu0
      %v472 = vadd.f32 0.0, %v471
      %v473 = vpop.f32.mrf.mxu0
      %v474 = vadd.f32 0.0, %v473
      %475 = vmatmul.bf16.gmra.mxu0 %v438
      %v476 = vpop.f32.mrf.mxu0
      %v477 = vadd.f32 0.0, %v476
      %v478 = vpop.f32.mrf.mxu0
      %v479 = vadd.f32 0.0, %v478
      %480 = vmatmul.bf16.gmra.mxu0 %v441
      %v481 = vpop.f32.mrf.mxu0
      %v482 = vadd.f32 0.0, %v481
      %v483 = vpop.f32.mrf.mxu0
      %v484 = vadd.f32 0.0, %v483
      %485 = vmatmul.bf16.gmra.mxu0 %v444
      %v486 = vpop.f32.mrf.mxu0
      %v487 = vadd.f32 0.0, %v486
      %v488 = vpop.f32.mrf.mxu0
      %v489 = vadd.f32 0.0, %v488
      %490 = vmatmul.bf16.gmra.mxu0 %v447
      %v491 = vpop.f32.mrf.mxu0
      %v492 = vadd.f32 0.0, %v491
      %v493 = vpop.f32.mrf.mxu0
      %v494 = vadd.f32 0.0, %v493
      %495 = vmatmul.bf16.gmra.mxu0 %v450
      %v496 = vpop.f32.mrf.mxu0
      %v497 = vadd.f32 0.0, %v496
      %v498 = vpop.f32.mrf.mxu0
      %v499 = vadd.f32 0.0, %v498
      %500 = vdwg.mxu0
      %v501 = vadd.f32 %v323, %v462
      %v502 = vadd.f32 %v324, %v464
      %v503 = vadd.f32 %v325, %v467
      %v504 = vadd.f32 %v326, %v469
      %v505 = vadd.f32 %v327, %v472
      %v506 = vadd.f32 %v328, %v474
      %v507 = vadd.f32 %v329, %v477
      %v508 = vadd.f32 %v330, %v479
      %v509 = vadd.f32 %v331, %v482
      %v510 = vadd.f32 %v332, %v484
      %v511 = vadd.f32 %v333, %v487
      %v512 = vadd.f32 %v334, %v489
      %v513 = vadd.f32 %v335, %v492
      %v514 = vadd.f32 %v336, %v494
      %v515 = vadd.f32 %v337, %v497
      %v516 = vadd.f32 %v338, %v499
      %517 = vst.msk [vmem:[#allocation2] sm:$0xff] %vm427, %v501
      %518 = vst.msk [vmem:[#allocation2 + $0x8] sm:$0xff] %vm427, %v502
      %519 = vst.msk [vmem:[#allocation2 + $0x10] sm:$0xff] %vm427, %v503
      %520 = vst.msk [vmem:[#allocation2 + $0x18] sm:$0xff] %vm427, %v504
      %521 = vst.msk [vmem:[#allocation2 + $0x20] sm:$0xff] %vm427, %v505
      %522 = vst.msk [vmem:[#allocation2 + $0x28] sm:$0xff] %vm427, %v506
      %523 = vst.msk [vmem:[#allocation2 + $0x30] sm:$0xff] %vm427, %v507
      %524 = vst.msk [vmem:[#allocation2 + $0x38] sm:$0xff] %vm427, %v508
      %525 = vst.msk [vmem:[#allocation2 + $0x40] sm:$0xff] %vm427, %v509
      %526 = vst.msk [vmem:[#allocation2 + $0x48] sm:$0xff] %vm427, %v510
      %527 = vst.msk [vmem:[#allocation2 + $0x50] sm:$0xff] %vm427, %v511
      %528 = vst.msk [vmem:[#allocation2 + $0x58] sm:$0xff] %vm427, %v512
      %529 = vst.msk [vmem:[#allocation2 + $0x60] sm:$0xff] %vm427, %v513
      %530 = vst.msk [vmem:[#allocation2 + $0x68] sm:$0xff] %vm427, %v514
      %531 = vst.msk [vmem:[#allocation2 + $0x70] sm:$0xff] %vm427, %v515
      %532 = vst.msk [vmem:[#allocation2 + $0x78] sm:$0xff] %vm427, %v516
      %p533 = scmp.eq.s32.totalorder %s22, 8
      // Predicated region
      $region41: #{resnet_forward.17} parent=35 // pred_check
        %p534 = pneg %p533
      $region42: #{resnet_forward.17} parent=35 // pred_check_branch
        %536 = sbr.rel (%p534) target = $region44
      $region43: #{resnet_forward.17} parent=35 // pred_region
        %v537 = vld [vmem:[#allocation2] sm:$0xff]
        %v538 = vld [vmem:[#allocation2 + $0x8] sm:$0xff]
        %v539 = vld [vmem:[#allocation2 + $0x10] sm:$0xff]
        %v540 = vld [vmem:[#allocation2 + $0x18] sm:$0xff]
        %v541 = vld [vmem:[#allocation2 + $0x20] sm:$0xff]
        %v542 = vld [vmem:[#allocation2 + $0x28] sm:$0xff]
        %v543 = vld [vmem:[#allocation2 + $0x30] sm:$0xff]
        %v544 = vld [vmem:[#allocation2 + $0x38] sm:$0xff]
        %v545 = vld [vmem:[#allocation2 + $0x40] sm:$0xff]
        %v546 = vld [vmem:[#allocation2 + $0x48] sm:$0xff]
        %v547 = vld [vmem:[#allocation2 + $0x50] sm:$0xff]
        %v548 = vld [vmem:[#allocation2 + $0x58] sm:$0xff]
        %v549 = vld [vmem:[#allocation2 + $0x60] sm:$0xff]
        %v550 = vld [vmem:[#allocation2 + $0x68] sm:$0xff]
        %v551 = vld [vmem:[#allocation2 + $0x70] sm:$0xff]
        %v552 = vld [vmem:[#allocation2 + $0x78] sm:$0xff]
        %v553 = vld [vmem:[%s288] sm:$0x1]
        %v555 = vperm.slane %v553, 0
        %v557 = vmul.f32 %v537, %v555
        %v558 = vmul.f32 %v538, %v555
        %v559 = vmul.f32 %v539, %v555
        %v560 = vmul.f32 %v540, %v555
        %v561 = vmul.f32 %v541, %v555
        %v562 = vmul.f32 %v542, %v555
        %v563 = vmul.f32 %v543, %v555
        %v564 = vmul.f32 %v544, %v555
        %v565 = vmul.f32 %v545, %v555
        %v566 = vmul.f32 %v546, %v555
        %v567 = vmul.f32 %v547, %v555
        %v568 = vmul.f32 %v548, %v555
        %v569 = vmul.f32 %v549, %v555
        %v570 = vmul.f32 %v550, %v555
        %v571 = vmul.f32 %v551, %v555
        %v572 = vmul.f32 %v552, %v555
        %v573 = vld [vmem:[%s291] sm:$0x1]
        %v575 = vperm.slane %v573, 0
        %v577 = vadd.f32 %v557, %v575
        %v578 = vadd.f32 %v558, %v575
        %v579 = vadd.f32 %v559, %v575
        %v580 = vadd.f32 %v560, %v575
        %v581 = vadd.f32 %v561, %v575
        %v582 = vadd.f32 %v562, %v575
        %v583 = vadd.f32 %v563, %v575
        %v584 = vadd.f32 %v564, %v575
        %v585 = vadd.f32 %v565, %v575
        %v586 = vadd.f32 %v566, %v575
        %v587 = vadd.f32 %v567, %v575
        %v588 = vadd.f32 %v568, %v575
        %v589 = vadd.f32 %v569, %v575
        %v590 = vadd.f32 %v570, %v575
        %v591 = vadd.f32 %v571, %v575
        %v592 = vadd.f32 %v572, %v575
        %v593 = vmax.f32 %v577, 0.0
        %v594 = vmax.f32 %v578, 0.0
        %v595 = vmax.f32 %v579, 0.0
        %v596 = vmax.f32 %v580, 0.0
        %v597 = vmax.f32 %v581, 0.0
        %v598 = vmax.f32 %v582, 0.0
        %v599 = vmax.f32 %v583, 0.0
        %v600 = vmax.f32 %v584, 0.0
        %v601 = vmax.f32 %v585, 0.0
        %v602 = vmax.f32 %v586, 0.0
        %v603 = vmax.f32 %v587, 0.0
        %v604 = vmax.f32 %v588, 0.0
        %v605 = vmax.f32 %v589, 0.0
        %v606 = vmax.f32 %v590, 0.0
        %v607 = vmax.f32 %v591, 0.0
        %v608 = vmax.f32 %v592, 0.0
        %v609 = vpack.c.bf16 %v593, %v593
        %v610 = vpack.c.bf16 %v594, %v594
        %v611 = vpack.c.bf16 %v595, %v595
        %v612 = vpack.c.bf16 %v596, %v596
        %v613 = vpack.c.bf16 %v597, %v597
        %v614 = vpack.c.bf16 %v598, %v598
        %v615 = vpack.c.bf16 %v599, %v599
        %v616 = vpack.c.bf16 %v600, %v600
        %v617 = vpack.c.bf16 %v601, %v601
        %v618 = vpack.c.bf16 %v602, %v602
        %v619 = vpack.c.bf16 %v603, %v603
        %v620 = vpack.c.bf16 %v604, %v604
        %v621 = vpack.c.bf16 %v605, %v605
        %v622 = vpack.c.bf16 %v606, %v606
        %v623 = vpack.c.bf16 %v607, %v607
        %v624 = vpack.c.bf16 %v608, %v608
        %vm625 = vcmask 519168
        %626 = vst.msk [vmem:[%s299] sm:$0xf] %vm625, %v609
        %627 = vst.msk [vmem:[%s299 + $0x4] sm:$0xf] %vm625, %v610
        %628 = vst.msk [vmem:[%s299 + $0x8] sm:$0xf] %vm625, %v611
        %629 = vst.msk [vmem:[%s299 + $0xc] sm:$0xf] %vm625, %v612
        %630 = vst.msk [vmem:[%s299 + $0x10] sm:$0xf] %vm625, %v613
        %631 = vst.msk [vmem:[%s299 + $0x14] sm:$0xf] %vm625, %v614
        %632 = vst.msk [vmem:[%s299 + $0x18] sm:$0xf] %vm625, %v615
        %633 = vst.msk [vmem:[%s299 + $0x1c] sm:$0xf] %vm625, %v616
        %634 = vst.msk [vmem:[%s299 + $0x20] sm:$0xf] %vm625, %v617
        %635 = vst.msk [vmem:[%s299 + $0x24] sm:$0xf] %vm625, %v618
        %636 = vst.msk [vmem:[%s299 + $0x28] sm:$0xf] %vm625, %v619
        %637 = vst.msk [vmem:[%s299 + $0x2c] sm:$0xf] %vm625, %v620
        %638 = vst.msk [vmem:[%s299 + $0x30] sm:$0xf] %vm625, %v621
        %639 = vst.msk [vmem:[%s299 + $0x34] sm:$0xf] %vm625, %v622
        %640 = vst.msk [vmem:[%s299 + $0x38] sm:$0xf] %vm625, %v623
        %641 = vst.msk [vmem:[%s299 + $0x3c] sm:$0xf] %vm625, %v624
      $region44: #{resnet_forward.17} parent=35 // pred_fallthru
        _
      %s642 = smul.u32 16, %s20
      %p643 = scmp.lt.s32.totalorder %s642, 15
      %s644 = scalar_select %p643, %s642, 15
      %p645 = scmp.lt.s32.totalorder %s21, 0
      %s646 = scalar_select %p645, %s21, 0
      %s647 = sadd.s32 %s646, %s644
      %s648 = smul.addr %s647, 4
      %s649 = scalar_lea.vmem %s4, %s648
      // Predicated region
      $region45: #{resnet_forward.17} parent=35 // pred_check
        %p650 = pneg %p162
      $region46: #{resnet_forward.17} parent=35 // pred_check_branch
        %652 = sbr.rel (%p650) target = $region48
      $region47: #{resnet_forward.17} parent=35 // pred_region
        %s653 = smul.u32 16, %s20
      $region48: #{resnet_forward.17} parent=35 // pred_fallthru
        _
      // Predicated region
      $region49: #{resnet_forward.17} parent=35 // pred_check
        %p654 = pneg %p162
      $region50: #{resnet_forward.17} parent=35 // pred_check_branch
        %656 = sbr.rel (%p654) target = $region52
      $region51: #{resnet_forward.17} parent=35 // pred_region
        %s657 = smul.u32 16, %s20
        %p658 = scmp.lt.s32.totalorder %s657, 15
        %s659 = scalar_select %p658, %s657, 15
        %p660 = scmp.lt.s32.totalorder %s21, 0
        %s661 = scalar_select %p660, %s21, 0
        %s662 = sadd.s32 %s661, %s659
        %s663 = smul.addr %s662, 4
        %s664 = scalar_lea.vmem %s4, %s663
      $region52: #{resnet_forward.17} parent=35 // pred_fallthru
        _
    $region36: #{resnet_forward.17} parent=5 // pred_fallthru
      _
    %p665 = scmp.le.s32.totalorder 2, %s10
    // Predicated region
    $region53: #{resnet_forward.17} parent=5 // pred_check
      %p666 = pneg %p665
    $region54: #{resnet_forward.17} parent=5 // pred_check_branch
      %668 = sbr.rel (%p666) target = $region56
    $region55: #{resnet_forward.17} parent=5 // pred_region
      %s669 = ssub.s32 %s10, 2
    $region56: #{resnet_forward.17} parent=5 // pred_fallthru
      _
  $region6: #{resnet_forward.17} parent=0 // loop_footer
    %s14 = sadd.s32 1, %s10
  $region7: #{resnet_forward.17} parent=0 // loop_footer_branch
    %9 = sbr.rel target = $region3
  $region8: #{resnet_forward.17} parent=0 // loop_exit
    _

// kernel: resnet_forward.18
$region0: #{resnet_forward.18}
  #allocation0 [shape = 'u32[]', space=smem, size = 0x4, offset = 0x4, fixed_abs, tag = 'smem constant byte address 0x4 - core index']
  #allocation1 [shape = 'u32[72,128]{1,0:T(1,128)}', space=vmem, size = 0x9000, scoped, tag = 'internal scratch']
  #allocation2 [shape = 'f32[128,64]{1,0:T(8,128)}', space=vmem, size = 0x10000, scoped, tag = 'scratch operand']
  %s0 = inlined_call_operand.vmem [shape: bf16[9,128,64], index: 0, kind: input, shape index: {}]
  %s1 = inlined_call_operand.vmem [shape: bf16[9,64,64], index: 1, kind: input, shape index: {}]
  %s2 = inlined_call_operand.vmem [shape: f32[1,64], index: 2, kind: input, shape index: {}]
  %s3 = inlined_call_operand.vmem [shape: f32[1,64], index: 3, kind: input, shape index: {}]
  %s4 = inlined_call_operand.vmem [shape: bf16[128,64], index: 4, kind: input, shape index: {}]
  %s5 = inlined_call_operand.vmem [shape: bf16[128,64], index: 5, kind: output, shape index: {}]
  %s6 = sld [smem:[#allocation0]]
  $region61: #{resnet_forward.18} parent=0
    _
  %s8 = ssub.s32 1, %s6
  %s9 = scalar_select 0, %s8, %s6
  loop: start=0, step=1, limit=11
  $region2: #{resnet_forward.18} parent=0 // loop_pre_header
    _
  $region3: #{resnet_forward.18} parent=0 // loop_header
    %s11 = sphi 0, %s15
    %p12 = scmp.ge.s32.totalorder %s11, 11
    %s18 = sphi 0, %s37
    %s19 = sphi 0, %s33
    %s20 = sphi 0, %s29
    %s21 = sphi 0, %s18
    %s22 = sphi 0, %s19
    %s23 = sphi 0, %s20
    %s24 = sphi 0, %s21
    %s25 = sphi 0, %s22
    %s26 = sphi 0, %s23
    %s42 = sphi 0, %s44
    %s45 = sphi 0, %s42
    %s46 = sphi 0, %s45
    %s62 = sphi 0, %s46
    %s70 = sphi 0, %s72
    %s73 = sphi 0, %s70
    %s74 = sphi 0, %s73
    %s90 = sphi 0, %s74
    %s96 = sphi 0, %s98
    %s99 = sphi 0, %s96
    %s100 = sphi 0, %s99
    %s116 = sphi 0, %s100
    %s122 = sphi 0, %s124
    %s125 = sphi 0, %s122
    %s126 = sphi 0, %s125
    %s142 = sphi 0, %s126
    %s150 = sphi 0, %s152
    %s153 = sphi 0, %s150
    %s154 = sphi 0, %s153
    %s170 = sphi 0, %s154
    %s178 = sphi 0, %s180
    %s181 = sphi 0, %s178
    %s182 = sphi 0, %s181
    %s198 = sphi 0, %s182
  $region4: #{resnet_forward.18} parent=0 // loop_header_branch
    %14 = sbr.rel (%p12) target = $region8
  $region5: #{resnet_forward.18} parent=0 // loop_body
    %s16 = ssub.s32 %s11, 1
    %s17 = ssub.s32 %s11, 2
    %s27 = sadd.s32 1, %s20
    %p28 = scmp.ge.s32.totalorder %s27, 9
    %s29 = scalar_select %p28, 0, %s27
    %s30 = sadd.s32 1, %s19
    %s31 = scalar_select %p28, %s30, %s19
    %p32 = scmp.ge.s32.totalorder %s31, 1
    %s33 = scalar_select %p32, 0, %s31
    %s34 = sadd.s32 1, %s18
    %s35 = scalar_select %p32, %s34, %s18
    %p36 = scmp.ge.s32.totalorder %s35, 1
    %s37 = scalar_select %p36, 0, %s35
    %s38 = ssub.s32 %s20, %s29
    %s39 = ssub.s32 %s18, %s37
    %s40 = sor.u32 %s38, %s39
    %p41 = scmp.eq.s32.totalorder %s40, 0
    %s43 = sadd.s32 %s42, 1
    %s44 = scalar_select %p41, %s42, %s43
    %p47 = pneg %p41
    %p48 = scmp.eq.s32.totalorder %s11, 8
    %p49 = por %p47, %p48
    %p50 = scmp.ne.s32.totalorder %s42, %s45
    %p51 = scmp.eq.s32.totalorder %s11, 0
    %p52 = por %p50, %p51
    %p53 = scmp.ne.s32.totalorder %s42, %s45
    %p54 = scmp.eq.s32.totalorder %s16, 8
    %p55 = por %p53, %p54
    %p56 = scmp.ne.s32.totalorder %s45, %s46
    %p57 = scmp.eq.s32.totalorder %s16, 0
    %p58 = por %p56, %p57
    %p59 = scmp.ne.s32.totalorder %s45, %s46
    %p60 = scmp.eq.s32.totalorder %s17, 8
    %p61 = por %p59, %p60
    %p63 = scmp.ne.s32.totalorder %s46, %s62
    %p64 = scmp.eq.s32.totalorder %s17, 0
    %p65 = por %p63, %p64
    %s66 = ssub.s32 %s20, %s29
    %s67 = ssub.s32 %s19, %s33
    %s68 = sor.u32 %s66, %s67
    %p69 = scmp.eq.s32.totalorder %s68, 0
    %s71 = sadd.s32 %s70, 1
    %s72 = scalar_select %p69, %s70, %s71
    %p75 = pneg %p69
    %p76 = scmp.eq.s32.totalorder %s11, 8
    %p77 = por %p75, %p76
    %p78 = scmp.ne.s32.totalorder %s70, %s73
    %p79 = scmp.eq.s32.totalorder %s11, 0
    %p80 = por %p78, %p79
    %p81 = scmp.ne.s32.totalorder %s70, %s73
    %p82 = scmp.eq.s32.totalorder %s16, 8
    %p83 = por %p81, %p82
    %p84 = scmp.ne.s32.totalorder %s73, %s74
    %p85 = scmp.eq.s32.totalorder %s16, 0
    %p86 = por %p84, %p85
    %p87 = scmp.ne.s32.totalorder %s73, %s74
    %p88 = scmp.eq.s32.totalorder %s17, 8
    %p89 = por %p87, %p88
    %p91 = scmp.ne.s32.totalorder %s74, %s90
    %p92 = scmp.eq.s32.totalorder %s17, 0
    %p93 = por %p91, %p92
    %s94 = ssub.s32 %s19, %s33
    %p95 = scmp.eq.s32.totalorder %s94, 0
    %s97 = sadd.s32 %s96, 1
    %s98 = scalar_select %p95, %s96, %s97
    %p101 = pneg %p95
    %p102 = scmp.eq.s32.totalorder %s11, 8
    %p103 = por %p101, %p102
    %p104 = scmp.ne.s32.totalorder %s96, %s99
    %p105 = scmp.eq.s32.totalorder %s11, 0
    %p106 = por %p104, %p105
    %p107 = scmp.ne.s32.totalorder %s96, %s99
    %p108 = scmp.eq.s32.totalorder %s16, 8
    %p109 = por %p107, %p108
    %p110 = scmp.ne.s32.totalorder %s99, %s100
    %p111 = scmp.eq.s32.totalorder %s16, 0
    %p112 = por %p110, %p111
    %p113 = scmp.ne.s32.totalorder %s99, %s100
    %p114 = scmp.eq.s32.totalorder %s17, 8
    %p115 = por %p113, %p114
    %p117 = scmp.ne.s32.totalorder %s100, %s116
    %p118 = scmp.eq.s32.totalorder %s17, 0
    %p119 = por %p117, %p118
    %s120 = ssub.s32 %s19, %s33
    %p121 = scmp.eq.s32.totalorder %s120, 0
    %s123 = sadd.s32 %s122, 1
    %s124 = scalar_select %p121, %s122, %s123
    %p127 = pneg %p121
    %p128 = scmp.eq.s32.totalorder %s11, 8
    %p129 = por %p127, %p128
    %p130 = scmp.ne.s32.totalorder %s122, %s125
    %p131 = scmp.eq.s32.totalorder %s11, 0
    %p132 = por %p130, %p131
    %p133 = scmp.ne.s32.totalorder %s122, %s125
    %p134 = scmp.eq.s32.totalorder %s16, 8
    %p135 = por %p133, %p134
    %p136 = scmp.ne.s32.totalorder %s125, %s126
    %p137 = scmp.eq.s32.totalorder %s16, 0
    %p138 = por %p136, %p137
    %p139 = scmp.ne.s32.totalorder %s125, %s126
    %p140 = scmp.eq.s32.totalorder %s17, 8
    %p141 = por %p139, %p140
    %p143 = scmp.ne.s32.totalorder %s126, %s142
    %p144 = scmp.eq.s32.totalorder %s17, 0
    %p145 = por %p143, %p144
    %s146 = ssub.s32 %s18, %s37
    %s147 = ssub.s32 %s19, %s33
    %s148 = sor.u32 %s146, %s147
    %p149 = scmp.eq.s32.totalorder %s148, 0
    %s151 = sadd.s32 %s150, 1
    %s152 = scalar_select %p149, %s150, %s151
    %p155 = pneg %p149
    %p156 = scmp.eq.s32.totalorder %s11, 8
    %p157 = por %p155, %p156
    %p158 = scmp.ne.s32.totalorder %s150, %s153
    %p159 = scmp.eq.s32.totalorder %s11, 0
    %p160 = por %p158, %p159
    %p161 = scmp.ne.s32.totalorder %s150, %s153
    %p162 = scmp.eq.s32.totalorder %s16, 8
    %p163 = por %p161, %p162
    %p164 = scmp.ne.s32.totalorder %s153, %s154
    %p165 = scmp.eq.s32.totalorder %s16, 0
    %p166 = por %p164, %p165
    %p167 = scmp.ne.s32.totalorder %s153, %s154
    %p168 = scmp.eq.s32.totalorder %s17, 8
    %p169 = por %p167, %p168
    %p171 = scmp.ne.s32.totalorder %s154, %s170
    %p172 = scmp.eq.s32.totalorder %s17, 0
    %p173 = por %p171, %p172
    %s174 = ssub.s32 %s18, %s37
    %s175 = ssub.s32 %s19, %s33
    %s176 = sor.u32 %s174, %s175
    %p177 = scmp.eq.s32.totalorder %s176, 0
    %s179 = sadd.s32 %s178, 1
    %s180 = scalar_select %p177, %s178, %s179
    %p183 = pneg %p177
    %p184 = scmp.eq.s32.totalorder %s11, 8
    %p185 = por %p183, %p184
    %p186 = scmp.ne.s32.totalorder %s178, %s181
    %p187 = scmp.eq.s32.totalorder %s11, 0
    %p188 = por %p186, %p187
    %p189 = scmp.ne.s32.totalorder %s178, %s181
    %p190 = scmp.eq.s32.totalorder %s16, 8
    %p191 = por %p189, %p190
    %p192 = scmp.ne.s32.totalorder %s181, %s182
    %p193 = scmp.eq.s32.totalorder %s16, 0
    %p194 = por %p192, %p193
    %p195 = scmp.ne.s32.totalorder %s181, %s182
    %p196 = scmp.eq.s32.totalorder %s17, 8
    %p197 = por %p195, %p196
    %p199 = scmp.ne.s32.totalorder %s182, %s198
    %p200 = scmp.eq.s32.totalorder %s17, 0
    %p201 = por %p199, %p200
    %p202 = scmp.le.s32.totalorder 1, %s11
    %p203 = scmp.lt.s32.totalorder %s11, 10
    %p204 = pnand %p202, %p203
    %p205 = pneg %p204
    // Predicated region
    $region9: #{resnet_forward.18} parent=5 // pred_check
      _
    $region10: #{resnet_forward.18} parent=5 // pred_check_branch
      %207 = sbr.rel (%p204) target = $region12
    $region11: #{resnet_forward.18} parent=5 // pred_region
      %s208 = ssub.s32 %s11, 1
      // Predicated region
      $region13: #{resnet_forward.18} parent=11 // pred_check
        %p209 = pneg %p112
      $region14: #{resnet_forward.18} parent=11 // pred_check_branch
        %211 = sbr.rel (%p209) target = $region16
      $region15: #{resnet_forward.18} parent=11 // pred_region
        %p212 = scmp.lt.s32.totalorder %s22, 0
        %s213 = scalar_select %p212, %s22, 0
        %s214 = scalar_lea.vmem %s2, %s213
      $region16: #{resnet_forward.18} parent=11 // pred_fallthru
        _
      // Predicated region
      $region17: #{resnet_forward.18} parent=11 // pred_check
        %p215 = pneg %p138
      $region18: #{resnet_forward.18} parent=11 // pred_check_branch
        %217 = sbr.rel (%p215) target = $region20
      $region19: #{resnet_forward.18} parent=11 // pred_region
        %p218 = scmp.lt.s32.totalorder %s22, 0
        %s219 = scalar_select %p218, %s22, 0
        %s220 = scalar_lea.vmem %s3, %s219
      $region20: #{resnet_forward.18} parent=11 // pred_fallthru
        _
      // Predicated region
      $region21: #{resnet_forward.18} parent=11 // pred_check
        %p221 = pneg %p166
      $region22: #{resnet_forward.18} parent=11 // pred_check_branch
        %223 = sbr.rel (%p221) target = $region24
      $region23: #{resnet_forward.18} parent=11 // pred_region
        %s224 = smul.u32 16, %s21
        %p225 = scmp.lt.s32.totalorder %s224, 15
        %s226 = scalar_select %p225, %s224, 15
        %p227 = scmp.lt.s32.totalorder %s22, 0
        %s228 = scalar_select %p227, %s22, 0
        %s229 = sadd.s32 %s228, %s226
        %s230 = smul.addr %s229, 4
        %s231 = scalar_lea.vmem %s4, %s230
        %s232 = smul.u32 16, %s21
      $region24: #{resnet_forward.18} parent=11 // pred_fallthru
        _
    $region12: #{resnet_forward.18} parent=5 // pred_fallthru
      _
    %p233 = scmp.lt.s32.totalorder %s11, 9
    // Predicated region
    $region25: #{resnet_forward.18} parent=5 // pred_check
      %p234 = pneg %p233
    $region26: #{resnet_forward.18} parent=5 // pred_check_branch
      %236 = sbr.rel (%p234) target = $region28
    $region27: #{resnet_forward.18} parent=5 // pred_region
      // Predicated region
      $region29: #{resnet_forward.18} parent=27 // pred_check
        %p237 = pneg %p52
      $region30: #{resnet_forward.18} parent=27 // pred_check_branch
        %239 = sbr.rel (%p237) target = $region32
      $region31: #{resnet_forward.18} parent=27 // pred_region
        %s240 = smul.u32 16, %s18
        %p241 = scmp.lt.s32.totalorder %s20, 8
        %s242 = scalar_select %p241, %s20, 8
        %p243 = scmp.lt.s32.totalorder %s240, 15
        %s244 = scalar_select %p243, %s240, 15
        %s245 = smul.addr %s242, 16
        %s246 = sadd.s32 %s244, %s245
        %s247 = smul.addr %s246, 4
        %s248 = scalar_lea.vmem %s0, %s247
        %s249 = smul.u32 16, %s18
      $region32: #{resnet_forward.18} parent=27 // pred_fallthru
        _
      // Predicated region
      $region33: #{resnet_forward.18} parent=27 // pred_check
        %p250 = pneg %p80
      $region34: #{resnet_forward.18} parent=27 // pred_check_branch
        %252 = sbr.rel (%p250) target = $region36
      $region35: #{resnet_forward.18} parent=27 // pred_region
        %p253 = scmp.lt.s32.totalorder %s20, 8
        %s254 = scalar_select %p253, %s20, 8
        %p255 = scmp.lt.s32.totalorder %s19, 0
        %s256 = scalar_select %p255, %s19, 0
        %s257 = smul.addr %s254, 8
        %s258 = sadd.s32 %s256, %s257
        %s259 = smul.addr %s258, 4
        %s260 = scalar_lea.vmem %s1, %s259
      $region36: #{resnet_forward.18} parent=27 // pred_fallthru
        _
    $region28: #{resnet_forward.18} parent=5 // pred_fallthru
      _
    %p261 = scmp.le.s32.totalorder 1, %s11
    %p262 = scmp.lt.s32.totalorder %s11, 10
    %p263 = pnand %p261, %p262
    %p264 = pneg %p263
    // Predicated region
    $region37: #{resnet_forward.18} parent=5 // pred_check
      _
    $region38: #{resnet_forward.18} parent=5 // pred_check_branch
      %266 = sbr.rel (%p263) target = $region40
    $region39: #{resnet_forward.18} parent=5 // pred_region
      %s267 = ssub.s32 %s11, 1
      %s268 = smul.u32 16, %s21
      %p269 = scmp.lt.s32.totalorder %s23, 8
      %s270 = scalar_select %p269, %s23, 8
      %p271 = scmp.lt.s32.totalorder %s268, 15
      %s272 = scalar_select %p271, %s268, 15
      %s273 = smul.addr %s270, 16
      %s274 = sadd.s32 %s272, %s273
      %s275 = smul.addr %s274, 4
      %s276 = scalar_lea.vmem %s0, %s275
      %p277 = pneg %p58
      %p278 = pneg %p55
      %p279 = scmp.lt.s32.totalorder %s23, 8
      %s280 = scalar_select %p279, %s23, 8
      %p281 = scmp.lt.s32.totalorder %s22, 0
      %s282 = scalar_select %p281, %s22, 0
      %s283 = smul.addr %s280, 8
      %s284 = sadd.s32 %s282, %s283
      %s285 = smul.addr %s284, 4
      %s286 = scalar_lea.vmem %s1, %s285
      %p287 = pneg %p86
      %p288 = pneg %p83
      %p289 = scmp.lt.s32.totalorder %s22, 0
      %s290 = scalar_select %p289, %s22, 0
      %s291 = scalar_lea.vmem %s2, %s290
      %p292 = pneg %p112
      %p293 = pneg %p109
      %p294 = scmp.lt.s32.totalorder %s22, 0
      %s295 = scalar_select %p294, %s22, 0
      %s296 = scalar_lea.vmem %s3, %s295
      %p297 = pneg %p138
      %p298 = pneg %p135
      %s299 = smul.u32 16, %s21
      %p300 = scmp.lt.s32.totalorder %s299, 15
      %s301 = scalar_select %p300, %s299, 15
      %p302 = scmp.lt.s32.totalorder %s22, 0
      %s303 = scalar_select %p302, %s22, 0
      %s304 = sadd.s32 %s303, %s301
      %s305 = smul.addr %s304, 4
      %s306 = scalar_lea.vmem %s4, %s305
      %p307 = pneg %p166
      %p308 = pneg %p163
      %p309 = pneg %p194
      %p310 = pneg %p191
      %s311 = smul.u32 16, %s21
      %p312 = scmp.lt.s32.totalorder %s311, 15
      %s313 = scalar_select %p312, %s311, 15
      %p314 = scmp.lt.s32.totalorder %s22, 0
      %s315 = scalar_select %p314, %s22, 0
      %s316 = sadd.s32 %s315, %s313
      %s317 = smul.addr %s316, 4
      %s318 = scalar_lea.vmem %s5, %s317
      %s319 = smul.u32 16, %s21
      %p320 = scmp.lt.s32.totalorder %s23, 8
      %s321 = scalar_select %p320, %s23, 8
      %p322 = scmp.lt.s32.totalorder %s319, 15
      %s323 = scalar_select %p322, %s319, 15
      %s324 = smul.addr %s321, 16
      %s325 = sadd.s32 %s323, %s324
      %s326 = smul.addr %s325, 4
      %s327 = scalar_lea.vmem %s0, %s326
      %s328 = smul.u32 16, %s21
      %p329 = scmp.lt.s32.totalorder %s23, 8
      %s330 = scalar_select %p329, %s23, 8
      %p331 = scmp.lt.s32.totalorder %s22, 0
      %s332 = scalar_select %p331, %s22, 0
      %s333 = smul.addr %s330, 8
      %s334 = sadd.s32 %s332, %s333
      %s335 = smul.addr %s334, 4
      %s336 = scalar_lea.vmem %s1, %s335
      %p337 = scmp.lt.s32.totalorder %s22, 0
      %s338 = scalar_select %p337, %s22, 0
      %s339 = scalar_lea.vmem %s2, %s338
      %p340 = scmp.lt.s32.totalorder %s22, 0
      %s341 = scalar_select %p340, %s22, 0
      %s342 = scalar_lea.vmem %s3, %s341
      %s343 = smul.u32 16, %s21
      %p344 = scmp.lt.s32.totalorder %s343, 15
      %s345 = scalar_select %p344, %s343, 15
      %p346 = scmp.lt.s32.totalorder %s22, 0
      %s347 = scalar_select %p346, %s22, 0
      %s348 = sadd.s32 %s347, %s345
      %s349 = smul.addr %s348, 4
      %s350 = scalar_lea.vmem %s4, %s349
      %s351 = smul.u32 16, %s21
      %s352 = smul.u32 16, %s21
      %p353 = scmp.lt.s32.totalorder %s352, 15
      %s354 = scalar_select %p353, %s352, 15
      %p355 = scmp.lt.s32.totalorder %s22, 0
      %s356 = scalar_select %p355, %s22, 0
      %s357 = sadd.s32 %s356, %s354
      %s358 = smul.addr %s357, 4
      %s359 = scalar_lea.vmem %s5, %s358
      %s360 = smul.u32 16, %s21
      %p362 = scmp.eq.s32.totalorder %s23, 0
      // Predicated region
      $region41: #{resnet_forward.18} parent=39 // pred_check
        %p363 = pneg %p362
      $region42: #{resnet_forward.18} parent=39 // pred_check_branch
        %365 = sbr.rel (%p363) target = $region44
      $region43: #{resnet_forward.18} parent=39 // pred_region
        %vm366 = vcmask 523264
        %367 = vst.msk [vmem:[#allocation2] sm:$0xff] %vm366, 0.0
        %368 = vst.msk [vmem:[#allocation2 + $0x8] sm:$0xff] %vm366, 0.0
        %369 = vst.msk [vmem:[#allocation2 + $0x10] sm:$0xff] %vm366, 0.0
        %370 = vst.msk [vmem:[#allocation2 + $0x18] sm:$0xff] %vm366, 0.0
        %371 = vst.msk [vmem:[#allocation2 + $0x20] sm:$0xff] %vm366, 0.0
        %372 = vst.msk [vmem:[#allocation2 + $0x28] sm:$0xff] %vm366, 0.0
        %373 = vst.msk [vmem:[#allocation2 + $0x30] sm:$0xff] %vm366, 0.0
        %374 = vst.msk [vmem:[#allocation2 + $0x38] sm:$0xff] %vm366, 0.0
        %375 = vst.msk [vmem:[#allocation2 + $0x40] sm:$0xff] %vm366, 0.0
        %376 = vst.msk [vmem:[#allocation2 + $0x48] sm:$0xff] %vm366, 0.0
        %377 = vst.msk [vmem:[#allocation2 + $0x50] sm:$0xff] %vm366, 0.0
        %378 = vst.msk [vmem:[#allocation2 + $0x58] sm:$0xff] %vm366, 0.0
        %379 = vst.msk [vmem:[#allocation2 + $0x60] sm:$0xff] %vm366, 0.0
        %380 = vst.msk [vmem:[#allocation2 + $0x68] sm:$0xff] %vm366, 0.0
        %381 = vst.msk [vmem:[#allocation2 + $0x70] sm:$0xff] %vm366, 0.0
        %382 = vst.msk [vmem:[#allocation2 + $0x78] sm:$0xff] %vm366, 0.0
      $region44: #{resnet_forward.18} parent=39 // pred_fallthru
        _
      %v383 = vld [vmem:[#allocation2] sm:$0xff]
      %v384 = vld [vmem:[#allocation2 + $0x8] sm:$0xff]
      %v385 = vld [vmem:[#allocation2 + $0x10] sm:$0xff]
      %v386 = vld [vmem:[#allocation2 + $0x18] sm:$0xff]
      %v387 = vld [vmem:[#allocation2 + $0x20] sm:$0xff]
      %v388 = vld [vmem:[#allocation2 + $0x28] sm:$0xff]
      %v389 = vld [vmem:[#allocation2 + $0x30] sm:$0xff]
      %v390 = vld [vmem:[#allocation2 + $0x38] sm:$0xff]
      %v391 = vld [vmem:[#allocation2 + $0x40] sm:$0xff]
      %v392 = vld [vmem:[#allocation2 + $0x48] sm:$0xff]
      %v393 = vld [vmem:[#allocation2 + $0x50] sm:$0xff]
      %v394 = vld [vmem:[#allocation2 + $0x58] sm:$0xff]
      %v395 = vld [vmem:[#allocation2 + $0x60] sm:$0xff]
      %v396 = vld [vmem:[#allocation2 + $0x68] sm:$0xff]
      %v397 = vld [vmem:[#allocation2 + $0x70] sm:$0xff]
      %v398 = vld [vmem:[#allocation2 + $0x78] sm:$0xff]
      %v399 = vld [vmem:[%s327] sm:$0xf]
      %v400 = vld [vmem:[%s327 + $0x4] sm:$0xf]
      %v401 = vld [vmem:[%s327 + $0x8] sm:$0xf]
      %v402 = vld [vmem:[%s327 + $0xc] sm:$0xf]
      %v403 = vld [vmem:[%s327 + $0x10] sm:$0xf]
      %v404 = vld [vmem:[%s327 + $0x14] sm:$0xf]
      %v405 = vld [vmem:[%s327 + $0x18] sm:$0xf]
      %v406 = vld [vmem:[%s327 + $0x1c] sm:$0xf]
      %v407 = vld [vmem:[%s327 + $0x20] sm:$0xf]
      %v408 = vld [vmem:[%s327 + $0x24] sm:$0xf]
      %v409 = vld [vmem:[%s327 + $0x28] sm:$0xf]
      %v410 = vld [vmem:[%s327 + $0x2c] sm:$0xf]
      %v411 = vld [vmem:[%s327 + $0x30] sm:$0xf]
      %v412 = vld [vmem:[%s327 + $0x34] sm:$0xf]
      %v413 = vld [vmem:[%s327 + $0x38] sm:$0xf]
      %v414 = vld [vmem:[%s327 + $0x3c] sm:$0xf]
      %v415 = vld [vmem:[%s336] sm:$0xf]
      %v416 = vld [vmem:[%s336 + $0x4] sm:$0xf]
      %v417 = vld [vmem:[%s336 + $0x8] sm:$0xf]
      %v418 = vld [vmem:[%s336 + $0xc] sm:$0xf]
      %v419 = vld [vmem:[%s336 + $0x10] sm:$0xf]
      %v420 = vld [vmem:[%s336 + $0x14] sm:$0xf]
      %v421 = vld [vmem:[%s336 + $0x18] sm:$0xf]
      %v422 = vld [vmem:[%s336 + $0x1c] sm:$0xf]
      %v439 = vunpack.c.l.b16 %v399
      %v440 = vunpack.c.l.b16 %v400
      %v441 = vunpack.c.l.b16 %v401
      %v442 = vunpack.c.l.b16 %v402
      %v443 = vunpack.c.l.b16 %v403
      %v444 = vunpack.c.l.b16 %v404
      %v445 = vunpack.c.l.b16 %v405
      %v446 = vunpack.c.l.b16 %v406
      %v447 = vunpack.c.l.b16 %v407
      %v448 = vunpack.c.l.b16 %v408
      %v449 = vunpack.c.l.b16 %v409
      %v450 = vunpack.c.l.b16 %v410
      %v451 = vunpack.c.l.b16 %v411
      %v452 = vunpack.c.l.b16 %v412
      %v453 = vunpack.c.l.b16 %v413
      %v454 = vunpack.c.l.b16 %v414
      %v455 = vpack.c.b16 %v440, %v439
      %v456 = vpack.c.b16 %v442, %v441
      %v457 = vpack.c.b16 %v444, %v443
      %v458 = vpack.c.b16 %v446, %v445
      %v459 = vpack.c.b16 %v448, %v447
      %v460 = vpack.c.b16 %v450, %v449
      %v461 = vpack.c.b16 %v452, %v451
      %v462 = vpack.c.b16 %v454, %v453
      %v471 = vunpack.c.l.b16 %v415
      %v472 = vunpack.c.l.b16 %v416
      %v473 = vunpack.c.l.b16 %v417
      %v474 = vunpack.c.l.b16 %v418
      %v475 = vunpack.c.l.b16 %v419
      %v476 = vunpack.c.l.b16 %v420
      %v477 = vunpack.c.l.b16 %v421
      %v478 = vunpack.c.l.b16 %v422
      %v479 = vpack.c.b16 %v472, %v471
      %v480 = vpack.c.b16 %v474, %v473
      %v481 = vpack.c.b16 %v476, %v475
      %v482 = vpack.c.b16 %v478, %v477
      %vm487 = vcmask 523264
      %v489 = vsel %vm487, %v455, 0
      %v492 = vsel %vm487, %v456, 0
      %v495 = vsel %vm487, %v457, 0
      %v498 = vsel %vm487, %v458, 0
      %v501 = vsel %vm487, %v459, 0
      %v504 = vsel %vm487, %v460, 0
      %v507 = vsel %vm487, %v461, 0
      %v510 = vsel %vm487, %v462, 0
      %512 = vmatpush.bf16.msra.mxu0 0
      %513 = vmatpush.bf16.msra.mxu0 0
      %514 = vmatpush.bf16.msra.mxu0 0
      %515 = vmatpush.bf16.msra.mxu0 0
      %516 = vmatpush.bf16.msra.mxu0 %v482
      %517 = vmatpush.bf16.msra.mxu0 %v481
      %518 = vmatpush.bf16.msra.mxu0 %v480
      %519 = vmatpush.bf16.msra.mxu0 %v479
      %520 = vmatmul.bf16.gmra.mxu0 %v489
      %v521 = vpop.f32.mrf.mxu0
      %v522 = vadd.f32 0.0, %v521
      %v523 = vpop.f32.mrf.mxu0
      %v524 = vadd.f32 0.0, %v523
      %525 = vmatmul.bf16.gmra.mxu0 %v492
      %v526 = vpop.f32.mrf.mxu0
      %v527 = vadd.f32 0.0, %v526
      %v528 = vpop.f32.mrf.mxu0
      %v529 = vadd.f32 0.0, %v528
      %530 = vmatmul.bf16.gmra.mxu0 %v495
      %v531 = vpop.f32.mrf.mxu0
      %v532 = vadd.f32 0.0, %v531
      %v533 = vpop.f32.mrf.mxu0
      %v534 = vadd.f32 0.0, %v533
      %535 = vmatmul.bf16.gmra.mxu0 %v498
      %v536 = vpop.f32.mrf.mxu0
      %v537 = vadd.f32 0.0, %v536
      %v538 = vpop.f32.mrf.mxu0
      %v539 = vadd.f32 0.0, %v538
      %540 = vmatmul.bf16.gmra.mxu0 %v501
      %v541 = vpop.f32.mrf.mxu0
      %v542 = vadd.f32 0.0, %v541
      %v543 = vpop.f32.mrf.mxu0
      %v544 = vadd.f32 0.0, %v543
      %545 = vmatmul.bf16.gmra.mxu0 %v504
      %v546 = vpop.f32.mrf.mxu0
      %v547 = vadd.f32 0.0, %v546
      %v548 = vpop.f32.mrf.mxu0
      %v549 = vadd.f32 0.0, %v548
      %550 = vmatmul.bf16.gmra.mxu0 %v507
      %v551 = vpop.f32.mrf.mxu0
      %v552 = vadd.f32 0.0, %v551
      %v553 = vpop.f32.mrf.mxu0
      %v554 = vadd.f32 0.0, %v553
      %555 = vmatmul.bf16.gmra.mxu0 %v510
      %v556 = vpop.f32.mrf.mxu0
      %v557 = vadd.f32 0.0, %v556
      %v558 = vpop.f32.mrf.mxu0
      %v559 = vadd.f32 0.0, %v558
      %560 = vdwg.mxu0
      %v561 = vadd.f32 %v383, %v522
      %v562 = vadd.f32 %v384, %v524
      %v563 = vadd.f32 %v385, %v527
      %v564 = vadd.f32 %v386, %v529
      %v565 = vadd.f32 %v387, %v532
      %v566 = vadd.f32 %v388, %v534
      %v567 = vadd.f32 %v389, %v537
      %v568 = vadd.f32 %v390, %v539
      %v569 = vadd.f32 %v391, %v542
      %v570 = vadd.f32 %v392, %v544
      %v571 = vadd.f32 %v393, %v547
      %v572 = vadd.f32 %v394, %v549
      %v573 = vadd.f32 %v395, %v552
      %v574 = vadd.f32 %v396, %v554
      %v575 = vadd.f32 %v397, %v557
      %v576 = vadd.f32 %v398, %v559
      %577 = vst.msk [vmem:[#allocation2] sm:$0xff] %vm487, %v561
      %578 = vst.msk [vmem:[#allocation2 + $0x8] sm:$0xff] %vm487, %v562
      %579 = vst.msk [vmem:[#allocation2 + $0x10] sm:$0xff] %vm487, %v563
      %580 = vst.msk [vmem:[#allocation2 + $0x18] sm:$0xff] %vm487, %v564
      %581 = vst.msk [vmem:[#allocation2 + $0x20] sm:$0xff] %vm487, %v565
      %582 = vst.msk [vmem:[#allocation2 + $0x28] sm:$0xff] %vm487, %v566
      %583 = vst.msk [vmem:[#allocation2 + $0x30] sm:$0xff] %vm487, %v567
      %584 = vst.msk [vmem:[#allocation2 + $0x38] sm:$0xff] %vm487, %v568
      %585 = vst.msk [vmem:[#allocation2 + $0x40] sm:$0xff] %vm487, %v569
      %586 = vst.msk [vmem:[#allocation2 + $0x48] sm:$0xff] %vm487, %v570
      %587 = vst.msk [vmem:[#allocation2 + $0x50] sm:$0xff] %vm487, %v571
      %588 = vst.msk [vmem:[#allocation2 + $0x58] sm:$0xff] %vm487, %v572
      %589 = vst.msk [vmem:[#allocation2 + $0x60] sm:$0xff] %vm487, %v573
      %590 = vst.msk [vmem:[#allocation2 + $0x68] sm:$0xff] %vm487, %v574
      %591 = vst.msk [vmem:[#allocation2 + $0x70] sm:$0xff] %vm487, %v575
      %592 = vst.msk [vmem:[#allocation2 + $0x78] sm:$0xff] %vm487, %v576
      %p593 = scmp.eq.s32.totalorder %s23, 8
      // Predicated region
      $region45: #{resnet_forward.18} parent=39 // pred_check
        %p594 = pneg %p593
      $region46: #{resnet_forward.18} parent=39 // pred_check_branch
        %596 = sbr.rel (%p594) target = $region48
      $region47: #{resnet_forward.18} parent=39 // pred_region
        %v597 = vld [vmem:[#allocation2] sm:$0xff]
        %v598 = vld [vmem:[#allocation2 + $0x8] sm:$0xff]
        %v599 = vld [vmem:[#allocation2 + $0x10] sm:$0xff]
        %v600 = vld [vmem:[#allocation2 + $0x18] sm:$0xff]
        %v601 = vld [vmem:[#allocation2 + $0x20] sm:$0xff]
        %v602 = vld [vmem:[#allocation2 + $0x28] sm:$0xff]
        %v603 = vld [vmem:[#allocation2 + $0x30] sm:$0xff]
        %v604 = vld [vmem:[#allocation2 + $0x38] sm:$0xff]
        %v605 = vld [vmem:[#allocation2 + $0x40] sm:$0xff]
        %v606 = vld [vmem:[#allocation2 + $0x48] sm:$0xff]
        %v607 = vld [vmem:[#allocation2 + $0x50] sm:$0xff]
        %v608 = vld [vmem:[#allocation2 + $0x58] sm:$0xff]
        %v609 = vld [vmem:[#allocation2 + $0x60] sm:$0xff]
        %v610 = vld [vmem:[#allocation2 + $0x68] sm:$0xff]
        %v611 = vld [vmem:[#allocation2 + $0x70] sm:$0xff]
        %v612 = vld [vmem:[#allocation2 + $0x78] sm:$0xff]
        %v613 = vld [vmem:[%s339] sm:$0x1]
        %v615 = vperm.slane %v613, 0
        %v617 = vmul.f32 %v597, %v615
        %v618 = vmul.f32 %v598, %v615
        %v619 = vmul.f32 %v599, %v615
        %v620 = vmul.f32 %v600, %v615
        %v621 = vmul.f32 %v601, %v615
        %v622 = vmul.f32 %v602, %v615
        %v623 = vmul.f32 %v603, %v615
        %v624 = vmul.f32 %v604, %v615
        %v625 = vmul.f32 %v605, %v615
        %v626 = vmul.f32 %v606, %v615
        %v627 = vmul.f32 %v607, %v615
        %v628 = vmul.f32 %v608, %v615
        %v629 = vmul.f32 %v609, %v615
        %v630 = vmul.f32 %v610, %v615
        %v631 = vmul.f32 %v611, %v615
        %v632 = vmul.f32 %v612, %v615
        %v633 = vld [vmem:[%s342] sm:$0x1]
        %v635 = vperm.slane %v633, 0
        %v637 = vadd.f32 %v617, %v635
        %v638 = vadd.f32 %v618, %v635
        %v639 = vadd.f32 %v619, %v635
        %v640 = vadd.f32 %v620, %v635
        %v641 = vadd.f32 %v621, %v635
        %v642 = vadd.f32 %v622, %v635
        %v643 = vadd.f32 %v623, %v635
        %v644 = vadd.f32 %v624, %v635
        %v645 = vadd.f32 %v625, %v635
        %v646 = vadd.f32 %v626, %v635
        %v647 = vadd.f32 %v627, %v635
        %v648 = vadd.f32 %v628, %v635
        %v649 = vadd.f32 %v629, %v635
        %v650 = vadd.f32 %v630, %v635
        %v651 = vadd.f32 %v631, %v635
        %v652 = vadd.f32 %v632, %v635
        %v653 = vld [vmem:[%s350] sm:$0xf]
        %v654 = vld [vmem:[%s350 + $0x4] sm:$0xf]
        %v655 = vld [vmem:[%s350 + $0x8] sm:$0xf]
        %v656 = vld [vmem:[%s350 + $0xc] sm:$0xf]
        %v657 = vld [vmem:[%s350 + $0x10] sm:$0xf]
        %v658 = vld [vmem:[%s350 + $0x14] sm:$0xf]
        %v659 = vld [vmem:[%s350 + $0x18] sm:$0xf]
        %v660 = vld [vmem:[%s350 + $0x1c] sm:$0xf]
        %v661 = vld [vmem:[%s350 + $0x20] sm:$0xf]
        %v662 = vld [vmem:[%s350 + $0x24] sm:$0xf]
        %v663 = vld [vmem:[%s350 + $0x28] sm:$0xf]
        %v664 = vld [vmem:[%s350 + $0x2c] sm:$0xf]
        %v665 = vld [vmem:[%s350 + $0x30] sm:$0xf]
        %v666 = vld [vmem:[%s350 + $0x34] sm:$0xf]
        %v667 = vld [vmem:[%s350 + $0x38] sm:$0xf]
        %v668 = vld [vmem:[%s350 + $0x3c] sm:$0xf]
        %v669 = vunpack.c.l.bf16 %v653
        %v670 = vunpack.c.l.bf16 %v654
        %v671 = vunpack.c.l.bf16 %v655
        %v672 = vunpack.c.l.bf16 %v656
        %v673 = vunpack.c.l.bf16 %v657
        %v674 = vunpack.c.l.bf16 %v658
        %v675 = vunpack.c.l.bf16 %v659
        %v676 = vunpack.c.l.bf16 %v660
        %v677 = vunpack.c.l.bf16 %v661
        %v678 = vunpack.c.l.bf16 %v662
        %v679 = vunpack.c.l.bf16 %v663
        %v680 = vunpack.c.l.bf16 %v664
        %v681 = vunpack.c.l.bf16 %v665
        %v682 = vunpack.c.l.bf16 %v666
        %v683 = vunpack.c.l.bf16 %v667
        %v684 = vunpack.c.l.bf16 %v668
        %v685 = vadd.f32 %v637, %v669
        %v686 = vadd.f32 %v638, %v670
        %v687 = vadd.f32 %v639, %v671
        %v688 = vadd.f32 %v640, %v672
        %v689 = vadd.f32 %v641, %v673
        %v690 = vadd.f32 %v642, %v674
        %v691 = vadd.f32 %v643, %v675
        %v692 = vadd.f32 %v644, %v676
        %v693 = vadd.f32 %v645, %v677
        %v694 = vadd.f32 %v646, %v678
        %v695 = vadd.f32 %v647, %v679
        %v696 = vadd.f32 %v648, %v680
        %v697 = vadd.f32 %v649, %v681
        %v698 = vadd.f32 %v650, %v682
        %v699 = vadd.f32 %v651, %v683
        %v700 = vadd.f32 %v652, %v684
        %v701 = vmax.f32 %v685, 0.0
        %v702 = vmax.f32 %v686, 0.0
        %v703 = vmax.f32 %v687, 0.0
        %v704 = vmax.f32 %v688, 0.0
        %v705 = vmax.f32 %v689, 0.0
        %v706 = vmax.f32 %v690, 0.0
        %v707 = vmax.f32 %v691, 0.0
        %v708 = vmax.f32 %v692, 0.0
        %v709 = vmax.f32 %v693, 0.0
        %v710 = vmax.f32 %v694, 0.0
        %v711 = vmax.f32 %v695, 0.0
        %v712 = vmax.f32 %v696, 0.0
        %v713 = vmax.f32 %v697, 0.0
        %v714 = vmax.f32 %v698, 0.0
        %v715 = vmax.f32 %v699, 0.0
        %v716 = vmax.f32 %v700, 0.0
        %v717 = vpack.c.bf16 %v701, %v701
        %v718 = vpack.c.bf16 %v702, %v702
        %v719 = vpack.c.bf16 %v703, %v703
        %v720 = vpack.c.bf16 %v704, %v704
        %v721 = vpack.c.bf16 %v705, %v705
        %v722 = vpack.c.bf16 %v706, %v706
        %v723 = vpack.c.bf16 %v707, %v707
        %v724 = vpack.c.bf16 %v708, %v708
        %v725 = vpack.c.bf16 %v709, %v709
        %v726 = vpack.c.bf16 %v710, %v710
        %v727 = vpack.c.bf16 %v711, %v711
        %v728 = vpack.c.bf16 %v712, %v712
        %v729 = vpack.c.bf16 %v713, %v713
        %v730 = vpack.c.bf16 %v714, %v714
        %v731 = vpack.c.bf16 %v715, %v715
        %v732 = vpack.c.bf16 %v716, %v716
        %vm733 = vcmask 519168
        %734 = vst.msk [vmem:[%s359] sm:$0xf] %vm733, %v717
        %735 = vst.msk [vmem:[%s359 + $0x4] sm:$0xf] %vm733, %v718
        %736 = vst.msk [vmem:[%s359 + $0x8] sm:$0xf] %vm733, %v719
        %737 = vst.msk [vmem:[%s359 + $0xc] sm:$0xf] %vm733, %v720
        %738 = vst.msk [vmem:[%s359 + $0x10] sm:$0xf] %vm733, %v721
        %739 = vst.msk [vmem:[%s359 + $0x14] sm:$0xf] %vm733, %v722
        %740 = vst.msk [vmem:[%s359 + $0x18] sm:$0xf] %vm733, %v723
        %741 = vst.msk [vmem:[%s359 + $0x1c] sm:$0xf] %vm733, %v724
        %742 = vst.msk [vmem:[%s359 + $0x20] sm:$0xf] %vm733, %v725
        %743 = vst.msk [vmem:[%s359 + $0x24] sm:$0xf] %vm733, %v726
        %744 = vst.msk [vmem:[%s359 + $0x28] sm:$0xf] %vm733, %v727
        %745 = vst.msk [vmem:[%s359 + $0x2c] sm:$0xf] %vm733, %v728
        %746 = vst.msk [vmem:[%s359 + $0x30] sm:$0xf] %vm733, %v729
        %747 = vst.msk [vmem:[%s359 + $0x34] sm:$0xf] %vm733, %v730
        %748 = vst.msk [vmem:[%s359 + $0x38] sm:$0xf] %vm733, %v731
        %749 = vst.msk [vmem:[%s359 + $0x3c] sm:$0xf] %vm733, %v732
      $region48: #{resnet_forward.18} parent=39 // pred_fallthru
        _
      %s750 = smul.u32 16, %s21
      %p751 = scmp.lt.s32.totalorder %s750, 15
      %s752 = scalar_select %p751, %s750, 15
      %p753 = scmp.lt.s32.totalorder %s22, 0
      %s754 = scalar_select %p753, %s22, 0
      %s755 = sadd.s32 %s754, %s752
      %s756 = smul.addr %s755, 4
      %s757 = scalar_lea.vmem %s5, %s756
      // Predicated region
      $region49: #{resnet_forward.18} parent=39 // pred_check
        %p758 = pneg %p191
      $region50: #{resnet_forward.18} parent=39 // pred_check_branch
        %760 = sbr.rel (%p758) target = $region52
      $region51: #{resnet_forward.18} parent=39 // pred_region
        %s761 = smul.u32 16, %s21
      $region52: #{resnet_forward.18} parent=39 // pred_fallthru
        _
      // Predicated region
      $region53: #{resnet_forward.18} parent=39 // pred_check
        %p762 = pneg %p191
      $region54: #{resnet_forward.18} parent=39 // pred_check_branch
        %764 = sbr.rel (%p762) target = $region56
      $region55: #{resnet_forward.18} parent=39 // pred_region
        %s765 = smul.u32 16, %s21
        %p766 = scmp.lt.s32.totalorder %s765, 15
        %s767 = scalar_select %p766, %s765, 15
        %p768 = scmp.lt.s32.totalorder %s22, 0
        %s769 = scalar_select %p768, %s22, 0
        %s770 = sadd.s32 %s769, %s767
        %s771 = smul.addr %s770, 4
        %s772 = scalar_lea.vmem %s5, %s771
      $region56: #{resnet_forward.18} parent=39 // pred_fallthru
        _
    $region40: #{resnet_forward.18} parent=5 // pred_fallthru
      _
    %p773 = scmp.le.s32.totalorder 2, %s11
    // Predicated region
    $region57: #{resnet_forward.18} parent=5 // pred_check
      %p774 = pneg %p773
    $region58: #{resnet_forward.18} parent=5 // pred_check_branch
      %776 = sbr.rel (%p774) target = $region60
    $region59: #{resnet_forward.18} parent=5 // pred_region
      %s777 = ssub.s32 %s11, 2
    $region60: #{resnet_forward.18} parent=5 // pred_fallthru
      _
  $region6: #{resnet_forward.18} parent=0 // loop_footer
    %s15 = sadd.s32 1, %s11
  $region7: #{resnet_forward.18} parent=0 // loop_footer_branch
    %10 = sbr.rel target = $region3
  $region8: #{resnet_forward.18} parent=0 // loop_exit
    _

// kernel: resnet_forward.19
$region0: #{resnet_forward.19}
  #allocation0 [shape = 'u32[]', space=smem, size = 0x4, offset = 0x4, fixed_abs, tag = 'smem constant byte address 0x4 - core index']
  #allocation1 [shape = 'u32[72,128]{1,0:T(1,128)}', space=vmem, size = 0x9000, scoped, tag = 'internal scratch']
  #allocation2 [shape = 'f32[32,128]{1,0:T(8,128)}', space=vmem, size = 0x4000, scoped, tag = 'scratch operand']
  %s0 = inlined_call_operand.vmem [shape: bf16[9,32,64], index: 0, kind: input, shape index: {}]
  %s1 = inlined_call_operand.vmem [shape: bf16[9,64,128], index: 1, kind: input, shape index: {}]
  %s2 = inlined_call_operand.vmem [shape: f32[1,128], index: 2, kind: input, shape index: {}]
  %s3 = inlined_call_operand.vmem [shape: f32[1,128], index: 3, kind: input, shape index: {}]
  %s4 = inlined_call_operand.vmem [shape: bf16[32,128], index: 4, kind: output, shape index: {}]
  %s5 = sld [smem:[#allocation0]]
  $region57: #{resnet_forward.19} parent=0
    _
  %s7 = ssub.s32 1, %s5
  %s8 = scalar_select 0, %s7, %s5
  loop: start=0, step=1, limit=11
  $region2: #{resnet_forward.19} parent=0 // loop_pre_header
    _
  $region3: #{resnet_forward.19} parent=0 // loop_header
    %s10 = sphi 0, %s14
    %p11 = scmp.ge.s32.totalorder %s10, 11
    %s17 = sphi 0, %s36
    %s18 = sphi 0, %s32
    %s19 = sphi 0, %s28
    %s20 = sphi 0, %s17
    %s21 = sphi 0, %s18
    %s22 = sphi 0, %s19
    %s23 = sphi 0, %s20
    %s24 = sphi 0, %s21
    %s25 = sphi 0, %s22
    %s41 = sphi 0, %s43
    %s44 = sphi 0, %s41
    %s45 = sphi 0, %s44
    %s61 = sphi 0, %s45
    %s69 = sphi 0, %s71
    %s72 = sphi 0, %s69
    %s73 = sphi 0, %s72
    %s89 = sphi 0, %s73
    %s95 = sphi 0, %s97
    %s98 = sphi 0, %s95
    %s99 = sphi 0, %s98
    %s115 = sphi 0, %s99
    %s121 = sphi 0, %s123
    %s124 = sphi 0, %s121
    %s125 = sphi 0, %s124
    %s141 = sphi 0, %s125
    %s149 = sphi 0, %s151
    %s152 = sphi 0, %s149
    %s153 = sphi 0, %s152
    %s169 = sphi 0, %s153
  $region4: #{resnet_forward.19} parent=0 // loop_header_branch
    %13 = sbr.rel (%p11) target = $region8
  $region5: #{resnet_forward.19} parent=0 // loop_body
    %s15 = ssub.s32 %s10, 1
    %s16 = ssub.s32 %s10, 2
    %s26 = sadd.s32 1, %s19
    %p27 = scmp.ge.s32.totalorder %s26, 9
    %s28 = scalar_select %p27, 0, %s26
    %s29 = sadd.s32 1, %s18
    %s30 = scalar_select %p27, %s29, %s18
    %p31 = scmp.ge.s32.totalorder %s30, 1
    %s32 = scalar_select %p31, 0, %s30
    %s33 = sadd.s32 1, %s17
    %s34 = scalar_select %p31, %s33, %s17
    %p35 = scmp.ge.s32.totalorder %s34, 1
    %s36 = scalar_select %p35, 0, %s34
    %s37 = ssub.s32 %s19, %s28
    %s38 = ssub.s32 %s17, %s36
    %s39 = sor.u32 %s37, %s38
    %p40 = scmp.eq.s32.totalorder %s39, 0
    %s42 = sadd.s32 %s41, 1
    %s43 = scalar_select %p40, %s41, %s42
    %p46 = pneg %p40
    %p47 = scmp.eq.s32.totalorder %s10, 8
    %p48 = por %p46, %p47
    %p49 = scmp.ne.s32.totalorder %s41, %s44
    %p50 = scmp.eq.s32.totalorder %s10, 0
    %p51 = por %p49, %p50
    %p52 = scmp.ne.s32.totalorder %s41, %s44
    %p53 = scmp.eq.s32.totalorder %s15, 8
    %p54 = por %p52, %p53
    %p55 = scmp.ne.s32.totalorder %s44, %s45
    %p56 = scmp.eq.s32.totalorder %s15, 0
    %p57 = por %p55, %p56
    %p58 = scmp.ne.s32.totalorder %s44, %s45
    %p59 = scmp.eq.s32.totalorder %s16, 8
    %p60 = por %p58, %p59
    %p62 = scmp.ne.s32.totalorder %s45, %s61
    %p63 = scmp.eq.s32.totalorder %s16, 0
    %p64 = por %p62, %p63
    %s65 = ssub.s32 %s19, %s28
    %s66 = ssub.s32 %s18, %s32
    %s67 = sor.u32 %s65, %s66
    %p68 = scmp.eq.s32.totalorder %s67, 0
    %s70 = sadd.s32 %s69, 1
    %s71 = scalar_select %p68, %s69, %s70
    %p74 = pneg %p68
    %p75 = scmp.eq.s32.totalorder %s10, 8
    %p76 = por %p74, %p75
    %p77 = scmp.ne.s32.totalorder %s69, %s72
    %p78 = scmp.eq.s32.totalorder %s10, 0
    %p79 = por %p77, %p78
    %p80 = scmp.ne.s32.totalorder %s69, %s72
    %p81 = scmp.eq.s32.totalorder %s15, 8
    %p82 = por %p80, %p81
    %p83 = scmp.ne.s32.totalorder %s72, %s73
    %p84 = scmp.eq.s32.totalorder %s15, 0
    %p85 = por %p83, %p84
    %p86 = scmp.ne.s32.totalorder %s72, %s73
    %p87 = scmp.eq.s32.totalorder %s16, 8
    %p88 = por %p86, %p87
    %p90 = scmp.ne.s32.totalorder %s73, %s89
    %p91 = scmp.eq.s32.totalorder %s16, 0
    %p92 = por %p90, %p91
    %s93 = ssub.s32 %s18, %s32
    %p94 = scmp.eq.s32.totalorder %s93, 0
    %s96 = sadd.s32 %s95, 1
    %s97 = scalar_select %p94, %s95, %s96
    %p100 = pneg %p94
    %p101 = scmp.eq.s32.totalorder %s10, 8
    %p102 = por %p100, %p101
    %p103 = scmp.ne.s32.totalorder %s95, %s98
    %p104 = scmp.eq.s32.totalorder %s10, 0
    %p105 = por %p103, %p104
    %p106 = scmp.ne.s32.totalorder %s95, %s98
    %p107 = scmp.eq.s32.totalorder %s15, 8
    %p108 = por %p106, %p107
    %p109 = scmp.ne.s32.totalorder %s98, %s99
    %p110 = scmp.eq.s32.totalorder %s15, 0
    %p111 = por %p109, %p110
    %p112 = scmp.ne.s32.totalorder %s98, %s99
    %p113 = scmp.eq.s32.totalorder %s16, 8
    %p114 = por %p112, %p113
    %p116 = scmp.ne.s32.totalorder %s99, %s115
    %p117 = scmp.eq.s32.totalorder %s16, 0
    %p118 = por %p116, %p117
    %s119 = ssub.s32 %s18, %s32
    %p120 = scmp.eq.s32.totalorder %s119, 0
    %s122 = sadd.s32 %s121, 1
    %s123 = scalar_select %p120, %s121, %s122
    %p126 = pneg %p120
    %p127 = scmp.eq.s32.totalorder %s10, 8
    %p128 = por %p126, %p127
    %p129 = scmp.ne.s32.totalorder %s121, %s124
    %p130 = scmp.eq.s32.totalorder %s10, 0
    %p131 = por %p129, %p130
    %p132 = scmp.ne.s32.totalorder %s121, %s124
    %p133 = scmp.eq.s32.totalorder %s15, 8
    %p134 = por %p132, %p133
    %p135 = scmp.ne.s32.totalorder %s124, %s125
    %p136 = scmp.eq.s32.totalorder %s15, 0
    %p137 = por %p135, %p136
    %p138 = scmp.ne.s32.totalorder %s124, %s125
    %p139 = scmp.eq.s32.totalorder %s16, 8
    %p140 = por %p138, %p139
    %p142 = scmp.ne.s32.totalorder %s125, %s141
    %p143 = scmp.eq.s32.totalorder %s16, 0
    %p144 = por %p142, %p143
    %s145 = ssub.s32 %s17, %s36
    %s146 = ssub.s32 %s18, %s32
    %s147 = sor.u32 %s145, %s146
    %p148 = scmp.eq.s32.totalorder %s147, 0
    %s150 = sadd.s32 %s149, 1
    %s151 = scalar_select %p148, %s149, %s150
    %p154 = pneg %p148
    %p155 = scmp.eq.s32.totalorder %s10, 8
    %p156 = por %p154, %p155
    %p157 = scmp.ne.s32.totalorder %s149, %s152
    %p158 = scmp.eq.s32.totalorder %s10, 0
    %p159 = por %p157, %p158
    %p160 = scmp.ne.s32.totalorder %s149, %s152
    %p161 = scmp.eq.s32.totalorder %s15, 8
    %p162 = por %p160, %p161
    %p163 = scmp.ne.s32.totalorder %s152, %s153
    %p164 = scmp.eq.s32.totalorder %s15, 0
    %p165 = por %p163, %p164
    %p166 = scmp.ne.s32.totalorder %s152, %s153
    %p167 = scmp.eq.s32.totalorder %s16, 8
    %p168 = por %p166, %p167
    %p170 = scmp.ne.s32.totalorder %s153, %s169
    %p171 = scmp.eq.s32.totalorder %s16, 0
    %p172 = por %p170, %p171
    %p173 = scmp.le.s32.totalorder 1, %s10
    %p174 = scmp.lt.s32.totalorder %s10, 10
    %p175 = pnand %p173, %p174
    %p176 = pneg %p175
    // Predicated region
    $region9: #{resnet_forward.19} parent=5 // pred_check
      _
    $region10: #{resnet_forward.19} parent=5 // pred_check_branch
      %178 = sbr.rel (%p175) target = $region12
    $region11: #{resnet_forward.19} parent=5 // pred_region
      %s179 = ssub.s32 %s10, 1
      // Predicated region
      $region13: #{resnet_forward.19} parent=11 // pred_check
        %p180 = pneg %p111
      $region14: #{resnet_forward.19} parent=11 // pred_check_branch
        %182 = sbr.rel (%p180) target = $region16
      $region15: #{resnet_forward.19} parent=11 // pred_region
        %p183 = scmp.lt.s32.totalorder %s21, 0
        %s184 = scalar_select %p183, %s21, 0
        %s185 = scalar_lea.vmem %s2, %s184
      $region16: #{resnet_forward.19} parent=11 // pred_fallthru
        _
      // Predicated region
      $region17: #{resnet_forward.19} parent=11 // pred_check
        %p186 = pneg %p137
      $region18: #{resnet_forward.19} parent=11 // pred_check_branch
        %188 = sbr.rel (%p186) target = $region20
      $region19: #{resnet_forward.19} parent=11 // pred_region
        %p189 = scmp.lt.s32.totalorder %s21, 0
        %s190 = scalar_select %p189, %s21, 0
        %s191 = scalar_lea.vmem %s3, %s190
      $region20: #{resnet_forward.19} parent=11 // pred_fallthru
        _
    $region12: #{resnet_forward.19} parent=5 // pred_fallthru
      _
    %p192 = scmp.lt.s32.totalorder %s10, 9
    // Predicated region
    $region21: #{resnet_forward.19} parent=5 // pred_check
      %p193 = pneg %p192
    $region22: #{resnet_forward.19} parent=5 // pred_check_branch
      %195 = sbr.rel (%p193) target = $region24
    $region23: #{resnet_forward.19} parent=5 // pred_region
      // Predicated region
      $region25: #{resnet_forward.19} parent=23 // pred_check
        %p196 = pneg %p51
      $region26: #{resnet_forward.19} parent=23 // pred_check_branch
        %198 = sbr.rel (%p196) target = $region28
      $region27: #{resnet_forward.19} parent=23 // pred_region
        %s199 = smul.u32 4, %s17
        %p200 = scmp.lt.s32.totalorder %s19, 8
        %s201 = scalar_select %p200, %s19, 8
        %p202 = scmp.lt.s32.totalorder %s199, 3
        %s203 = scalar_select %p202, %s199, 3
        %s204 = smul.addr %s201, 4
        %s205 = sadd.s32 %s203, %s204
        %s206 = smul.addr %s205, 4
        %s207 = scalar_lea.vmem %s0, %s206
        %s208 = smul.u32 4, %s17
      $region28: #{resnet_forward.19} parent=23 // pred_fallthru
        _
      // Predicated region
      $region29: #{resnet_forward.19} parent=23 // pred_check
        %p209 = pneg %p79
      $region30: #{resnet_forward.19} parent=23 // pred_check_branch
        %211 = sbr.rel (%p209) target = $region32
      $region31: #{resnet_forward.19} parent=23 // pred_region
        %p212 = scmp.lt.s32.totalorder %s19, 8
        %s213 = scalar_select %p212, %s19, 8
        %p214 = scmp.lt.s32.totalorder %s18, 0
        %s215 = scalar_select %p214, %s18, 0
        %s216 = smul.addr %s213, 8
        %s217 = sadd.s32 %s215, %s216
        %s218 = smul.addr %s217, 4
        %s219 = scalar_lea.vmem %s1, %s218
      $region32: #{resnet_forward.19} parent=23 // pred_fallthru
        _
    $region24: #{resnet_forward.19} parent=5 // pred_fallthru
      _
    %p220 = scmp.le.s32.totalorder 1, %s10
    %p221 = scmp.lt.s32.totalorder %s10, 10
    %p222 = pnand %p220, %p221
    %p223 = pneg %p222
    // Predicated region
    $region33: #{resnet_forward.19} parent=5 // pred_check
      _
    $region34: #{resnet_forward.19} parent=5 // pred_check_branch
      %225 = sbr.rel (%p222) target = $region36
    $region35: #{resnet_forward.19} parent=5 // pred_region
      %s226 = ssub.s32 %s10, 1
      %s227 = smul.u32 4, %s20
      %p228 = scmp.lt.s32.totalorder %s22, 8
      %s229 = scalar_select %p228, %s22, 8
      %p230 = scmp.lt.s32.totalorder %s227, 3
      %s231 = scalar_select %p230, %s227, 3
      %s232 = smul.addr %s229, 4
      %s233 = sadd.s32 %s231, %s232
      %s234 = smul.addr %s233, 4
      %s235 = scalar_lea.vmem %s0, %s234
      %p236 = pneg %p57
      %p237 = pneg %p54
      %p238 = scmp.lt.s32.totalorder %s22, 8
      %s239 = scalar_select %p238, %s22, 8
      %p240 = scmp.lt.s32.totalorder %s21, 0
      %s241 = scalar_select %p240, %s21, 0
      %s242 = smul.addr %s239, 8
      %s243 = sadd.s32 %s241, %s242
      %s244 = smul.addr %s243, 4
      %s245 = scalar_lea.vmem %s1, %s244
      %p246 = pneg %p85
      %p247 = pneg %p82
      %p248 = scmp.lt.s32.totalorder %s21, 0
      %s249 = scalar_select %p248, %s21, 0
      %s250 = scalar_lea.vmem %s2, %s249
      %p251 = pneg %p111
      %p252 = pneg %p108
      %p253 = scmp.lt.s32.totalorder %s21, 0
      %s254 = scalar_select %p253, %s21, 0
      %s255 = scalar_lea.vmem %s3, %s254
      %p256 = pneg %p137
      %p257 = pneg %p134
      %p258 = pneg %p165
      %p259 = pneg %p162
      %s260 = smul.u32 4, %s20
      %p261 = scmp.lt.s32.totalorder %s260, 3
      %s262 = scalar_select %p261, %s260, 3
      %p263 = scmp.lt.s32.totalorder %s21, 0
      %s264 = scalar_select %p263, %s21, 0
      %s265 = sadd.s32 %s264, %s262
      %s266 = smul.addr %s265, 4
      %s267 = scalar_lea.vmem %s4, %s266
      %s268 = smul.u32 4, %s20
      %p269 = scmp.lt.s32.totalorder %s22, 8
      %s270 = scalar_select %p269, %s22, 8
      %p271 = scmp.lt.s32.totalorder %s268, 3
      %s272 = scalar_select %p271, %s268, 3
      %s273 = smul.addr %s270, 4
      %s274 = sadd.s32 %s272, %s273
      %s275 = smul.addr %s274, 4
      %s276 = scalar_lea.vmem %s0, %s275
      %s277 = smul.u32 4, %s20
      %p278 = scmp.lt.s32.totalorder %s22, 8
      %s279 = scalar_select %p278, %s22, 8
      %p280 = scmp.lt.s32.totalorder %s21, 0
      %s281 = scalar_select %p280, %s21, 0
      %s282 = smul.addr %s279, 8
      %s283 = sadd.s32 %s281, %s282
      %s284 = smul.addr %s283, 4
      %s285 = scalar_lea.vmem %s1, %s284
      %p286 = scmp.lt.s32.totalorder %s21, 0
      %s287 = scalar_select %p286, %s21, 0
      %s288 = scalar_lea.vmem %s2, %s287
      %p289 = scmp.lt.s32.totalorder %s21, 0
      %s290 = scalar_select %p289, %s21, 0
      %s291 = scalar_lea.vmem %s3, %s290
      %s292 = smul.u32 4, %s20
      %p293 = scmp.lt.s32.totalorder %s292, 3
      %s294 = scalar_select %p293, %s292, 3
      %p295 = scmp.lt.s32.totalorder %s21, 0
      %s296 = scalar_select %p295, %s21, 0
      %s297 = sadd.s32 %s296, %s294
      %s298 = smul.addr %s297, 4
      %s299 = scalar_lea.vmem %s4, %s298
      %s300 = smul.u32 4, %s20
      %p302 = scmp.eq.s32.totalorder %s22, 0
      // Predicated region
      $region37: #{resnet_forward.19} parent=35 // pred_check
        %p303 = pneg %p302
      $region38: #{resnet_forward.19} parent=35 // pred_check_branch
        %305 = sbr.rel (%p303) target = $region40
      $region39: #{resnet_forward.19} parent=35 // pred_region
        %306 = vst [vmem:[#allocation2] sm:$0xff] 0.0
        %307 = vst [vmem:[#allocation2 + $0x8] sm:$0xff] 0.0
        %308 = vst [vmem:[#allocation2 + $0x10] sm:$0xff] 0.0
        %309 = vst [vmem:[#allocation2 + $0x18] sm:$0xff] 0.0
      $region40: #{resnet_forward.19} parent=35 // pred_fallthru
        _
      %v310 = vld [vmem:[#allocation2] sm:$0xff]
      %v311 = vld [vmem:[#allocation2 + $0x8] sm:$0xff]
      %v312 = vld [vmem:[#allocation2 + $0x10] sm:$0xff]
      %v313 = vld [vmem:[#allocation2 + $0x18] sm:$0xff]
      %v314 = vld [vmem:[%s276] sm:$0xf]
      %v315 = vld [vmem:[%s276 + $0x4] sm:$0xf]
      %v316 = vld [vmem:[%s276 + $0x8] sm:$0xf]
      %v317 = vld [vmem:[%s276 + $0xc] sm:$0xf]
      %v318 = vld [vmem:[%s285] sm:$0xf]
      %v319 = vld [vmem:[%s285 + $0x4] sm:$0xf]
      %v320 = vld [vmem:[%s285 + $0x8] sm:$0xf]
      %v321 = vld [vmem:[%s285 + $0xc] sm:$0xf]
      %v322 = vld [vmem:[%s285 + $0x10] sm:$0xf]
      %v323 = vld [vmem:[%s285 + $0x14] sm:$0xf]
      %v324 = vld [vmem:[%s285 + $0x18] sm:$0xf]
      %v325 = vld [vmem:[%s285 + $0x1c] sm:$0xf]
      %v330 = vunpack.c.l.b16 %v314
      %v331 = vunpack.c.l.b16 %v315
      %v332 = vunpack.c.l.b16 %v316
      %v333 = vunpack.c.l.b16 %v317
      %v334 = vpack.c.b16 %v331, %v330
      %v335 = vpack.c.b16 %v333, %v332
      %v344 = vunpack.c.l.b16 %v318
      %v345 = vunpack.c.l.b16 %v319
      %v346 = vunpack.c.l.b16 %v320
      %v347 = vunpack.c.l.b16 %v321
      %v348 = vunpack.c.l.b16 %v322
      %v349 = vunpack.c.l.b16 %v323
      %v350 = vunpack.c.l.b16 %v324
      %v351 = vunpack.c.l.b16 %v325
      %v352 = vpack.c.b16 %v345, %v344
      %v353 = vpack.c.b16 %v347, %v346
      %v354 = vpack.c.b16 %v349, %v348
      %v355 = vpack.c.b16 %v351, %v350
      %vm360 = vcmask 523264
      %v362 = vsel %vm360, %v334, 0
      %v365 = vsel %vm360, %v335, 0
      %367 = vmatpush.bf16.msra.mxu0 0
      %368 = vmatpush.bf16.msra.mxu0 0
      %369 = vmatpush.bf16.msra.mxu0 0
      %370 = vmatpush.bf16.msra.mxu0 0
      %371 = vmatpush.bf16.msra.mxu0 %v355
      %372 = vmatpush.bf16.msra.mxu0 %v354
      %373 = vmatpush.bf16.msra.mxu0 %v353
      %374 = vmatpush.bf16.msra.mxu0 %v352
      %375 = vmatmul.bf16.gmra.mxu0 %v362
      %v376 = vpop.f32.mrf.mxu0
      %v377 = vadd.f32 0.0, %v376
      %v378 = vpop.f32.mrf.mxu0
      %v379 = vadd.f32 0.0, %v378
      %380 = vmatmul.bf16.gmra.mxu0 %v365
      %v381 = vpop.f32.mrf.mxu0
      %v382 = vadd.f32 0.0, %v381
      %v383 = vpop.f32.mrf.mxu0
      %v384 = vadd.f32 0.0, %v383
      %385 = vdwg.mxu0
      %v386 = vadd.f32 %v310, %v377
      %v387 = vadd.f32 %v311, %v379
      %v388 = vadd.f32 %v312, %v382
      %v389 = vadd.f32 %v313, %v384
      %390 = vst [vmem:[#allocation2] sm:$0xff] %v386
      %391 = vst [vmem:[#allocation2 + $0x8] sm:$0xff] %v387
      %392 = vst [vmem:[#allocation2 + $0x10] sm:$0xff] %v388
      %393 = vst [vmem:[#allocation2 + $0x18] sm:$0xff] %v389
      %p394 = scmp.eq.s32.totalorder %s22, 8
      // Predicated region
      $region41: #{resnet_forward.19} parent=35 // pred_check
        %p395 = pneg %p394
      $region42: #{resnet_forward.19} parent=35 // pred_check_branch
        %397 = sbr.rel (%p395) target = $region44
      $region43: #{resnet_forward.19} parent=35 // pred_region
        %v398 = vld [vmem:[#allocation2] sm:$0xff]
        %v399 = vld [vmem:[#allocation2 + $0x8] sm:$0xff]
        %v400 = vld [vmem:[#allocation2 + $0x10] sm:$0xff]
        %v401 = vld [vmem:[#allocation2 + $0x18] sm:$0xff]
        %v402 = vld [vmem:[%s288] sm:$0x1]
        %v404 = vperm.slane %v402, 0
        %v406 = vmul.f32 %v398, %v404
        %v407 = vmul.f32 %v399, %v404
        %v408 = vmul.f32 %v400, %v404
        %v409 = vmul.f32 %v401, %v404
        %v410 = vld [vmem:[%s291] sm:$0x1]
        %v412 = vperm.slane %v410, 0
        %v414 = vadd.f32 %v406, %v412
        %v415 = vadd.f32 %v407, %v412
        %v416 = vadd.f32 %v408, %v412
        %v417 = vadd.f32 %v409, %v412
        %v418 = vmax.f32 %v414, 0.0
        %v419 = vmax.f32 %v415, 0.0
        %v420 = vmax.f32 %v416, 0.0
        %v421 = vmax.f32 %v417, 0.0
        %v422 = vpack.c.bf16 %v418, %v418
        %v423 = vpack.c.bf16 %v419, %v419
        %v424 = vpack.c.bf16 %v420, %v420
        %v425 = vpack.c.bf16 %v421, %v421
        %426 = vst [vmem:[%s299] sm:$0xf] %v422
        %427 = vst [vmem:[%s299 + $0x4] sm:$0xf] %v423
        %428 = vst [vmem:[%s299 + $0x8] sm:$0xf] %v424
        %429 = vst [vmem:[%s299 + $0xc] sm:$0xf] %v425
      $region44: #{resnet_forward.19} parent=35 // pred_fallthru
        _
      %s430 = smul.u32 4, %s20
      %p431 = scmp.lt.s32.totalorder %s430, 3
      %s432 = scalar_select %p431, %s430, 3
      %p433 = scmp.lt.s32.totalorder %s21, 0
      %s434 = scalar_select %p433, %s21, 0
      %s435 = sadd.s32 %s434, %s432
      %s436 = smul.addr %s435, 4
      %s437 = scalar_lea.vmem %s4, %s436
      // Predicated region
      $region45: #{resnet_forward.19} parent=35 // pred_check
        %p438 = pneg %p162
      $region46: #{resnet_forward.19} parent=35 // pred_check_branch
        %440 = sbr.rel (%p438) target = $region48
      $region47: #{resnet_forward.19} parent=35 // pred_region
        %s441 = smul.u32 4, %s20
      $region48: #{resnet_forward.19} parent=35 // pred_fallthru
        _
      // Predicated region
      $region49: #{resnet_forward.19} parent=35 // pred_check
        %p442 = pneg %p162
      $region50: #{resnet_forward.19} parent=35 // pred_check_branch
        %444 = sbr.rel (%p442) target = $region52
      $region51: #{resnet_forward.19} parent=35 // pred_region
        %s445 = smul.u32 4, %s20
        %p446 = scmp.lt.s32.totalorder %s445, 3
        %s447 = scalar_select %p446, %s445, 3
        %p448 = scmp.lt.s32.totalorder %s21, 0
        %s449 = scalar_select %p448, %s21, 0
        %s450 = sadd.s32 %s449, %s447
        %s451 = smul.addr %s450, 4
        %s452 = scalar_lea.vmem %s4, %s451
      $region52: #{resnet_forward.19} parent=35 // pred_fallthru
        _
    $region36: #{resnet_forward.19} parent=5 // pred_fallthru
      _
    %p453 = scmp.le.s32.totalorder 2, %s10
    // Predicated region
    $region53: #{resnet_forward.19} parent=5 // pred_check
      %p454 = pneg %p453
    $region54: #{resnet_forward.19} parent=5 // pred_check_branch
      %456 = sbr.rel (%p454) target = $region56
    $region55: #{resnet_forward.19} parent=5 // pred_region
      %s457 = ssub.s32 %s10, 2
    $region56: #{resnet_forward.19} parent=5 // pred_fallthru
      _
  $region6: #{resnet_forward.19} parent=0 // loop_footer
    %s14 = sadd.s32 1, %s10
  $region7: #{resnet_forward.19} parent=0 // loop_footer_branch
    %9 = sbr.rel target = $region3
  $region8: #{resnet_forward.19} parent=0 // loop_exit
    _

// kernel: resnet_forward.21
$region0: #{resnet_forward.21}
  #allocation0 [shape = 'u32[]', space=smem, size = 0x4, offset = 0x4, fixed_abs, tag = 'smem constant byte address 0x4 - core index']
  #allocation1 [shape = 'u32[72,128]{1,0:T(1,128)}', space=vmem, size = 0x9000, scoped, tag = 'internal scratch']
  #allocation2 [shape = 'f32[32,128]{1,0:T(8,128)}', space=vmem, size = 0x4000, scoped, tag = 'scratch operand']
  %s0 = inlined_call_operand.vmem [shape: bf16[9,32,128], index: 0, kind: input, shape index: {}]
  %s1 = inlined_call_operand.vmem [shape: bf16[9,128,128], index: 1, kind: input, shape index: {}]
  %s2 = inlined_call_operand.hbm [shape: f32[1,128], index: 2, kind: input, shape index: {}]
  %s3 = inlined_call_operand.hbm [shape: f32[1,128], index: 3, kind: input, shape index: {}]
  %s4 = inlined_call_operand.vmem [shape: bf16[32,128], index: 4, kind: input, shape index: {}]
  %s5 = inlined_call_operand.vmem [shape: bf16[32,128], index: 5, kind: output, shape index: {}]
  %s6 = sld [smem:[#allocation0]]
  $region69: #{resnet_forward.21} parent=0
    _
  %s8 = ssub.s32 1, %s6
  %s9 = scalar_select 0, %s8, %s6
  $region1: #{resnet_forward.21} parent=0
    #allocation3 [shape = 'u8[512]{0}', space=vmem, size = 0x400, scoped, tag = 'input window, operand 2, single buffered']
    #allocation4 [shape = 's32[2]{0}', space=sflag, size = 0x8, scoped, tag = 'scoped memory for resnet_forward.21']
    #allocation5 [shape = 'u8[512]{0}', space=vmem, size = 0x400, scoped, tag = 'input window, operand 3, single buffered']
    #allocation6 [shape = 's32[1]{0}', space=sflag, size = 0x4, scoped, tag = 'scoped memory for resnet_forward.21']
    %10 = vsyncpa [#allocation4], 0
    %11 = vsyncpa [#allocation6], 0
    loop: start=0, step=1, limit=11
    $region2: #{resnet_forward.21} parent=1 // loop_pre_header
      _
    $region3: #{resnet_forward.21} parent=1 // loop_header
      %s13 = sphi 0, %s17
      %p14 = scmp.ge.s32.totalorder %s13, 11
      %s20 = sphi 0, %s39
      %s21 = sphi 0, %s35
      %s22 = sphi 0, %s31
      %s23 = sphi 0, %s20
      %s24 = sphi 0, %s21
      %s25 = sphi 0, %s22
      %s26 = sphi 0, %s23
      %s27 = sphi 0, %s24
      %s28 = sphi 0, %s25
      %s44 = sphi 0, %s46
      %s47 = sphi 0, %s44
      %s48 = sphi 0, %s47
      %s64 = sphi 0, %s48
      %s72 = sphi 0, %s74
      %s75 = sphi 0, %s72
      %s76 = sphi 0, %s75
      %s92 = sphi 0, %s76
      %s98 = sphi 0, %s100
      %s101 = sphi 0, %s98
      %s102 = sphi 0, %s101
      %s118 = sphi 0, %s102
      %s124 = sphi 0, %s126
      %s127 = sphi 0, %s124
      %s128 = sphi 0, %s127
      %s144 = sphi 0, %s128
      %s152 = sphi 0, %s154
      %s155 = sphi 0, %s152
      %s156 = sphi 0, %s155
      %s172 = sphi 0, %s156
      %s180 = sphi 0, %s182
      %s183 = sphi 0, %s180
      %s184 = sphi 0, %s183
      %s200 = sphi 0, %s184
    $region4: #{resnet_forward.21} parent=1 // loop_header_branch
      %16 = sbr.rel (%p14) target = $region8
    $region5: #{resnet_forward.21} parent=1 // loop_body
      %s18 = ssub.s32 %s13, 1
      %s19 = ssub.s32 %s13, 2
      %s29 = sadd.s32 1, %s22
      %p30 = scmp.ge.s32.totalorder %s29, 9
      %s31 = scalar_select %p30, 0, %s29
      %s32 = sadd.s32 1, %s21
      %s33 = scalar_select %p30, %s32, %s21
      %p34 = scmp.ge.s32.totalorder %s33, 1
      %s35 = scalar_select %p34, 0, %s33
      %s36 = sadd.s32 1, %s20
      %s37 = scalar_select %p34, %s36, %s20
      %p38 = scmp.ge.s32.totalorder %s37, 1
      %s39 = scalar_select %p38, 0, %s37
      %s40 = ssub.s32 %s22, %s31
      %s41 = ssub.s32 %s20, %s39
      %s42 = sor.u32 %s40, %s41
      %p43 = scmp.eq.s32.totalorder %s42, 0
      %s45 = sadd.s32 %s44, 1
      %s46 = scalar_select %p43, %s44, %s45
      %p49 = pneg %p43
      %p50 = scmp.eq.s32.totalorder %s13, 8
      %p51 = por %p49, %p50
      %p52 = scmp.ne.s32.totalorder %s44, %s47
      %p53 = scmp.eq.s32.totalorder %s13, 0
      %p54 = por %p52, %p53
      %p55 = scmp.ne.s32.totalorder %s44, %s47
      %p56 = scmp.eq.s32.totalorder %s18, 8
      %p57 = por %p55, %p56
      %p58 = scmp.ne.s32.totalorder %s47, %s48
      %p59 = scmp.eq.s32.totalorder %s18, 0
      %p60 = por %p58, %p59
      %p61 = scmp.ne.s32.totalorder %s47, %s48
      %p62 = scmp.eq.s32.totalorder %s19, 8
      %p63 = por %p61, %p62
      %p65 = scmp.ne.s32.totalorder %s48, %s64
      %p66 = scmp.eq.s32.totalorder %s19, 0
      %p67 = por %p65, %p66
      %s68 = ssub.s32 %s22, %s31
      %s69 = ssub.s32 %s21, %s35
      %s70 = sor.u32 %s68, %s69
      %p71 = scmp.eq.s32.totalorder %s70, 0
      %s73 = sadd.s32 %s72, 1
      %s74 = scalar_select %p71, %s72, %s73
      %p77 = pneg %p71
      %p78 = scmp.eq.s32.totalorder %s13, 8
      %p79 = por %p77, %p78
      %p80 = scmp.ne.s32.totalorder %s72, %s75
      %p81 = scmp.eq.s32.totalorder %s13, 0
      %p82 = por %p80, %p81
      %p83 = scmp.ne.s32.totalorder %s72, %s75
      %p84 = scmp.eq.s32.totalorder %s18, 8
      %p85 = por %p83, %p84
      %p86 = scmp.ne.s32.totalorder %s75, %s76
      %p87 = scmp.eq.s32.totalorder %s18, 0
      %p88 = por %p86, %p87
      %p89 = scmp.ne.s32.totalorder %s75, %s76
      %p90 = scmp.eq.s32.totalorder %s19, 8
      %p91 = por %p89, %p90
      %p93 = scmp.ne.s32.totalorder %s76, %s92
      %p94 = scmp.eq.s32.totalorder %s19, 0
      %p95 = por %p93, %p94
      %s96 = ssub.s32 %s21, %s35
      %p97 = scmp.eq.s32.totalorder %s96, 0
      %s99 = sadd.s32 %s98, 1
      %s100 = scalar_select %p97, %s98, %s99
      %p103 = pneg %p97
      %p104 = scmp.eq.s32.totalorder %s13, 8
      %p105 = por %p103, %p104
      %p106 = scmp.ne.s32.totalorder %s98, %s101
      %p107 = scmp.eq.s32.totalorder %s13, 0
      %p108 = por %p106, %p107
      %p109 = scmp.ne.s32.totalorder %s98, %s101
      %p110 = scmp.eq.s32.totalorder %s18, 8
      %p111 = por %p109, %p110
      %p112 = scmp.ne.s32.totalorder %s101, %s102
      %p113 = scmp.eq.s32.totalorder %s18, 0
      %p114 = por %p112, %p113
      %p115 = scmp.ne.s32.totalorder %s101, %s102
      %p116 = scmp.eq.s32.totalorder %s19, 8
      %p117 = por %p115, %p116
      %p119 = scmp.ne.s32.totalorder %s102, %s118
      %p120 = scmp.eq.s32.totalorder %s19, 0
      %p121 = por %p119, %p120
      %s122 = ssub.s32 %s21, %s35
      %p123 = scmp.eq.s32.totalorder %s122, 0
      %s125 = sadd.s32 %s124, 1
      %s126 = scalar_select %p123, %s124, %s125
      %p129 = pneg %p123
      %p130 = scmp.eq.s32.totalorder %s13, 8
      %p131 = por %p129, %p130
      %p132 = scmp.ne.s32.totalorder %s124, %s127
      %p133 = scmp.eq.s32.totalorder %s13, 0
      %p134 = por %p132, %p133
      %p135 = scmp.ne.s32.totalorder %s124, %s127
      %p136 = scmp.eq.s32.totalorder %s18, 8
      %p137 = por %p135, %p136
      %p138 = scmp.ne.s32.totalorder %s127, %s128
      %p139 = scmp.eq.s32.totalorder %s18, 0
      %p140 = por %p138, %p139
      %p141 = scmp.ne.s32.totalorder %s127, %s128
      %p142 = scmp.eq.s32.totalorder %s19, 8
      %p143 = por %p141, %p142
      %p145 = scmp.ne.s32.totalorder %s128, %s144
      %p146 = scmp.eq.s32.totalorder %s19, 0
      %p147 = por %p145, %p146
      %s148 = ssub.s32 %s20, %s39
      %s149 = ssub.s32 %s21, %s35
      %s150 = sor.u32 %s148, %s149
      %p151 = scmp.eq.s32.totalorder %s150, 0
      %s153 = sadd.s32 %s152, 1
      %s154 = scalar_select %p151, %s152, %s153
      %p157 = pneg %p151
      %p158 = scmp.eq.s32.totalorder %s13, 8
      %p159 = por %p157, %p158
      %p160 = scmp.ne.s32.totalorder %s152, %s155
      %p161 = scmp.eq.s32.totalorder %s13, 0
      %p162 = por %p160, %p161
      %p163 = scmp.ne.s32.totalorder %s152, %s155
      %p164 = scmp.eq.s32.totalorder %s18, 8
      %p165 = por %p163, %p164
      %p166 = scmp.ne.s32.totalorder %s155, %s156
      %p167 = scmp.eq.s32.totalorder %s18, 0
      %p168 = por %p166, %p167
      %p169 = scmp.ne.s32.totalorder %s155, %s156
      %p170 = scmp.eq.s32.totalorder %s19, 8
      %p171 = por %p169, %p170
      %p173 = scmp.ne.s32.totalorder %s156, %s172
      %p174 = scmp.eq.s32.totalorder %s19, 0
      %p175 = por %p173, %p174
      %s176 = ssub.s32 %s20, %s39
      %s177 = ssub.s32 %s21, %s35
      %s178 = sor.u32 %s176, %s177
      %p179 = scmp.eq.s32.totalorder %s178, 0
      %s181 = sadd.s32 %s180, 1
      %s182 = scalar_select %p179, %s180, %s181
      %p185 = pneg %p179
      %p186 = scmp.eq.s32.totalorder %s13, 8
      %p187 = por %p185, %p186
      %p188 = scmp.ne.s32.totalorder %s180, %s183
      %p189 = scmp.eq.s32.totalorder %s13, 0
      %p190 = por %p188, %p189
      %p191 = scmp.ne.s32.totalorder %s180, %s183
      %p192 = scmp.eq.s32.totalorder %s18, 8
      %p193 = por %p191, %p192
      %p194 = scmp.ne.s32.totalorder %s183, %s184
      %p195 = scmp.eq.s32.totalorder %s18, 0
      %p196 = por %p194, %p195
      %p197 = scmp.ne.s32.totalorder %s183, %s184
      %p198 = scmp.eq.s32.totalorder %s19, 8
      %p199 = por %p197, %p198
      %p201 = scmp.ne.s32.totalorder %s184, %s200
      %p202 = scmp.eq.s32.totalorder %s19, 0
      %p203 = por %p201, %p202
      %p204 = scmp.le.s32.totalorder 1, %s13
      %p205 = scmp.lt.s32.totalorder %s13, 10
      %p206 = pnand %p204, %p205
      %p207 = pneg %p206
      // Predicated region
      $region9: #{resnet_forward.21} parent=5 // pred_check
        _
      $region10: #{resnet_forward.21} parent=5 // pred_check_branch
        %209 = sbr.rel (%p206) target = $region12
      $region11: #{resnet_forward.21} parent=5 // pred_region
        %s210 = ssub.s32 %s13, 1
        // Predicated region
        $region13: #{resnet_forward.21} parent=11 // pred_check
          %p211 = pneg %p114
        $region14: #{resnet_forward.21} parent=11 // pred_check_branch
          %213 = sbr.rel (%p211) target = $region16
        $region15: #{resnet_forward.21} parent=11 // pred_region
          %215 = vsyncadd [#allocation4], 0
          %s216 = scalar_lea.hbm %s2, %s24
          %s218 = sshll.u32 %s216, 4
          %s219 = int_to_ptr.hbm [resolvable:$true] %s218
          %s220 = sshll.u32 [#allocation3], 4
          %s221 = int_to_ptr.vmem [resolvable:$true] %s220
          %223 = dma.hbm_to_vmem [thread:$0]  %s219, 16, %s221, [#allocation4]
        $region16: #{resnet_forward.21} parent=11 // pred_fallthru
          _
        // Predicated region
        $region17: #{resnet_forward.21} parent=11 // pred_check
          %p224 = pneg %p140
        $region18: #{resnet_forward.21} parent=11 // pred_check_branch
          %226 = sbr.rel (%p224) target = $region20
        $region19: #{resnet_forward.21} parent=11 // pred_region
          %228 = vsyncadd [#allocation6], 0
          %s229 = scalar_lea.hbm %s3, %s24
          %s231 = sshll.u32 %s229, 4
          %s232 = int_to_ptr.hbm [resolvable:$true] %s231
          %s233 = sshll.u32 [#allocation5], 4
          %s234 = int_to_ptr.vmem [resolvable:$true] %s233
          %236 = dma.hbm_to_vmem [thread:$0]  %s232, 16, %s234, [#allocation6]
        $region20: #{resnet_forward.21} parent=11 // pred_fallthru
          _
        // Predicated region
        $region21: #{resnet_forward.21} parent=11 // pred_check
          %p237 = pneg %p168
        $region22: #{resnet_forward.21} parent=11 // pred_check_branch
          %239 = sbr.rel (%p237) target = $region24
        $region23: #{resnet_forward.21} parent=11 // pred_region
          %s240 = smul.u32 4, %s23
          %p241 = scmp.lt.s32.totalorder %s240, 3
          %s242 = scalar_select %p241, %s240, 3
          %p243 = scmp.lt.s32.totalorder %s24, 0
          %s244 = scalar_select %p243, %s24, 0
          %s245 = sadd.s32 %s244, %s242
          %s246 = smul.addr %s245, 4
          %s247 = scalar_lea.vmem %s4, %s246
          %s248 = smul.u32 4, %s23
        $region24: #{resnet_forward.21} parent=11 // pred_fallthru
          _
      $region12: #{resnet_forward.21} parent=5 // pred_fallthru
        _
      %p249 = scmp.lt.s32.totalorder %s13, 9
      // Predicated region
      $region25: #{resnet_forward.21} parent=5 // pred_check
        %p250 = pneg %p249
      $region26: #{resnet_forward.21} parent=5 // pred_check_branch
        %252 = sbr.rel (%p250) target = $region28
      $region27: #{resnet_forward.21} parent=5 // pred_region
        // Predicated region
        $region29: #{resnet_forward.21} parent=27 // pred_check
          %p253 = pneg %p54
        $region30: #{resnet_forward.21} parent=27 // pred_check_branch
          %255 = sbr.rel (%p253) target = $region32
        $region31: #{resnet_forward.21} parent=27 // pred_region
          %s256 = smul.u32 4, %s20
          %p257 = scmp.lt.s32.totalorder %s22, 8
          %s258 = scalar_select %p257, %s22, 8
          %p259 = scmp.lt.s32.totalorder %s256, 3
          %s260 = scalar_select %p259, %s256, 3
          %s261 = smul.addr %s258, 4
          %s262 = sadd.s32 %s260, %s261
          %s263 = smul.addr %s262, 4
          %s264 = scalar_lea.vmem %s0, %s263
          %s265 = smul.u32 4, %s20
        $region32: #{resnet_forward.21} parent=27 // pred_fallthru
          _
        // Predicated region
        $region33: #{resnet_forward.21} parent=27 // pred_check
          %p266 = pneg %p82
        $region34: #{resnet_forward.21} parent=27 // pred_check_branch
          %268 = sbr.rel (%p266) target = $region36
        $region35: #{resnet_forward.21} parent=27 // pred_region
          %p269 = scmp.lt.s32.totalorder %s22, 8
          %s270 = scalar_select %p269, %s22, 8
          %p271 = scmp.lt.s32.totalorder %s21, 0
          %s272 = scalar_select %p271, %s21, 0
          %s273 = smul.addr %s270, 16
          %s274 = sadd.s32 %s272, %s273
          %s275 = smul.addr %s274, 4
          %s276 = scalar_lea.vmem %s1, %s275
        $region36: #{resnet_forward.21} parent=27 // pred_fallthru
          _
      $region28: #{resnet_forward.21} parent=5 // pred_fallthru
        _
      %p277 = scmp.le.s32.totalorder 1, %s13
      %p278 = scmp.lt.s32.totalorder %s13, 10
      %p279 = pnand %p277, %p278
      %p280 = pneg %p279
      // Predicated region
      $region37: #{resnet_forward.21} parent=5 // pred_check
        _
      $region38: #{resnet_forward.21} parent=5 // pred_check_branch
        %282 = sbr.rel (%p279) target = $region40
      $region39: #{resnet_forward.21} parent=5 // pred_region
        %s283 = ssub.s32 %s13, 1
        // Predicated region
        $region41: #{resnet_forward.21} parent=39 // pred_check
          %p284 = pneg %p114
        $region42: #{resnet_forward.21} parent=39 // pred_check_branch
          %286 = sbr.rel (%p284) target = $region44
        $region43: #{resnet_forward.21} parent=39 // pred_region
          %288 = dma.done [#allocation4], 16
        $region44: #{resnet_forward.21} parent=39 // pred_fallthru
          _
        // Predicated region
        $region45: #{resnet_forward.21} parent=39 // pred_check
          %p289 = pneg %p140
        $region46: #{resnet_forward.21} parent=39 // pred_check_branch
          %291 = sbr.rel (%p289) target = $region48
        $region47: #{resnet_forward.21} parent=39 // pred_region
          %293 = dma.done [#allocation6], 16
        $region48: #{resnet_forward.21} parent=39 // pred_fallthru
          _
        %s294 = smul.u32 4, %s23
        %p295 = scmp.lt.s32.totalorder %s25, 8
        %s296 = scalar_select %p295, %s25, 8
        %p297 = scmp.lt.s32.totalorder %s294, 3
        %s298 = scalar_select %p297, %s294, 3
        %s299 = smul.addr %s296, 4
        %s300 = sadd.s32 %s298, %s299
        %s301 = smul.addr %s300, 4
        %s302 = scalar_lea.vmem %s0, %s301
        %p303 = pneg %p60
        %p304 = pneg %p57
        %p305 = scmp.lt.s32.totalorder %s25, 8
        %s306 = scalar_select %p305, %s25, 8
        %p307 = scmp.lt.s32.totalorder %s24, 0
        %s308 = scalar_select %p307, %s24, 0
        %s309 = smul.addr %s306, 16
        %s310 = sadd.s32 %s308, %s309
        %s311 = smul.addr %s310, 4
        %s312 = scalar_lea.vmem %s1, %s311
        %p313 = pneg %p88
        %p314 = pneg %p85
        %p315 = pneg %p114
        %p316 = pneg %p111
        %p317 = pneg %p140
        %p318 = pneg %p137
        %s319 = smul.u32 4, %s23
        %p320 = scmp.lt.s32.totalorder %s319, 3
        %s321 = scalar_select %p320, %s319, 3
        %p322 = scmp.lt.s32.totalorder %s24, 0
        %s323 = scalar_select %p322, %s24, 0
        %s324 = sadd.s32 %s323, %s321
        %s325 = smul.addr %s324, 4
        %s326 = scalar_lea.vmem %s4, %s325
        %p327 = pneg %p168
        %p328 = pneg %p165
        %p329 = pneg %p196
        %p330 = pneg %p193
        %s331 = smul.u32 4, %s23
        %p332 = scmp.lt.s32.totalorder %s331, 3
        %s333 = scalar_select %p332, %s331, 3
        %p334 = scmp.lt.s32.totalorder %s24, 0
        %s335 = scalar_select %p334, %s24, 0
        %s336 = sadd.s32 %s335, %s333
        %s337 = smul.addr %s336, 4
        %s338 = scalar_lea.vmem %s5, %s337
        %s339 = smul.u32 4, %s23
        %p340 = scmp.lt.s32.totalorder %s25, 8
        %s341 = scalar_select %p340, %s25, 8
        %p342 = scmp.lt.s32.totalorder %s339, 3
        %s343 = scalar_select %p342, %s339, 3
        %s344 = smul.addr %s341, 4
        %s345 = sadd.s32 %s343, %s344
        %s346 = smul.addr %s345, 4
        %s347 = scalar_lea.vmem %s0, %s346
        %s348 = smul.u32 4, %s23
        %p349 = scmp.lt.s32.totalorder %s25, 8
        %s350 = scalar_select %p349, %s25, 8
        %p351 = scmp.lt.s32.totalorder %s24, 0
        %s352 = scalar_select %p351, %s24, 0
        %s353 = smul.addr %s350, 16
        %s354 = sadd.s32 %s352, %s353
        %s355 = smul.addr %s354, 4
        %s356 = scalar_lea.vmem %s1, %s355
        %s357 = smul.u32 4, %s23
        %p358 = scmp.lt.s32.totalorder %s357, 3
        %s359 = scalar_select %p358, %s357, 3
        %p360 = scmp.lt.s32.totalorder %s24, 0
        %s361 = scalar_select %p360, %s24, 0
        %s362 = sadd.s32 %s361, %s359
        %s363 = smul.addr %s362, 4
        %s364 = scalar_lea.vmem %s4, %s363
        %s365 = smul.u32 4, %s23
        %s366 = smul.u32 4, %s23
        %p367 = scmp.lt.s32.totalorder %s366, 3
        %s368 = scalar_select %p367, %s366, 3
        %p369 = scmp.lt.s32.totalorder %s24, 0
        %s370 = scalar_select %p369, %s24, 0
        %s371 = sadd.s32 %s370, %s368
        %s372 = smul.addr %s371, 4
        %s373 = scalar_lea.vmem %s5, %s372
        %s374 = smul.u32 4, %s23
        %p375 = scmp.eq.s32.totalorder %s25, 0
        // Predicated region
        $region49: #{resnet_forward.21} parent=39 // pred_check
          %p376 = pneg %p375
        $region50: #{resnet_forward.21} parent=39 // pred_check_branch
          %378 = sbr.rel (%p376) target = $region52
        $region51: #{resnet_forward.21} parent=39 // pred_region
          %379 = vst [vmem:[#allocation2] sm:$0xff] 0.0
          %380 = vst [vmem:[#allocation2 + $0x8] sm:$0xff] 0.0
          %381 = vst [vmem:[#allocation2 + $0x10] sm:$0xff] 0.0
          %382 = vst [vmem:[#allocation2 + $0x18] sm:$0xff] 0.0
        $region52: #{resnet_forward.21} parent=39 // pred_fallthru
          _
        %v383 = vld [vmem:[#allocation2] sm:$0xff]
        %v384 = vld [vmem:[#allocation2 + $0x8] sm:$0xff]
        %v385 = vld [vmem:[#allocation2 + $0x10] sm:$0xff]
        %v386 = vld [vmem:[#allocation2 + $0x18] sm:$0xff]
        %v387 = vld [vmem:[%s347] sm:$0xf]
        %v388 = vld [vmem:[%s347 + $0x4] sm:$0xf]
        %v389 = vld [vmem:[%s347 + $0x8] sm:$0xf]
        %v390 = vld [vmem:[%s347 + $0xc] sm:$0xf]
        %v391 = vld [vmem:[%s356] sm:$0xf]
        %v392 = vld [vmem:[%s356 + $0x4] sm:$0xf]
        %v393 = vld [vmem:[%s356 + $0x8] sm:$0xf]
        %v394 = vld [vmem:[%s356 + $0xc] sm:$0xf]
        %v395 = vld [vmem:[%s356 + $0x10] sm:$0xf]
        %v396 = vld [vmem:[%s356 + $0x14] sm:$0xf]
        %v397 = vld [vmem:[%s356 + $0x18] sm:$0xf]
        %v398 = vld [vmem:[%s356 + $0x1c] sm:$0xf]
        %v399 = vld [vmem:[%s356 + $0x20] sm:$0xf]
        %v400 = vld [vmem:[%s356 + $0x24] sm:$0xf]
        %v401 = vld [vmem:[%s356 + $0x28] sm:$0xf]
        %v402 = vld [vmem:[%s356 + $0x2c] sm:$0xf]
        %v403 = vld [vmem:[%s356 + $0x30] sm:$0xf]
        %v404 = vld [vmem:[%s356 + $0x34] sm:$0xf]
        %v405 = vld [vmem:[%s356 + $0x38] sm:$0xf]
        %v406 = vld [vmem:[%s356 + $0x3c] sm:$0xf]
        %v411 = vunpack.c.l.b16 %v387
        %v412 = vunpack.c.l.b16 %v388
        %v413 = vunpack.c.l.b16 %v389
        %v414 = vunpack.c.l.b16 %v390
        %v415 = vpack.c.b16 %v412, %v411
        %v416 = vpack.c.b16 %v414, %v413
        %v435 = vunpack.c.l.b16 %v391
        %v436 = vunpack.c.l.b16 %v392
        %v437 = vunpack.c.l.b16 %v393
        %v438 = vunpack.c.l.b16 %v394
        %v439 = vunpack.c.l.b16 %v395
        %v440 = vunpack.c.l.b16 %v396
        %v441 = vunpack.c.l.b16 %v397
        %v442 = vunpack.c.l.b16 %v398
        %v443 = vunpack.c.l.b16 %v399
        %v444 = vunpack.c.l.b16 %v400
        %v445 = vunpack.c.l.b16 %v401
        %v446 = vunpack.c.l.b16 %v402
        %v447 = vunpack.c.l.b16 %v403
        %v448 = vunpack.c.l.b16 %v404
        %v449 = vunpack.c.l.b16 %v405
        %v450 = vunpack.c.l.b16 %v406
        %v451 = vpack.c.b16 %v436, %v435
        %v452 = vpack.c.b16 %v438, %v437
        %v453 = vpack.c.b16 %v440, %v439
        %v454 = vpack.c.b16 %v442, %v441
        %v455 = vpack.c.b16 %v444, %v443
        %v456 = vpack.c.b16 %v446, %v445
        %v457 = vpack.c.b16 %v448, %v447
        %v458 = vpack.c.b16 %v450, %v449
        %467 = vmatpush.bf16.msra.mxu0 %v458
        %468 = vmatpush.bf16.msra.mxu0 %v457
        %469 = vmatpush.bf16.msra.mxu0 %v456
        %470 = vmatpush.bf16.msra.mxu0 %v455
        %471 = vmatpush.bf16.msra.mxu0 %v454
        %472 = vmatpush.bf16.msra.mxu0 %v453
        %473 = vmatpush.bf16.msra.mxu0 %v452
        %474 = vmatpush.bf16.msra.mxu0 %v451
        %475 = vmatmul.bf16.gmra.mxu0 %v415
        %v476 = vpop.f32.mrf.mxu0
        %v477 = vadd.f32 0.0, %v476
        %v478 = vpop.f32.mrf.mxu0
        %v479 = vadd.f32 0.0, %v478
        %480 = vmatmul.bf16.gmra.mxu0 %v416
        %v481 = vpop.f32.mrf.mxu0
        %v482 = vadd.f32 0.0, %v481
        %v483 = vpop.f32.mrf.mxu0
        %v484 = vadd.f32 0.0, %v483
        %485 = vdwg.mxu0
        %v486 = vadd.f32 %v383, %v477
        %v487 = vadd.f32 %v384, %v479
        %v488 = vadd.f32 %v385, %v482
        %v489 = vadd.f32 %v386, %v484
        %490 = vst [vmem:[#allocation2] sm:$0xff] %v486
        %491 = vst [vmem:[#allocation2 + $0x8] sm:$0xff] %v487
        %492 = vst [vmem:[#allocation2 + $0x10] sm:$0xff] %v488
        %493 = vst [vmem:[#allocation2 + $0x18] sm:$0xff] %v489
        %p494 = scmp.eq.s32.totalorder %s25, 8
        // Predicated region
        $region53: #{resnet_forward.21} parent=39 // pred_check
          %p495 = pneg %p494
        $region54: #{resnet_forward.21} parent=39 // pred_check_branch
          %497 = sbr.rel (%p495) target = $region56
        $region55: #{resnet_forward.21} parent=39 // pred_region
          %v498 = vld [vmem:[#allocation2] sm:$0xff]
          %v499 = vld [vmem:[#allocation2 + $0x8] sm:$0xff]
          %v500 = vld [vmem:[#allocation2 + $0x10] sm:$0xff]
          %v501 = vld [vmem:[#allocation2 + $0x18] sm:$0xff]
          %v502 = vld [vmem:[#allocation3] sm:$0x1]
          %v504 = vperm.slane %v502, 0
          %v506 = vmul.f32 %v498, %v504
          %v507 = vmul.f32 %v499, %v504
          %v508 = vmul.f32 %v500, %v504
          %v509 = vmul.f32 %v501, %v504
          %v510 = vld [vmem:[#allocation5] sm:$0x1]
          %v512 = vperm.slane %v510, 0
          %v514 = vadd.f32 %v506, %v512
          %v515 = vadd.f32 %v507, %v512
          %v516 = vadd.f32 %v508, %v512
          %v517 = vadd.f32 %v509, %v512
          %v518 = vld [vmem:[%s364] sm:$0xf]
          %v519 = vld [vmem:[%s364 + $0x4] sm:$0xf]
          %v520 = vld [vmem:[%s364 + $0x8] sm:$0xf]
          %v521 = vld [vmem:[%s364 + $0xc] sm:$0xf]
          %v522 = vunpack.c.l.bf16 %v518
          %v523 = vunpack.c.l.bf16 %v519
          %v524 = vunpack.c.l.bf16 %v520
          %v525 = vunpack.c.l.bf16 %v521
          %v526 = vadd.f32 %v514, %v522
          %v527 = vadd.f32 %v515, %v523
          %v528 = vadd.f32 %v516, %v524
          %v529 = vadd.f32 %v517, %v525
          %v530 = vmax.f32 %v526, 0.0
          %v531 = vmax.f32 %v527, 0.0
          %v532 = vmax.f32 %v528, 0.0
          %v533 = vmax.f32 %v529, 0.0
          %v534 = vpack.c.bf16 %v530, %v530
          %v535 = vpack.c.bf16 %v531, %v531
          %v536 = vpack.c.bf16 %v532, %v532
          %v537 = vpack.c.bf16 %v533, %v533
          %538 = vst [vmem:[%s373] sm:$0xf] %v534
          %539 = vst [vmem:[%s373 + $0x4] sm:$0xf] %v535
          %540 = vst [vmem:[%s373 + $0x8] sm:$0xf] %v536
          %541 = vst [vmem:[%s373 + $0xc] sm:$0xf] %v537
        $region56: #{resnet_forward.21} parent=39 // pred_fallthru
          _
        %s542 = smul.u32 4, %s23
        %p543 = scmp.lt.s32.totalorder %s542, 3
        %s544 = scalar_select %p543, %s542, 3
        %p545 = scmp.lt.s32.totalorder %s24, 0
        %s546 = scalar_select %p545, %s24, 0
        %s547 = sadd.s32 %s546, %s544
        %s548 = smul.addr %s547, 4
        %s549 = scalar_lea.vmem %s5, %s548
        // Predicated region
        $region57: #{resnet_forward.21} parent=39 // pred_check
          %p550 = pneg %p193
        $region58: #{resnet_forward.21} parent=39 // pred_check_branch
          %552 = sbr.rel (%p550) target = $region60
        $region59: #{resnet_forward.21} parent=39 // pred_region
          %s553 = smul.u32 4, %s23
        $region60: #{resnet_forward.21} parent=39 // pred_fallthru
          _
        // Predicated region
        $region61: #{resnet_forward.21} parent=39 // pred_check
          %p554 = pneg %p193
        $region62: #{resnet_forward.21} parent=39 // pred_check_branch
          %556 = sbr.rel (%p554) target = $region64
        $region63: #{resnet_forward.21} parent=39 // pred_region
          %s557 = smul.u32 4, %s23
          %p558 = scmp.lt.s32.totalorder %s557, 3
          %s559 = scalar_select %p558, %s557, 3
          %p560 = scmp.lt.s32.totalorder %s24, 0
          %s561 = scalar_select %p560, %s24, 0
          %s562 = sadd.s32 %s561, %s559
          %s563 = smul.addr %s562, 4
          %s564 = scalar_lea.vmem %s5, %s563
        $region64: #{resnet_forward.21} parent=39 // pred_fallthru
          _
      $region40: #{resnet_forward.21} parent=5 // pred_fallthru
        _
      %p565 = scmp.le.s32.totalorder 2, %s13
      // Predicated region
      $region65: #{resnet_forward.21} parent=5 // pred_check
        %p566 = pneg %p565
      $region66: #{resnet_forward.21} parent=5 // pred_check_branch
        %568 = sbr.rel (%p566) target = $region68
      $region67: #{resnet_forward.21} parent=5 // pred_region
        %s569 = ssub.s32 %s13, 2
      $region68: #{resnet_forward.21} parent=5 // pred_fallthru
        _
    $region6: #{resnet_forward.21} parent=1 // loop_footer
      %s17 = sadd.s32 1, %s13
    $region7: #{resnet_forward.21} parent=1 // loop_footer_branch
      %12 = sbr.rel target = $region3
    $region8: #{resnet_forward.21} parent=1 // loop_exit
      _
    %570 = vsyncpa [#allocation4], 1
    %s571 = scalar_lea.sflag [#allocation4], 1
    %572 = vsyncpa %s571, 1
    %573 = vsyncpa [#allocation6], 1

// kernel: resnet_forward.20
$region0: #{resnet_forward.20}
  #allocation0 [shape = 'u32[]', space=smem, size = 0x4, offset = 0x4, fixed_abs, tag = 'smem constant byte address 0x4 - core index']
  #allocation1 [shape = 'u32[72,128]{1,0:T(1,128)}', space=vmem, size = 0x9000, scoped, tag = 'internal scratch']
  #allocation2 [shape = 'f32[32,128]{1,0:T(8,128)}', space=vmem, size = 0x4000, scoped, tag = 'scratch operand']
  %s0 = inlined_call_operand.vmem [shape: bf16[1,32,64], index: 0, kind: input, shape index: {}]
  %s1 = inlined_call_operand.vmem [shape: bf16[1,64,128], index: 1, kind: input, shape index: {}]
  %s2 = inlined_call_operand.vmem [shape: f32[1,128], index: 2, kind: input, shape index: {}]
  %s3 = inlined_call_operand.hbm [shape: f32[1,128], index: 3, kind: input, shape index: {}]
  %s4 = inlined_call_operand.vmem [shape: bf16[32,128], index: 4, kind: output, shape index: {}]
  %s5 = sld [smem:[#allocation0]]
  $region38: #{resnet_forward.20} parent=0
    _
  %s7 = ssub.s32 1, %s5
  %s8 = scalar_select 0, %s7, %s5
  $region1: #{resnet_forward.20} parent=0
    #allocation3 [shape = 'u8[512]{0}', space=vmem, size = 0x400, scoped, tag = 'input window, operand 3, single buffered']
    #allocation4 [shape = 's32[1]{0}', space=sflag, size = 0x4, scoped, tag = 'scoped memory for resnet_forward.20']
    %9 = vsyncpa [#allocation4], 0
    // Predicated region
    $region2: #{resnet_forward.20} parent=1 // pred_check
      _
    $region3: #{resnet_forward.20} parent=1 // pred_check_branch
      %11 = sbr.rel (0) target = $region5
    $region4: #{resnet_forward.20} parent=1 // pred_region
      _
    $region5: #{resnet_forward.20} parent=1 // pred_fallthru
      _
    // Predicated region
    $region6: #{resnet_forward.20} parent=1 // pred_check
      _
    $region7: #{resnet_forward.20} parent=1 // pred_check_branch
      %13 = sbr.rel (0) target = $region9
    $region8: #{resnet_forward.20} parent=1 // pred_region
      _
    $region9: #{resnet_forward.20} parent=1 // pred_fallthru
      _
    // Predicated region
    $region10: #{resnet_forward.20} parent=1 // pred_check
      _
    $region11: #{resnet_forward.20} parent=1 // pred_check_branch
      %15 = sbr.rel (0) target = $region13
    $region12: #{resnet_forward.20} parent=1 // pred_region
      _
    $region13: #{resnet_forward.20} parent=1 // pred_fallthru
      _
    // Predicated region
    $region14: #{resnet_forward.20} parent=1 // pred_check
      _
    $region15: #{resnet_forward.20} parent=1 // pred_check_branch
      %17 = sbr.rel (0) target = $region17
    $region16: #{resnet_forward.20} parent=1 // pred_region
      %19 = vsyncadd [#allocation4], 0
      %s21 = sshll.u32 %s3, 4
      %s22 = int_to_ptr.hbm [resolvable:$true] %s21
      %s23 = sshll.u32 [#allocation3], 4
      %s24 = int_to_ptr.vmem [resolvable:$true] %s23
      %26 = dma.hbm_to_vmem [thread:$0]  %s22, 16, %s24, [#allocation4]
    $region17: #{resnet_forward.20} parent=1 // pred_fallthru
      _
    // Predicated region
    $region18: #{resnet_forward.20} parent=1 // pred_check
      _
    $region19: #{resnet_forward.20} parent=1 // pred_check_branch
      %28 = sbr.rel (0) target = $region21
    $region20: #{resnet_forward.20} parent=1 // pred_region
      %30 = dma.done [#allocation4], 16
    $region21: #{resnet_forward.20} parent=1 // pred_fallthru
      _
    %p32 = scmp.eq.s32.totalorder 0, 0
    // Predicated region
    $region22: #{resnet_forward.20} parent=1 // pred_check
      %p33 = pneg %p32
    $region23: #{resnet_forward.20} parent=1 // pred_check_branch
      %35 = sbr.rel (%p33) target = $region25
    $region24: #{resnet_forward.20} parent=1 // pred_region
      %36 = vst [vmem:[#allocation2] sm:$0xff] 0.0
      %37 = vst [vmem:[#allocation2 + $0x8] sm:$0xff] 0.0
      %38 = vst [vmem:[#allocation2 + $0x10] sm:$0xff] 0.0
      %39 = vst [vmem:[#allocation2 + $0x18] sm:$0xff] 0.0
    $region25: #{resnet_forward.20} parent=1 // pred_fallthru
      _
    %v40 = vld [vmem:[#allocation2] sm:$0xff]
    %v41 = vld [vmem:[#allocation2 + $0x8] sm:$0xff]
    %v42 = vld [vmem:[#allocation2 + $0x10] sm:$0xff]
    %v43 = vld [vmem:[#allocation2 + $0x18] sm:$0xff]
    %v44 = vld [vmem:[%s0] sm:$0xf]
    %v45 = vld [vmem:[%s0 + $0x4] sm:$0xf]
    %v46 = vld [vmem:[%s0 + $0x8] sm:$0xf]
    %v47 = vld [vmem:[%s0 + $0xc] sm:$0xf]
    %v48 = vld [vmem:[%s1] sm:$0xf]
    %v49 = vld [vmem:[%s1 + $0x4] sm:$0xf]
    %v50 = vld [vmem:[%s1 + $0x8] sm:$0xf]
    %v51 = vld [vmem:[%s1 + $0xc] sm:$0xf]
    %v52 = vld [vmem:[%s1 + $0x10] sm:$0xf]
    %v53 = vld [vmem:[%s1 + $0x14] sm:$0xf]
    %v54 = vld [vmem:[%s1 + $0x18] sm:$0xf]
    %v55 = vld [vmem:[%s1 + $0x1c] sm:$0xf]
    %v60 = vunpack.c.l.b16 %v44
    %v61 = vunpack.c.l.b16 %v45
    %v62 = vunpack.c.l.b16 %v46
    %v63 = vunpack.c.l.b16 %v47
    %v64 = vpack.c.b16 %v61, %v60
    %v65 = vpack.c.b16 %v63, %v62
    %v74 = vunpack.c.l.b16 %v48
    %v75 = vunpack.c.l.b16 %v49
    %v76 = vunpack.c.l.b16 %v50
    %v77 = vunpack.c.l.b16 %v51
    %v78 = vunpack.c.l.b16 %v52
    %v79 = vunpack.c.l.b16 %v53
    %v80 = vunpack.c.l.b16 %v54
    %v81 = vunpack.c.l.b16 %v55
    %v82 = vpack.c.b16 %v75, %v74
    %v83 = vpack.c.b16 %v77, %v76
    %v84 = vpack.c.b16 %v79, %v78
    %v85 = vpack.c.b16 %v81, %v80
    %vm90 = vcmask 523264
    %v92 = vsel %vm90, %v64, 0
    %v95 = vsel %vm90, %v65, 0
    %97 = vmatpush.bf16.msra.mxu0 0
    %98 = vmatpush.bf16.msra.mxu0 0
    %99 = vmatpush.bf16.msra.mxu0 0
    %100 = vmatpush.bf16.msra.mxu0 0
    %101 = vmatpush.bf16.msra.mxu0 %v85
    %102 = vmatpush.bf16.msra.mxu0 %v84
    %103 = vmatpush.bf16.msra.mxu0 %v83
    %104 = vmatpush.bf16.msra.mxu0 %v82
    %105 = vmatmul.bf16.gmra.mxu0 %v92
    %v106 = vpop.f32.mrf.mxu0
    %v107 = vadd.f32 0.0, %v106
    %v108 = vpop.f32.mrf.mxu0
    %v109 = vadd.f32 0.0, %v108
    %110 = vmatmul.bf16.gmra.mxu0 %v95
    %v111 = vpop.f32.mrf.mxu0
    %v112 = vadd.f32 0.0, %v111
    %v113 = vpop.f32.mrf.mxu0
    %v114 = vadd.f32 0.0, %v113
    %115 = vdwg.mxu0
    %v116 = vadd.f32 %v40, %v107
    %v117 = vadd.f32 %v41, %v109
    %v118 = vadd.f32 %v42, %v112
    %v119 = vadd.f32 %v43, %v114
    %120 = vst [vmem:[#allocation2] sm:$0xff] %v116
    %121 = vst [vmem:[#allocation2 + $0x8] sm:$0xff] %v117
    %122 = vst [vmem:[#allocation2 + $0x10] sm:$0xff] %v118
    %123 = vst [vmem:[#allocation2 + $0x18] sm:$0xff] %v119
    // Predicated region
    $region26: #{resnet_forward.20} parent=1 // pred_check
      %p124 = pneg %p32
    $region27: #{resnet_forward.20} parent=1 // pred_check_branch
      %126 = sbr.rel (%p124) target = $region29
    $region28: #{resnet_forward.20} parent=1 // pred_region
      %v127 = vld [vmem:[#allocation2] sm:$0xff]
      %v128 = vld [vmem:[#allocation2 + $0x8] sm:$0xff]
      %v129 = vld [vmem:[#allocation2 + $0x10] sm:$0xff]
      %v130 = vld [vmem:[#allocation2 + $0x18] sm:$0xff]
      %v131 = vld [vmem:[%s2] sm:$0x1]
      %v133 = vperm.slane %v131, 0
      %v135 = vmul.f32 %v127, %v133
      %v136 = vmul.f32 %v128, %v133
      %v137 = vmul.f32 %v129, %v133
      %v138 = vmul.f32 %v130, %v133
      %v139 = vld [vmem:[#allocation3] sm:$0x1]
      %v141 = vperm.slane %v139, 0
      %v143 = vadd.f32 %v135, %v141
      %v144 = vadd.f32 %v136, %v141
      %v145 = vadd.f32 %v137, %v141
      %v146 = vadd.f32 %v138, %v141
      %v147 = vpack.c.bf16 %v143, %v143
      %v148 = vpack.c.bf16 %v144, %v144
      %v149 = vpack.c.bf16 %v145, %v145
      %v150 = vpack.c.bf16 %v146, %v146
      %151 = vst [vmem:[%s4] sm:$0xf] %v147
      %152 = vst [vmem:[%s4 + $0x4] sm:$0xf] %v148
      %153 = vst [vmem:[%s4 + $0x8] sm:$0xf] %v149
      %154 = vst [vmem:[%s4 + $0xc] sm:$0xf] %v150
    $region29: #{resnet_forward.20} parent=1 // pred_fallthru
      _
    // Predicated region
    $region30: #{resnet_forward.20} parent=1 // pred_check
      _
    $region31: #{resnet_forward.20} parent=1 // pred_check_branch
      %156 = sbr.rel (0) target = $region33
    $region32: #{resnet_forward.20} parent=1 // pred_region
      _
    $region33: #{resnet_forward.20} parent=1 // pred_fallthru
      _
    // Predicated region
    $region34: #{resnet_forward.20} parent=1 // pred_check
      _
    $region35: #{resnet_forward.20} parent=1 // pred_check_branch
      %158 = sbr.rel (0) target = $region37
    $region36: #{resnet_forward.20} parent=1 // pred_region
      _
    $region37: #{resnet_forward.20} parent=1 // pred_fallthru
      _
    %159 = vsyncpa [#allocation4], 1

// kernel: resnet_forward.22
$region0: #{resnet_forward.22}
  #allocation0 [shape = 'u32[]', space=smem, size = 0x4, offset = 0x4, fixed_abs, tag = 'smem constant byte address 0x4 - core index']
  #allocation1 [shape = 'u32[72,128]{1,0:T(1,128)}', space=vmem, size = 0x9000, scoped, tag = 'internal scratch']
  #allocation2 [shape = 'f32[8,256]{1,0:T(8,128)}', space=vmem, size = 0x2000, scoped, tag = 'scratch operand']
  %s0 = inlined_call_operand.vmem [shape: bf16[9,8,128], index: 0, kind: input, shape index: {}]
  %s1 = inlined_call_operand.vmem [shape: bf16[9,128,256], index: 1, kind: input, shape index: {}]
  %s2 = inlined_call_operand.vmem [shape: f32[1,256], index: 2, kind: input, shape index: {}]
  %s3 = inlined_call_operand.vmem [shape: f32[1,256], index: 3, kind: input, shape index: {}]
  %s4 = inlined_call_operand.vmem [shape: bf16[8,256], index: 4, kind: output, shape index: {}]
  %s5 = sld [smem:[#allocation0]]
  $region57: #{resnet_forward.22} parent=0
    _
  %s7 = ssub.s32 1, %s5
  %s8 = scalar_select 0, %s7, %s5
  loop: start=0, step=1, limit=11
  $region2: #{resnet_forward.22} parent=0 // loop_pre_header
    _
  $region3: #{resnet_forward.22} parent=0 // loop_header
    %s10 = sphi 0, %s14
    %p11 = scmp.ge.s32.totalorder %s10, 11
    %s17 = sphi 0, %s36
    %s18 = sphi 0, %s32
    %s19 = sphi 0, %s28
    %s20 = sphi 0, %s17
    %s21 = sphi 0, %s18
    %s22 = sphi 0, %s19
    %s23 = sphi 0, %s20
    %s24 = sphi 0, %s21
    %s25 = sphi 0, %s22
    %s41 = sphi 0, %s43
    %s44 = sphi 0, %s41
    %s45 = sphi 0, %s44
    %s61 = sphi 0, %s45
    %s69 = sphi 0, %s71
    %s72 = sphi 0, %s69
    %s73 = sphi 0, %s72
    %s89 = sphi 0, %s73
    %s95 = sphi 0, %s97
    %s98 = sphi 0, %s95
    %s99 = sphi 0, %s98
    %s115 = sphi 0, %s99
    %s121 = sphi 0, %s123
    %s124 = sphi 0, %s121
    %s125 = sphi 0, %s124
    %s141 = sphi 0, %s125
    %s149 = sphi 0, %s151
    %s152 = sphi 0, %s149
    %s153 = sphi 0, %s152
    %s169 = sphi 0, %s153
  $region4: #{resnet_forward.22} parent=0 // loop_header_branch
    %13 = sbr.rel (%p11) target = $region8
  $region5: #{resnet_forward.22} parent=0 // loop_body
    %s15 = ssub.s32 %s10, 1
    %s16 = ssub.s32 %s10, 2
    %s26 = sadd.s32 1, %s19
    %p27 = scmp.ge.s32.totalorder %s26, 9
    %s28 = scalar_select %p27, 0, %s26
    %s29 = sadd.s32 1, %s18
    %s30 = scalar_select %p27, %s29, %s18
    %p31 = scmp.ge.s32.totalorder %s30, 1
    %s32 = scalar_select %p31, 0, %s30
    %s33 = sadd.s32 1, %s17
    %s34 = scalar_select %p31, %s33, %s17
    %p35 = scmp.ge.s32.totalorder %s34, 1
    %s36 = scalar_select %p35, 0, %s34
    %s37 = ssub.s32 %s19, %s28
    %s38 = ssub.s32 %s17, %s36
    %s39 = sor.u32 %s37, %s38
    %p40 = scmp.eq.s32.totalorder %s39, 0
    %s42 = sadd.s32 %s41, 1
    %s43 = scalar_select %p40, %s41, %s42
    %p46 = pneg %p40
    %p47 = scmp.eq.s32.totalorder %s10, 8
    %p48 = por %p46, %p47
    %p49 = scmp.ne.s32.totalorder %s41, %s44
    %p50 = scmp.eq.s32.totalorder %s10, 0
    %p51 = por %p49, %p50
    %p52 = scmp.ne.s32.totalorder %s41, %s44
    %p53 = scmp.eq.s32.totalorder %s15, 8
    %p54 = por %p52, %p53
    %p55 = scmp.ne.s32.totalorder %s44, %s45
    %p56 = scmp.eq.s32.totalorder %s15, 0
    %p57 = por %p55, %p56
    %p58 = scmp.ne.s32.totalorder %s44, %s45
    %p59 = scmp.eq.s32.totalorder %s16, 8
    %p60 = por %p58, %p59
    %p62 = scmp.ne.s32.totalorder %s45, %s61
    %p63 = scmp.eq.s32.totalorder %s16, 0
    %p64 = por %p62, %p63
    %s65 = ssub.s32 %s19, %s28
    %s66 = ssub.s32 %s18, %s32
    %s67 = sor.u32 %s65, %s66
    %p68 = scmp.eq.s32.totalorder %s67, 0
    %s70 = sadd.s32 %s69, 1
    %s71 = scalar_select %p68, %s69, %s70
    %p74 = pneg %p68
    %p75 = scmp.eq.s32.totalorder %s10, 8
    %p76 = por %p74, %p75
    %p77 = scmp.ne.s32.totalorder %s69, %s72
    %p78 = scmp.eq.s32.totalorder %s10, 0
    %p79 = por %p77, %p78
    %p80 = scmp.ne.s32.totalorder %s69, %s72
    %p81 = scmp.eq.s32.totalorder %s15, 8
    %p82 = por %p80, %p81
    %p83 = scmp.ne.s32.totalorder %s72, %s73
    %p84 = scmp.eq.s32.totalorder %s15, 0
    %p85 = por %p83, %p84
    %p86 = scmp.ne.s32.totalorder %s72, %s73
    %p87 = scmp.eq.s32.totalorder %s16, 8
    %p88 = por %p86, %p87
    %p90 = scmp.ne.s32.totalorder %s73, %s89
    %p91 = scmp.eq.s32.totalorder %s16, 0
    %p92 = por %p90, %p91
    %s93 = ssub.s32 %s18, %s32
    %p94 = scmp.eq.s32.totalorder %s93, 0
    %s96 = sadd.s32 %s95, 1
    %s97 = scalar_select %p94, %s95, %s96
    %p100 = pneg %p94
    %p101 = scmp.eq.s32.totalorder %s10, 8
    %p102 = por %p100, %p101
    %p103 = scmp.ne.s32.totalorder %s95, %s98
    %p104 = scmp.eq.s32.totalorder %s10, 0
    %p105 = por %p103, %p104
    %p106 = scmp.ne.s32.totalorder %s95, %s98
    %p107 = scmp.eq.s32.totalorder %s15, 8
    %p108 = por %p106, %p107
    %p109 = scmp.ne.s32.totalorder %s98, %s99
    %p110 = scmp.eq.s32.totalorder %s15, 0
    %p111 = por %p109, %p110
    %p112 = scmp.ne.s32.totalorder %s98, %s99
    %p113 = scmp.eq.s32.totalorder %s16, 8
    %p114 = por %p112, %p113
    %p116 = scmp.ne.s32.totalorder %s99, %s115
    %p117 = scmp.eq.s32.totalorder %s16, 0
    %p118 = por %p116, %p117
    %s119 = ssub.s32 %s18, %s32
    %p120 = scmp.eq.s32.totalorder %s119, 0
    %s122 = sadd.s32 %s121, 1
    %s123 = scalar_select %p120, %s121, %s122
    %p126 = pneg %p120
    %p127 = scmp.eq.s32.totalorder %s10, 8
    %p128 = por %p126, %p127
    %p129 = scmp.ne.s32.totalorder %s121, %s124
    %p130 = scmp.eq.s32.totalorder %s10, 0
    %p131 = por %p129, %p130
    %p132 = scmp.ne.s32.totalorder %s121, %s124
    %p133 = scmp.eq.s32.totalorder %s15, 8
    %p134 = por %p132, %p133
    %p135 = scmp.ne.s32.totalorder %s124, %s125
    %p136 = scmp.eq.s32.totalorder %s15, 0
    %p137 = por %p135, %p136
    %p138 = scmp.ne.s32.totalorder %s124, %s125
    %p139 = scmp.eq.s32.totalorder %s16, 8
    %p140 = por %p138, %p139
    %p142 = scmp.ne.s32.totalorder %s125, %s141
    %p143 = scmp.eq.s32.totalorder %s16, 0
    %p144 = por %p142, %p143
    %s145 = ssub.s32 %s17, %s36
    %s146 = ssub.s32 %s18, %s32
    %s147 = sor.u32 %s145, %s146
    %p148 = scmp.eq.s32.totalorder %s147, 0
    %s150 = sadd.s32 %s149, 1
    %s151 = scalar_select %p148, %s149, %s150
    %p154 = pneg %p148
    %p155 = scmp.eq.s32.totalorder %s10, 8
    %p156 = por %p154, %p155
    %p157 = scmp.ne.s32.totalorder %s149, %s152
    %p158 = scmp.eq.s32.totalorder %s10, 0
    %p159 = por %p157, %p158
    %p160 = scmp.ne.s32.totalorder %s149, %s152
    %p161 = scmp.eq.s32.totalorder %s15, 8
    %p162 = por %p160, %p161
    %p163 = scmp.ne.s32.totalorder %s152, %s153
    %p164 = scmp.eq.s32.totalorder %s15, 0
    %p165 = por %p163, %p164
    %p166 = scmp.ne.s32.totalorder %s152, %s153
    %p167 = scmp.eq.s32.totalorder %s16, 8
    %p168 = por %p166, %p167
    %p170 = scmp.ne.s32.totalorder %s153, %s169
    %p171 = scmp.eq.s32.totalorder %s16, 0
    %p172 = por %p170, %p171
    %p173 = scmp.le.s32.totalorder 1, %s10
    %p174 = scmp.lt.s32.totalorder %s10, 10
    %p175 = pnand %p173, %p174
    %p176 = pneg %p175
    // Predicated region
    $region9: #{resnet_forward.22} parent=5 // pred_check
      _
    $region10: #{resnet_forward.22} parent=5 // pred_check_branch
      %178 = sbr.rel (%p175) target = $region12
    $region11: #{resnet_forward.22} parent=5 // pred_region
      %s179 = ssub.s32 %s10, 1
      // Predicated region
      $region13: #{resnet_forward.22} parent=11 // pred_check
        %p180 = pneg %p111
      $region14: #{resnet_forward.22} parent=11 // pred_check_branch
        %182 = sbr.rel (%p180) target = $region16
      $region15: #{resnet_forward.22} parent=11 // pred_region
        %s183 = smul.u32 2, %s21
        %p184 = scmp.lt.s32.totalorder %s183, 1
        %s185 = scalar_select %p184, %s183, 1
        %s186 = scalar_lea.vmem %s2, %s185
        %s187 = smul.u32 2, %s21
      $region16: #{resnet_forward.22} parent=11 // pred_fallthru
        _
      // Predicated region
      $region17: #{resnet_forward.22} parent=11 // pred_check
        %p188 = pneg %p137
      $region18: #{resnet_forward.22} parent=11 // pred_check_branch
        %190 = sbr.rel (%p188) target = $region20
      $region19: #{resnet_forward.22} parent=11 // pred_region
        %s191 = smul.u32 2, %s21
        %p192 = scmp.lt.s32.totalorder %s191, 1
        %s193 = scalar_select %p192, %s191, 1
        %s194 = scalar_lea.vmem %s3, %s193
        %s195 = smul.u32 2, %s21
      $region20: #{resnet_forward.22} parent=11 // pred_fallthru
        _
    $region12: #{resnet_forward.22} parent=5 // pred_fallthru
      _
    %p196 = scmp.lt.s32.totalorder %s10, 9
    // Predicated region
    $region21: #{resnet_forward.22} parent=5 // pred_check
      %p197 = pneg %p196
    $region22: #{resnet_forward.22} parent=5 // pred_check_branch
      %199 = sbr.rel (%p197) target = $region24
    $region23: #{resnet_forward.22} parent=5 // pred_region
      // Predicated region
      $region25: #{resnet_forward.22} parent=23 // pred_check
        %p200 = pneg %p51
      $region26: #{resnet_forward.22} parent=23 // pred_check_branch
        %202 = sbr.rel (%p200) target = $region28
      $region27: #{resnet_forward.22} parent=23 // pred_region
        %p203 = scmp.lt.s32.totalorder %s19, 8
        %s204 = scalar_select %p203, %s19, 8
        %p205 = scmp.lt.s32.totalorder %s17, 0
        %s206 = scalar_select %p205, %s17, 0
        %s207 = sadd.s32 %s206, %s204
        %s208 = smul.addr %s207, 4
        %s209 = scalar_lea.vmem %s0, %s208
      $region28: #{resnet_forward.22} parent=23 // pred_fallthru
        _
      // Predicated region
      $region29: #{resnet_forward.22} parent=23 // pred_check
        %p210 = pneg %p79
      $region30: #{resnet_forward.22} parent=23 // pred_check_branch
        %212 = sbr.rel (%p210) target = $region32
      $region31: #{resnet_forward.22} parent=23 // pred_region
        %s213 = smul.u32 2, %s18
        %p214 = scmp.lt.s32.totalorder %s19, 8
        %s215 = scalar_select %p214, %s19, 8
        %p216 = scmp.lt.s32.totalorder %s213, 1
        %s217 = scalar_select %p216, %s213, 1
        %s218 = smul.addr %s215, 32
        %s219 = sadd.s32 %s217, %s218
        %s220 = smul.addr %s219, 4
        %s221 = scalar_lea.vmem %s1, %s220
        %s222 = smul.u32 2, %s18
      $region32: #{resnet_forward.22} parent=23 // pred_fallthru
        _
    $region24: #{resnet_forward.22} parent=5 // pred_fallthru
      _
    %p223 = scmp.le.s32.totalorder 1, %s10
    %p224 = scmp.lt.s32.totalorder %s10, 10
    %p225 = pnand %p223, %p224
    %p226 = pneg %p225
    // Predicated region
    $region33: #{resnet_forward.22} parent=5 // pred_check
      _
    $region34: #{resnet_forward.22} parent=5 // pred_check_branch
      %228 = sbr.rel (%p225) target = $region36
    $region35: #{resnet_forward.22} parent=5 // pred_region
      %s229 = ssub.s32 %s10, 1
      %p230 = scmp.lt.s32.totalorder %s22, 8
      %s231 = scalar_select %p230, %s22, 8
      %p232 = scmp.lt.s32.totalorder %s20, 0
      %s233 = scalar_select %p232, %s20, 0
      %s234 = sadd.s32 %s233, %s231
      %s235 = smul.addr %s234, 4
      %s236 = scalar_lea.vmem %s0, %s235
      %p237 = pneg %p57
      %p238 = pneg %p54
      %s239 = smul.u32 2, %s21
      %p240 = scmp.lt.s32.totalorder %s22, 8
      %s241 = scalar_select %p240, %s22, 8
      %p242 = scmp.lt.s32.totalorder %s239, 1
      %s243 = scalar_select %p242, %s239, 1
      %s244 = smul.addr %s241, 32
      %s245 = sadd.s32 %s243, %s244
      %s246 = smul.addr %s245, 4
      %s247 = scalar_lea.vmem %s1, %s246
      %p248 = pneg %p85
      %p249 = pneg %p82
      %s250 = smul.u32 2, %s21
      %p251 = scmp.lt.s32.totalorder %s250, 1
      %s252 = scalar_select %p251, %s250, 1
      %s253 = scalar_lea.vmem %s2, %s252
      %p254 = pneg %p111
      %p255 = pneg %p108
      %s256 = smul.u32 2, %s21
      %p257 = scmp.lt.s32.totalorder %s256, 1
      %s258 = scalar_select %p257, %s256, 1
      %s259 = scalar_lea.vmem %s3, %s258
      %p260 = pneg %p137
      %p261 = pneg %p134
      %p262 = pneg %p165
      %p263 = pneg %p162
      %s264 = smul.u32 2, %s21
      %p265 = scmp.lt.s32.totalorder %s20, 0
      %s266 = scalar_select %p265, %s20, 0
      %p267 = scmp.lt.s32.totalorder %s264, 1
      %s268 = scalar_select %p267, %s264, 1
      %s269 = smul.addr %s266, 2
      %s270 = sadd.s32 %s268, %s269
      %s271 = smul.addr %s270, 4
      %s272 = scalar_lea.vmem %s4, %s271
      %p273 = scmp.lt.s32.totalorder %s22, 8
      %s274 = scalar_select %p273, %s22, 8
      %p275 = scmp.lt.s32.totalorder %s20, 0
      %s276 = scalar_select %p275, %s20, 0
      %s277 = sadd.s32 %s276, %s274
      %s278 = smul.addr %s277, 4
      %s279 = scalar_lea.vmem %s0, %s278
      %s280 = smul.u32 2, %s21
      %p281 = scmp.lt.s32.totalorder %s22, 8
      %s282 = scalar_select %p281, %s22, 8
      %p283 = scmp.lt.s32.totalorder %s280, 1
      %s284 = scalar_select %p283, %s280, 1
      %s285 = smul.addr %s282, 32
      %s286 = sadd.s32 %s284, %s285
      %s287 = smul.addr %s286, 4
      %s288 = scalar_lea.vmem %s1, %s287
      %s289 = smul.u32 2, %s21
      %s290 = smul.u32 2, %s21
      %p291 = scmp.lt.s32.totalorder %s290, 1
      %s292 = scalar_select %p291, %s290, 1
      %s293 = scalar_lea.vmem %s2, %s292
      %s294 = smul.u32 2, %s21
      %s295 = smul.u32 2, %s21
      %p296 = scmp.lt.s32.totalorder %s295, 1
      %s297 = scalar_select %p296, %s295, 1
      %s298 = scalar_lea.vmem %s3, %s297
      %s299 = smul.u32 2, %s21
      %s300 = smul.u32 2, %s21
      %p301 = scmp.lt.s32.totalorder %s20, 0
      %s302 = scalar_select %p301, %s20, 0
      %p303 = scmp.lt.s32.totalorder %s300, 1
      %s304 = scalar_select %p303, %s300, 1
      %s305 = smul.addr %s302, 2
      %s306 = sadd.s32 %s304, %s305
      %s307 = smul.addr %s306, 4
      %s308 = scalar_lea.vmem %s4, %s307
      %s309 = smul.u32 2, %s21
      %p310 = scmp.eq.s32.totalorder %s22, 0
      // Predicated region
      $region37: #{resnet_forward.22} parent=35 // pred_check
        %p311 = pneg %p310
      $region38: #{resnet_forward.22} parent=35 // pred_check_branch
        %313 = sbr.rel (%p311) target = $region40
      $region39: #{resnet_forward.22} parent=35 // pred_region
        %314 = vst [vmem:[#allocation2] sm:$0xff] 0.0
        %315 = vst [vmem:[#allocation2 + $0x8] sm:$0xff] 0.0
      $region40: #{resnet_forward.22} parent=35 // pred_fallthru
        _
      %v316 = vld [vmem:[#allocation2] sm:$0xff]
      %v317 = vld [vmem:[#allocation2 + $0x8] sm:$0xff]
      %v318 = vld [vmem:[%s279] sm:$0xf]
      %v319 = vld [vmem:[%s288] sm:$0xff]
      %v320 = vld [vmem:[%s288 + $0x8] sm:$0xff]
      %v321 = vld [vmem:[%s288 + $0x10] sm:$0xff]
      %v322 = vld [vmem:[%s288 + $0x18] sm:$0xff]
      %v323 = vld [vmem:[%s288 + $0x20] sm:$0xff]
      %v324 = vld [vmem:[%s288 + $0x28] sm:$0xff]
      %v325 = vld [vmem:[%s288 + $0x30] sm:$0xff]
      %v326 = vld [vmem:[%s288 + $0x38] sm:$0xff]
      %v327 = vld [vmem:[%s288 + $0x40] sm:$0xff]
      %v328 = vld [vmem:[%s288 + $0x48] sm:$0xff]
      %v329 = vld [vmem:[%s288 + $0x50] sm:$0xff]
      %v330 = vld [vmem:[%s288 + $0x58] sm:$0xff]
      %v331 = vld [vmem:[%s288 + $0x60] sm:$0xff]
      %v332 = vld [vmem:[%s288 + $0x68] sm:$0xff]
      %v333 = vld [vmem:[%s288 + $0x70] sm:$0xff]
      %v334 = vld [vmem:[%s288 + $0x78] sm:$0xff]
      %v351 = vunpack.c.l.b16 %v319
      %v352 = vunpack.c.h.b16 %v319
      %v353 = vunpack.c.l.b16 %v320
      %v354 = vunpack.c.h.b16 %v320
      %v355 = vunpack.c.l.b16 %v321
      %v356 = vunpack.c.h.b16 %v321
      %v357 = vunpack.c.l.b16 %v322
      %v358 = vunpack.c.h.b16 %v322
      %v359 = vunpack.c.l.b16 %v323
      %v360 = vunpack.c.h.b16 %v323
      %v361 = vunpack.c.l.b16 %v324
      %v362 = vunpack.c.h.b16 %v324
      %v363 = vunpack.c.l.b16 %v325
      %v364 = vunpack.c.h.b16 %v325
      %v365 = vunpack.c.l.b16 %v326
      %v366 = vunpack.c.h.b16 %v326
      %v367 = vunpack.c.l.b16 %v327
      %v368 = vunpack.c.h.b16 %v327
      %v369 = vunpack.c.l.b16 %v328
      %v370 = vunpack.c.h.b16 %v328
      %v371 = vunpack.c.l.b16 %v329
      %v372 = vunpack.c.h.b16 %v329
      %v373 = vunpack.c.l.b16 %v330
      %v374 = vunpack.c.h.b16 %v330
      %v375 = vunpack.c.l.b16 %v331
      %v376 = vunpack.c.h.b16 %v331
      %v377 = vunpack.c.l.b16 %v332
      %v378 = vunpack.c.h.b16 %v332
      %v379 = vunpack.c.l.b16 %v333
      %v380 = vunpack.c.h.b16 %v333
      %v381 = vunpack.c.l.b16 %v334
      %v382 = vunpack.c.h.b16 %v334
      %v383 = vpack.c.b16 %v353, %v351
      %v384 = vpack.c.b16 %v354, %v352
      %v385 = vpack.c.b16 %v357, %v355
      %v386 = vpack.c.b16 %v358, %v356
      %v387 = vpack.c.b16 %v361, %v359
      %v388 = vpack.c.b16 %v362, %v360
      %v389 = vpack.c.b16 %v365, %v363
      %v390 = vpack.c.b16 %v366, %v364
      %v391 = vpack.c.b16 %v369, %v367
      %v392 = vpack.c.b16 %v370, %v368
      %v393 = vpack.c.b16 %v373, %v371
      %v394 = vpack.c.b16 %v374, %v372
      %v395 = vpack.c.b16 %v377, %v375
      %v396 = vpack.c.b16 %v378, %v376
      %v397 = vpack.c.b16 %v381, %v379
      %v398 = vpack.c.b16 %v382, %v380
      %415 = vmatpush.bf16.msra.mxu0 %v397
      %416 = vmatpush.bf16.msra.mxu0 %v395
      %417 = vmatpush.bf16.msra.mxu0 %v393
      %418 = vmatpush.bf16.msra.mxu0 %v391
      %419 = vmatpush.bf16.msra.mxu0 %v389
      %420 = vmatpush.bf16.msra.mxu0 %v387
      %421 = vmatpush.bf16.msra.mxu0 %v385
      %422 = vmatpush.bf16.msra.mxu0 %v383
      %423 = vmatmul.bf16.gmra.mxu0 %v318
      %v424 = vpop.f32.mrf.mxu0
      %v425 = vadd.f32 0.0, %v424
      %v426 = vpop.f32.mrf.mxu0
      %427 = vdwg.mxu0
      %428 = vmatpush.bf16.msra.mxu0 %v398
      %429 = vmatpush.bf16.msra.mxu0 %v396
      %430 = vmatpush.bf16.msra.mxu0 %v394
      %431 = vmatpush.bf16.msra.mxu0 %v392
      %432 = vmatpush.bf16.msra.mxu0 %v390
      %433 = vmatpush.bf16.msra.mxu0 %v388
      %434 = vmatpush.bf16.msra.mxu0 %v386
      %435 = vmatpush.bf16.msra.mxu0 %v384
      %436 = vmatmul.bf16.gmra.mxu0 %v318
      %v437 = vpop.f32.mrf.mxu0
      %v438 = vadd.f32 0.0, %v437
      %v439 = vpop.f32.mrf.mxu0
      %440 = vdwg.mxu0
      %v441 = vadd.f32 %v316, %v425
      %v442 = vadd.f32 %v317, %v438
      %443 = vst [vmem:[#allocation2] sm:$0xff] %v441
      %444 = vst [vmem:[#allocation2 + $0x8] sm:$0xff] %v442
      %p445 = scmp.eq.s32.totalorder %s22, 8
      // Predicated region
      $region41: #{resnet_forward.22} parent=35 // pred_check
        %p446 = pneg %p445
      $region42: #{resnet_forward.22} parent=35 // pred_check_branch
        %448 = sbr.rel (%p446) target = $region44
      $region43: #{resnet_forward.22} parent=35 // pred_region
        %v449 = vld [vmem:[#allocation2] sm:$0xff]
        %v450 = vld [vmem:[#allocation2 + $0x8] sm:$0xff]
        %v451 = vld [vmem:[%s293] sm:$0x3]
        %v453 = vperm.slane %v451, 0
        %v454 = vperm.slane %v451, 1
        %v457 = vmul.f32 %v449, %v453
        %v458 = vmul.f32 %v450, %v454
        %v459 = vld [vmem:[%s298] sm:$0x3]
        %v461 = vperm.slane %v459, 0
        %v462 = vperm.slane %v459, 1
        %v465 = vadd.f32 %v457, %v461
        %v466 = vadd.f32 %v458, %v462
        %v467 = vmax.f32 %v465, 0.0
        %v468 = vmax.f32 %v466, 0.0
        %v469 = vpack.c.bf16 %v468, %v467
        %470 = vst [vmem:[%s308] sm:$0xff] %v469
      $region44: #{resnet_forward.22} parent=35 // pred_fallthru
        _
      %s471 = smul.u32 2, %s21
      %p472 = scmp.lt.s32.totalorder %s20, 0
      %s473 = scalar_select %p472, %s20, 0
      %p474 = scmp.lt.s32.totalorder %s471, 1
      %s475 = scalar_select %p474, %s471, 1
      %s476 = smul.addr %s473, 2
      %s477 = sadd.s32 %s475, %s476
      %s478 = smul.addr %s477, 4
      %s479 = scalar_lea.vmem %s4, %s478
      // Predicated region
      $region45: #{resnet_forward.22} parent=35 // pred_check
        %p480 = pneg %p162
      $region46: #{resnet_forward.22} parent=35 // pred_check_branch
        %482 = sbr.rel (%p480) target = $region48
      $region47: #{resnet_forward.22} parent=35 // pred_region
        %s483 = smul.u32 2, %s21
      $region48: #{resnet_forward.22} parent=35 // pred_fallthru
        _
      // Predicated region
      $region49: #{resnet_forward.22} parent=35 // pred_check
        %p484 = pneg %p162
      $region50: #{resnet_forward.22} parent=35 // pred_check_branch
        %486 = sbr.rel (%p484) target = $region52
      $region51: #{resnet_forward.22} parent=35 // pred_region
        %s487 = smul.u32 2, %s21
        %p488 = scmp.lt.s32.totalorder %s20, 0
        %s489 = scalar_select %p488, %s20, 0
        %p490 = scmp.lt.s32.totalorder %s487, 1
        %s491 = scalar_select %p490, %s487, 1
        %s492 = smul.addr %s489, 2
        %s493 = sadd.s32 %s491, %s492
        %s494 = smul.addr %s493, 4
        %s495 = scalar_lea.vmem %s4, %s494
      $region52: #{resnet_forward.22} parent=35 // pred_fallthru
        _
    $region36: #{resnet_forward.22} parent=5 // pred_fallthru
      _
    %p496 = scmp.le.s32.totalorder 2, %s10
    // Predicated region
    $region53: #{resnet_forward.22} parent=5 // pred_check
      %p497 = pneg %p496
    $region54: #{resnet_forward.22} parent=5 // pred_check_branch
      %499 = sbr.rel (%p497) target = $region56
    $region55: #{resnet_forward.22} parent=5 // pred_region
      %s500 = ssub.s32 %s10, 2
    $region56: #{resnet_forward.22} parent=5 // pred_fallthru
      _
  $region6: #{resnet_forward.22} parent=0 // loop_footer
    %s14 = sadd.s32 1, %s10
  $region7: #{resnet_forward.22} parent=0 // loop_footer_branch
    %9 = sbr.rel target = $region3
  $region8: #{resnet_forward.22} parent=0 // loop_exit
    _

// kernel: resnet_forward.24
$region0: #{resnet_forward.24}
  #allocation0 [shape = 'u32[]', space=smem, size = 0x4, offset = 0x4, fixed_abs, tag = 'smem constant byte address 0x4 - core index']
  #allocation1 [shape = 'u32[72,128]{1,0:T(1,128)}', space=vmem, size = 0x9000, scoped, tag = 'internal scratch']
  #allocation2 [shape = 'f32[8,256]{1,0:T(8,128)}', space=vmem, size = 0x2000, scoped, tag = 'scratch operand']
  %s0 = inlined_call_operand.vmem [shape: bf16[9,8,256], index: 0, kind: input, shape index: {}]
  %s1 = inlined_call_operand.vmem [shape: bf16[9,256,256], index: 1, kind: input, shape index: {}]
  %s2 = inlined_call_operand.vmem [shape: f32[1,256], index: 2, kind: input, shape index: {}]
  %s3 = inlined_call_operand.vmem [shape: f32[1,256], index: 3, kind: input, shape index: {}]
  %s4 = inlined_call_operand.vmem [shape: bf16[8,256], index: 4, kind: input, shape index: {}]
  %s5 = inlined_call_operand.vmem [shape: bf16[8,256], index: 5, kind: output, shape index: {}]
  %s6 = sld [smem:[#allocation0]]
  $region61: #{resnet_forward.24} parent=0
    _
  %s8 = ssub.s32 1, %s6
  %s9 = scalar_select 0, %s8, %s6
  loop: start=0, step=1, limit=11
  $region2: #{resnet_forward.24} parent=0 // loop_pre_header
    _
  $region3: #{resnet_forward.24} parent=0 // loop_header
    %s11 = sphi 0, %s15
    %p12 = scmp.ge.s32.totalorder %s11, 11
    %s18 = sphi 0, %s37
    %s19 = sphi 0, %s33
    %s20 = sphi 0, %s29
    %s21 = sphi 0, %s18
    %s22 = sphi 0, %s19
    %s23 = sphi 0, %s20
    %s24 = sphi 0, %s21
    %s25 = sphi 0, %s22
    %s26 = sphi 0, %s23
    %s42 = sphi 0, %s44
    %s45 = sphi 0, %s42
    %s46 = sphi 0, %s45
    %s62 = sphi 0, %s46
    %s70 = sphi 0, %s72
    %s73 = sphi 0, %s70
    %s74 = sphi 0, %s73
    %s90 = sphi 0, %s74
    %s96 = sphi 0, %s98
    %s99 = sphi 0, %s96
    %s100 = sphi 0, %s99
    %s116 = sphi 0, %s100
    %s122 = sphi 0, %s124
    %s125 = sphi 0, %s122
    %s126 = sphi 0, %s125
    %s142 = sphi 0, %s126
    %s150 = sphi 0, %s152
    %s153 = sphi 0, %s150
    %s154 = sphi 0, %s153
    %s170 = sphi 0, %s154
    %s178 = sphi 0, %s180
    %s181 = sphi 0, %s178
    %s182 = sphi 0, %s181
    %s198 = sphi 0, %s182
  $region4: #{resnet_forward.24} parent=0 // loop_header_branch
    %14 = sbr.rel (%p12) target = $region8
  $region5: #{resnet_forward.24} parent=0 // loop_body
    %s16 = ssub.s32 %s11, 1
    %s17 = ssub.s32 %s11, 2
    %s27 = sadd.s32 1, %s20
    %p28 = scmp.ge.s32.totalorder %s27, 9
    %s29 = scalar_select %p28, 0, %s27
    %s30 = sadd.s32 1, %s19
    %s31 = scalar_select %p28, %s30, %s19
    %p32 = scmp.ge.s32.totalorder %s31, 1
    %s33 = scalar_select %p32, 0, %s31
    %s34 = sadd.s32 1, %s18
    %s35 = scalar_select %p32, %s34, %s18
    %p36 = scmp.ge.s32.totalorder %s35, 1
    %s37 = scalar_select %p36, 0, %s35
    %s38 = ssub.s32 %s20, %s29
    %s39 = ssub.s32 %s18, %s37
    %s40 = sor.u32 %s38, %s39
    %p41 = scmp.eq.s32.totalorder %s40, 0
    %s43 = sadd.s32 %s42, 1
    %s44 = scalar_select %p41, %s42, %s43
    %p47 = pneg %p41
    %p48 = scmp.eq.s32.totalorder %s11, 8
    %p49 = por %p47, %p48
    %p50 = scmp.ne.s32.totalorder %s42, %s45
    %p51 = scmp.eq.s32.totalorder %s11, 0
    %p52 = por %p50, %p51
    %p53 = scmp.ne.s32.totalorder %s42, %s45
    %p54 = scmp.eq.s32.totalorder %s16, 8
    %p55 = por %p53, %p54
    %p56 = scmp.ne.s32.totalorder %s45, %s46
    %p57 = scmp.eq.s32.totalorder %s16, 0
    %p58 = por %p56, %p57
    %p59 = scmp.ne.s32.totalorder %s45, %s46
    %p60 = scmp.eq.s32.totalorder %s17, 8
    %p61 = por %p59, %p60
    %p63 = scmp.ne.s32.totalorder %s46, %s62
    %p64 = scmp.eq.s32.totalorder %s17, 0
    %p65 = por %p63, %p64
    %s66 = ssub.s32 %s20, %s29
    %s67 = ssub.s32 %s19, %s33
    %s68 = sor.u32 %s66, %s67
    %p69 = scmp.eq.s32.totalorder %s68, 0
    %s71 = sadd.s32 %s70, 1
    %s72 = scalar_select %p69, %s70, %s71
    %p75 = pneg %p69
    %p76 = scmp.eq.s32.totalorder %s11, 8
    %p77 = por %p75, %p76
    %p78 = scmp.ne.s32.totalorder %s70, %s73
    %p79 = scmp.eq.s32.totalorder %s11, 0
    %p80 = por %p78, %p79
    %p81 = scmp.ne.s32.totalorder %s70, %s73
    %p82 = scmp.eq.s32.totalorder %s16, 8
    %p83 = por %p81, %p82
    %p84 = scmp.ne.s32.totalorder %s73, %s74
    %p85 = scmp.eq.s32.totalorder %s16, 0
    %p86 = por %p84, %p85
    %p87 = scmp.ne.s32.totalorder %s73, %s74
    %p88 = scmp.eq.s32.totalorder %s17, 8
    %p89 = por %p87, %p88
    %p91 = scmp.ne.s32.totalorder %s74, %s90
    %p92 = scmp.eq.s32.totalorder %s17, 0
    %p93 = por %p91, %p92
    %s94 = ssub.s32 %s19, %s33
    %p95 = scmp.eq.s32.totalorder %s94, 0
    %s97 = sadd.s32 %s96, 1
    %s98 = scalar_select %p95, %s96, %s97
    %p101 = pneg %p95
    %p102 = scmp.eq.s32.totalorder %s11, 8
    %p103 = por %p101, %p102
    %p104 = scmp.ne.s32.totalorder %s96, %s99
    %p105 = scmp.eq.s32.totalorder %s11, 0
    %p106 = por %p104, %p105
    %p107 = scmp.ne.s32.totalorder %s96, %s99
    %p108 = scmp.eq.s32.totalorder %s16, 8
    %p109 = por %p107, %p108
    %p110 = scmp.ne.s32.totalorder %s99, %s100
    %p111 = scmp.eq.s32.totalorder %s16, 0
    %p112 = por %p110, %p111
    %p113 = scmp.ne.s32.totalorder %s99, %s100
    %p114 = scmp.eq.s32.totalorder %s17, 8
    %p115 = por %p113, %p114
    %p117 = scmp.ne.s32.totalorder %s100, %s116
    %p118 = scmp.eq.s32.totalorder %s17, 0
    %p119 = por %p117, %p118
    %s120 = ssub.s32 %s19, %s33
    %p121 = scmp.eq.s32.totalorder %s120, 0
    %s123 = sadd.s32 %s122, 1
    %s124 = scalar_select %p121, %s122, %s123
    %p127 = pneg %p121
    %p128 = scmp.eq.s32.totalorder %s11, 8
    %p129 = por %p127, %p128
    %p130 = scmp.ne.s32.totalorder %s122, %s125
    %p131 = scmp.eq.s32.totalorder %s11, 0
    %p132 = por %p130, %p131
    %p133 = scmp.ne.s32.totalorder %s122, %s125
    %p134 = scmp.eq.s32.totalorder %s16, 8
    %p135 = por %p133, %p134
    %p136 = scmp.ne.s32.totalorder %s125, %s126
    %p137 = scmp.eq.s32.totalorder %s16, 0
    %p138 = por %p136, %p137
    %p139 = scmp.ne.s32.totalorder %s125, %s126
    %p140 = scmp.eq.s32.totalorder %s17, 8
    %p141 = por %p139, %p140
    %p143 = scmp.ne.s32.totalorder %s126, %s142
    %p144 = scmp.eq.s32.totalorder %s17, 0
    %p145 = por %p143, %p144
    %s146 = ssub.s32 %s18, %s37
    %s147 = ssub.s32 %s19, %s33
    %s148 = sor.u32 %s146, %s147
    %p149 = scmp.eq.s32.totalorder %s148, 0
    %s151 = sadd.s32 %s150, 1
    %s152 = scalar_select %p149, %s150, %s151
    %p155 = pneg %p149
    %p156 = scmp.eq.s32.totalorder %s11, 8
    %p157 = por %p155, %p156
    %p158 = scmp.ne.s32.totalorder %s150, %s153
    %p159 = scmp.eq.s32.totalorder %s11, 0
    %p160 = por %p158, %p159
    %p161 = scmp.ne.s32.totalorder %s150, %s153
    %p162 = scmp.eq.s32.totalorder %s16, 8
    %p163 = por %p161, %p162
    %p164 = scmp.ne.s32.totalorder %s153, %s154
    %p165 = scmp.eq.s32.totalorder %s16, 0
    %p166 = por %p164, %p165
    %p167 = scmp.ne.s32.totalorder %s153, %s154
    %p168 = scmp.eq.s32.totalorder %s17, 8
    %p169 = por %p167, %p168
    %p171 = scmp.ne.s32.totalorder %s154, %s170
    %p172 = scmp.eq.s32.totalorder %s17, 0
    %p173 = por %p171, %p172
    %s174 = ssub.s32 %s18, %s37
    %s175 = ssub.s32 %s19, %s33
    %s176 = sor.u32 %s174, %s175
    %p177 = scmp.eq.s32.totalorder %s176, 0
    %s179 = sadd.s32 %s178, 1
    %s180 = scalar_select %p177, %s178, %s179
    %p183 = pneg %p177
    %p184 = scmp.eq.s32.totalorder %s11, 8
    %p185 = por %p183, %p184
    %p186 = scmp.ne.s32.totalorder %s178, %s181
    %p187 = scmp.eq.s32.totalorder %s11, 0
    %p188 = por %p186, %p187
    %p189 = scmp.ne.s32.totalorder %s178, %s181
    %p190 = scmp.eq.s32.totalorder %s16, 8
    %p191 = por %p189, %p190
    %p192 = scmp.ne.s32.totalorder %s181, %s182
    %p193 = scmp.eq.s32.totalorder %s16, 0
    %p194 = por %p192, %p193
    %p195 = scmp.ne.s32.totalorder %s181, %s182
    %p196 = scmp.eq.s32.totalorder %s17, 8
    %p197 = por %p195, %p196
    %p199 = scmp.ne.s32.totalorder %s182, %s198
    %p200 = scmp.eq.s32.totalorder %s17, 0
    %p201 = por %p199, %p200
    %p202 = scmp.le.s32.totalorder 1, %s11
    %p203 = scmp.lt.s32.totalorder %s11, 10
    %p204 = pnand %p202, %p203
    %p205 = pneg %p204
    // Predicated region
    $region9: #{resnet_forward.24} parent=5 // pred_check
      _
    $region10: #{resnet_forward.24} parent=5 // pred_check_branch
      %207 = sbr.rel (%p204) target = $region12
    $region11: #{resnet_forward.24} parent=5 // pred_region
      %s208 = ssub.s32 %s11, 1
      // Predicated region
      $region13: #{resnet_forward.24} parent=11 // pred_check
        %p209 = pneg %p112
      $region14: #{resnet_forward.24} parent=11 // pred_check_branch
        %211 = sbr.rel (%p209) target = $region16
      $region15: #{resnet_forward.24} parent=11 // pred_region
        %s212 = smul.u32 2, %s22
        %p213 = scmp.lt.s32.totalorder %s212, 1
        %s214 = scalar_select %p213, %s212, 1
        %s215 = scalar_lea.vmem %s2, %s214
        %s216 = smul.u32 2, %s22
      $region16: #{resnet_forward.24} parent=11 // pred_fallthru
        _
      // Predicated region
      $region17: #{resnet_forward.24} parent=11 // pred_check
        %p217 = pneg %p138
      $region18: #{resnet_forward.24} parent=11 // pred_check_branch
        %219 = sbr.rel (%p217) target = $region20
      $region19: #{resnet_forward.24} parent=11 // pred_region
        %s220 = smul.u32 2, %s22
        %p221 = scmp.lt.s32.totalorder %s220, 1
        %s222 = scalar_select %p221, %s220, 1
        %s223 = scalar_lea.vmem %s3, %s222
        %s224 = smul.u32 2, %s22
      $region20: #{resnet_forward.24} parent=11 // pred_fallthru
        _
      // Predicated region
      $region21: #{resnet_forward.24} parent=11 // pred_check
        %p225 = pneg %p166
      $region22: #{resnet_forward.24} parent=11 // pred_check_branch
        %227 = sbr.rel (%p225) target = $region24
      $region23: #{resnet_forward.24} parent=11 // pred_region
        %s228 = smul.u32 2, %s22
        %p229 = scmp.lt.s32.totalorder %s21, 0
        %s230 = scalar_select %p229, %s21, 0
        %p231 = scmp.lt.s32.totalorder %s228, 1
        %s232 = scalar_select %p231, %s228, 1
        %s233 = smul.addr %s230, 2
        %s234 = sadd.s32 %s232, %s233
        %s235 = smul.addr %s234, 4
        %s236 = scalar_lea.vmem %s4, %s235
        %s237 = smul.u32 2, %s22
      $region24: #{resnet_forward.24} parent=11 // pred_fallthru
        _
    $region12: #{resnet_forward.24} parent=5 // pred_fallthru
      _
    %p238 = scmp.lt.s32.totalorder %s11, 9
    // Predicated region
    $region25: #{resnet_forward.24} parent=5 // pred_check
      %p239 = pneg %p238
    $region26: #{resnet_forward.24} parent=5 // pred_check_branch
      %241 = sbr.rel (%p239) target = $region28
    $region27: #{resnet_forward.24} parent=5 // pred_region
      // Predicated region
      $region29: #{resnet_forward.24} parent=27 // pred_check
        %p242 = pneg %p52
      $region30: #{resnet_forward.24} parent=27 // pred_check_branch
        %244 = sbr.rel (%p242) target = $region32
      $region31: #{resnet_forward.24} parent=27 // pred_region
        %p245 = scmp.lt.s32.totalorder %s20, 8
        %s246 = scalar_select %p245, %s20, 8
        %p247 = scmp.lt.s32.totalorder %s18, 0
        %s248 = scalar_select %p247, %s18, 0
        %s249 = smul.addr %s248, 2
        %s250 = smul.addr %s246, 2
        %s251 = sadd.s32 %s249, %s250
        %s252 = smul.addr %s251, 4
        %s253 = scalar_lea.vmem %s0, %s252
      $region32: #{resnet_forward.24} parent=27 // pred_fallthru
        _
      // Predicated region
      $region33: #{resnet_forward.24} parent=27 // pred_check
        %p254 = pneg %p80
      $region34: #{resnet_forward.24} parent=27 // pred_check_branch
        %256 = sbr.rel (%p254) target = $region36
      $region35: #{resnet_forward.24} parent=27 // pred_region
        %s257 = smul.u32 2, %s19
        %p258 = scmp.lt.s32.totalorder %s20, 8
        %s259 = scalar_select %p258, %s20, 8
        %p260 = scmp.lt.s32.totalorder %s257, 1
        %s261 = scalar_select %p260, %s257, 1
        %s262 = smul.addr %s259, 64
        %s263 = sadd.s32 %s261, %s262
        %s264 = smul.addr %s263, 4
        %s265 = scalar_lea.vmem %s1, %s264
        %s266 = smul.u32 2, %s19
      $region36: #{resnet_forward.24} parent=27 // pred_fallthru
        _
    $region28: #{resnet_forward.24} parent=5 // pred_fallthru
      _
    %p267 = scmp.le.s32.totalorder 1, %s11
    %p268 = scmp.lt.s32.totalorder %s11, 10
    %p269 = pnand %p267, %p268
    %p270 = pneg %p269
    // Predicated region
    $region37: #{resnet_forward.24} parent=5 // pred_check
      _
    $region38: #{resnet_forward.24} parent=5 // pred_check_branch
      %272 = sbr.rel (%p269) target = $region40
    $region39: #{resnet_forward.24} parent=5 // pred_region
      %s273 = ssub.s32 %s11, 1
      %p274 = scmp.lt.s32.totalorder %s23, 8
      %s275 = scalar_select %p274, %s23, 8
      %p276 = scmp.lt.s32.totalorder %s21, 0
      %s277 = scalar_select %p276, %s21, 0
      %s278 = smul.addr %s277, 2
      %s279 = smul.addr %s275, 2
      %s280 = sadd.s32 %s278, %s279
      %s281 = smul.addr %s280, 4
      %s282 = scalar_lea.vmem %s0, %s281
      %p283 = pneg %p58
      %p284 = pneg %p55
      %s285 = smul.u32 2, %s22
      %p286 = scmp.lt.s32.totalorder %s23, 8
      %s287 = scalar_select %p286, %s23, 8
      %p288 = scmp.lt.s32.totalorder %s285, 1
      %s289 = scalar_select %p288, %s285, 1
      %s290 = smul.addr %s287, 64
      %s291 = sadd.s32 %s289, %s290
      %s292 = smul.addr %s291, 4
      %s293 = scalar_lea.vmem %s1, %s292
      %p294 = pneg %p86
      %p295 = pneg %p83
      %s296 = smul.u32 2, %s22
      %p297 = scmp.lt.s32.totalorder %s296, 1
      %s298 = scalar_select %p297, %s296, 1
      %s299 = scalar_lea.vmem %s2, %s298
      %p300 = pneg %p112
      %p301 = pneg %p109
      %s302 = smul.u32 2, %s22
      %p303 = scmp.lt.s32.totalorder %s302, 1
      %s304 = scalar_select %p303, %s302, 1
      %s305 = scalar_lea.vmem %s3, %s304
      %p306 = pneg %p138
      %p307 = pneg %p135
      %s308 = smul.u32 2, %s22
      %p309 = scmp.lt.s32.totalorder %s21, 0
      %s310 = scalar_select %p309, %s21, 0
      %p311 = scmp.lt.s32.totalorder %s308, 1
      %s312 = scalar_select %p311, %s308, 1
      %s313 = smul.addr %s310, 2
      %s314 = sadd.s32 %s312, %s313
      %s315 = smul.addr %s314, 4
      %s316 = scalar_lea.vmem %s4, %s315
      %p317 = pneg %p166
      %p318 = pneg %p163
      %p319 = pneg %p194
      %p320 = pneg %p191
      %s321 = smul.u32 2, %s22
      %p322 = scmp.lt.s32.totalorder %s21, 0
      %s323 = scalar_select %p322, %s21, 0
      %p324 = scmp.lt.s32.totalorder %s321, 1
      %s325 = scalar_select %p324, %s321, 1
      %s326 = smul.addr %s323, 2
      %s327 = sadd.s32 %s325, %s326
      %s328 = smul.addr %s327, 4
      %s329 = scalar_lea.vmem %s5, %s328
      %p330 = scmp.lt.s32.totalorder %s23, 8
      %s331 = scalar_select %p330, %s23, 8
      %p332 = scmp.lt.s32.totalorder %s21, 0
      %s333 = scalar_select %p332, %s21, 0
      %s334 = smul.addr %s333, 2
      %s335 = smul.addr %s331, 2
      %s336 = sadd.s32 %s334, %s335
      %s337 = smul.addr %s336, 4
      %s338 = scalar_lea.vmem %s0, %s337
      %s339 = smul.u32 2, %s22
      %p340 = scmp.lt.s32.totalorder %s23, 8
      %s341 = scalar_select %p340, %s23, 8
      %p342 = scmp.lt.s32.totalorder %s339, 1
      %s343 = scalar_select %p342, %s339, 1
      %s344 = smul.addr %s341, 64
      %s345 = sadd.s32 %s343, %s344
      %s346 = smul.addr %s345, 4
      %s347 = scalar_lea.vmem %s1, %s346
      %s348 = smul.u32 2, %s22
      %s349 = smul.u32 2, %s22
      %p350 = scmp.lt.s32.totalorder %s349, 1
      %s351 = scalar_select %p350, %s349, 1
      %s352 = scalar_lea.vmem %s2, %s351
      %s353 = smul.u32 2, %s22
      %s354 = smul.u32 2, %s22
      %p355 = scmp.lt.s32.totalorder %s354, 1
      %s356 = scalar_select %p355, %s354, 1
      %s357 = scalar_lea.vmem %s3, %s356
      %s358 = smul.u32 2, %s22
      %s359 = smul.u32 2, %s22
      %p360 = scmp.lt.s32.totalorder %s21, 0
      %s361 = scalar_select %p360, %s21, 0
      %p362 = scmp.lt.s32.totalorder %s359, 1
      %s363 = scalar_select %p362, %s359, 1
      %s364 = smul.addr %s361, 2
      %s365 = sadd.s32 %s363, %s364
      %s366 = smul.addr %s365, 4
      %s367 = scalar_lea.vmem %s4, %s366
      %s368 = smul.u32 2, %s22
      %s369 = smul.u32 2, %s22
      %p370 = scmp.lt.s32.totalorder %s21, 0
      %s371 = scalar_select %p370, %s21, 0
      %p372 = scmp.lt.s32.totalorder %s369, 1
      %s373 = scalar_select %p372, %s369, 1
      %s374 = smul.addr %s371, 2
      %s375 = sadd.s32 %s373, %s374
      %s376 = smul.addr %s375, 4
      %s377 = scalar_lea.vmem %s5, %s376
      %s378 = smul.u32 2, %s22
      %p379 = scmp.eq.s32.totalorder %s23, 0
      // Predicated region
      $region41: #{resnet_forward.24} parent=39 // pred_check
        %p380 = pneg %p379
      $region42: #{resnet_forward.24} parent=39 // pred_check_branch
        %382 = sbr.rel (%p380) target = $region44
      $region43: #{resnet_forward.24} parent=39 // pred_region
        %383 = vst [vmem:[#allocation2] sm:$0xff] 0.0
        %384 = vst [vmem:[#allocation2 + $0x8] sm:$0xff] 0.0
      $region44: #{resnet_forward.24} parent=39 // pred_fallthru
        _
      %v385 = vld [vmem:[#allocation2] sm:$0xff]
      %v386 = vld [vmem:[#allocation2 + $0x8] sm:$0xff]
      %v387 = vld [vmem:[%s338] sm:$0xff]
      %v388 = vld [vmem:[%s347] sm:$0xff]
      %v389 = vld [vmem:[%s347 + $0x8] sm:$0xff]
      %v390 = vld [vmem:[%s347 + $0x10] sm:$0xff]
      %v391 = vld [vmem:[%s347 + $0x18] sm:$0xff]
      %v392 = vld [vmem:[%s347 + $0x20] sm:$0xff]
      %v393 = vld [vmem:[%s347 + $0x28] sm:$0xff]
      %v394 = vld [vmem:[%s347 + $0x30] sm:$0xff]
      %v395 = vld [vmem:[%s347 + $0x38] sm:$0xff]
      %v396 = vld [vmem:[%s347 + $0x40] sm:$0xff]
      %v397 = vld [vmem:[%s347 + $0x48] sm:$0xff]
      %v398 = vld [vmem:[%s347 + $0x50] sm:$0xff]
      %v399 = vld [vmem:[%s347 + $0x58] sm:$0xff]
      %v400 = vld [vmem:[%s347 + $0x60] sm:$0xff]
      %v401 = vld [vmem:[%s347 + $0x68] sm:$0xff]
      %v402 = vld [vmem:[%s347 + $0x70] sm:$0xff]
      %v403 = vld [vmem:[%s347 + $0x78] sm:$0xff]
      %v404 = vld [vmem:[%s347 + $0x80] sm:$0xff]
      %v405 = vld [vmem:[%s347 + $0x88] sm:$0xff]
      %v406 = vld [vmem:[%s347 + $0x90] sm:$0xff]
      %v407 = vld [vmem:[%s347 + $0x98] sm:$0xff]
      %v408 = vld [vmem:[%s347 + $0xa0] sm:$0xff]
      %v409 = vld [vmem:[%s347 + $0xa8] sm:$0xff]
      %v410 = vld [vmem:[%s347 + $0xb0] sm:$0xff]
      %v411 = vld [vmem:[%s347 + $0xb8] sm:$0xff]
      %v412 = vld [vmem:[%s347 + $0xc0] sm:$0xff]
      %v413 = vld [vmem:[%s347 + $0xc8] sm:$0xff]
      %v414 = vld [vmem:[%s347 + $0xd0] sm:$0xff]
      %v415 = vld [vmem:[%s347 + $0xd8] sm:$0xff]
      %v416 = vld [vmem:[%s347 + $0xe0] sm:$0xff]
      %v417 = vld [vmem:[%s347 + $0xe8] sm:$0xff]
      %v418 = vld [vmem:[%s347 + $0xf0] sm:$0xff]
      %v419 = vld [vmem:[%s347 + $0xf8] sm:$0xff]
      %v421 = vunpack.c.l.b16 %v387
      %v422 = vunpack.c.h.b16 %v387
      %v423 = vpack.c.b16 %v421, %v421
      %v424 = vpack.c.b16 %v422, %v422
      %v459 = vunpack.c.l.b16 %v388
      %v460 = vunpack.c.h.b16 %v388
      %v461 = vunpack.c.l.b16 %v389
      %v462 = vunpack.c.h.b16 %v389
      %v463 = vunpack.c.l.b16 %v390
      %v464 = vunpack.c.h.b16 %v390
      %v465 = vunpack.c.l.b16 %v391
      %v466 = vunpack.c.h.b16 %v391
      %v467 = vunpack.c.l.b16 %v392
      %v468 = vunpack.c.h.b16 %v392
      %v469 = vunpack.c.l.b16 %v393
      %v470 = vunpack.c.h.b16 %v393
      %v471 = vunpack.c.l.b16 %v394
      %v472 = vunpack.c.h.b16 %v394
      %v473 = vunpack.c.l.b16 %v395
      %v474 = vunpack.c.h.b16 %v395
      %v475 = vunpack.c.l.b16 %v396
      %v476 = vunpack.c.h.b16 %v396
      %v477 = vunpack.c.l.b16 %v397
      %v478 = vunpack.c.h.b16 %v397
      %v479 = vunpack.c.l.b16 %v398
      %v480 = vunpack.c.h.b16 %v398
      %v481 = vunpack.c.l.b16 %v399
      %v482 = vunpack.c.h.b16 %v399
      %v483 = vunpack.c.l.b16 %v400
      %v484 = vunpack.c.h.b16 %v400
      %v485 = vunpack.c.l.b16 %v401
      %v486 = vunpack.c.h.b16 %v401
      %v487 = vunpack.c.l.b16 %v402
      %v488 = vunpack.c.h.b16 %v402
      %v489 = vunpack.c.l.b16 %v403
      %v490 = vunpack.c.h.b16 %v403
      %v491 = vunpack.c.l.b16 %v404
      %v492 = vunpack.c.h.b16 %v404
      %v493 = vunpack.c.l.b16 %v405
      %v494 = vunpack.c.h.b16 %v405
      %v495 = vunpack.c.l.b16 %v406
      %v496 = vunpack.c.h.b16 %v406
      %v497 = vunpack.c.l.b16 %v407
      %v498 = vunpack.c.h.b16 %v407
      %v499 = vunpack.c.l.b16 %v408
      %v500 = vunpack.c.h.b16 %v408
      %v501 = vunpack.c.l.b16 %v409
      %v502 = vunpack.c.h.b16 %v409
      %v503 = vunpack.c.l.b16 %v410
      %v504 = vunpack.c.h.b16 %v410
      %v505 = vunpack.c.l.b16 %v411
      %v506 = vunpack.c.h.b16 %v411
      %v507 = vunpack.c.l.b16 %v412
      %v508 = vunpack.c.h.b16 %v412
      %v509 = vunpack.c.l.b16 %v413
      %v510 = vunpack.c.h.b16 %v413
      %v511 = vunpack.c.l.b16 %v414
      %v512 = vunpack.c.h.b16 %v414
      %v513 = vunpack.c.l.b16 %v415
      %v514 = vunpack.c.h.b16 %v415
      %v515 = vunpack.c.l.b16 %v416
      %v516 = vunpack.c.h.b16 %v416
      %v517 = vunpack.c.l.b16 %v417
      %v518 = vunpack.c.h.b16 %v417
      %v519 = vunpack.c.l.b16 %v418
      %v520 = vunpack.c.h.b16 %v418
      %v521 = vunpack.c.l.b16 %v419
      %v522 = vunpack.c.h.b16 %v419
      %v523 = vpack.c.b16 %v461, %v459
      %v524 = vpack.c.b16 %v462, %v460
      %v525 = vpack.c.b16 %v465, %v463
      %v526 = vpack.c.b16 %v466, %v464
      %v527 = vpack.c.b16 %v469, %v467
      %v528 = vpack.c.b16 %v470, %v468
      %v529 = vpack.c.b16 %v473, %v471
      %v530 = vpack.c.b16 %v474, %v472
      %v531 = vpack.c.b16 %v477, %v475
      %v532 = vpack.c.b16 %v478, %v476
      %v533 = vpack.c.b16 %v481, %v479
      %v534 = vpack.c.b16 %v482, %v480
      %v535 = vpack.c.b16 %v485, %v483
      %v536 = vpack.c.b16 %v486, %v484
      %v537 = vpack.c.b16 %v489, %v487
      %v538 = vpack.c.b16 %v490, %v488
      %v539 = vpack.c.b16 %v493, %v491
      %v540 = vpack.c.b16 %v494, %v492
      %v541 = vpack.c.b16 %v497, %v495
      %v542 = vpack.c.b16 %v498, %v496
      %v543 = vpack.c.b16 %v501, %v499
      %v544 = vpack.c.b16 %v502, %v500
      %v545 = vpack.c.b16 %v505, %v503
      %v546 = vpack.c.b16 %v506, %v504
      %v547 = vpack.c.b16 %v509, %v507
      %v548 = vpack.c.b16 %v510, %v508
      %v549 = vpack.c.b16 %v513, %v511
      %v550 = vpack.c.b16 %v514, %v512
      %v551 = vpack.c.b16 %v517, %v515
      %v552 = vpack.c.b16 %v518, %v516
      %v553 = vpack.c.b16 %v521, %v519
      %v554 = vpack.c.b16 %v522, %v520
      %587 = vmatpush.bf16.msra.mxu0 %v537
      %588 = vmatpush.bf16.msra.mxu0 %v535
      %589 = vmatpush.bf16.msra.mxu0 %v533
      %590 = vmatpush.bf16.msra.mxu0 %v531
      %591 = vmatpush.bf16.msra.mxu0 %v529
      %592 = vmatpush.bf16.msra.mxu0 %v527
      %593 = vmatpush.bf16.msra.mxu0 %v525
      %594 = vmatpush.bf16.msra.mxu0 %v523
      %595 = vmatmul.bf16.gmra.mxu0 %v423
      %v596 = vpop.f32.mrf.mxu0
      %v597 = vadd.f32 0.0, %v596
      %v598 = vpop.f32.mrf.mxu0
      %599 = vdwg.mxu0
      %600 = vmatpush.bf16.msra.mxu0 %v553
      %601 = vmatpush.bf16.msra.mxu0 %v551
      %602 = vmatpush.bf16.msra.mxu0 %v549
      %603 = vmatpush.bf16.msra.mxu0 %v547
      %604 = vmatpush.bf16.msra.mxu0 %v545
      %605 = vmatpush.bf16.msra.mxu0 %v543
      %606 = vmatpush.bf16.msra.mxu0 %v541
      %607 = vmatpush.bf16.msra.mxu0 %v539
      %608 = vmatmul.bf16.gmra.mxu0 %v424
      %v609 = vpop.f32.mrf.mxu0
      %v610 = vadd.f32 %v597, %v609
      %v611 = vpop.f32.mrf.mxu0
      %612 = vdwg.mxu0
      %613 = vmatpush.bf16.msra.mxu0 %v538
      %614 = vmatpush.bf16.msra.mxu0 %v536
      %615 = vmatpush.bf16.msra.mxu0 %v534
      %616 = vmatpush.bf16.msra.mxu0 %v532
      %617 = vmatpush.bf16.msra.mxu0 %v530
      %618 = vmatpush.bf16.msra.mxu0 %v528
      %619 = vmatpush.bf16.msra.mxu0 %v526
      %620 = vmatpush.bf16.msra.mxu0 %v524
      %621 = vmatmul.bf16.gmra.mxu0 %v423
      %v622 = vpop.f32.mrf.mxu0
      %v623 = vadd.f32 0.0, %v622
      %v624 = vpop.f32.mrf.mxu0
      %625 = vdwg.mxu0
      %626 = vmatpush.bf16.msra.mxu0 %v554
      %627 = vmatpush.bf16.msra.mxu0 %v552
      %628 = vmatpush.bf16.msra.mxu0 %v550
      %629 = vmatpush.bf16.msra.mxu0 %v548
      %630 = vmatpush.bf16.msra.mxu0 %v546
      %631 = vmatpush.bf16.msra.mxu0 %v544
      %632 = vmatpush.bf16.msra.mxu0 %v542
      %633 = vmatpush.bf16.msra.mxu0 %v540
      %634 = vmatmul.bf16.gmra.mxu0 %v424
      %v635 = vpop.f32.mrf.mxu0
      %v636 = vadd.f32 %v623, %v635
      %v637 = vpop.f32.mrf.mxu0
      %638 = vdwg.mxu0
      %v639 = vadd.f32 %v385, %v610
      %v640 = vadd.f32 %v386, %v636
      %641 = vst [vmem:[#allocation2] sm:$0xff] %v639
      %642 = vst [vmem:[#allocation2 + $0x8] sm:$0xff] %v640
      %p643 = scmp.eq.s32.totalorder %s23, 8
      // Predicated region
      $region45: #{resnet_forward.24} parent=39 // pred_check
        %p644 = pneg %p643
      $region46: #{resnet_forward.24} parent=39 // pred_check_branch
        %646 = sbr.rel (%p644) target = $region48
      $region47: #{resnet_forward.24} parent=39 // pred_region
        %v647 = vld [vmem:[#allocation2] sm:$0xff]
        %v648 = vld [vmem:[#allocation2 + $0x8] sm:$0xff]
        %v649 = vld [vmem:[%s352] sm:$0x3]
        %v651 = vperm.slane %v649, 0
        %v652 = vperm.slane %v649, 1
        %v655 = vmul.f32 %v647, %v651
        %v656 = vmul.f32 %v648, %v652
        %v657 = vld [vmem:[%s357] sm:$0x3]
        %v659 = vperm.slane %v657, 0
        %v660 = vperm.slane %v657, 1
        %v663 = vadd.f32 %v655, %v659
        %v664 = vadd.f32 %v656, %v660
        %v665 = vld [vmem:[%s367] sm:$0xff]
        %v666 = vunpack.c.l.bf16 %v665
        %v667 = vunpack.c.h.bf16 %v665
        %v668 = vadd.f32 %v663, %v666
        %v669 = vadd.f32 %v664, %v667
        %v670 = vmax.f32 %v668, 0.0
        %v671 = vmax.f32 %v669, 0.0
        %v672 = vpack.c.bf16 %v671, %v670
        %673 = vst [vmem:[%s377] sm:$0xff] %v672
      $region48: #{resnet_forward.24} parent=39 // pred_fallthru
        _
      %s674 = smul.u32 2, %s22
      %p675 = scmp.lt.s32.totalorder %s21, 0
      %s676 = scalar_select %p675, %s21, 0
      %p677 = scmp.lt.s32.totalorder %s674, 1
      %s678 = scalar_select %p677, %s674, 1
      %s679 = smul.addr %s676, 2
      %s680 = sadd.s32 %s678, %s679
      %s681 = smul.addr %s680, 4
      %s682 = scalar_lea.vmem %s5, %s681
      // Predicated region
      $region49: #{resnet_forward.24} parent=39 // pred_check
        %p683 = pneg %p191
      $region50: #{resnet_forward.24} parent=39 // pred_check_branch
        %685 = sbr.rel (%p683) target = $region52
      $region51: #{resnet_forward.24} parent=39 // pred_region
        %s686 = smul.u32 2, %s22
      $region52: #{resnet_forward.24} parent=39 // pred_fallthru
        _
      // Predicated region
      $region53: #{resnet_forward.24} parent=39 // pred_check
        %p687 = pneg %p191
      $region54: #{resnet_forward.24} parent=39 // pred_check_branch
        %689 = sbr.rel (%p687) target = $region56
      $region55: #{resnet_forward.24} parent=39 // pred_region
        %s690 = smul.u32 2, %s22
        %p691 = scmp.lt.s32.totalorder %s21, 0
        %s692 = scalar_select %p691, %s21, 0
        %p693 = scmp.lt.s32.totalorder %s690, 1
        %s694 = scalar_select %p693, %s690, 1
        %s695 = smul.addr %s692, 2
        %s696 = sadd.s32 %s694, %s695
        %s697 = smul.addr %s696, 4
        %s698 = scalar_lea.vmem %s5, %s697
      $region56: #{resnet_forward.24} parent=39 // pred_fallthru
        _
    $region40: #{resnet_forward.24} parent=5 // pred_fallthru
      _
    %p699 = scmp.le.s32.totalorder 2, %s11
    // Predicated region
    $region57: #{resnet_forward.24} parent=5 // pred_check
      %p700 = pneg %p699
    $region58: #{resnet_forward.24} parent=5 // pred_check_branch
      %702 = sbr.rel (%p700) target = $region60
    $region59: #{resnet_forward.24} parent=5 // pred_region
      %s703 = ssub.s32 %s11, 2
    $region60: #{resnet_forward.24} parent=5 // pred_fallthru
      _
  $region6: #{resnet_forward.24} parent=0 // loop_footer
    %s15 = sadd.s32 1, %s11
  $region7: #{resnet_forward.24} parent=0 // loop_footer_branch
    %10 = sbr.rel target = $region3
  $region8: #{resnet_forward.24} parent=0 // loop_exit
    _

// kernel: resnet_forward.23
$region0: #{resnet_forward.23}
  #allocation0 [shape = 'u32[]', space=smem, size = 0x4, offset = 0x4, fixed_abs, tag = 'smem constant byte address 0x4 - core index']
  #allocation1 [shape = 'u32[72,128]{1,0:T(1,128)}', space=vmem, size = 0x9000, scoped, tag = 'internal scratch']
  #allocation2 [shape = 'f32[8,256]{1,0:T(8,128)}', space=vmem, size = 0x2000, scoped, tag = 'scratch operand']
  %s0 = inlined_call_operand.vmem [shape: bf16[1,8,128], index: 0, kind: input, shape index: {}]
  %s1 = inlined_call_operand.vmem [shape: bf16[1,128,256], index: 1, kind: input, shape index: {}]
  %s2 = inlined_call_operand.vmem [shape: f32[1,256], index: 2, kind: input, shape index: {}]
  %s3 = inlined_call_operand.vmem [shape: f32[1,256], index: 3, kind: input, shape index: {}]
  %s4 = inlined_call_operand.vmem [shape: bf16[8,256], index: 4, kind: output, shape index: {}]
  %s5 = sld [smem:[#allocation0]]
  $region34: #{resnet_forward.23} parent=0
    _
  %s7 = ssub.s32 1, %s5
  %s8 = scalar_select 0, %s7, %s5
  // Predicated region
  $region2: #{resnet_forward.23} parent=0 // pred_check
    _
  $region3: #{resnet_forward.23} parent=0 // pred_check_branch
    %10 = sbr.rel (0) target = $region5
  $region4: #{resnet_forward.23} parent=0 // pred_region
    _
  $region5: #{resnet_forward.23} parent=0 // pred_fallthru
    _
  // Predicated region
  $region6: #{resnet_forward.23} parent=0 // pred_check
    _
  $region7: #{resnet_forward.23} parent=0 // pred_check_branch
    %12 = sbr.rel (0) target = $region9
  $region8: #{resnet_forward.23} parent=0 // pred_region
    _
  $region9: #{resnet_forward.23} parent=0 // pred_fallthru
    _
  // Predicated region
  $region10: #{resnet_forward.23} parent=0 // pred_check
    _
  $region11: #{resnet_forward.23} parent=0 // pred_check_branch
    %14 = sbr.rel (0) target = $region13
  $region12: #{resnet_forward.23} parent=0 // pred_region
    _
  $region13: #{resnet_forward.23} parent=0 // pred_fallthru
    _
  // Predicated region
  $region14: #{resnet_forward.23} parent=0 // pred_check
    _
  $region15: #{resnet_forward.23} parent=0 // pred_check_branch
    %16 = sbr.rel (0) target = $region17
  $region16: #{resnet_forward.23} parent=0 // pred_region
    _
  $region17: #{resnet_forward.23} parent=0 // pred_fallthru
    _
  %p17 = scmp.eq.s32.totalorder 0, 0
  // Predicated region
  $region18: #{resnet_forward.23} parent=0 // pred_check
    %p18 = pneg %p17
  $region19: #{resnet_forward.23} parent=0 // pred_check_branch
    %20 = sbr.rel (%p18) target = $region21
  $region20: #{resnet_forward.23} parent=0 // pred_region
    %21 = vst [vmem:[#allocation2] sm:$0xff] 0.0
    %22 = vst [vmem:[#allocation2 + $0x8] sm:$0xff] 0.0
  $region21: #{resnet_forward.23} parent=0 // pred_fallthru
    _
  %v23 = vld [vmem:[#allocation2] sm:$0xff]
  %v24 = vld [vmem:[#allocation2 + $0x8] sm:$0xff]
  %v25 = vld [vmem:[%s0] sm:$0xf]
  %v26 = vld [vmem:[%s1] sm:$0xff]
  %v27 = vld [vmem:[%s1 + $0x8] sm:$0xff]
  %v28 = vld [vmem:[%s1 + $0x10] sm:$0xff]
  %v29 = vld [vmem:[%s1 + $0x18] sm:$0xff]
  %v30 = vld [vmem:[%s1 + $0x20] sm:$0xff]
  %v31 = vld [vmem:[%s1 + $0x28] sm:$0xff]
  %v32 = vld [vmem:[%s1 + $0x30] sm:$0xff]
  %v33 = vld [vmem:[%s1 + $0x38] sm:$0xff]
  %v34 = vld [vmem:[%s1 + $0x40] sm:$0xff]
  %v35 = vld [vmem:[%s1 + $0x48] sm:$0xff]
  %v36 = vld [vmem:[%s1 + $0x50] sm:$0xff]
  %v37 = vld [vmem:[%s1 + $0x58] sm:$0xff]
  %v38 = vld [vmem:[%s1 + $0x60] sm:$0xff]
  %v39 = vld [vmem:[%s1 + $0x68] sm:$0xff]
  %v40 = vld [vmem:[%s1 + $0x70] sm:$0xff]
  %v41 = vld [vmem:[%s1 + $0x78] sm:$0xff]
  %v58 = vunpack.c.l.b16 %v26
  %v59 = vunpack.c.h.b16 %v26
  %v60 = vunpack.c.l.b16 %v27
  %v61 = vunpack.c.h.b16 %v27
  %v62 = vunpack.c.l.b16 %v28
  %v63 = vunpack.c.h.b16 %v28
  %v64 = vunpack.c.l.b16 %v29
  %v65 = vunpack.c.h.b16 %v29
  %v66 = vunpack.c.l.b16 %v30
  %v67 = vunpack.c.h.b16 %v30
  %v68 = vunpack.c.l.b16 %v31
  %v69 = vunpack.c.h.b16 %v31
  %v70 = vunpack.c.l.b16 %v32
  %v71 = vunpack.c.h.b16 %v32
  %v72 = vunpack.c.l.b16 %v33
  %v73 = vunpack.c.h.b16 %v33
  %v74 = vunpack.c.l.b16 %v34
  %v75 = vunpack.c.h.b16 %v34
  %v76 = vunpack.c.l.b16 %v35
  %v77 = vunpack.c.h.b16 %v35
  %v78 = vunpack.c.l.b16 %v36
  %v79 = vunpack.c.h.b16 %v36
  %v80 = vunpack.c.l.b16 %v37
  %v81 = vunpack.c.h.b16 %v37
  %v82 = vunpack.c.l.b16 %v38
  %v83 = vunpack.c.h.b16 %v38
  %v84 = vunpack.c.l.b16 %v39
  %v85 = vunpack.c.h.b16 %v39
  %v86 = vunpack.c.l.b16 %v40
  %v87 = vunpack.c.h.b16 %v40
  %v88 = vunpack.c.l.b16 %v41
  %v89 = vunpack.c.h.b16 %v41
  %v90 = vpack.c.b16 %v60, %v58
  %v91 = vpack.c.b16 %v61, %v59
  %v92 = vpack.c.b16 %v64, %v62
  %v93 = vpack.c.b16 %v65, %v63
  %v94 = vpack.c.b16 %v68, %v66
  %v95 = vpack.c.b16 %v69, %v67
  %v96 = vpack.c.b16 %v72, %v70
  %v97 = vpack.c.b16 %v73, %v71
  %v98 = vpack.c.b16 %v76, %v74
  %v99 = vpack.c.b16 %v77, %v75
  %v100 = vpack.c.b16 %v80, %v78
  %v101 = vpack.c.b16 %v81, %v79
  %v102 = vpack.c.b16 %v84, %v82
  %v103 = vpack.c.b16 %v85, %v83
  %v104 = vpack.c.b16 %v88, %v86
  %v105 = vpack.c.b16 %v89, %v87
  %122 = vmatpush.bf16.msra.mxu0 %v104
  %123 = vmatpush.bf16.msra.mxu0 %v102
  %124 = vmatpush.bf16.msra.mxu0 %v100
  %125 = vmatpush.bf16.msra.mxu0 %v98
  %126 = vmatpush.bf16.msra.mxu0 %v96
  %127 = vmatpush.bf16.msra.mxu0 %v94
  %128 = vmatpush.bf16.msra.mxu0 %v92
  %129 = vmatpush.bf16.msra.mxu0 %v90
  %130 = vmatmul.bf16.gmra.mxu0 %v25
  %v131 = vpop.f32.mrf.mxu0
  %v132 = vadd.f32 0.0, %v131
  %v133 = vpop.f32.mrf.mxu0
  %134 = vdwg.mxu0
  %135 = vmatpush.bf16.msra.mxu0 %v105
  %136 = vmatpush.bf16.msra.mxu0 %v103
  %137 = vmatpush.bf16.msra.mxu0 %v101
  %138 = vmatpush.bf16.msra.mxu0 %v99
  %139 = vmatpush.bf16.msra.mxu0 %v97
  %140 = vmatpush.bf16.msra.mxu0 %v95
  %141 = vmatpush.bf16.msra.mxu0 %v93
  %142 = vmatpush.bf16.msra.mxu0 %v91
  %143 = vmatmul.bf16.gmra.mxu0 %v25
  %v144 = vpop.f32.mrf.mxu0
  %v145 = vadd.f32 0.0, %v144
  %v146 = vpop.f32.mrf.mxu0
  %147 = vdwg.mxu0
  %v148 = vadd.f32 %v23, %v132
  %v149 = vadd.f32 %v24, %v145
  %150 = vst [vmem:[#allocation2] sm:$0xff] %v148
  %151 = vst [vmem:[#allocation2 + $0x8] sm:$0xff] %v149
  // Predicated region
  $region22: #{resnet_forward.23} parent=0 // pred_check
    %p152 = pneg %p17
  $region23: #{resnet_forward.23} parent=0 // pred_check_branch
    %154 = sbr.rel (%p152) target = $region25
  $region24: #{resnet_forward.23} parent=0 // pred_region
    %v155 = vld [vmem:[#allocation2] sm:$0xff]
    %v156 = vld [vmem:[#allocation2 + $0x8] sm:$0xff]
    %v157 = vld [vmem:[%s2] sm:$0x3]
    %v159 = vperm.slane %v157, 0
    %v160 = vperm.slane %v157, 1
    %v163 = vmul.f32 %v155, %v159
    %v164 = vmul.f32 %v156, %v160
    %v165 = vld [vmem:[%s3] sm:$0x3]
    %v167 = vperm.slane %v165, 0
    %v168 = vperm.slane %v165, 1
    %v171 = vadd.f32 %v163, %v167
    %v172 = vadd.f32 %v164, %v168
    %v173 = vpack.c.bf16 %v172, %v171
    %174 = vst [vmem:[%s4] sm:$0xff] %v173
  $region25: #{resnet_forward.23} parent=0 // pred_fallthru
    _
  // Predicated region
  $region26: #{resnet_forward.23} parent=0 // pred_check
    _
  $region27: #{resnet_forward.23} parent=0 // pred_check_branch
    %176 = sbr.rel (0) target = $region29
  $region28: #{resnet_forward.23} parent=0 // pred_region
    _
  $region29: #{resnet_forward.23} parent=0 // pred_fallthru
    _
  // Predicated region
  $region30: #{resnet_forward.23} parent=0 // pred_check
    _
  $region31: #{resnet_forward.23} parent=0 // pred_check_branch
    %178 = sbr.rel (0) target = $region33
  $region32: #{resnet_forward.23} parent=0 // pred_region
    _
  $region33: #{resnet_forward.23} parent=0 // pred_fallthru
    _

// kernel: resnet_forward.28
$region0: #{resnet_forward.28}
  #allocation0 [shape = 'u32[]', space=smem, size = 0x4, offset = 0x4, fixed_abs, tag = 'smem constant byte address 0x4 - core index']
  #allocation1 [shape = 'u32[72,128]{1,0:T(1,128)}', space=vmem, size = 0x9000, scoped, tag = 'internal scratch']
  #allocation2 [shape = 'f32[2,256]{1,0:T(2,128)}', space=vmem, size = 0x800, scoped, tag = 'scratch operand']
  %s0 = inlined_call_operand.vmem [shape: bf16[9,2,512], index: 0, kind: input, shape index: {}, may-alias: {0,5}]
  %s1 = inlined_call_operand.vmem [shape: bf16[9,2,256], index: 1, kind: input, shape index: {}]
  %s2 = inlined_call_operand.vmem [shape: bf16[9,256,512], index: 2, kind: input, shape index: {}]
  %s3 = inlined_call_operand.vmem [shape: f32[1,512], index: 3, kind: input, shape index: {}]
  %s4 = inlined_call_operand.vmem [shape: f32[1,512], index: 4, kind: input, shape index: {}]
  %s5 = inlined_call_operand.vmem [shape: bf16[9,2,512], index: 5, kind: output, shape index: {}, may-alias: {0,5}]
  %s6 = scalar_lea.vmem %s5, 16
  %s7 = sld [smem:[#allocation0]]
  $region125: #{resnet_forward.28} parent=0
    _
  %s9 = ssub.s32 1, %s7
  %s10 = scalar_select 0, %s9, %s7
  $region1: #{resnet_forward.28} parent=0
    #allocation3 [shape = 'u8[262144]{0}', space=vmem, size = 0x40000, scoped, tag = 'input window, operand 1']
    #allocation4 [shape = 'u8[2048]{0}', space=vmem, size = 0x800, scoped, tag = 'output window, operand 0']
    loop: start=0, step=1, limit=20
    $region2: #{resnet_forward.28} parent=1 // loop_pre_header
      _
    $region3: #{resnet_forward.28} parent=1 // loop_header
      %s12 = sphi 0, %s16
      %p13 = scmp.ge.s32.totalorder %s12, 20
      %s19 = sphi 0, %s38
      %s20 = sphi 0, %s34
      %s21 = sphi 0, %s30
      %s22 = sphi 0, %s19
      %s23 = sphi 0, %s20
      %s24 = sphi 0, %s21
      %s25 = sphi 0, %s22
      %s26 = sphi 0, %s23
      %s27 = sphi 0, %s24
      %s43 = sphi 0, %s45
      %s46 = sphi 0, %s43
      %s47 = sphi 0, %s46
      %s63 = sphi 0, %s47
      %s71 = sphi 0, %s73
      %s74 = sphi 0, %s71
      %s75 = sphi 0, %s74
      %s91 = sphi 0, %s75
      %s97 = sphi 0, %s99
      %s100 = sphi 0, %s97
      %s101 = sphi 0, %s100
      %s117 = sphi 0, %s101
      %s123 = sphi 0, %s125
      %s126 = sphi 0, %s123
      %s127 = sphi 0, %s126
      %s143 = sphi 0, %s127
      %s151 = sphi 0, %s153
      %s154 = sphi 0, %s151
      %s155 = sphi 0, %s154
      %s171 = sphi 0, %s155
    $region4: #{resnet_forward.28} parent=1 // loop_header_branch
      %15 = sbr.rel (%p13) target = $region8
    $region5: #{resnet_forward.28} parent=1 // loop_body
      %s17 = ssub.s32 %s12, 1
      %s18 = ssub.s32 %s12, 2
      %s28 = sadd.s32 1, %s21
      %p29 = scmp.ge.s32.totalorder %s28, 9
      %s30 = scalar_select %p29, 0, %s28
      %s31 = sadd.s32 1, %s20
      %s32 = scalar_select %p29, %s31, %s20
      %p33 = scmp.ge.s32.totalorder %s32, 2
      %s34 = scalar_select %p33, 0, %s32
      %s35 = sadd.s32 1, %s19
      %s36 = scalar_select %p33, %s35, %s19
      %p37 = scmp.ge.s32.totalorder %s36, 1
      %s38 = scalar_select %p37, 0, %s36
      %s39 = ssub.s32 %s21, %s30
      %s40 = ssub.s32 %s19, %s38
      %s41 = sor.u32 %s39, %s40
      %p42 = scmp.eq.s32.totalorder %s41, 0
      %s44 = sadd.s32 %s43, 1
      %s45 = scalar_select %p42, %s43, %s44
      %p48 = pneg %p42
      %p49 = scmp.eq.s32.totalorder %s12, 17
      %p50 = por %p48, %p49
      %p51 = scmp.ne.s32.totalorder %s43, %s46
      %p52 = scmp.eq.s32.totalorder %s12, 0
      %p53 = por %p51, %p52
      %p54 = scmp.ne.s32.totalorder %s43, %s46
      %p55 = scmp.eq.s32.totalorder %s17, 17
      %p56 = por %p54, %p55
      %p57 = scmp.ne.s32.totalorder %s46, %s47
      %p58 = scmp.eq.s32.totalorder %s17, 0
      %p59 = por %p57, %p58
      %p60 = scmp.ne.s32.totalorder %s46, %s47
      %p61 = scmp.eq.s32.totalorder %s18, 17
      %p62 = por %p60, %p61
      %p64 = scmp.ne.s32.totalorder %s47, %s63
      %p65 = scmp.eq.s32.totalorder %s18, 0
      %p66 = por %p64, %p65
      %s67 = ssub.s32 %s21, %s30
      %s68 = ssub.s32 %s20, %s34
      %s69 = sor.u32 %s67, %s68
      %p70 = scmp.eq.s32.totalorder %s69, 0
      %s72 = sadd.s32 %s71, 1
      %s73 = scalar_select %p70, %s71, %s72
      %p76 = pneg %p70
      %p77 = scmp.eq.s32.totalorder %s12, 17
      %p78 = por %p76, %p77
      %p79 = scmp.ne.s32.totalorder %s71, %s74
      %p80 = scmp.eq.s32.totalorder %s12, 0
      %p81 = por %p79, %p80
      %p82 = scmp.ne.s32.totalorder %s71, %s74
      %p83 = scmp.eq.s32.totalorder %s17, 17
      %p84 = por %p82, %p83
      %p85 = scmp.ne.s32.totalorder %s74, %s75
      %p86 = scmp.eq.s32.totalorder %s17, 0
      %p87 = por %p85, %p86
      %p88 = scmp.ne.s32.totalorder %s74, %s75
      %p89 = scmp.eq.s32.totalorder %s18, 17
      %p90 = por %p88, %p89
      %p92 = scmp.ne.s32.totalorder %s75, %s91
      %p93 = scmp.eq.s32.totalorder %s18, 0
      %p94 = por %p92, %p93
      %s95 = ssub.s32 %s20, %s34
      %p96 = scmp.eq.s32.totalorder %s95, 0
      %s98 = sadd.s32 %s97, 1
      %s99 = scalar_select %p96, %s97, %s98
      %p102 = pneg %p96
      %p103 = scmp.eq.s32.totalorder %s12, 17
      %p104 = por %p102, %p103
      %p105 = scmp.ne.s32.totalorder %s97, %s100
      %p106 = scmp.eq.s32.totalorder %s12, 0
      %p107 = por %p105, %p106
      %p108 = scmp.ne.s32.totalorder %s97, %s100
      %p109 = scmp.eq.s32.totalorder %s17, 17
      %p110 = por %p108, %p109
      %p111 = scmp.ne.s32.totalorder %s100, %s101
      %p112 = scmp.eq.s32.totalorder %s17, 0
      %p113 = por %p111, %p112
      %p114 = scmp.ne.s32.totalorder %s100, %s101
      %p115 = scmp.eq.s32.totalorder %s18, 17
      %p116 = por %p114, %p115
      %p118 = scmp.ne.s32.totalorder %s101, %s117
      %p119 = scmp.eq.s32.totalorder %s18, 0
      %p120 = por %p118, %p119
      %s121 = ssub.s32 %s20, %s34
      %p122 = scmp.eq.s32.totalorder %s121, 0
      %s124 = sadd.s32 %s123, 1
      %s125 = scalar_select %p122, %s123, %s124
      %p128 = pneg %p122
      %p129 = scmp.eq.s32.totalorder %s12, 17
      %p130 = por %p128, %p129
      %p131 = scmp.ne.s32.totalorder %s123, %s126
      %p132 = scmp.eq.s32.totalorder %s12, 0
      %p133 = por %p131, %p132
      %p134 = scmp.ne.s32.totalorder %s123, %s126
      %p135 = scmp.eq.s32.totalorder %s17, 17
      %p136 = por %p134, %p135
      %p137 = scmp.ne.s32.totalorder %s126, %s127
      %p138 = scmp.eq.s32.totalorder %s17, 0
      %p139 = por %p137, %p138
      %p140 = scmp.ne.s32.totalorder %s126, %s127
      %p141 = scmp.eq.s32.totalorder %s18, 17
      %p142 = por %p140, %p141
      %p144 = scmp.ne.s32.totalorder %s127, %s143
      %p145 = scmp.eq.s32.totalorder %s18, 0
      %p146 = por %p144, %p145
      %s147 = ssub.s32 %s19, %s38
      %s148 = ssub.s32 %s20, %s34
      %s149 = sor.u32 %s147, %s148
      %p150 = scmp.eq.s32.totalorder %s149, 0
      %s152 = sadd.s32 %s151, 1
      %s153 = scalar_select %p150, %s151, %s152
      %p156 = pneg %p150
      %p157 = scmp.eq.s32.totalorder %s12, 17
      %p158 = por %p156, %p157
      %p159 = scmp.ne.s32.totalorder %s151, %s154
      %p160 = scmp.eq.s32.totalorder %s12, 0
      %p161 = por %p159, %p160
      %p162 = scmp.ne.s32.totalorder %s151, %s154
      %p163 = scmp.eq.s32.totalorder %s17, 17
      %p164 = por %p162, %p163
      %p165 = scmp.ne.s32.totalorder %s154, %s155
      %p166 = scmp.eq.s32.totalorder %s17, 0
      %p167 = por %p165, %p166
      %p168 = scmp.ne.s32.totalorder %s154, %s155
      %p169 = scmp.eq.s32.totalorder %s18, 17
      %p170 = por %p168, %p169
      %p172 = scmp.ne.s32.totalorder %s155, %s171
      %p173 = scmp.eq.s32.totalorder %s18, 0
      %p174 = por %p172, %p173
      %p175 = scmp.le.s32.totalorder 1, %s12
      %p176 = scmp.lt.s32.totalorder %s12, 19
      %p177 = pnand %p175, %p176
      %p178 = pneg %p177
      // Predicated region
      $region9: #{resnet_forward.28} parent=5 // pred_check
        _
      $region10: #{resnet_forward.28} parent=5 // pred_check_branch
        %180 = sbr.rel (%p177) target = $region12
      $region11: #{resnet_forward.28} parent=5 // pred_region
        %s181 = ssub.s32 %s12, 1
      $region12: #{resnet_forward.28} parent=5 // pred_fallthru
        _
      %p182 = scmp.lt.s32.totalorder %s12, 18
      // Predicated region
      $region13: #{resnet_forward.28} parent=5 // pred_check
        %p183 = pneg %p182
      $region14: #{resnet_forward.28} parent=5 // pred_check_branch
        %185 = sbr.rel (%p183) target = $region16
      $region15: #{resnet_forward.28} parent=5 // pred_region
        // Predicated region
        $region17: #{resnet_forward.28} parent=15 // pred_check
          %p186 = pneg %p53
        $region18: #{resnet_forward.28} parent=15 // pred_check_branch
          %188 = sbr.rel (%p186) target = $region20
        $region19: #{resnet_forward.28} parent=15 // pred_region
          %p189 = scmp.lt.s32.totalorder %s21, 8
          %s190 = scalar_select %p189, %s21, 8
          %p191 = scmp.lt.s32.totalorder %s19, 0
          %s192 = scalar_select %p191, %s19, 0
          %s193 = smul.addr %s192, 2
          %s194 = smul.addr %s190, 2
          %s195 = sadd.s32 %s193, %s194
          %s196 = scalar_lea.vmem %s1, %s195
        $region20: #{resnet_forward.28} parent=15 // pred_fallthru
          _
        // Predicated region
        $region21: #{resnet_forward.28} parent=15 // pred_check
          %p197 = pneg %p81
        $region22: #{resnet_forward.28} parent=15 // pred_check_branch
          %199 = sbr.rel (%p197) target = $region24
        $region23: #{resnet_forward.28} parent=15 // pred_region
          %s200 = sand.u32 %s71, 1
          %s201 = sand.u32 %s71, 1
          %s202 = smul.addr %s201, 256
          %s203 = scalar_lea.vmem [#allocation3], %s202
          %s204 = smul.u32 2, %s20
          %s205 = smul.addr %s21, 128
          %s206 = sadd.s32 %s204, %s205
          %s207 = smul.addr %s206, 4
          %s208 = scalar_lea.vmem %s2, %s207
          // Predicated region
          $region25: #{resnet_forward.28} parent=23 // pred_check
            _
          $region26: #{resnet_forward.28} parent=23 // pred_check_branch
            %210 = sbr.rel (0) target = $region28
          $region27: #{resnet_forward.28} parent=23 // pred_region
            // Predicated region
            $region29: #{resnet_forward.28} parent=27 // pred_check
              _
            $region30: #{resnet_forward.28} parent=27 // pred_check_branch
              %212 = sbr.rel (0) target = $region32
            $region31: #{resnet_forward.28} parent=27 // pred_region
              // Predicated region
              $region44: #{resnet_forward.28} parent=31 // pred_check
                _
              $region45: #{resnet_forward.28} parent=31 // pred_check_branch
                %290 = sbr.rel (0) target = $region47
              $region46: #{resnet_forward.28} parent=31 // pred_region
                loop: start=0, step=1, limit=1
                $region48: #{resnet_forward.28} parent=46 // loop_pre_header
                  _
                $region49: #{resnet_forward.28} parent=46 // loop_header
                  %s292 = sphi 0, %s296
                  %p293 = scmp.ge.s32.totalorder %s292, 1
                  %s297 = sphi %s208, %s208
                  %s298 = sphi %s203, %s203
                $region50: #{resnet_forward.28} parent=46 // loop_header_branch
                  %295 = sbr.rel (%p293) target = $region54
                $region51: #{resnet_forward.28} parent=46 // loop_body
                  %v299 = vld [vmem:[%s297] sm:$0xff]
                  %300 = vst [vmem:[%s298] sm:$0xff] %v299
                  %v301 = vld [vmem:[%s297 + $0x10] sm:$0xff]
                  %302 = vst [vmem:[%s298 + $0x8] sm:$0xff] %v301
                  %v303 = vld [vmem:[%s297 + $0x20] sm:$0xff]
                  %304 = vst [vmem:[%s298 + $0x10] sm:$0xff] %v303
                  %v305 = vld [vmem:[%s297 + $0x30] sm:$0xff]
                  %306 = vst [vmem:[%s298 + $0x18] sm:$0xff] %v305
                  %v307 = vld [vmem:[%s297 + $0x40] sm:$0xff]
                  %308 = vst [vmem:[%s298 + $0x20] sm:$0xff] %v307
                  %v309 = vld [vmem:[%s297 + $0x50] sm:$0xff]
                  %310 = vst [vmem:[%s298 + $0x28] sm:$0xff] %v309
                  %v311 = vld [vmem:[%s297 + $0x60] sm:$0xff]
                  %312 = vst [vmem:[%s298 + $0x30] sm:$0xff] %v311
                  %v313 = vld [vmem:[%s297 + $0x70] sm:$0xff]
                  %314 = vst [vmem:[%s298 + $0x38] sm:$0xff] %v313
                  %v315 = vld [vmem:[%s297 + $0x80] sm:$0xff]
                  %316 = vst [vmem:[%s298 + $0x40] sm:$0xff] %v315
                  %v317 = vld [vmem:[%s297 + $0x90] sm:$0xff]
                  %318 = vst [vmem:[%s298 + $0x48] sm:$0xff] %v317
                  %v319 = vld [vmem:[%s297 + $0xa0] sm:$0xff]
                  %320 = vst [vmem:[%s298 + $0x50] sm:$0xff] %v319
                  %v321 = vld [vmem:[%s297 + $0xb0] sm:$0xff]
                  %322 = vst [vmem:[%s298 + $0x58] sm:$0xff] %v321
                  %v323 = vld [vmem:[%s297 + $0xc0] sm:$0xff]
                  %324 = vst [vmem:[%s298 + $0x60] sm:$0xff] %v323
                  %v325 = vld [vmem:[%s297 + $0xd0] sm:$0xff]
                  %326 = vst [vmem:[%s298 + $0x68] sm:$0xff] %v325
                  %v327 = vld [vmem:[%s297 + $0xe0] sm:$0xff]
                  %328 = vst [vmem:[%s298 + $0x70] sm:$0xff] %v327
                  %v329 = vld [vmem:[%s297 + $0xf0] sm:$0xff]
                  %330 = vst [vmem:[%s298 + $0x78] sm:$0xff] %v329
                  %v331 = vld [vmem:[%s297 + $0x100] sm:$0xff]
                  %332 = vst [vmem:[%s298 + $0x80] sm:$0xff] %v331
                  %v333 = vld [vmem:[%s297 + $0x110] sm:$0xff]
                  %334 = vst [vmem:[%s298 + $0x88] sm:$0xff] %v333
                  %v335 = vld [vmem:[%s297 + $0x120] sm:$0xff]
                  %336 = vst [vmem:[%s298 + $0x90] sm:$0xff] %v335
                  %v337 = vld [vmem:[%s297 + $0x130] sm:$0xff]
                  %338 = vst [vmem:[%s298 + $0x98] sm:$0xff] %v337
                  %v339 = vld [vmem:[%s297 + $0x140] sm:$0xff]
                  %340 = vst [vmem:[%s298 + $0xa0] sm:$0xff] %v339
                  %v341 = vld [vmem:[%s297 + $0x150] sm:$0xff]
                  %342 = vst [vmem:[%s298 + $0xa8] sm:$0xff] %v341
                  %v343 = vld [vmem:[%s297 + $0x160] sm:$0xff]
                  %344 = vst [vmem:[%s298 + $0xb0] sm:$0xff] %v343
                  %v345 = vld [vmem:[%s297 + $0x170] sm:$0xff]
                  %346 = vst [vmem:[%s298 + $0xb8] sm:$0xff] %v345
                  %v347 = vld [vmem:[%s297 + $0x180] sm:$0xff]
                  %348 = vst [vmem:[%s298 + $0xc0] sm:$0xff] %v347
                  %v349 = vld [vmem:[%s297 + $0x190] sm:$0xff]
                  %350 = vst [vmem:[%s298 + $0xc8] sm:$0xff] %v349
                  %v351 = vld [vmem:[%s297 + $0x1a0] sm:$0xff]
                  %352 = vst [vmem:[%s298 + $0xd0] sm:$0xff] %v351
                  %v353 = vld [vmem:[%s297 + $0x1b0] sm:$0xff]
                  %354 = vst [vmem:[%s298 + $0xd8] sm:$0xff] %v353
                  %v355 = vld [vmem:[%s297 + $0x1c0] sm:$0xff]
                  %356 = vst [vmem:[%s298 + $0xe0] sm:$0xff] %v355
                  %v357 = vld [vmem:[%s297 + $0x1d0] sm:$0xff]
                  %358 = vst [vmem:[%s298 + $0xe8] sm:$0xff] %v357
                  %v359 = vld [vmem:[%s297 + $0x1e0] sm:$0xff]
                  %360 = vst [vmem:[%s298 + $0xf0] sm:$0xff] %v359
                  %v361 = vld [vmem:[%s297 + $0x1f0] sm:$0xff]
                  %362 = vst [vmem:[%s298 + $0xf8] sm:$0xff] %v361
                $region52: #{resnet_forward.28} parent=46 // loop_footer
                  %s296 = sadd.s32 1, %s292
                $region53: #{resnet_forward.28} parent=46 // loop_footer_branch
                  %291 = sbr.rel target = $region49
                $region54: #{resnet_forward.28} parent=46 // loop_exit
                  _
              $region47: #{resnet_forward.28} parent=31 // pred_fallthru
                _
              // Predicated region
              $region55: #{resnet_forward.28} parent=31 // pred_check
                _
              $region56: #{resnet_forward.28} parent=31 // pred_check_branch
                %364 = sbr.rel target = $region58
              $region57: #{resnet_forward.28} parent=31 // pred_region
                _
              $region58: #{resnet_forward.28} parent=31 // pred_fallthru
                _
            $region32: #{resnet_forward.28} parent=27 // pred_fallthru
              _
            // Predicated region
            $region33: #{resnet_forward.28} parent=27 // pred_check
              _
            $region34: #{resnet_forward.28} parent=27 // pred_check_branch
              %214 = sbr.rel target = $region36
            $region35: #{resnet_forward.28} parent=27 // pred_region
              %s216 = ssub.s32 256, 1
              loop: start=0, step=1, limit=1
              $region37: #{resnet_forward.28} parent=35 // loop_pre_header
                _
              $region38: #{resnet_forward.28} parent=35 // loop_header
                %s218 = sphi 0, %s222
                %p219 = scmp.ge.s32.totalorder %s218, 1
                %s223 = sphi %s208, %s208
                %s224 = sphi %s203, %s203
              $region39: #{resnet_forward.28} parent=35 // loop_header_branch
                %221 = sbr.rel (%p219) target = $region43
              $region40: #{resnet_forward.28} parent=35 // loop_body
                %v225 = vld [vmem:[%s223] sm:%s216]
                %226 = vst [vmem:[%s224] sm:%s216] %v225
                %v227 = vld [vmem:[%s223 + $0x10] sm:%s216]
                %228 = vst [vmem:[%s224 + $0x8] sm:%s216] %v227
                %v229 = vld [vmem:[%s223 + $0x20] sm:%s216]
                %230 = vst [vmem:[%s224 + $0x10] sm:%s216] %v229
                %v231 = vld [vmem:[%s223 + $0x30] sm:%s216]
                %232 = vst [vmem:[%s224 + $0x18] sm:%s216] %v231
                %v233 = vld [vmem:[%s223 + $0x40] sm:%s216]
                %234 = vst [vmem:[%s224 + $0x20] sm:%s216] %v233
                %v235 = vld [vmem:[%s223 + $0x50] sm:%s216]
                %236 = vst [vmem:[%s224 + $0x28] sm:%s216] %v235
                %v237 = vld [vmem:[%s223 + $0x60] sm:%s216]
                %238 = vst [vmem:[%s224 + $0x30] sm:%s216] %v237
                %v239 = vld [vmem:[%s223 + $0x70] sm:%s216]
                %240 = vst [vmem:[%s224 + $0x38] sm:%s216] %v239
                %v241 = vld [vmem:[%s223 + $0x80] sm:%s216]
                %242 = vst [vmem:[%s224 + $0x40] sm:%s216] %v241
                %v243 = vld [vmem:[%s223 + $0x90] sm:%s216]
                %244 = vst [vmem:[%s224 + $0x48] sm:%s216] %v243
                %v245 = vld [vmem:[%s223 + $0xa0] sm:%s216]
                %246 = vst [vmem:[%s224 + $0x50] sm:%s216] %v245
                %v247 = vld [vmem:[%s223 + $0xb0] sm:%s216]
                %248 = vst [vmem:[%s224 + $0x58] sm:%s216] %v247
                %v249 = vld [vmem:[%s223 + $0xc0] sm:%s216]
                %250 = vst [vmem:[%s224 + $0x60] sm:%s216] %v249
                %v251 = vld [vmem:[%s223 + $0xd0] sm:%s216]
                %252 = vst [vmem:[%s224 + $0x68] sm:%s216] %v251
                %v253 = vld [vmem:[%s223 + $0xe0] sm:%s216]
                %254 = vst [vmem:[%s224 + $0x70] sm:%s216] %v253
                %v255 = vld [vmem:[%s223 + $0xf0] sm:%s216]
                %256 = vst [vmem:[%s224 + $0x78] sm:%s216] %v255
                %v257 = vld [vmem:[%s223 + $0x100] sm:%s216]
                %258 = vst [vmem:[%s224 + $0x80] sm:%s216] %v257
                %v259 = vld [vmem:[%s223 + $0x110] sm:%s216]
                %260 = vst [vmem:[%s224 + $0x88] sm:%s216] %v259
                %v261 = vld [vmem:[%s223 + $0x120] sm:%s216]
                %262 = vst [vmem:[%s224 + $0x90] sm:%s216] %v261
                %v263 = vld [vmem:[%s223 + $0x130] sm:%s216]
                %264 = vst [vmem:[%s224 + $0x98] sm:%s216] %v263
                %v265 = vld [vmem:[%s223 + $0x140] sm:%s216]
                %266 = vst [vmem:[%s224 + $0xa0] sm:%s216] %v265
                %v267 = vld [vmem:[%s223 + $0x150] sm:%s216]
                %268 = vst [vmem:[%s224 + $0xa8] sm:%s216] %v267
                %v269 = vld [vmem:[%s223 + $0x160] sm:%s216]
                %270 = vst [vmem:[%s224 + $0xb0] sm:%s216] %v269
                %v271 = vld [vmem:[%s223 + $0x170] sm:%s216]
                %272 = vst [vmem:[%s224 + $0xb8] sm:%s216] %v271
                %v273 = vld [vmem:[%s223 + $0x180] sm:%s216]
                %274 = vst [vmem:[%s224 + $0xc0] sm:%s216] %v273
                %v275 = vld [vmem:[%s223 + $0x190] sm:%s216]
                %276 = vst [vmem:[%s224 + $0xc8] sm:%s216] %v275
                %v277 = vld [vmem:[%s223 + $0x1a0] sm:%s216]
                %278 = vst [vmem:[%s224 + $0xd0] sm:%s216] %v277
                %v279 = vld [vmem:[%s223 + $0x1b0] sm:%s216]
                %280 = vst [vmem:[%s224 + $0xd8] sm:%s216] %v279
                %v281 = vld [vmem:[%s223 + $0x1c0] sm:%s216]
                %282 = vst [vmem:[%s224 + $0xe0] sm:%s216] %v281
                %v283 = vld [vmem:[%s223 + $0x1d0] sm:%s216]
                %284 = vst [vmem:[%s224 + $0xe8] sm:%s216] %v283
                %v285 = vld [vmem:[%s223 + $0x1e0] sm:%s216]
                %286 = vst [vmem:[%s224 + $0xf0] sm:%s216] %v285
                %v287 = vld [vmem:[%s223 + $0x1f0] sm:%s216]
                %288 = vst [vmem:[%s224 + $0xf8] sm:%s216] %v287
              $region41: #{resnet_forward.28} parent=35 // loop_footer
                %s222 = sadd.s32 1, %s218
              $region42: #{resnet_forward.28} parent=35 // loop_footer_branch
                %217 = sbr.rel target = $region38
              $region43: #{resnet_forward.28} parent=35 // loop_exit
                _
            $region36: #{resnet_forward.28} parent=27 // pred_fallthru
              _
          $region28: #{resnet_forward.28} parent=23 // pred_fallthru
            _
          %365 = vnop
        $region24: #{resnet_forward.28} parent=15 // pred_fallthru
          _
        // Predicated region
        $region59: #{resnet_forward.28} parent=15 // pred_check
          %p366 = pneg %p107
        $region60: #{resnet_forward.28} parent=15 // pred_check_branch
          %368 = sbr.rel (%p366) target = $region62
        $region61: #{resnet_forward.28} parent=15 // pred_region
          %s369 = smul.u32 2, %s20
          %p370 = scmp.lt.s32.totalorder %s369, 3
          %s371 = scalar_select %p370, %s369, 3
          %s372 = scalar_lea.vmem %s3, %s371
          %s373 = smul.u32 2, %s20
        $region62: #{resnet_forward.28} parent=15 // pred_fallthru
          _
        // Predicated region
        $region63: #{resnet_forward.28} parent=15 // pred_check
          %p374 = pneg %p133
        $region64: #{resnet_forward.28} parent=15 // pred_check_branch
          %376 = sbr.rel (%p374) target = $region66
        $region65: #{resnet_forward.28} parent=15 // pred_region
          %s377 = smul.u32 2, %s20
          %p378 = scmp.lt.s32.totalorder %s377, 3
          %s379 = scalar_select %p378, %s377, 3
          %s380 = scalar_lea.vmem %s4, %s379
          %s381 = smul.u32 2, %s20
        $region66: #{resnet_forward.28} parent=15 // pred_fallthru
          _
      $region16: #{resnet_forward.28} parent=5 // pred_fallthru
        _
      %p382 = scmp.le.s32.totalorder 1, %s12
      %p383 = scmp.lt.s32.totalorder %s12, 19
      %p384 = pnand %p382, %p383
      %p385 = pneg %p384
      // Predicated region
      $region67: #{resnet_forward.28} parent=5 // pred_check
        _
      $region68: #{resnet_forward.28} parent=5 // pred_check_branch
        %387 = sbr.rel (%p384) target = $region70
      $region69: #{resnet_forward.28} parent=5 // pred_region
        %s388 = ssub.s32 %s12, 1
        %s389 = sand.u32 %s74, 1
        %s390 = sand.u32 %s74, 1
        %s391 = smul.addr %s390, 256
        %s392 = scalar_lea.vmem [#allocation3], %s391
        // Predicated region
        $region71: #{resnet_forward.28} parent=69 // pred_check
          %p393 = pneg %p87
        $region72: #{resnet_forward.28} parent=69 // pred_check_branch
          %395 = sbr.rel (%p393) target = $region74
        $region73: #{resnet_forward.28} parent=69 // pred_region
          _
        $region74: #{resnet_forward.28} parent=69 // pred_fallthru
          _
        %p396 = scmp.lt.s32.totalorder %s24, 8
        %s397 = scalar_select %p396, %s24, 8
        %p398 = scmp.lt.s32.totalorder %s22, 0
        %s399 = scalar_select %p398, %s22, 0
        %s400 = smul.addr %s399, 2
        %s401 = smul.addr %s397, 2
        %s402 = sadd.s32 %s400, %s401
        %s403 = scalar_lea.vmem %s1, %s402
        %p404 = pneg %p59
        %p405 = pneg %p56
        %s406 = sand.u32 %s74, 1
        %s407 = sand.u32 %s74, 1
        %s408 = smul.addr %s407, 256
        %s409 = scalar_lea.vmem [#allocation3], %s408
        %p410 = pneg %p87
        %p411 = pneg %p84
        %s412 = smul.u32 2, %s23
        %p413 = scmp.lt.s32.totalorder %s412, 3
        %s414 = scalar_select %p413, %s412, 3
        %s415 = scalar_lea.vmem %s3, %s414
        %p416 = pneg %p113
        %p417 = pneg %p110
        %s418 = smul.u32 2, %s23
        %p419 = scmp.lt.s32.totalorder %s418, 3
        %s420 = scalar_select %p419, %s418, 3
        %s421 = scalar_lea.vmem %s4, %s420
        %p422 = pneg %p139
        %p423 = pneg %p136
        %p424 = pneg %p167
        %p425 = pneg %p164
        %s426 = sand.u32 %s154, 1
        %s427 = sand.u32 %s154, 1
        %s428 = smul.addr %s427, 2
        %s429 = scalar_lea.vmem [#allocation4], %s428
        %p430 = scmp.lt.s32.totalorder %s24, 8
        %s431 = scalar_select %p430, %s24, 8
        %p432 = scmp.lt.s32.totalorder %s22, 0
        %s433 = scalar_select %p432, %s22, 0
        %s434 = smul.addr %s433, 2
        %s435 = smul.addr %s431, 2
        %s436 = sadd.s32 %s434, %s435
        %s437 = scalar_lea.vmem %s1, %s436
        %s438 = smul.u32 2, %s23
        %s439 = smul.u32 2, %s23
        %p440 = scmp.lt.s32.totalorder %s439, 3
        %s441 = scalar_select %p440, %s439, 3
        %s442 = scalar_lea.vmem %s3, %s441
        %s443 = smul.u32 2, %s23
        %s444 = smul.u32 2, %s23
        %p445 = scmp.lt.s32.totalorder %s444, 3
        %s446 = scalar_select %p445, %s444, 3
        %s447 = scalar_lea.vmem %s4, %s446
        %s448 = smul.u32 2, %s23
        %s449 = smul.u32 2, %s23
        %p450 = scmp.eq.s32.totalorder %s24, 0
        // Predicated region
        $region75: #{resnet_forward.28} parent=69 // pred_check
          %p451 = pneg %p450
        $region76: #{resnet_forward.28} parent=69 // pred_check_branch
          %453 = sbr.rel (%p451) target = $region78
        $region77: #{resnet_forward.28} parent=69 // pred_region
          %454 = vst [vmem:[#allocation2] sm:$0xf] 0.0
        $region78: #{resnet_forward.28} parent=69 // pred_fallthru
          _
        %v455 = vld [vmem:[#allocation2] sm:$0xf]
        %v456 = vld [vmem:[%s437] sm:$0x3]
        %v457 = vld [vmem:[%s392] sm:$0xff]
        %v458 = vld [vmem:[%s392 + $0x8] sm:$0xff]
        %v459 = vld [vmem:[%s392 + $0x10] sm:$0xff]
        %v460 = vld [vmem:[%s392 + $0x18] sm:$0xff]
        %v461 = vld [vmem:[%s392 + $0x20] sm:$0xff]
        %v462 = vld [vmem:[%s392 + $0x28] sm:$0xff]
        %v463 = vld [vmem:[%s392 + $0x30] sm:$0xff]
        %v464 = vld [vmem:[%s392 + $0x38] sm:$0xff]
        %v465 = vld [vmem:[%s392 + $0x40] sm:$0xff]
        %v466 = vld [vmem:[%s392 + $0x48] sm:$0xff]
        %v467 = vld [vmem:[%s392 + $0x50] sm:$0xff]
        %v468 = vld [vmem:[%s392 + $0x58] sm:$0xff]
        %v469 = vld [vmem:[%s392 + $0x60] sm:$0xff]
        %v470 = vld [vmem:[%s392 + $0x68] sm:$0xff]
        %v471 = vld [vmem:[%s392 + $0x70] sm:$0xff]
        %v472 = vld [vmem:[%s392 + $0x78] sm:$0xff]
        %v473 = vld [vmem:[%s392 + $0x80] sm:$0xff]
        %v474 = vld [vmem:[%s392 + $0x88] sm:$0xff]
        %v475 = vld [vmem:[%s392 + $0x90] sm:$0xff]
        %v476 = vld [vmem:[%s392 + $0x98] sm:$0xff]
        %v477 = vld [vmem:[%s392 + $0xa0] sm:$0xff]
        %v478 = vld [vmem:[%s392 + $0xa8] sm:$0xff]
        %v479 = vld [vmem:[%s392 + $0xb0] sm:$0xff]
        %v480 = vld [vmem:[%s392 + $0xb8] sm:$0xff]
        %v481 = vld [vmem:[%s392 + $0xc0] sm:$0xff]
        %v482 = vld [vmem:[%s392 + $0xc8] sm:$0xff]
        %v483 = vld [vmem:[%s392 + $0xd0] sm:$0xff]
        %v484 = vld [vmem:[%s392 + $0xd8] sm:$0xff]
        %v485 = vld [vmem:[%s392 + $0xe0] sm:$0xff]
        %v486 = vld [vmem:[%s392 + $0xe8] sm:$0xff]
        %v487 = vld [vmem:[%s392 + $0xf0] sm:$0xff]
        %v488 = vld [vmem:[%s392 + $0xf8] sm:$0xff]
        %490 = vst [vmem:[#allocation1] ss:$9 sm:$0xff] %v456
        %v491 = vld [vmem:[#allocation1] sm:$0xff]
        %v492 = vld [vmem:[#allocation1 + $0x9] sm:$0xff]
        %v527 = vunpack.c.l.b16 %v457
        %v528 = vunpack.c.h.b16 %v457
        %v529 = vunpack.c.l.b16 %v458
        %v530 = vunpack.c.h.b16 %v458
        %v531 = vunpack.c.l.b16 %v459
        %v532 = vunpack.c.h.b16 %v459
        %v533 = vunpack.c.l.b16 %v460
        %v534 = vunpack.c.h.b16 %v460
        %v535 = vunpack.c.l.b16 %v461
        %v536 = vunpack.c.h.b16 %v461
        %v537 = vunpack.c.l.b16 %v462
        %v538 = vunpack.c.h.b16 %v462
        %v539 = vunpack.c.l.b16 %v463
        %v540 = vunpack.c.h.b16 %v463
        %v541 = vunpack.c.l.b16 %v464
        %v542 = vunpack.c.h.b16 %v464
        %v543 = vunpack.c.l.b16 %v465
        %v544 = vunpack.c.h.b16 %v465
        %v545 = vunpack.c.l.b16 %v466
        %v546 = vunpack.c.h.b16 %v466
        %v547 = vunpack.c.l.b16 %v467
        %v548 = vunpack.c.h.b16 %v467
        %v549 = vunpack.c.l.b16 %v468
        %v550 = vunpack.c.h.b16 %v468
        %v551 = vunpack.c.l.b16 %v469
        %v552 = vunpack.c.h.b16 %v469
        %v553 = vunpack.c.l.b16 %v470
        %v554 = vunpack.c.h.b16 %v470
        %v555 = vunpack.c.l.b16 %v471
        %v556 = vunpack.c.h.b16 %v471
        %v557 = vunpack.c.l.b16 %v472
        %v558 = vunpack.c.h.b16 %v472
        %v559 = vunpack.c.l.b16 %v473
        %v560 = vunpack.c.h.b16 %v473
        %v561 = vunpack.c.l.b16 %v474
        %v562 = vunpack.c.h.b16 %v474
        %v563 = vunpack.c.l.b16 %v475
        %v564 = vunpack.c.h.b16 %v475
        %v565 = vunpack.c.l.b16 %v476
        %v566 = vunpack.c.h.b16 %v476
        %v567 = vunpack.c.l.b16 %v477
        %v568 = vunpack.c.h.b16 %v477
        %v569 = vunpack.c.l.b16 %v478
        %v570 = vunpack.c.h.b16 %v478
        %v571 = vunpack.c.l.b16 %v479
        %v572 = vunpack.c.h.b16 %v479
        %v573 = vunpack.c.l.b16 %v480
        %v574 = vunpack.c.h.b16 %v480
        %v575 = vunpack.c.l.b16 %v481
        %v576 = vunpack.c.h.b16 %v481
        %v577 = vunpack.c.l.b16 %v482
        %v578 = vunpack.c.h.b16 %v482
        %v579 = vunpack.c.l.b16 %v483
        %v580 = vunpack.c.h.b16 %v483
        %v581 = vunpack.c.l.b16 %v484
        %v582 = vunpack.c.h.b16 %v484
        %v583 = vunpack.c.l.b16 %v485
        %v584 = vunpack.c.h.b16 %v485
        %v585 = vunpack.c.l.b16 %v486
        %v586 = vunpack.c.h.b16 %v486
        %v587 = vunpack.c.l.b16 %v487
        %v588 = vunpack.c.h.b16 %v487
        %v589 = vunpack.c.l.b16 %v488
        %v590 = vunpack.c.h.b16 %v488
        %v591 = vpack.c.b16 %v529, %v527
        %v592 = vpack.c.b16 %v530, %v528
        %v593 = vpack.c.b16 %v533, %v531
        %v594 = vpack.c.b16 %v534, %v532
        %v595 = vpack.c.b16 %v537, %v535
        %v596 = vpack.c.b16 %v538, %v536
        %v597 = vpack.c.b16 %v541, %v539
        %v598 = vpack.c.b16 %v542, %v540
        %v599 = vpack.c.b16 %v545, %v543
        %v600 = vpack.c.b16 %v546, %v544
        %v601 = vpack.c.b16 %v549, %v547
        %v602 = vpack.c.b16 %v550, %v548
        %v603 = vpack.c.b16 %v553, %v551
        %v604 = vpack.c.b16 %v554, %v552
        %v605 = vpack.c.b16 %v557, %v555
        %v606 = vpack.c.b16 %v558, %v556
        %v607 = vpack.c.b16 %v561, %v559
        %v608 = vpack.c.b16 %v562, %v560
        %v609 = vpack.c.b16 %v565, %v563
        %v610 = vpack.c.b16 %v566, %v564
        %v611 = vpack.c.b16 %v569, %v567
        %v612 = vpack.c.b16 %v570, %v568
        %v613 = vpack.c.b16 %v573, %v571
        %v614 = vpack.c.b16 %v574, %v572
        %v615 = vpack.c.b16 %v577, %v575
        %v616 = vpack.c.b16 %v578, %v576
        %v617 = vpack.c.b16 %v581, %v579
        %v618 = vpack.c.b16 %v582, %v580
        %v619 = vpack.c.b16 %v585, %v583
        %v620 = vpack.c.b16 %v586, %v584
        %v621 = vpack.c.b16 %v589, %v587
        %v622 = vpack.c.b16 %v590, %v588
        %655 = vmatpush.bf16.msra.mxu0 %v605
        %656 = vmatpush.bf16.msra.mxu0 %v603
        %657 = vmatpush.bf16.msra.mxu0 %v601
        %658 = vmatpush.bf16.msra.mxu0 %v599
        %659 = vmatpush.bf16.msra.mxu0 %v597
        %660 = vmatpush.bf16.msra.mxu0 %v595
        %661 = vmatpush.bf16.msra.mxu0 %v593
        %662 = vmatpush.bf16.msra.mxu0 %v591
        %663 = vmatmul.bf16.gmra.mxu0 %v491
        %v664 = vpop.f32.mrf.mxu0
        %v665 = vadd.f32 0.0, %v664
        %v666 = vpop.f32.mrf.mxu0
        %667 = vdwg.mxu0
        %668 = vmatpush.bf16.msra.mxu0 %v621
        %669 = vmatpush.bf16.msra.mxu0 %v619
        %670 = vmatpush.bf16.msra.mxu0 %v617
        %671 = vmatpush.bf16.msra.mxu0 %v615
        %672 = vmatpush.bf16.msra.mxu0 %v613
        %673 = vmatpush.bf16.msra.mxu0 %v611
        %674 = vmatpush.bf16.msra.mxu0 %v609
        %675 = vmatpush.bf16.msra.mxu0 %v607
        %676 = vmatmul.bf16.gmra.mxu0 %v492
        %v677 = vpop.f32.mrf.mxu0
        %v678 = vadd.f32 %v665, %v677
        %v679 = vpop.f32.mrf.mxu0
        %680 = vdwg.mxu0
        %681 = vmatpush.bf16.msra.mxu0 %v606
        %682 = vmatpush.bf16.msra.mxu0 %v604
        %683 = vmatpush.bf16.msra.mxu0 %v602
        %684 = vmatpush.bf16.msra.mxu0 %v600
        %685 = vmatpush.bf16.msra.mxu0 %v598
        %686 = vmatpush.bf16.msra.mxu0 %v596
        %687 = vmatpush.bf16.msra.mxu0 %v594
        %688 = vmatpush.bf16.msra.mxu0 %v592
        %689 = vmatmul.bf16.gmra.mxu0 %v491
        %v690 = vpop.f32.mrf.mxu0
        %v691 = vadd.f32 0.0, %v690
        %v692 = vpop.f32.mrf.mxu0
        %693 = vdwg.mxu0
        %694 = vmatpush.bf16.msra.mxu0 %v622
        %695 = vmatpush.bf16.msra.mxu0 %v620
        %696 = vmatpush.bf16.msra.mxu0 %v618
        %697 = vmatpush.bf16.msra.mxu0 %v616
        %698 = vmatpush.bf16.msra.mxu0 %v614
        %699 = vmatpush.bf16.msra.mxu0 %v612
        %700 = vmatpush.bf16.msra.mxu0 %v610
        %701 = vmatpush.bf16.msra.mxu0 %v608
        %702 = vmatmul.bf16.gmra.mxu0 %v492
        %v703 = vpop.f32.mrf.mxu0
        %v704 = vadd.f32 %v691, %v703
        %v705 = vpop.f32.mrf.mxu0
        %706 = vdwg.mxu0
        %v709 = vrot.slane %v704, 6
        %vm710 = vcmask 1041408
        %v711 = vsel %vm710, %v678, %v709
        %v713 = vadd.f32 %v455, %v711
        %714 = vst [vmem:[#allocation2] sm:$0xf] %v713
        %p715 = scmp.eq.s32.totalorder %s24, 8
        // Predicated region
        $region79: #{resnet_forward.28} parent=69 // pred_check
          %p716 = pneg %p715
        $region80: #{resnet_forward.28} parent=69 // pred_check_branch
          %718 = sbr.rel (%p716) target = $region82
        $region81: #{resnet_forward.28} parent=69 // pred_region
          %v719 = vld [vmem:[#allocation2] sm:$0xf]
          %v720 = vld [vmem:[%s442] sm:$0x3]
          %v722 = vperm.slane %v720, 0
          %v723 = vperm.slane %v720, 1
          %v724 = vrot.slane %v723, 6
          %v725 = vsel %vm710, %v722, %v724
          %v727 = vmul.f32 %v719, %v725
          %v728 = vld [vmem:[%s447] sm:$0x3]
          %v730 = vperm.slane %v728, 0
          %v731 = vperm.slane %v728, 1
          %v732 = vrot.slane %v731, 6
          %v733 = vsel %vm710, %v730, %v732
          %v735 = vadd.f32 %v727, %v733
          %v736 = vmax.f32 %v735, 0.0
          %738 = vst [vmem:[#allocation1] ss:$4 sm:$0xff] %v736
          %v739 = vld.sshfl [vmem:[#allocation1] sm:$0xff pattern:$0x73625140]
          %v740 = vld.sshfl [vmem:[#allocation1 + $0x8] sm:$0xff pattern:$0x73625140]
          %v743 = vpack.c.bf16 %v740, %v739
          %v745 = vrot.slane %v743, 3
          %vm746 = vcmask 1040384
          %v749 = vsel %vm746, %v743, %v745
          %751 = vst [vmem:[%s429] sm:$0x3] %v749
        $region82: #{resnet_forward.28} parent=69 // pred_fallthru
          _
        %s752 = sand.u32 %s154, 1
        %s753 = sand.u32 %s154, 1
        %s754 = smul.addr %s753, 2
        %s755 = scalar_lea.vmem [#allocation4], %s754
        // Predicated region
        $region83: #{resnet_forward.28} parent=69 // pred_check
          %p756 = pneg %p164
        $region84: #{resnet_forward.28} parent=69 // pred_check_branch
          %758 = sbr.rel (%p756) target = $region86
        $region85: #{resnet_forward.28} parent=69 // pred_region
          %s759 = smul.u32 2, %s23
          %s760 = smul.addr %s22, 4
          %s761 = sadd.s32 %s759, %s760
          %s762 = scalar_lea.vmem %s6, %s761
          // Predicated region
          $region87: #{resnet_forward.28} parent=85 // pred_check
            _
          $region88: #{resnet_forward.28} parent=85 // pred_check_branch
            %764 = sbr.rel (0) target = $region90
          $region89: #{resnet_forward.28} parent=85 // pred_region
            // Predicated region
            $region91: #{resnet_forward.28} parent=89 // pred_check
              _
            $region92: #{resnet_forward.28} parent=89 // pred_check_branch
              %766 = sbr.rel target = $region94
            $region93: #{resnet_forward.28} parent=89 // pred_region
              // Predicated region
              $region106: #{resnet_forward.28} parent=93 // pred_check
                _
              $region107: #{resnet_forward.28} parent=93 // pred_check_branch
                %782 = sbr.rel (0) target = $region109
              $region108: #{resnet_forward.28} parent=93 // pred_region
                %s784 = ssub.s32 4, 1
                loop: start=0, step=1, limit=1
                $region110: #{resnet_forward.28} parent=108 // loop_pre_header
                  _
                $region111: #{resnet_forward.28} parent=108 // loop_header
                  %s786 = sphi 0, %s790
                  %p787 = scmp.ge.s32.totalorder %s786, 1
                  %s791 = sphi %s755, %s755
                  %s792 = sphi %s762, %s762
                $region112: #{resnet_forward.28} parent=108 // loop_header_branch
                  %789 = sbr.rel (%p787) target = $region116
                $region113: #{resnet_forward.28} parent=108 // loop_body
                  %v793 = vld [vmem:[%s791] sm:%s784]
                  %794 = vst [vmem:[%s792] sm:%s784] %v793
                $region114: #{resnet_forward.28} parent=108 // loop_footer
                  %s790 = sadd.s32 1, %s786
                $region115: #{resnet_forward.28} parent=108 // loop_footer_branch
                  %785 = sbr.rel target = $region111
                $region116: #{resnet_forward.28} parent=108 // loop_exit
                  _
              $region109: #{resnet_forward.28} parent=93 // pred_fallthru
                _
            $region94: #{resnet_forward.28} parent=89 // pred_fallthru
              _
            // Predicated region
            $region95: #{resnet_forward.28} parent=89 // pred_check
              _
            $region96: #{resnet_forward.28} parent=89 // pred_check_branch
              %768 = sbr.rel (0) target = $region98
            $region97: #{resnet_forward.28} parent=89 // pred_region
              %s770 = ssub.s32 4, 1
              loop: start=0, step=1, limit=1
              $region99: #{resnet_forward.28} parent=97 // loop_pre_header
                _
              $region100: #{resnet_forward.28} parent=97 // loop_header
                %s772 = sphi 0, %s776
                %p773 = scmp.ge.s32.totalorder %s772, 1
                %s777 = sphi %s755, %s755
                %s778 = sphi %s762, %s762
              $region101: #{resnet_forward.28} parent=97 // loop_header_branch
                %775 = sbr.rel (%p773) target = $region105
              $region102: #{resnet_forward.28} parent=97 // loop_body
                %v779 = vld [vmem:[%s777] sm:%s770]
                %780 = vst [vmem:[%s778] sm:%s770] %v779
              $region103: #{resnet_forward.28} parent=97 // loop_footer
                %s776 = sadd.s32 1, %s772
              $region104: #{resnet_forward.28} parent=97 // loop_footer_branch
                %771 = sbr.rel target = $region100
              $region105: #{resnet_forward.28} parent=97 // loop_exit
                _
            $region98: #{resnet_forward.28} parent=89 // pred_fallthru
              _
          $region90: #{resnet_forward.28} parent=85 // pred_fallthru
            _
          %795 = vnop
        $region86: #{resnet_forward.28} parent=69 // pred_fallthru
          _
      $region70: #{resnet_forward.28} parent=5 // pred_fallthru
        _
      %p796 = scmp.le.s32.totalorder 2, %s12
      // Predicated region
      $region117: #{resnet_forward.28} parent=5 // pred_check
        %p797 = pneg %p796
      $region118: #{resnet_forward.28} parent=5 // pred_check_branch
        %799 = sbr.rel (%p797) target = $region120
      $region119: #{resnet_forward.28} parent=5 // pred_region
        %s800 = ssub.s32 %s12, 2
        // Predicated region
        $region121: #{resnet_forward.28} parent=119 // pred_check
          %p801 = pneg %p170
        $region122: #{resnet_forward.28} parent=119 // pred_check_branch
          %803 = sbr.rel (%p801) target = $region124
        $region123: #{resnet_forward.28} parent=119 // pred_region
          %s804 = sand.u32 %s155, 1
          %s805 = sand.u32 %s155, 1
          %s806 = smul.addr %s805, 2
          %s807 = scalar_lea.vmem [#allocation4], %s806
        $region124: #{resnet_forward.28} parent=119 // pred_fallthru
          _
      $region120: #{resnet_forward.28} parent=5 // pred_fallthru
        _
    $region6: #{resnet_forward.28} parent=1 // loop_footer
      %s16 = sadd.s32 1, %s12
    $region7: #{resnet_forward.28} parent=1 // loop_footer_branch
      %11 = sbr.rel target = $region3
    $region8: #{resnet_forward.28} parent=1 // loop_exit
      _

// kernel: resnet_forward.25
$region0: #{resnet_forward.25}
  #allocation0 [shape = 'u32[]', space=smem, size = 0x4, offset = 0x4, fixed_abs, tag = 'smem constant byte address 0x4 - core index']
  #allocation1 [shape = 'u32[72,128]{1,0:T(1,128)}', space=vmem, size = 0x9000, scoped, tag = 'internal scratch']
  #allocation2 [shape = 'f32[2,256]{1,0:T(2,128)}', space=vmem, size = 0x800, scoped, tag = 'scratch operand']
  %s0 = inlined_call_operand.vmem [shape: bf16[1,2,256], index: 0, kind: input, shape index: {}]
  %s1 = inlined_call_operand.vmem [shape: bf16[1,256,512], index: 1, kind: input, shape index: {}]
  %s2 = inlined_call_operand.vmem [shape: f32[1,512], index: 2, kind: input, shape index: {}]
  %s3 = inlined_call_operand.vmem [shape: f32[1,512], index: 3, kind: input, shape index: {}]
  %s4 = inlined_call_operand.vmem [shape: bf16[2,512], index: 4, kind: output, shape index: {}]
  %s5 = sld [smem:[#allocation0]]
  $region95: #{resnet_forward.25} parent=0
    _
  %s7 = ssub.s32 1, %s5
  %s8 = scalar_select 0, %s7, %s5
  $region1: #{resnet_forward.25} parent=0
    #allocation3 [shape = 'u8[262144]{0}', space=vmem, size = 0x40000, scoped, tag = 'input window, operand 1']
    loop: start=0, step=1, limit=4
    $region2: #{resnet_forward.25} parent=1 // loop_pre_header
      _
    $region3: #{resnet_forward.25} parent=1 // loop_header
      %s10 = sphi 0, %s14
      %p11 = scmp.ge.s32.totalorder %s10, 4
      %s17 = sphi 0, %s36
      %s18 = sphi 0, %s32
      %s19 = sphi 0, %s28
      %s20 = sphi 0, %s17
      %s21 = sphi 0, %s18
      %s22 = sphi 0, %s19
      %s23 = sphi 0, %s20
      %s24 = sphi 0, %s21
      %s25 = sphi 0, %s22
      %s41 = sphi 0, %s43
      %s44 = sphi 0, %s41
      %s45 = sphi 0, %s44
      %s61 = sphi 0, %s45
      %s69 = sphi 0, %s71
      %s72 = sphi 0, %s69
      %s73 = sphi 0, %s72
      %s89 = sphi 0, %s73
      %s95 = sphi 0, %s97
      %s98 = sphi 0, %s95
      %s99 = sphi 0, %s98
      %s115 = sphi 0, %s99
      %s121 = sphi 0, %s123
      %s124 = sphi 0, %s121
      %s125 = sphi 0, %s124
      %s141 = sphi 0, %s125
      %s149 = sphi 0, %s151
      %s152 = sphi 0, %s149
      %s153 = sphi 0, %s152
      %s169 = sphi 0, %s153
    $region4: #{resnet_forward.25} parent=1 // loop_header_branch
      %13 = sbr.rel (%p11) target = $region8
    $region5: #{resnet_forward.25} parent=1 // loop_body
      %s15 = ssub.s32 %s10, 1
      %s16 = ssub.s32 %s10, 2
      %s26 = sadd.s32 1, %s19
      %p27 = scmp.ge.s32.totalorder %s26, 1
      %s28 = scalar_select %p27, 0, %s26
      %s29 = sadd.s32 1, %s18
      %s30 = scalar_select %p27, %s29, %s18
      %p31 = scmp.ge.s32.totalorder %s30, 2
      %s32 = scalar_select %p31, 0, %s30
      %s33 = sadd.s32 1, %s17
      %s34 = scalar_select %p31, %s33, %s17
      %p35 = scmp.ge.s32.totalorder %s34, 1
      %s36 = scalar_select %p35, 0, %s34
      %s37 = ssub.s32 %s19, %s28
      %s38 = ssub.s32 %s17, %s36
      %s39 = sor.u32 %s37, %s38
      %p40 = scmp.eq.s32.totalorder %s39, 0
      %s42 = sadd.s32 %s41, 1
      %s43 = scalar_select %p40, %s41, %s42
      %p46 = pneg %p40
      %p47 = scmp.eq.s32.totalorder %s10, 1
      %p48 = por %p46, %p47
      %p49 = scmp.ne.s32.totalorder %s41, %s44
      %p50 = scmp.eq.s32.totalorder %s10, 0
      %p51 = por %p49, %p50
      %p52 = scmp.ne.s32.totalorder %s41, %s44
      %p53 = scmp.eq.s32.totalorder %s15, 1
      %p54 = por %p52, %p53
      %p55 = scmp.ne.s32.totalorder %s44, %s45
      %p56 = scmp.eq.s32.totalorder %s15, 0
      %p57 = por %p55, %p56
      %p58 = scmp.ne.s32.totalorder %s44, %s45
      %p59 = scmp.eq.s32.totalorder %s16, 1
      %p60 = por %p58, %p59
      %p62 = scmp.ne.s32.totalorder %s45, %s61
      %p63 = scmp.eq.s32.totalorder %s16, 0
      %p64 = por %p62, %p63
      %s65 = ssub.s32 %s19, %s28
      %s66 = ssub.s32 %s18, %s32
      %s67 = sor.u32 %s65, %s66
      %p68 = scmp.eq.s32.totalorder %s67, 0
      %s70 = sadd.s32 %s69, 1
      %s71 = scalar_select %p68, %s69, %s70
      %p74 = pneg %p68
      %p75 = scmp.eq.s32.totalorder %s10, 1
      %p76 = por %p74, %p75
      %p77 = scmp.ne.s32.totalorder %s69, %s72
      %p78 = scmp.eq.s32.totalorder %s10, 0
      %p79 = por %p77, %p78
      %p80 = scmp.ne.s32.totalorder %s69, %s72
      %p81 = scmp.eq.s32.totalorder %s15, 1
      %p82 = por %p80, %p81
      %p83 = scmp.ne.s32.totalorder %s72, %s73
      %p84 = scmp.eq.s32.totalorder %s15, 0
      %p85 = por %p83, %p84
      %p86 = scmp.ne.s32.totalorder %s72, %s73
      %p87 = scmp.eq.s32.totalorder %s16, 1
      %p88 = por %p86, %p87
      %p90 = scmp.ne.s32.totalorder %s73, %s89
      %p91 = scmp.eq.s32.totalorder %s16, 0
      %p92 = por %p90, %p91
      %s93 = ssub.s32 %s18, %s32
      %p94 = scmp.eq.s32.totalorder %s93, 0
      %s96 = sadd.s32 %s95, 1
      %s97 = scalar_select %p94, %s95, %s96
      %p100 = pneg %p94
      %p101 = scmp.eq.s32.totalorder %s10, 1
      %p102 = por %p100, %p101
      %p103 = scmp.ne.s32.totalorder %s95, %s98
      %p104 = scmp.eq.s32.totalorder %s10, 0
      %p105 = por %p103, %p104
      %p106 = scmp.ne.s32.totalorder %s95, %s98
      %p107 = scmp.eq.s32.totalorder %s15, 1
      %p108 = por %p106, %p107
      %p109 = scmp.ne.s32.totalorder %s98, %s99
      %p110 = scmp.eq.s32.totalorder %s15, 0
      %p111 = por %p109, %p110
      %p112 = scmp.ne.s32.totalorder %s98, %s99
      %p113 = scmp.eq.s32.totalorder %s16, 1
      %p114 = por %p112, %p113
      %p116 = scmp.ne.s32.totalorder %s99, %s115
      %p117 = scmp.eq.s32.totalorder %s16, 0
      %p118 = por %p116, %p117
      %s119 = ssub.s32 %s18, %s32
      %p120 = scmp.eq.s32.totalorder %s119, 0
      %s122 = sadd.s32 %s121, 1
      %s123 = scalar_select %p120, %s121, %s122
      %p126 = pneg %p120
      %p127 = scmp.eq.s32.totalorder %s10, 1
      %p128 = por %p126, %p127
      %p129 = scmp.ne.s32.totalorder %s121, %s124
      %p130 = scmp.eq.s32.totalorder %s10, 0
      %p131 = por %p129, %p130
      %p132 = scmp.ne.s32.totalorder %s121, %s124
      %p133 = scmp.eq.s32.totalorder %s15, 1
      %p134 = por %p132, %p133
      %p135 = scmp.ne.s32.totalorder %s124, %s125
      %p136 = scmp.eq.s32.totalorder %s15, 0
      %p137 = por %p135, %p136
      %p138 = scmp.ne.s32.totalorder %s124, %s125
      %p139 = scmp.eq.s32.totalorder %s16, 1
      %p140 = por %p138, %p139
      %p142 = scmp.ne.s32.totalorder %s125, %s141
      %p143 = scmp.eq.s32.totalorder %s16, 0
      %p144 = por %p142, %p143
      %s145 = ssub.s32 %s17, %s36
      %s146 = ssub.s32 %s18, %s32
      %s147 = sor.u32 %s145, %s146
      %p148 = scmp.eq.s32.totalorder %s147, 0
      %s150 = sadd.s32 %s149, 1
      %s151 = scalar_select %p148, %s149, %s150
      %p154 = pneg %p148
      %p155 = scmp.eq.s32.totalorder %s10, 1
      %p156 = por %p154, %p155
      %p157 = scmp.ne.s32.totalorder %s149, %s152
      %p158 = scmp.eq.s32.totalorder %s10, 0
      %p159 = por %p157, %p158
      %p160 = scmp.ne.s32.totalorder %s149, %s152
      %p161 = scmp.eq.s32.totalorder %s15, 1
      %p162 = por %p160, %p161
      %p163 = scmp.ne.s32.totalorder %s152, %s153
      %p164 = scmp.eq.s32.totalorder %s15, 0
      %p165 = por %p163, %p164
      %p166 = scmp.ne.s32.totalorder %s152, %s153
      %p167 = scmp.eq.s32.totalorder %s16, 1
      %p168 = por %p166, %p167
      %p170 = scmp.ne.s32.totalorder %s153, %s169
      %p171 = scmp.eq.s32.totalorder %s16, 0
      %p172 = por %p170, %p171
      %p173 = scmp.le.s32.totalorder 1, %s10
      %p174 = scmp.lt.s32.totalorder %s10, 3
      %p175 = pnand %p173, %p174
      %p176 = pneg %p175
      // Predicated region
      $region9: #{resnet_forward.25} parent=5 // pred_check
        _
      $region10: #{resnet_forward.25} parent=5 // pred_check_branch
        %178 = sbr.rel (%p175) target = $region12
      $region11: #{resnet_forward.25} parent=5 // pred_region
        %s179 = ssub.s32 %s10, 1
        // Predicated region
        $region13: #{resnet_forward.25} parent=11 // pred_check
          %p180 = pneg %p57
        $region14: #{resnet_forward.25} parent=11 // pred_check_branch
          %182 = sbr.rel (%p180) target = $region16
        $region15: #{resnet_forward.25} parent=11 // pred_region
          %p183 = scmp.lt.s32.totalorder %s22, 0
          %s184 = scalar_select %p183, %s22, 0
          %p185 = scmp.lt.s32.totalorder %s20, 0
          %s186 = scalar_select %p185, %s20, 0
          %s187 = smul.addr %s186, 2
          %s188 = smul.addr %s184, 2
          %s189 = sadd.s32 %s187, %s188
          %s190 = scalar_lea.vmem %s0, %s189
        $region16: #{resnet_forward.25} parent=11 // pred_fallthru
          _
      $region12: #{resnet_forward.25} parent=5 // pred_fallthru
        _
      %p191 = scmp.lt.s32.totalorder %s10, 2
      // Predicated region
      $region17: #{resnet_forward.25} parent=5 // pred_check
        %p192 = pneg %p191
      $region18: #{resnet_forward.25} parent=5 // pred_check_branch
        %194 = sbr.rel (%p192) target = $region20
      $region19: #{resnet_forward.25} parent=5 // pred_region
        // Predicated region
        $region21: #{resnet_forward.25} parent=19 // pred_check
          %p195 = pneg %p79
        $region22: #{resnet_forward.25} parent=19 // pred_check_branch
          %197 = sbr.rel (%p195) target = $region24
        $region23: #{resnet_forward.25} parent=19 // pred_region
          %s198 = sand.u32 %s69, 1
          %s199 = sand.u32 %s69, 1
          %s200 = smul.addr %s199, 256
          %s201 = scalar_lea.vmem [#allocation3], %s200
          %s202 = smul.u32 2, %s18
          %s203 = smul.addr %s19, 128
          %s204 = sadd.s32 %s202, %s203
          %s205 = smul.addr %s204, 4
          %s206 = scalar_lea.vmem %s1, %s205
          // Predicated region
          $region25: #{resnet_forward.25} parent=23 // pred_check
            _
          $region26: #{resnet_forward.25} parent=23 // pred_check_branch
            %208 = sbr.rel (0) target = $region28
          $region27: #{resnet_forward.25} parent=23 // pred_region
            // Predicated region
            $region29: #{resnet_forward.25} parent=27 // pred_check
              _
            $region30: #{resnet_forward.25} parent=27 // pred_check_branch
              %210 = sbr.rel (0) target = $region32
            $region31: #{resnet_forward.25} parent=27 // pred_region
              // Predicated region
              $region44: #{resnet_forward.25} parent=31 // pred_check
                _
              $region45: #{resnet_forward.25} parent=31 // pred_check_branch
                %288 = sbr.rel (0) target = $region47
              $region46: #{resnet_forward.25} parent=31 // pred_region
                loop: start=0, step=1, limit=1
                $region48: #{resnet_forward.25} parent=46 // loop_pre_header
                  _
                $region49: #{resnet_forward.25} parent=46 // loop_header
                  %s290 = sphi 0, %s294
                  %p291 = scmp.ge.s32.totalorder %s290, 1
                  %s295 = sphi %s206, %s206
                  %s296 = sphi %s201, %s201
                $region50: #{resnet_forward.25} parent=46 // loop_header_branch
                  %293 = sbr.rel (%p291) target = $region54
                $region51: #{resnet_forward.25} parent=46 // loop_body
                  %v297 = vld [vmem:[%s295] sm:$0xff]
                  %298 = vst [vmem:[%s296] sm:$0xff] %v297
                  %v299 = vld [vmem:[%s295 + $0x10] sm:$0xff]
                  %300 = vst [vmem:[%s296 + $0x8] sm:$0xff] %v299
                  %v301 = vld [vmem:[%s295 + $0x20] sm:$0xff]
                  %302 = vst [vmem:[%s296 + $0x10] sm:$0xff] %v301
                  %v303 = vld [vmem:[%s295 + $0x30] sm:$0xff]
                  %304 = vst [vmem:[%s296 + $0x18] sm:$0xff] %v303
                  %v305 = vld [vmem:[%s295 + $0x40] sm:$0xff]
                  %306 = vst [vmem:[%s296 + $0x20] sm:$0xff] %v305
                  %v307 = vld [vmem:[%s295 + $0x50] sm:$0xff]
                  %308 = vst [vmem:[%s296 + $0x28] sm:$0xff] %v307
                  %v309 = vld [vmem:[%s295 + $0x60] sm:$0xff]
                  %310 = vst [vmem:[%s296 + $0x30] sm:$0xff] %v309
                  %v311 = vld [vmem:[%s295 + $0x70] sm:$0xff]
                  %312 = vst [vmem:[%s296 + $0x38] sm:$0xff] %v311
                  %v313 = vld [vmem:[%s295 + $0x80] sm:$0xff]
                  %314 = vst [vmem:[%s296 + $0x40] sm:$0xff] %v313
                  %v315 = vld [vmem:[%s295 + $0x90] sm:$0xff]
                  %316 = vst [vmem:[%s296 + $0x48] sm:$0xff] %v315
                  %v317 = vld [vmem:[%s295 + $0xa0] sm:$0xff]
                  %318 = vst [vmem:[%s296 + $0x50] sm:$0xff] %v317
                  %v319 = vld [vmem:[%s295 + $0xb0] sm:$0xff]
                  %320 = vst [vmem:[%s296 + $0x58] sm:$0xff] %v319
                  %v321 = vld [vmem:[%s295 + $0xc0] sm:$0xff]
                  %322 = vst [vmem:[%s296 + $0x60] sm:$0xff] %v321
                  %v323 = vld [vmem:[%s295 + $0xd0] sm:$0xff]
                  %324 = vst [vmem:[%s296 + $0x68] sm:$0xff] %v323
                  %v325 = vld [vmem:[%s295 + $0xe0] sm:$0xff]
                  %326 = vst [vmem:[%s296 + $0x70] sm:$0xff] %v325
                  %v327 = vld [vmem:[%s295 + $0xf0] sm:$0xff]
                  %328 = vst [vmem:[%s296 + $0x78] sm:$0xff] %v327
                  %v329 = vld [vmem:[%s295 + $0x100] sm:$0xff]
                  %330 = vst [vmem:[%s296 + $0x80] sm:$0xff] %v329
                  %v331 = vld [vmem:[%s295 + $0x110] sm:$0xff]
                  %332 = vst [vmem:[%s296 + $0x88] sm:$0xff] %v331
                  %v333 = vld [vmem:[%s295 + $0x120] sm:$0xff]
                  %334 = vst [vmem:[%s296 + $0x90] sm:$0xff] %v333
                  %v335 = vld [vmem:[%s295 + $0x130] sm:$0xff]
                  %336 = vst [vmem:[%s296 + $0x98] sm:$0xff] %v335
                  %v337 = vld [vmem:[%s295 + $0x140] sm:$0xff]
                  %338 = vst [vmem:[%s296 + $0xa0] sm:$0xff] %v337
                  %v339 = vld [vmem:[%s295 + $0x150] sm:$0xff]
                  %340 = vst [vmem:[%s296 + $0xa8] sm:$0xff] %v339
                  %v341 = vld [vmem:[%s295 + $0x160] sm:$0xff]
                  %342 = vst [vmem:[%s296 + $0xb0] sm:$0xff] %v341
                  %v343 = vld [vmem:[%s295 + $0x170] sm:$0xff]
                  %344 = vst [vmem:[%s296 + $0xb8] sm:$0xff] %v343
                  %v345 = vld [vmem:[%s295 + $0x180] sm:$0xff]
                  %346 = vst [vmem:[%s296 + $0xc0] sm:$0xff] %v345
                  %v347 = vld [vmem:[%s295 + $0x190] sm:$0xff]
                  %348 = vst [vmem:[%s296 + $0xc8] sm:$0xff] %v347
                  %v349 = vld [vmem:[%s295 + $0x1a0] sm:$0xff]
                  %350 = vst [vmem:[%s296 + $0xd0] sm:$0xff] %v349
                  %v351 = vld [vmem:[%s295 + $0x1b0] sm:$0xff]
                  %352 = vst [vmem:[%s296 + $0xd8] sm:$0xff] %v351
                  %v353 = vld [vmem:[%s295 + $0x1c0] sm:$0xff]
                  %354 = vst [vmem:[%s296 + $0xe0] sm:$0xff] %v353
                  %v355 = vld [vmem:[%s295 + $0x1d0] sm:$0xff]
                  %356 = vst [vmem:[%s296 + $0xe8] sm:$0xff] %v355
                  %v357 = vld [vmem:[%s295 + $0x1e0] sm:$0xff]
                  %358 = vst [vmem:[%s296 + $0xf0] sm:$0xff] %v357
                  %v359 = vld [vmem:[%s295 + $0x1f0] sm:$0xff]
                  %360 = vst [vmem:[%s296 + $0xf8] sm:$0xff] %v359
                $region52: #{resnet_forward.25} parent=46 // loop_footer
                  %s294 = sadd.s32 1, %s290
                $region53: #{resnet_forward.25} parent=46 // loop_footer_branch
                  %289 = sbr.rel target = $region49
                $region54: #{resnet_forward.25} parent=46 // loop_exit
                  _
              $region47: #{resnet_forward.25} parent=31 // pred_fallthru
                _
              // Predicated region
              $region55: #{resnet_forward.25} parent=31 // pred_check
                _
              $region56: #{resnet_forward.25} parent=31 // pred_check_branch
                %362 = sbr.rel target = $region58
              $region57: #{resnet_forward.25} parent=31 // pred_region
                _
              $region58: #{resnet_forward.25} parent=31 // pred_fallthru
                _
            $region32: #{resnet_forward.25} parent=27 // pred_fallthru
              _
            // Predicated region
            $region33: #{resnet_forward.25} parent=27 // pred_check
              _
            $region34: #{resnet_forward.25} parent=27 // pred_check_branch
              %212 = sbr.rel target = $region36
            $region35: #{resnet_forward.25} parent=27 // pred_region
              %s214 = ssub.s32 256, 1
              loop: start=0, step=1, limit=1
              $region37: #{resnet_forward.25} parent=35 // loop_pre_header
                _
              $region38: #{resnet_forward.25} parent=35 // loop_header
                %s216 = sphi 0, %s220
                %p217 = scmp.ge.s32.totalorder %s216, 1
                %s221 = sphi %s206, %s206
                %s222 = sphi %s201, %s201
              $region39: #{resnet_forward.25} parent=35 // loop_header_branch
                %219 = sbr.rel (%p217) target = $region43
              $region40: #{resnet_forward.25} parent=35 // loop_body
                %v223 = vld [vmem:[%s221] sm:%s214]
                %224 = vst [vmem:[%s222] sm:%s214] %v223
                %v225 = vld [vmem:[%s221 + $0x10] sm:%s214]
                %226 = vst [vmem:[%s222 + $0x8] sm:%s214] %v225
                %v227 = vld [vmem:[%s221 + $0x20] sm:%s214]
                %228 = vst [vmem:[%s222 + $0x10] sm:%s214] %v227
                %v229 = vld [vmem:[%s221 + $0x30] sm:%s214]
                %230 = vst [vmem:[%s222 + $0x18] sm:%s214] %v229
                %v231 = vld [vmem:[%s221 + $0x40] sm:%s214]
                %232 = vst [vmem:[%s222 + $0x20] sm:%s214] %v231
                %v233 = vld [vmem:[%s221 + $0x50] sm:%s214]
                %234 = vst [vmem:[%s222 + $0x28] sm:%s214] %v233
                %v235 = vld [vmem:[%s221 + $0x60] sm:%s214]
                %236 = vst [vmem:[%s222 + $0x30] sm:%s214] %v235
                %v237 = vld [vmem:[%s221 + $0x70] sm:%s214]
                %238 = vst [vmem:[%s222 + $0x38] sm:%s214] %v237
                %v239 = vld [vmem:[%s221 + $0x80] sm:%s214]
                %240 = vst [vmem:[%s222 + $0x40] sm:%s214] %v239
                %v241 = vld [vmem:[%s221 + $0x90] sm:%s214]
                %242 = vst [vmem:[%s222 + $0x48] sm:%s214] %v241
                %v243 = vld [vmem:[%s221 + $0xa0] sm:%s214]
                %244 = vst [vmem:[%s222 + $0x50] sm:%s214] %v243
                %v245 = vld [vmem:[%s221 + $0xb0] sm:%s214]
                %246 = vst [vmem:[%s222 + $0x58] sm:%s214] %v245
                %v247 = vld [vmem:[%s221 + $0xc0] sm:%s214]
                %248 = vst [vmem:[%s222 + $0x60] sm:%s214] %v247
                %v249 = vld [vmem:[%s221 + $0xd0] sm:%s214]
                %250 = vst [vmem:[%s222 + $0x68] sm:%s214] %v249
                %v251 = vld [vmem:[%s221 + $0xe0] sm:%s214]
                %252 = vst [vmem:[%s222 + $0x70] sm:%s214] %v251
                %v253 = vld [vmem:[%s221 + $0xf0] sm:%s214]
                %254 = vst [vmem:[%s222 + $0x78] sm:%s214] %v253
                %v255 = vld [vmem:[%s221 + $0x100] sm:%s214]
                %256 = vst [vmem:[%s222 + $0x80] sm:%s214] %v255
                %v257 = vld [vmem:[%s221 + $0x110] sm:%s214]
                %258 = vst [vmem:[%s222 + $0x88] sm:%s214] %v257
                %v259 = vld [vmem:[%s221 + $0x120] sm:%s214]
                %260 = vst [vmem:[%s222 + $0x90] sm:%s214] %v259
                %v261 = vld [vmem:[%s221 + $0x130] sm:%s214]
                %262 = vst [vmem:[%s222 + $0x98] sm:%s214] %v261
                %v263 = vld [vmem:[%s221 + $0x140] sm:%s214]
                %264 = vst [vmem:[%s222 + $0xa0] sm:%s214] %v263
                %v265 = vld [vmem:[%s221 + $0x150] sm:%s214]
                %266 = vst [vmem:[%s222 + $0xa8] sm:%s214] %v265
                %v267 = vld [vmem:[%s221 + $0x160] sm:%s214]
                %268 = vst [vmem:[%s222 + $0xb0] sm:%s214] %v267
                %v269 = vld [vmem:[%s221 + $0x170] sm:%s214]
                %270 = vst [vmem:[%s222 + $0xb8] sm:%s214] %v269
                %v271 = vld [vmem:[%s221 + $0x180] sm:%s214]
                %272 = vst [vmem:[%s222 + $0xc0] sm:%s214] %v271
                %v273 = vld [vmem:[%s221 + $0x190] sm:%s214]
                %274 = vst [vmem:[%s222 + $0xc8] sm:%s214] %v273
                %v275 = vld [vmem:[%s221 + $0x1a0] sm:%s214]
                %276 = vst [vmem:[%s222 + $0xd0] sm:%s214] %v275
                %v277 = vld [vmem:[%s221 + $0x1b0] sm:%s214]
                %278 = vst [vmem:[%s222 + $0xd8] sm:%s214] %v277
                %v279 = vld [vmem:[%s221 + $0x1c0] sm:%s214]
                %280 = vst [vmem:[%s222 + $0xe0] sm:%s214] %v279
                %v281 = vld [vmem:[%s221 + $0x1d0] sm:%s214]
                %282 = vst [vmem:[%s222 + $0xe8] sm:%s214] %v281
                %v283 = vld [vmem:[%s221 + $0x1e0] sm:%s214]
                %284 = vst [vmem:[%s222 + $0xf0] sm:%s214] %v283
                %v285 = vld [vmem:[%s221 + $0x1f0] sm:%s214]
                %286 = vst [vmem:[%s222 + $0xf8] sm:%s214] %v285
              $region41: #{resnet_forward.25} parent=35 // loop_footer
                %s220 = sadd.s32 1, %s216
              $region42: #{resnet_forward.25} parent=35 // loop_footer_branch
                %215 = sbr.rel target = $region38
              $region43: #{resnet_forward.25} parent=35 // loop_exit
                _
            $region36: #{resnet_forward.25} parent=27 // pred_fallthru
              _
          $region28: #{resnet_forward.25} parent=23 // pred_fallthru
            _
          %363 = vnop
        $region24: #{resnet_forward.25} parent=19 // pred_fallthru
          _
        // Predicated region
        $region59: #{resnet_forward.25} parent=19 // pred_check
          %p364 = pneg %p105
        $region60: #{resnet_forward.25} parent=19 // pred_check_branch
          %366 = sbr.rel (%p364) target = $region62
        $region61: #{resnet_forward.25} parent=19 // pred_region
          %s367 = smul.u32 2, %s18
          %p368 = scmp.lt.s32.totalorder %s367, 3
          %s369 = scalar_select %p368, %s367, 3
          %s370 = scalar_lea.vmem %s2, %s369
          %s371 = smul.u32 2, %s18
        $region62: #{resnet_forward.25} parent=19 // pred_fallthru
          _
        // Predicated region
        $region63: #{resnet_forward.25} parent=19 // pred_check
          %p372 = pneg %p131
        $region64: #{resnet_forward.25} parent=19 // pred_check_branch
          %374 = sbr.rel (%p372) target = $region66
        $region65: #{resnet_forward.25} parent=19 // pred_region
          %s375 = smul.u32 2, %s18
          %p376 = scmp.lt.s32.totalorder %s375, 3
          %s377 = scalar_select %p376, %s375, 3
          %s378 = scalar_lea.vmem %s3, %s377
          %s379 = smul.u32 2, %s18
        $region66: #{resnet_forward.25} parent=19 // pred_fallthru
          _
      $region20: #{resnet_forward.25} parent=5 // pred_fallthru
        _
      %p380 = scmp.le.s32.totalorder 1, %s10
      %p381 = scmp.lt.s32.totalorder %s10, 3
      %p382 = pnand %p380, %p381
      %p383 = pneg %p382
      // Predicated region
      $region67: #{resnet_forward.25} parent=5 // pred_check
        _
      $region68: #{resnet_forward.25} parent=5 // pred_check_branch
        %385 = sbr.rel (%p382) target = $region70
      $region69: #{resnet_forward.25} parent=5 // pred_region
        %s386 = ssub.s32 %s10, 1
        %s387 = sand.u32 %s72, 1
        %s388 = sand.u32 %s72, 1
        %s389 = smul.addr %s388, 256
        %s390 = scalar_lea.vmem [#allocation3], %s389
        // Predicated region
        $region71: #{resnet_forward.25} parent=69 // pred_check
          %p391 = pneg %p85
        $region72: #{resnet_forward.25} parent=69 // pred_check_branch
          %393 = sbr.rel (%p391) target = $region74
        $region73: #{resnet_forward.25} parent=69 // pred_region
          _
        $region74: #{resnet_forward.25} parent=69 // pred_fallthru
          _
        %p394 = scmp.lt.s32.totalorder %s22, 0
        %s395 = scalar_select %p394, %s22, 0
        %p396 = scmp.lt.s32.totalorder %s20, 0
        %s397 = scalar_select %p396, %s20, 0
        %s398 = smul.addr %s397, 2
        %s399 = smul.addr %s395, 2
        %s400 = sadd.s32 %s398, %s399
        %s401 = scalar_lea.vmem %s0, %s400
        %p402 = pneg %p57
        %p403 = pneg %p54
        %s404 = sand.u32 %s72, 1
        %s405 = sand.u32 %s72, 1
        %s406 = smul.addr %s405, 256
        %s407 = scalar_lea.vmem [#allocation3], %s406
        %p408 = pneg %p85
        %p409 = pneg %p82
        %s410 = smul.u32 2, %s21
        %p411 = scmp.lt.s32.totalorder %s410, 3
        %s412 = scalar_select %p411, %s410, 3
        %s413 = scalar_lea.vmem %s2, %s412
        %p414 = pneg %p111
        %p415 = pneg %p108
        %s416 = smul.u32 2, %s21
        %p417 = scmp.lt.s32.totalorder %s416, 3
        %s418 = scalar_select %p417, %s416, 3
        %s419 = scalar_lea.vmem %s3, %s418
        %p420 = pneg %p137
        %p421 = pneg %p134
        %p422 = pneg %p165
        %p423 = pneg %p162
        %s424 = smul.u32 2, %s21
        %p425 = scmp.lt.s32.totalorder %s20, 0
        %s426 = scalar_select %p425, %s20, 0
        %p427 = scmp.lt.s32.totalorder %s424, 3
        %s428 = scalar_select %p427, %s424, 3
        %s429 = smul.addr %s426, 4
        %s430 = sadd.s32 %s428, %s429
        %s431 = scalar_lea.vmem %s4, %s430
        %p432 = scmp.lt.s32.totalorder %s22, 0
        %s433 = scalar_select %p432, %s22, 0
        %p434 = scmp.lt.s32.totalorder %s20, 0
        %s435 = scalar_select %p434, %s20, 0
        %s436 = smul.addr %s435, 2
        %s437 = smul.addr %s433, 2
        %s438 = sadd.s32 %s436, %s437
        %s439 = scalar_lea.vmem %s0, %s438
        %s440 = smul.u32 2, %s21
        %s441 = smul.u32 2, %s21
        %p442 = scmp.lt.s32.totalorder %s441, 3
        %s443 = scalar_select %p442, %s441, 3
        %s444 = scalar_lea.vmem %s2, %s443
        %s445 = smul.u32 2, %s21
        %s446 = smul.u32 2, %s21
        %p447 = scmp.lt.s32.totalorder %s446, 3
        %s448 = scalar_select %p447, %s446, 3
        %s449 = scalar_lea.vmem %s3, %s448
        %s450 = smul.u32 2, %s21
        %s451 = smul.u32 2, %s21
        %p452 = scmp.lt.s32.totalorder %s20, 0
        %s453 = scalar_select %p452, %s20, 0
        %p454 = scmp.lt.s32.totalorder %s451, 3
        %s455 = scalar_select %p454, %s451, 3
        %s456 = smul.addr %s453, 4
        %s457 = sadd.s32 %s455, %s456
        %s458 = scalar_lea.vmem %s4, %s457
        %s459 = smul.u32 2, %s21
        %p460 = scmp.eq.s32.totalorder %s22, 0
        // Predicated region
        $region75: #{resnet_forward.25} parent=69 // pred_check
          %p461 = pneg %p460
        $region76: #{resnet_forward.25} parent=69 // pred_check_branch
          %463 = sbr.rel (%p461) target = $region78
        $region77: #{resnet_forward.25} parent=69 // pred_region
          %464 = vst [vmem:[#allocation2] sm:$0xf] 0.0
        $region78: #{resnet_forward.25} parent=69 // pred_fallthru
          _
        %v465 = vld [vmem:[#allocation2] sm:$0xf]
        %v466 = vld [vmem:[%s439] sm:$0x3]
        %v467 = vld [vmem:[%s390] sm:$0xff]
        %v468 = vld [vmem:[%s390 + $0x8] sm:$0xff]
        %v469 = vld [vmem:[%s390 + $0x10] sm:$0xff]
        %v470 = vld [vmem:[%s390 + $0x18] sm:$0xff]
        %v471 = vld [vmem:[%s390 + $0x20] sm:$0xff]
        %v472 = vld [vmem:[%s390 + $0x28] sm:$0xff]
        %v473 = vld [vmem:[%s390 + $0x30] sm:$0xff]
        %v474 = vld [vmem:[%s390 + $0x38] sm:$0xff]
        %v475 = vld [vmem:[%s390 + $0x40] sm:$0xff]
        %v476 = vld [vmem:[%s390 + $0x48] sm:$0xff]
        %v477 = vld [vmem:[%s390 + $0x50] sm:$0xff]
        %v478 = vld [vmem:[%s390 + $0x58] sm:$0xff]
        %v479 = vld [vmem:[%s390 + $0x60] sm:$0xff]
        %v480 = vld [vmem:[%s390 + $0x68] sm:$0xff]
        %v481 = vld [vmem:[%s390 + $0x70] sm:$0xff]
        %v482 = vld [vmem:[%s390 + $0x78] sm:$0xff]
        %v483 = vld [vmem:[%s390 + $0x80] sm:$0xff]
        %v484 = vld [vmem:[%s390 + $0x88] sm:$0xff]
        %v485 = vld [vmem:[%s390 + $0x90] sm:$0xff]
        %v486 = vld [vmem:[%s390 + $0x98] sm:$0xff]
        %v487 = vld [vmem:[%s390 + $0xa0] sm:$0xff]
        %v488 = vld [vmem:[%s390 + $0xa8] sm:$0xff]
        %v489 = vld [vmem:[%s390 + $0xb0] sm:$0xff]
        %v490 = vld [vmem:[%s390 + $0xb8] sm:$0xff]
        %v491 = vld [vmem:[%s390 + $0xc0] sm:$0xff]
        %v492 = vld [vmem:[%s390 + $0xc8] sm:$0xff]
        %v493 = vld [vmem:[%s390 + $0xd0] sm:$0xff]
        %v494 = vld [vmem:[%s390 + $0xd8] sm:$0xff]
        %v495 = vld [vmem:[%s390 + $0xe0] sm:$0xff]
        %v496 = vld [vmem:[%s390 + $0xe8] sm:$0xff]
        %v497 = vld [vmem:[%s390 + $0xf0] sm:$0xff]
        %v498 = vld [vmem:[%s390 + $0xf8] sm:$0xff]
        %500 = vst [vmem:[#allocation1] ss:$9 sm:$0xff] %v466
        %v501 = vld [vmem:[#allocation1] sm:$0xff]
        %v502 = vld [vmem:[#allocation1 + $0x9] sm:$0xff]
        %v537 = vunpack.c.l.b16 %v467
        %v538 = vunpack.c.h.b16 %v467
        %v539 = vunpack.c.l.b16 %v468
        %v540 = vunpack.c.h.b16 %v468
        %v541 = vunpack.c.l.b16 %v469
        %v542 = vunpack.c.h.b16 %v469
        %v543 = vunpack.c.l.b16 %v470
        %v544 = vunpack.c.h.b16 %v470
        %v545 = vunpack.c.l.b16 %v471
        %v546 = vunpack.c.h.b16 %v471
        %v547 = vunpack.c.l.b16 %v472
        %v548 = vunpack.c.h.b16 %v472
        %v549 = vunpack.c.l.b16 %v473
        %v550 = vunpack.c.h.b16 %v473
        %v551 = vunpack.c.l.b16 %v474
        %v552 = vunpack.c.h.b16 %v474
        %v553 = vunpack.c.l.b16 %v475
        %v554 = vunpack.c.h.b16 %v475
        %v555 = vunpack.c.l.b16 %v476
        %v556 = vunpack.c.h.b16 %v476
        %v557 = vunpack.c.l.b16 %v477
        %v558 = vunpack.c.h.b16 %v477
        %v559 = vunpack.c.l.b16 %v478
        %v560 = vunpack.c.h.b16 %v478
        %v561 = vunpack.c.l.b16 %v479
        %v562 = vunpack.c.h.b16 %v479
        %v563 = vunpack.c.l.b16 %v480
        %v564 = vunpack.c.h.b16 %v480
        %v565 = vunpack.c.l.b16 %v481
        %v566 = vunpack.c.h.b16 %v481
        %v567 = vunpack.c.l.b16 %v482
        %v568 = vunpack.c.h.b16 %v482
        %v569 = vunpack.c.l.b16 %v483
        %v570 = vunpack.c.h.b16 %v483
        %v571 = vunpack.c.l.b16 %v484
        %v572 = vunpack.c.h.b16 %v484
        %v573 = vunpack.c.l.b16 %v485
        %v574 = vunpack.c.h.b16 %v485
        %v575 = vunpack.c.l.b16 %v486
        %v576 = vunpack.c.h.b16 %v486
        %v577 = vunpack.c.l.b16 %v487
        %v578 = vunpack.c.h.b16 %v487
        %v579 = vunpack.c.l.b16 %v488
        %v580 = vunpack.c.h.b16 %v488
        %v581 = vunpack.c.l.b16 %v489
        %v582 = vunpack.c.h.b16 %v489
        %v583 = vunpack.c.l.b16 %v490
        %v584 = vunpack.c.h.b16 %v490
        %v585 = vunpack.c.l.b16 %v491
        %v586 = vunpack.c.h.b16 %v491
        %v587 = vunpack.c.l.b16 %v492
        %v588 = vunpack.c.h.b16 %v492
        %v589 = vunpack.c.l.b16 %v493
        %v590 = vunpack.c.h.b16 %v493
        %v591 = vunpack.c.l.b16 %v494
        %v592 = vunpack.c.h.b16 %v494
        %v593 = vunpack.c.l.b16 %v495
        %v594 = vunpack.c.h.b16 %v495
        %v595 = vunpack.c.l.b16 %v496
        %v596 = vunpack.c.h.b16 %v496
        %v597 = vunpack.c.l.b16 %v497
        %v598 = vunpack.c.h.b16 %v497
        %v599 = vunpack.c.l.b16 %v498
        %v600 = vunpack.c.h.b16 %v498
        %v601 = vpack.c.b16 %v539, %v537
        %v602 = vpack.c.b16 %v540, %v538
        %v603 = vpack.c.b16 %v543, %v541
        %v604 = vpack.c.b16 %v544, %v542
        %v605 = vpack.c.b16 %v547, %v545
        %v606 = vpack.c.b16 %v548, %v546
        %v607 = vpack.c.b16 %v551, %v549
        %v608 = vpack.c.b16 %v552, %v550
        %v609 = vpack.c.b16 %v555, %v553
        %v610 = vpack.c.b16 %v556, %v554
        %v611 = vpack.c.b16 %v559, %v557
        %v612 = vpack.c.b16 %v560, %v558
        %v613 = vpack.c.b16 %v563, %v561
        %v614 = vpack.c.b16 %v564, %v562
        %v615 = vpack.c.b16 %v567, %v565
        %v616 = vpack.c.b16 %v568, %v566
        %v617 = vpack.c.b16 %v571, %v569
        %v618 = vpack.c.b16 %v572, %v570
        %v619 = vpack.c.b16 %v575, %v573
        %v620 = vpack.c.b16 %v576, %v574
        %v621 = vpack.c.b16 %v579, %v577
        %v622 = vpack.c.b16 %v580, %v578
        %v623 = vpack.c.b16 %v583, %v581
        %v624 = vpack.c.b16 %v584, %v582
        %v625 = vpack.c.b16 %v587, %v585
        %v626 = vpack.c.b16 %v588, %v586
        %v627 = vpack.c.b16 %v591, %v589
        %v628 = vpack.c.b16 %v592, %v590
        %v629 = vpack.c.b16 %v595, %v593
        %v630 = vpack.c.b16 %v596, %v594
        %v631 = vpack.c.b16 %v599, %v597
        %v632 = vpack.c.b16 %v600, %v598
        %665 = vmatpush.bf16.msra.mxu0 %v615
        %666 = vmatpush.bf16.msra.mxu0 %v613
        %667 = vmatpush.bf16.msra.mxu0 %v611
        %668 = vmatpush.bf16.msra.mxu0 %v609
        %669 = vmatpush.bf16.msra.mxu0 %v607
        %670 = vmatpush.bf16.msra.mxu0 %v605
        %671 = vmatpush.bf16.msra.mxu0 %v603
        %672 = vmatpush.bf16.msra.mxu0 %v601
        %673 = vmatmul.bf16.gmra.mxu0 %v501
        %v674 = vpop.f32.mrf.mxu0
        %v675 = vadd.f32 0.0, %v674
        %v676 = vpop.f32.mrf.mxu0
        %677 = vdwg.mxu0
        %678 = vmatpush.bf16.msra.mxu0 %v631
        %679 = vmatpush.bf16.msra.mxu0 %v629
        %680 = vmatpush.bf16.msra.mxu0 %v627
        %681 = vmatpush.bf16.msra.mxu0 %v625
        %682 = vmatpush.bf16.msra.mxu0 %v623
        %683 = vmatpush.bf16.msra.mxu0 %v621
        %684 = vmatpush.bf16.msra.mxu0 %v619
        %685 = vmatpush.bf16.msra.mxu0 %v617
        %686 = vmatmul.bf16.gmra.mxu0 %v502
        %v687 = vpop.f32.mrf.mxu0
        %v688 = vadd.f32 %v675, %v687
        %v689 = vpop.f32.mrf.mxu0
        %690 = vdwg.mxu0
        %691 = vmatpush.bf16.msra.mxu0 %v616
        %692 = vmatpush.bf16.msra.mxu0 %v614
        %693 = vmatpush.bf16.msra.mxu0 %v612
        %694 = vmatpush.bf16.msra.mxu0 %v610
        %695 = vmatpush.bf16.msra.mxu0 %v608
        %696 = vmatpush.bf16.msra.mxu0 %v606
        %697 = vmatpush.bf16.msra.mxu0 %v604
        %698 = vmatpush.bf16.msra.mxu0 %v602
        %699 = vmatmul.bf16.gmra.mxu0 %v501
        %v700 = vpop.f32.mrf.mxu0
        %v701 = vadd.f32 0.0, %v700
        %v702 = vpop.f32.mrf.mxu0
        %703 = vdwg.mxu0
        %704 = vmatpush.bf16.msra.mxu0 %v632
        %705 = vmatpush.bf16.msra.mxu0 %v630
        %706 = vmatpush.bf16.msra.mxu0 %v628
        %707 = vmatpush.bf16.msra.mxu0 %v626
        %708 = vmatpush.bf16.msra.mxu0 %v624
        %709 = vmatpush.bf16.msra.mxu0 %v622
        %710 = vmatpush.bf16.msra.mxu0 %v620
        %711 = vmatpush.bf16.msra.mxu0 %v618
        %712 = vmatmul.bf16.gmra.mxu0 %v502
        %v713 = vpop.f32.mrf.mxu0
        %v714 = vadd.f32 %v701, %v713
        %v715 = vpop.f32.mrf.mxu0
        %716 = vdwg.mxu0
        %v719 = vrot.slane %v714, 6
        %vm720 = vcmask 1041408
        %v721 = vsel %vm720, %v688, %v719
        %v723 = vadd.f32 %v465, %v721
        %724 = vst [vmem:[#allocation2] sm:$0xf] %v723
        // Predicated region
        $region79: #{resnet_forward.25} parent=69 // pred_check
          %p725 = pneg %p460
        $region80: #{resnet_forward.25} parent=69 // pred_check_branch
          %727 = sbr.rel (%p725) target = $region82
        $region81: #{resnet_forward.25} parent=69 // pred_region
          %v728 = vld [vmem:[#allocation2] sm:$0xf]
          %v729 = vld [vmem:[%s444] sm:$0x3]
          %v731 = vperm.slane %v729, 0
          %v732 = vperm.slane %v729, 1
          %v733 = vrot.slane %v732, 6
          %v734 = vsel %vm720, %v731, %v733
          %v736 = vmul.f32 %v728, %v734
          %v737 = vld [vmem:[%s449] sm:$0x3]
          %v739 = vperm.slane %v737, 0
          %v740 = vperm.slane %v737, 1
          %v741 = vrot.slane %v740, 6
          %v742 = vsel %vm720, %v739, %v741
          %v744 = vadd.f32 %v736, %v742
          %746 = vst [vmem:[#allocation1] ss:$4 sm:$0xff] %v744
          %v747 = vld.sshfl [vmem:[#allocation1] sm:$0xff pattern:$0x73625140]
          %v748 = vld.sshfl [vmem:[#allocation1 + $0x8] sm:$0xff pattern:$0x73625140]
          %v751 = vpack.c.bf16 %v748, %v747
          %v753 = vrot.slane %v751, 3
          %vm754 = vcmask 1040384
          %v757 = vsel %vm754, %v751, %v753
          %759 = vst [vmem:[%s458] sm:$0x3] %v757
        $region82: #{resnet_forward.25} parent=69 // pred_fallthru
          _
        %s760 = smul.u32 2, %s21
        %p761 = scmp.lt.s32.totalorder %s20, 0
        %s762 = scalar_select %p761, %s20, 0
        %p763 = scmp.lt.s32.totalorder %s760, 3
        %s764 = scalar_select %p763, %s760, 3
        %s765 = smul.addr %s762, 4
        %s766 = sadd.s32 %s764, %s765
        %s767 = scalar_lea.vmem %s4, %s766
        // Predicated region
        $region83: #{resnet_forward.25} parent=69 // pred_check
          %p768 = pneg %p162
        $region84: #{resnet_forward.25} parent=69 // pred_check_branch
          %770 = sbr.rel (%p768) target = $region86
        $region85: #{resnet_forward.25} parent=69 // pred_region
          %s771 = smul.u32 2, %s21
        $region86: #{resnet_forward.25} parent=69 // pred_fallthru
          _
      $region70: #{resnet_forward.25} parent=5 // pred_fallthru
        _
      %p772 = scmp.le.s32.totalorder 2, %s10
      // Predicated region
      $region87: #{resnet_forward.25} parent=5 // pred_check
        %p773 = pneg %p772
      $region88: #{resnet_forward.25} parent=5 // pred_check_branch
        %775 = sbr.rel (%p773) target = $region90
      $region89: #{resnet_forward.25} parent=5 // pred_region
        %s776 = ssub.s32 %s10, 2
        // Predicated region
        $region91: #{resnet_forward.25} parent=89 // pred_check
          %p777 = pneg %p168
        $region92: #{resnet_forward.25} parent=89 // pred_check_branch
          %779 = sbr.rel (%p777) target = $region94
        $region93: #{resnet_forward.25} parent=89 // pred_region
          %s780 = smul.u32 2, %s24
          %p781 = scmp.lt.s32.totalorder %s23, 0
          %s782 = scalar_select %p781, %s23, 0
          %p783 = scmp.lt.s32.totalorder %s780, 3
          %s784 = scalar_select %p783, %s780, 3
          %s785 = smul.addr %s782, 4
          %s786 = sadd.s32 %s784, %s785
          %s787 = scalar_lea.vmem %s4, %s786
        $region94: #{resnet_forward.25} parent=89 // pred_fallthru
          _
      $region90: #{resnet_forward.25} parent=5 // pred_fallthru
        _
    $region6: #{resnet_forward.25} parent=1 // loop_footer
      %s14 = sadd.s32 1, %s10
    $region7: #{resnet_forward.25} parent=1 // loop_footer_branch
      %9 = sbr.rel target = $region3
    $region8: #{resnet_forward.25} parent=1 // loop_exit
      _

// kernel: resnet_forward.27
$region0: #{resnet_forward.27}
  #allocation0 [shape = 'u32[]', space=smem, size = 0x4, offset = 0x4, fixed_abs, tag = 'smem constant byte address 0x4 - core index']
  #allocation1 [shape = 'u32[72,128]{1,0:T(1,128)}', space=vmem, size = 0x9000, scoped, tag = 'internal scratch']
  %s0 = inlined_call_operand.vmem [shape: bf16[2,1,512], index: 0, kind: input, shape index: {}]
  %s1 = inlined_call_operand.vmem [shape: f32[512,10], index: 1, kind: input, shape index: {}]
  %s2 = inlined_call_operand.vmem [shape: f32[1,10], index: 2, kind: input, shape index: {}]
  %s3 = inlined_call_operand.hbm [shape: f32[2,10], index: 3, kind: output, shape index: {}]
  %s4 = sld [smem:[#allocation0]]
  $region22: #{resnet_forward.27} parent=0
    _
  %s6 = ssub.s32 1, %s4
  %s7 = scalar_select 0, %s6, %s4
  $region1: #{resnet_forward.27} parent=0
    #allocation2 [shape = 'u8[1024]{0}', space=vmem, size = 0x400, scoped, tag = 'output window, operand 0, single buffered']
    #allocation3 [shape = 's32[1]{0}', space=sflag, size = 0x4, scoped, tag = 'scoped memory for resnet_forward.27']
    %8 = vsyncpa [#allocation3], 0
    // Predicated region
    $region2: #{resnet_forward.27} parent=1 // pred_check
      _
    $region3: #{resnet_forward.27} parent=1 // pred_check_branch
      %10 = sbr.rel (0) target = $region5
    $region4: #{resnet_forward.27} parent=1 // pred_region
      _
    $region5: #{resnet_forward.27} parent=1 // pred_fallthru
      _
    // Predicated region
    $region6: #{resnet_forward.27} parent=1 // pred_check
      _
    $region7: #{resnet_forward.27} parent=1 // pred_check_branch
      %12 = sbr.rel (0) target = $region9
    $region8: #{resnet_forward.27} parent=1 // pred_region
      _
    $region9: #{resnet_forward.27} parent=1 // pred_fallthru
      _
    // Predicated region
    $region10: #{resnet_forward.27} parent=1 // pred_check
      _
    $region11: #{resnet_forward.27} parent=1 // pred_check_branch
      %14 = sbr.rel (0) target = $region13
    $region12: #{resnet_forward.27} parent=1 // pred_region
      _
    $region13: #{resnet_forward.27} parent=1 // pred_fallthru
      _
    %v15 = vld [vmem:[%s0] sm:$0xf]
    %v16 = vld [vmem:[%s0 + $0x4] sm:$0xf]
    %v17 = vunpack.c.l.bf16 %v15
    %v18 = vunpack.c.l.bf16 %v16
    %v19 = vadd.f32 %v17, 0.0
    %v20 = vadd.f32 %v18, 0.0
    %v21 = vld [vmem:[%s1] sm:$0xff]
    %v22 = vld [vmem:[%s1 + $0x8] sm:$0xff]
    %v23 = vld [vmem:[%s1 + $0x10] sm:$0xff]
    %v24 = vld [vmem:[%s1 + $0x18] sm:$0xff]
    %v25 = vld [vmem:[%s1 + $0x20] sm:$0xff]
    %v26 = vld [vmem:[%s1 + $0x28] sm:$0xff]
    %v27 = vld [vmem:[%s1 + $0x30] sm:$0xff]
    %v28 = vld [vmem:[%s1 + $0x38] sm:$0xff]
    %v29 = vld [vmem:[%s1 + $0x40] sm:$0xff]
    %v30 = vld [vmem:[%s1 + $0x48] sm:$0xff]
    %v31 = vld [vmem:[%s1 + $0x50] sm:$0xff]
    %v32 = vld [vmem:[%s1 + $0x58] sm:$0xff]
    %v33 = vld [vmem:[%s1 + $0x60] sm:$0xff]
    %v34 = vld [vmem:[%s1 + $0x68] sm:$0xff]
    %v35 = vld [vmem:[%s1 + $0x70] sm:$0xff]
    %v36 = vld [vmem:[%s1 + $0x78] sm:$0xff]
    %v37 = vld [vmem:[%s1 + $0x80] sm:$0xff]
    %v38 = vld [vmem:[%s1 + $0x88] sm:$0xff]
    %v39 = vld [vmem:[%s1 + $0x90] sm:$0xff]
    %v40 = vld [vmem:[%s1 + $0x98] sm:$0xff]
    %v41 = vld [vmem:[%s1 + $0xa0] sm:$0xff]
    %v42 = vld [vmem:[%s1 + $0xa8] sm:$0xff]
    %v43 = vld [vmem:[%s1 + $0xb0] sm:$0xff]
    %v44 = vld [vmem:[%s1 + $0xb8] sm:$0xff]
    %v45 = vld [vmem:[%s1 + $0xc0] sm:$0xff]
    %v46 = vld [vmem:[%s1 + $0xc8] sm:$0xff]
    %v47 = vld [vmem:[%s1 + $0xd0] sm:$0xff]
    %v48 = vld [vmem:[%s1 + $0xd8] sm:$0xff]
    %v49 = vld [vmem:[%s1 + $0xe0] sm:$0xff]
    %v50 = vld [vmem:[%s1 + $0xe8] sm:$0xff]
    %v51 = vld [vmem:[%s1 + $0xf0] sm:$0xff]
    %v52 = vld [vmem:[%s1 + $0xf8] sm:$0xff]
    %v53 = vld [vmem:[%s1 + $0x100] sm:$0xff]
    %v54 = vld [vmem:[%s1 + $0x108] sm:$0xff]
    %v55 = vld [vmem:[%s1 + $0x110] sm:$0xff]
    %v56 = vld [vmem:[%s1 + $0x118] sm:$0xff]
    %v57 = vld [vmem:[%s1 + $0x120] sm:$0xff]
    %v58 = vld [vmem:[%s1 + $0x128] sm:$0xff]
    %v59 = vld [vmem:[%s1 + $0x130] sm:$0xff]
    %v60 = vld [vmem:[%s1 + $0x138] sm:$0xff]
    %v61 = vld [vmem:[%s1 + $0x140] sm:$0xff]
    %v62 = vld [vmem:[%s1 + $0x148] sm:$0xff]
    %v63 = vld [vmem:[%s1 + $0x150] sm:$0xff]
    %v64 = vld [vmem:[%s1 + $0x158] sm:$0xff]
    %v65 = vld [vmem:[%s1 + $0x160] sm:$0xff]
    %v66 = vld [vmem:[%s1 + $0x168] sm:$0xff]
    %v67 = vld [vmem:[%s1 + $0x170] sm:$0xff]
    %v68 = vld [vmem:[%s1 + $0x178] sm:$0xff]
    %v69 = vld [vmem:[%s1 + $0x180] sm:$0xff]
    %v70 = vld [vmem:[%s1 + $0x188] sm:$0xff]
    %v71 = vld [vmem:[%s1 + $0x190] sm:$0xff]
    %v72 = vld [vmem:[%s1 + $0x198] sm:$0xff]
    %v73 = vld [vmem:[%s1 + $0x1a0] sm:$0xff]
    %v74 = vld [vmem:[%s1 + $0x1a8] sm:$0xff]
    %v75 = vld [vmem:[%s1 + $0x1b0] sm:$0xff]
    %v76 = vld [vmem:[%s1 + $0x1b8] sm:$0xff]
    %v77 = vld [vmem:[%s1 + $0x1c0] sm:$0xff]
    %v78 = vld [vmem:[%s1 + $0x1c8] sm:$0xff]
    %v79 = vld [vmem:[%s1 + $0x1d0] sm:$0xff]
    %v80 = vld [vmem:[%s1 + $0x1d8] sm:$0xff]
    %v81 = vld [vmem:[%s1 + $0x1e0] sm:$0xff]
    %v82 = vld [vmem:[%s1 + $0x1e8] sm:$0xff]
    %v83 = vld [vmem:[%s1 + $0x1f0] sm:$0xff]
    %v84 = vld [vmem:[%s1 + $0x1f8] sm:$0xff]
    %v85 = vld [vmem:[%s2] sm:$0x1]
    %v87 = vperm.slane %v85, 0
    %v91 = vperm.slane %v19, 0
    %v92 = vperm.slane %v19, 2
    %v93 = vperm.slane %v19, 4
    %v94 = vperm.slane %v19, 6
    %v95 = vperm.slane %v20, 0
    %v96 = vperm.slane %v20, 2
    %v97 = vperm.slane %v20, 4
    %v98 = vperm.slane %v20, 6
    %vm99 = vcmask 1041409
    %v100 = vsel %vm99, %v95, %v91
    %v101 = vsel %vm99, %v96, %v92
    %v102 = vsel %vm99, %v97, %v93
    %v103 = vsel %vm99, %v98, %v94
    %108 = vmatpush.msra.mxu0 %v36
    %109 = vmatpush.msra.mxu0 %v35
    %110 = vmatpush.msra.mxu0 %v34
    %111 = vmatpush.msra.mxu0 %v33
    %112 = vmatpush.msra.mxu0 %v32
    %113 = vmatpush.msra.mxu0 %v31
    %114 = vmatpush.msra.mxu0 %v30
    %115 = vmatpush.msra.mxu0 %v29
    %116 = vmatpush.msra.mxu0 %v28
    %117 = vmatpush.msra.mxu0 %v27
    %118 = vmatpush.msra.mxu0 %v26
    %119 = vmatpush.msra.mxu0 %v25
    %120 = vmatpush.msra.mxu0 %v24
    %121 = vmatpush.msra.mxu0 %v23
    %122 = vmatpush.msra.mxu0 %v22
    %123 = vmatpush.msra.mxu0 %v21
    %124 = vmatmul.f32.gmra.mxu0 %v100
    %v125 = vpop.f32.mrf.mxu0
    %v126 = vadd.f32 %v87, %v125
    %127 = vdwg.mxu0
    %128 = vmatpush.msra.mxu0 %v52
    %129 = vmatpush.msra.mxu0 %v51
    %130 = vmatpush.msra.mxu0 %v50
    %131 = vmatpush.msra.mxu0 %v49
    %132 = vmatpush.msra.mxu0 %v48
    %133 = vmatpush.msra.mxu0 %v47
    %134 = vmatpush.msra.mxu0 %v46
    %135 = vmatpush.msra.mxu0 %v45
    %136 = vmatpush.msra.mxu0 %v44
    %137 = vmatpush.msra.mxu0 %v43
    %138 = vmatpush.msra.mxu0 %v42
    %139 = vmatpush.msra.mxu0 %v41
    %140 = vmatpush.msra.mxu0 %v40
    %141 = vmatpush.msra.mxu0 %v39
    %142 = vmatpush.msra.mxu0 %v38
    %143 = vmatpush.msra.mxu0 %v37
    %144 = vmatmul.f32.gmra.mxu0 %v101
    %v145 = vpop.f32.mrf.mxu0
    %v146 = vadd.f32 %v126, %v145
    %147 = vdwg.mxu0
    %148 = vmatpush.msra.mxu0 %v68
    %149 = vmatpush.msra.mxu0 %v67
    %150 = vmatpush.msra.mxu0 %v66
    %151 = vmatpush.msra.mxu0 %v65
    %152 = vmatpush.msra.mxu0 %v64
    %153 = vmatpush.msra.mxu0 %v63
    %154 = vmatpush.msra.mxu0 %v62
    %155 = vmatpush.msra.mxu0 %v61
    %156 = vmatpush.msra.mxu0 %v60
    %157 = vmatpush.msra.mxu0 %v59
    %158 = vmatpush.msra.mxu0 %v58
    %159 = vmatpush.msra.mxu0 %v57
    %160 = vmatpush.msra.mxu0 %v56
    %161 = vmatpush.msra.mxu0 %v55
    %162 = vmatpush.msra.mxu0 %v54
    %163 = vmatpush.msra.mxu0 %v53
    %164 = vmatmul.f32.gmra.mxu0 %v102
    %v165 = vpop.f32.mrf.mxu0
    %v166 = vadd.f32 %v146, %v165
    %167 = vdwg.mxu0
    %168 = vmatpush.msra.mxu0 %v84
    %169 = vmatpush.msra.mxu0 %v83
    %170 = vmatpush.msra.mxu0 %v82
    %171 = vmatpush.msra.mxu0 %v81
    %172 = vmatpush.msra.mxu0 %v80
    %173 = vmatpush.msra.mxu0 %v79
    %174 = vmatpush.msra.mxu0 %v78
    %175 = vmatpush.msra.mxu0 %v77
    %176 = vmatpush.msra.mxu0 %v76
    %177 = vmatpush.msra.mxu0 %v75
    %178 = vmatpush.msra.mxu0 %v74
    %179 = vmatpush.msra.mxu0 %v73
    %180 = vmatpush.msra.mxu0 %v72
    %181 = vmatpush.msra.mxu0 %v71
    %182 = vmatpush.msra.mxu0 %v70
    %183 = vmatpush.msra.mxu0 %v69
    %184 = vmatmul.f32.gmra.mxu0 %v103
    %v185 = vpop.f32.mrf.mxu0
    %v186 = vadd.f32 %v166, %v185
    %187 = vdwg.mxu0
    %vm188 = vcmask 74752
    %189 = vst.msk [vmem:[#allocation2] sm:$0x3] %vm188, %v186
    // Predicated region
    $region14: #{resnet_forward.27} parent=1 // pred_check
      _
    $region15: #{resnet_forward.27} parent=1 // pred_check_branch
      %191 = sbr.rel (0) target = $region17
    $region16: #{resnet_forward.27} parent=1 // pred_region
      %193 = vsyncadd [#allocation3], 0
      %s195 = sshll.u32 [#allocation2], 4
      %s196 = int_to_ptr.vmem [resolvable:$true] %s195
      %s197 = sshll.u32 %s3, 4
      %s198 = int_to_ptr.hbm [resolvable:$true] %s197
      %200 = dma.vmem_to_hbm [thread:$0]  %s196, 32, %s198, [#allocation3]
    $region17: #{resnet_forward.27} parent=1 // pred_fallthru
      _
    // Predicated region
    $region18: #{resnet_forward.27} parent=1 // pred_check
      _
    $region19: #{resnet_forward.27} parent=1 // pred_check_branch
      %202 = sbr.rel (0) target = $region21
    $region20: #{resnet_forward.27} parent=1 // pred_region
      %204 = dma.done [#allocation3], 32
    $region21: #{resnet_forward.27} parent=1 // pred_fallthru
      _
    %205 = vsyncpa [#allocation3], 1

// kernel: resnet_forward.26
$region0: #{resnet_forward.26}
  #allocation0 [shape = 'u32[]', space=smem, size = 0x4, offset = 0x4, fixed_abs, tag = 'smem constant byte address 0x4 - core index']
  #allocation1 [shape = 'u32[72,128]{1,0:T(1,128)}', space=vmem, size = 0x9000, scoped, tag = 'internal scratch']
  #allocation2 [shape = 'f32[2,256]{1,0:T(2,128)}', space=vmem, size = 0x800, scoped, tag = 'scratch operand']
  %s0 = inlined_call_operand.vmem [shape: bf16[9,2,512], index: 0, kind: input, shape index: {}]
  %s1 = inlined_call_operand.vmem [shape: bf16[9,512,512], index: 1, kind: input, shape index: {}]
  %s2 = inlined_call_operand.vmem [shape: f32[1,512], index: 2, kind: input, shape index: {}]
  %s3 = inlined_call_operand.vmem [shape: f32[1,512], index: 3, kind: input, shape index: {}]
  %s4 = inlined_call_operand.vmem [shape: bf16[2,512], index: 4, kind: input, shape index: {}]
  %s5 = inlined_call_operand.vmem [shape: bf16[2,512], index: 5, kind: output, shape index: {}]
  %s6 = sld [smem:[#allocation0]]
  $region99: #{resnet_forward.26} parent=0
    _
  %s8 = ssub.s32 1, %s6
  %s9 = scalar_select 0, %s8, %s6
  $region1: #{resnet_forward.26} parent=0
    #allocation3 [shape = 'u8[524288]{0}', space=vmem, size = 0x80000, scoped, tag = 'input window, operand 1']
    loop: start=0, step=1, limit=20
    $region2: #{resnet_forward.26} parent=1 // loop_pre_header
      _
    $region3: #{resnet_forward.26} parent=1 // loop_header
      %s11 = sphi 0, %s15
      %p12 = scmp.ge.s32.totalorder %s11, 20
      %s18 = sphi 0, %s37
      %s19 = sphi 0, %s33
      %s20 = sphi 0, %s29
      %s21 = sphi 0, %s18
      %s22 = sphi 0, %s19
      %s23 = sphi 0, %s20
      %s24 = sphi 0, %s21
      %s25 = sphi 0, %s22
      %s26 = sphi 0, %s23
      %s42 = sphi 0, %s44
      %s45 = sphi 0, %s42
      %s46 = sphi 0, %s45
      %s62 = sphi 0, %s46
      %s70 = sphi 0, %s72
      %s73 = sphi 0, %s70
      %s74 = sphi 0, %s73
      %s90 = sphi 0, %s74
      %s96 = sphi 0, %s98
      %s99 = sphi 0, %s96
      %s100 = sphi 0, %s99
      %s116 = sphi 0, %s100
      %s122 = sphi 0, %s124
      %s125 = sphi 0, %s122
      %s126 = sphi 0, %s125
      %s142 = sphi 0, %s126
      %s150 = sphi 0, %s152
      %s153 = sphi 0, %s150
      %s154 = sphi 0, %s153
      %s170 = sphi 0, %s154
      %s178 = sphi 0, %s180
      %s181 = sphi 0, %s178
      %s182 = sphi 0, %s181
      %s198 = sphi 0, %s182
    $region4: #{resnet_forward.26} parent=1 // loop_header_branch
      %14 = sbr.rel (%p12) target = $region8
    $region5: #{resnet_forward.26} parent=1 // loop_body
      %s16 = ssub.s32 %s11, 1
      %s17 = ssub.s32 %s11, 2
      %s27 = sadd.s32 1, %s20
      %p28 = scmp.ge.s32.totalorder %s27, 9
      %s29 = scalar_select %p28, 0, %s27
      %s30 = sadd.s32 1, %s19
      %s31 = scalar_select %p28, %s30, %s19
      %p32 = scmp.ge.s32.totalorder %s31, 2
      %s33 = scalar_select %p32, 0, %s31
      %s34 = sadd.s32 1, %s18
      %s35 = scalar_select %p32, %s34, %s18
      %p36 = scmp.ge.s32.totalorder %s35, 1
      %s37 = scalar_select %p36, 0, %s35
      %s38 = ssub.s32 %s20, %s29
      %s39 = ssub.s32 %s18, %s37
      %s40 = sor.u32 %s38, %s39
      %p41 = scmp.eq.s32.totalorder %s40, 0
      %s43 = sadd.s32 %s42, 1
      %s44 = scalar_select %p41, %s42, %s43
      %p47 = pneg %p41
      %p48 = scmp.eq.s32.totalorder %s11, 17
      %p49 = por %p47, %p48
      %p50 = scmp.ne.s32.totalorder %s42, %s45
      %p51 = scmp.eq.s32.totalorder %s11, 0
      %p52 = por %p50, %p51
      %p53 = scmp.ne.s32.totalorder %s42, %s45
      %p54 = scmp.eq.s32.totalorder %s16, 17
      %p55 = por %p53, %p54
      %p56 = scmp.ne.s32.totalorder %s45, %s46
      %p57 = scmp.eq.s32.totalorder %s16, 0
      %p58 = por %p56, %p57
      %p59 = scmp.ne.s32.totalorder %s45, %s46
      %p60 = scmp.eq.s32.totalorder %s17, 17
      %p61 = por %p59, %p60
      %p63 = scmp.ne.s32.totalorder %s46, %s62
      %p64 = scmp.eq.s32.totalorder %s17, 0
      %p65 = por %p63, %p64
      %s66 = ssub.s32 %s20, %s29
      %s67 = ssub.s32 %s19, %s33
      %s68 = sor.u32 %s66, %s67
      %p69 = scmp.eq.s32.totalorder %s68, 0
      %s71 = sadd.s32 %s70, 1
      %s72 = scalar_select %p69, %s70, %s71
      %p75 = pneg %p69
      %p76 = scmp.eq.s32.totalorder %s11, 17
      %p77 = por %p75, %p76
      %p78 = scmp.ne.s32.totalorder %s70, %s73
      %p79 = scmp.eq.s32.totalorder %s11, 0
      %p80 = por %p78, %p79
      %p81 = scmp.ne.s32.totalorder %s70, %s73
      %p82 = scmp.eq.s32.totalorder %s16, 17
      %p83 = por %p81, %p82
      %p84 = scmp.ne.s32.totalorder %s73, %s74
      %p85 = scmp.eq.s32.totalorder %s16, 0
      %p86 = por %p84, %p85
      %p87 = scmp.ne.s32.totalorder %s73, %s74
      %p88 = scmp.eq.s32.totalorder %s17, 17
      %p89 = por %p87, %p88
      %p91 = scmp.ne.s32.totalorder %s74, %s90
      %p92 = scmp.eq.s32.totalorder %s17, 0
      %p93 = por %p91, %p92
      %s94 = ssub.s32 %s19, %s33
      %p95 = scmp.eq.s32.totalorder %s94, 0
      %s97 = sadd.s32 %s96, 1
      %s98 = scalar_select %p95, %s96, %s97
      %p101 = pneg %p95
      %p102 = scmp.eq.s32.totalorder %s11, 17
      %p103 = por %p101, %p102
      %p104 = scmp.ne.s32.totalorder %s96, %s99
      %p105 = scmp.eq.s32.totalorder %s11, 0
      %p106 = por %p104, %p105
      %p107 = scmp.ne.s32.totalorder %s96, %s99
      %p108 = scmp.eq.s32.totalorder %s16, 17
      %p109 = por %p107, %p108
      %p110 = scmp.ne.s32.totalorder %s99, %s100
      %p111 = scmp.eq.s32.totalorder %s16, 0
      %p112 = por %p110, %p111
      %p113 = scmp.ne.s32.totalorder %s99, %s100
      %p114 = scmp.eq.s32.totalorder %s17, 17
      %p115 = por %p113, %p114
      %p117 = scmp.ne.s32.totalorder %s100, %s116
      %p118 = scmp.eq.s32.totalorder %s17, 0
      %p119 = por %p117, %p118
      %s120 = ssub.s32 %s19, %s33
      %p121 = scmp.eq.s32.totalorder %s120, 0
      %s123 = sadd.s32 %s122, 1
      %s124 = scalar_select %p121, %s122, %s123
      %p127 = pneg %p121
      %p128 = scmp.eq.s32.totalorder %s11, 17
      %p129 = por %p127, %p128
      %p130 = scmp.ne.s32.totalorder %s122, %s125
      %p131 = scmp.eq.s32.totalorder %s11, 0
      %p132 = por %p130, %p131
      %p133 = scmp.ne.s32.totalorder %s122, %s125
      %p134 = scmp.eq.s32.totalorder %s16, 17
      %p135 = por %p133, %p134
      %p136 = scmp.ne.s32.totalorder %s125, %s126
      %p137 = scmp.eq.s32.totalorder %s16, 0
      %p138 = por %p136, %p137
      %p139 = scmp.ne.s32.totalorder %s125, %s126
      %p140 = scmp.eq.s32.totalorder %s17, 17
      %p141 = por %p139, %p140
      %p143 = scmp.ne.s32.totalorder %s126, %s142
      %p144 = scmp.eq.s32.totalorder %s17, 0
      %p145 = por %p143, %p144
      %s146 = ssub.s32 %s18, %s37
      %s147 = ssub.s32 %s19, %s33
      %s148 = sor.u32 %s146, %s147
      %p149 = scmp.eq.s32.totalorder %s148, 0
      %s151 = sadd.s32 %s150, 1
      %s152 = scalar_select %p149, %s150, %s151
      %p155 = pneg %p149
      %p156 = scmp.eq.s32.totalorder %s11, 17
      %p157 = por %p155, %p156
      %p158 = scmp.ne.s32.totalorder %s150, %s153
      %p159 = scmp.eq.s32.totalorder %s11, 0
      %p160 = por %p158, %p159
      %p161 = scmp.ne.s32.totalorder %s150, %s153
      %p162 = scmp.eq.s32.totalorder %s16, 17
      %p163 = por %p161, %p162
      %p164 = scmp.ne.s32.totalorder %s153, %s154
      %p165 = scmp.eq.s32.totalorder %s16, 0
      %p166 = por %p164, %p165
      %p167 = scmp.ne.s32.totalorder %s153, %s154
      %p168 = scmp.eq.s32.totalorder %s17, 17
      %p169 = por %p167, %p168
      %p171 = scmp.ne.s32.totalorder %s154, %s170
      %p172 = scmp.eq.s32.totalorder %s17, 0
      %p173 = por %p171, %p172
      %s174 = ssub.s32 %s18, %s37
      %s175 = ssub.s32 %s19, %s33
      %s176 = sor.u32 %s174, %s175
      %p177 = scmp.eq.s32.totalorder %s176, 0
      %s179 = sadd.s32 %s178, 1
      %s180 = scalar_select %p177, %s178, %s179
      %p183 = pneg %p177
      %p184 = scmp.eq.s32.totalorder %s11, 17
      %p185 = por %p183, %p184
      %p186 = scmp.ne.s32.totalorder %s178, %s181
      %p187 = scmp.eq.s32.totalorder %s11, 0
      %p188 = por %p186, %p187
      %p189 = scmp.ne.s32.totalorder %s178, %s181
      %p190 = scmp.eq.s32.totalorder %s16, 17
      %p191 = por %p189, %p190
      %p192 = scmp.ne.s32.totalorder %s181, %s182
      %p193 = scmp.eq.s32.totalorder %s16, 0
      %p194 = por %p192, %p193
      %p195 = scmp.ne.s32.totalorder %s181, %s182
      %p196 = scmp.eq.s32.totalorder %s17, 17
      %p197 = por %p195, %p196
      %p199 = scmp.ne.s32.totalorder %s182, %s198
      %p200 = scmp.eq.s32.totalorder %s17, 0
      %p201 = por %p199, %p200
      %p202 = scmp.le.s32.totalorder 1, %s11
      %p203 = scmp.lt.s32.totalorder %s11, 19
      %p204 = pnand %p202, %p203
      %p205 = pneg %p204
      // Predicated region
      $region9: #{resnet_forward.26} parent=5 // pred_check
        _
      $region10: #{resnet_forward.26} parent=5 // pred_check_branch
        %207 = sbr.rel (%p204) target = $region12
      $region11: #{resnet_forward.26} parent=5 // pred_region
        %s208 = ssub.s32 %s11, 1
      $region12: #{resnet_forward.26} parent=5 // pred_fallthru
        _
      %p209 = scmp.lt.s32.totalorder %s11, 18
      // Predicated region
      $region13: #{resnet_forward.26} parent=5 // pred_check
        %p210 = pneg %p209
      $region14: #{resnet_forward.26} parent=5 // pred_check_branch
        %212 = sbr.rel (%p210) target = $region16
      $region15: #{resnet_forward.26} parent=5 // pred_region
        // Predicated region
        $region17: #{resnet_forward.26} parent=15 // pred_check
          %p213 = pneg %p52
        $region18: #{resnet_forward.26} parent=15 // pred_check_branch
          %215 = sbr.rel (%p213) target = $region20
        $region19: #{resnet_forward.26} parent=15 // pred_region
          %p216 = scmp.lt.s32.totalorder %s20, 8
          %s217 = scalar_select %p216, %s20, 8
          %p218 = scmp.lt.s32.totalorder %s18, 0
          %s219 = scalar_select %p218, %s18, 0
          %s220 = smul.addr %s219, 4
          %s221 = smul.addr %s217, 4
          %s222 = sadd.s32 %s220, %s221
          %s223 = scalar_lea.vmem %s0, %s222
        $region20: #{resnet_forward.26} parent=15 // pred_fallthru
          _
        // Predicated region
        $region21: #{resnet_forward.26} parent=15 // pred_check
          %p224 = pneg %p80
        $region22: #{resnet_forward.26} parent=15 // pred_check_branch
          %226 = sbr.rel (%p224) target = $region24
        $region23: #{resnet_forward.26} parent=15 // pred_region
          %s227 = sand.u32 %s70, 1
          %s228 = sand.u32 %s70, 1
          %s229 = smul.addr %s228, 512
          %s230 = scalar_lea.vmem [#allocation3], %s229
          %s231 = smul.u32 2, %s19
          %s232 = smul.addr %s20, 256
          %s233 = sadd.s32 %s231, %s232
          %s234 = smul.addr %s233, 4
          %s235 = scalar_lea.vmem %s1, %s234
          // Predicated region
          $region25: #{resnet_forward.26} parent=23 // pred_check
            _
          $region26: #{resnet_forward.26} parent=23 // pred_check_branch
            %237 = sbr.rel (0) target = $region28
          $region27: #{resnet_forward.26} parent=23 // pred_region
            // Predicated region
            $region29: #{resnet_forward.26} parent=27 // pred_check
              _
            $region30: #{resnet_forward.26} parent=27 // pred_check_branch
              %239 = sbr.rel (0) target = $region32
            $region31: #{resnet_forward.26} parent=27 // pred_region
              // Predicated region
              $region44: #{resnet_forward.26} parent=31 // pred_check
                _
              $region45: #{resnet_forward.26} parent=31 // pred_check_branch
                %381 = sbr.rel (0) target = $region47
              $region46: #{resnet_forward.26} parent=31 // pred_region
                loop: start=0, step=1, limit=1
                $region48: #{resnet_forward.26} parent=46 // loop_pre_header
                  _
                $region49: #{resnet_forward.26} parent=46 // loop_header
                  %s383 = sphi 0, %s387
                  %p384 = scmp.ge.s32.totalorder %s383, 1
                  %s388 = sphi %s235, %s235
                  %s389 = sphi %s230, %s230
                $region50: #{resnet_forward.26} parent=46 // loop_header_branch
                  %386 = sbr.rel (%p384) target = $region54
                $region51: #{resnet_forward.26} parent=46 // loop_body
                  %v390 = vld [vmem:[%s388] sm:$0xff]
                  %391 = vst [vmem:[%s389] sm:$0xff] %v390
                  %v392 = vld [vmem:[%s388 + $0x10] sm:$0xff]
                  %393 = vst [vmem:[%s389 + $0x8] sm:$0xff] %v392
                  %v394 = vld [vmem:[%s388 + $0x20] sm:$0xff]
                  %395 = vst [vmem:[%s389 + $0x10] sm:$0xff] %v394
                  %v396 = vld [vmem:[%s388 + $0x30] sm:$0xff]
                  %397 = vst [vmem:[%s389 + $0x18] sm:$0xff] %v396
                  %v398 = vld [vmem:[%s388 + $0x40] sm:$0xff]
                  %399 = vst [vmem:[%s389 + $0x20] sm:$0xff] %v398
                  %v400 = vld [vmem:[%s388 + $0x50] sm:$0xff]
                  %401 = vst [vmem:[%s389 + $0x28] sm:$0xff] %v400
                  %v402 = vld [vmem:[%s388 + $0x60] sm:$0xff]
                  %403 = vst [vmem:[%s389 + $0x30] sm:$0xff] %v402
                  %v404 = vld [vmem:[%s388 + $0x70] sm:$0xff]
                  %405 = vst [vmem:[%s389 + $0x38] sm:$0xff] %v404
                  %v406 = vld [vmem:[%s388 + $0x80] sm:$0xff]
                  %407 = vst [vmem:[%s389 + $0x40] sm:$0xff] %v406
                  %v408 = vld [vmem:[%s388 + $0x90] sm:$0xff]
                  %409 = vst [vmem:[%s389 + $0x48] sm:$0xff] %v408
                  %v410 = vld [vmem:[%s388 + $0xa0] sm:$0xff]
                  %411 = vst [vmem:[%s389 + $0x50] sm:$0xff] %v410
                  %v412 = vld [vmem:[%s388 + $0xb0] sm:$0xff]
                  %413 = vst [vmem:[%s389 + $0x58] sm:$0xff] %v412
                  %v414 = vld [vmem:[%s388 + $0xc0] sm:$0xff]
                  %415 = vst [vmem:[%s389 + $0x60] sm:$0xff] %v414
                  %v416 = vld [vmem:[%s388 + $0xd0] sm:$0xff]
                  %417 = vst [vmem:[%s389 + $0x68] sm:$0xff] %v416
                  %v418 = vld [vmem:[%s388 + $0xe0] sm:$0xff]
                  %419 = vst [vmem:[%s389 + $0x70] sm:$0xff] %v418
                  %v420 = vld [vmem:[%s388 + $0xf0] sm:$0xff]
                  %421 = vst [vmem:[%s389 + $0x78] sm:$0xff] %v420
                  %v422 = vld [vmem:[%s388 + $0x100] sm:$0xff]
                  %423 = vst [vmem:[%s389 + $0x80] sm:$0xff] %v422
                  %v424 = vld [vmem:[%s388 + $0x110] sm:$0xff]
                  %425 = vst [vmem:[%s389 + $0x88] sm:$0xff] %v424
                  %v426 = vld [vmem:[%s388 + $0x120] sm:$0xff]
                  %427 = vst [vmem:[%s389 + $0x90] sm:$0xff] %v426
                  %v428 = vld [vmem:[%s388 + $0x130] sm:$0xff]
                  %429 = vst [vmem:[%s389 + $0x98] sm:$0xff] %v428
                  %v430 = vld [vmem:[%s388 + $0x140] sm:$0xff]
                  %431 = vst [vmem:[%s389 + $0xa0] sm:$0xff] %v430
                  %v432 = vld [vmem:[%s388 + $0x150] sm:$0xff]
                  %433 = vst [vmem:[%s389 + $0xa8] sm:$0xff] %v432
                  %v434 = vld [vmem:[%s388 + $0x160] sm:$0xff]
                  %435 = vst [vmem:[%s389 + $0xb0] sm:$0xff] %v434
                  %v436 = vld [vmem:[%s388 + $0x170] sm:$0xff]
                  %437 = vst [vmem:[%s389 + $0xb8] sm:$0xff] %v436
                  %v438 = vld [vmem:[%s388 + $0x180] sm:$0xff]
                  %439 = vst [vmem:[%s389 + $0xc0] sm:$0xff] %v438
                  %v440 = vld [vmem:[%s388 + $0x190] sm:$0xff]
                  %441 = vst [vmem:[%s389 + $0xc8] sm:$0xff] %v440
                  %v442 = vld [vmem:[%s388 + $0x1a0] sm:$0xff]
                  %443 = vst [vmem:[%s389 + $0xd0] sm:$0xff] %v442
                  %v444 = vld [vmem:[%s388 + $0x1b0] sm:$0xff]
                  %445 = vst [vmem:[%s389 + $0xd8] sm:$0xff] %v444
                  %v446 = vld [vmem:[%s388 + $0x1c0] sm:$0xff]
                  %447 = vst [vmem:[%s389 + $0xe0] sm:$0xff] %v446
                  %v448 = vld [vmem:[%s388 + $0x1d0] sm:$0xff]
                  %449 = vst [vmem:[%s389 + $0xe8] sm:$0xff] %v448
                  %v450 = vld [vmem:[%s388 + $0x1e0] sm:$0xff]
                  %451 = vst [vmem:[%s389 + $0xf0] sm:$0xff] %v450
                  %v452 = vld [vmem:[%s388 + $0x1f0] sm:$0xff]
                  %453 = vst [vmem:[%s389 + $0xf8] sm:$0xff] %v452
                  %v454 = vld [vmem:[%s388 + $0x200] sm:$0xff]
                  %455 = vst [vmem:[%s389 + $0x100] sm:$0xff] %v454
                  %v456 = vld [vmem:[%s388 + $0x210] sm:$0xff]
                  %457 = vst [vmem:[%s389 + $0x108] sm:$0xff] %v456
                  %v458 = vld [vmem:[%s388 + $0x220] sm:$0xff]
                  %459 = vst [vmem:[%s389 + $0x110] sm:$0xff] %v458
                  %v460 = vld [vmem:[%s388 + $0x230] sm:$0xff]
                  %461 = vst [vmem:[%s389 + $0x118] sm:$0xff] %v460
                  %v462 = vld [vmem:[%s388 + $0x240] sm:$0xff]
                  %463 = vst [vmem:[%s389 + $0x120] sm:$0xff] %v462
                  %v464 = vld [vmem:[%s388 + $0x250] sm:$0xff]
                  %465 = vst [vmem:[%s389 + $0x128] sm:$0xff] %v464
                  %v466 = vld [vmem:[%s388 + $0x260] sm:$0xff]
                  %467 = vst [vmem:[%s389 + $0x130] sm:$0xff] %v466
                  %v468 = vld [vmem:[%s388 + $0x270] sm:$0xff]
                  %469 = vst [vmem:[%s389 + $0x138] sm:$0xff] %v468
                  %v470 = vld [vmem:[%s388 + $0x280] sm:$0xff]
                  %471 = vst [vmem:[%s389 + $0x140] sm:$0xff] %v470
                  %v472 = vld [vmem:[%s388 + $0x290] sm:$0xff]
                  %473 = vst [vmem:[%s389 + $0x148] sm:$0xff] %v472
                  %v474 = vld [vmem:[%s388 + $0x2a0] sm:$0xff]
                  %475 = vst [vmem:[%s389 + $0x150] sm:$0xff] %v474
                  %v476 = vld [vmem:[%s388 + $0x2b0] sm:$0xff]
                  %477 = vst [vmem:[%s389 + $0x158] sm:$0xff] %v476
                  %v478 = vld [vmem:[%s388 + $0x2c0] sm:$0xff]
                  %479 = vst [vmem:[%s389 + $0x160] sm:$0xff] %v478
                  %v480 = vld [vmem:[%s388 + $0x2d0] sm:$0xff]
                  %481 = vst [vmem:[%s389 + $0x168] sm:$0xff] %v480
                  %v482 = vld [vmem:[%s388 + $0x2e0] sm:$0xff]
                  %483 = vst [vmem:[%s389 + $0x170] sm:$0xff] %v482
                  %v484 = vld [vmem:[%s388 + $0x2f0] sm:$0xff]
                  %485 = vst [vmem:[%s389 + $0x178] sm:$0xff] %v484
                  %v486 = vld [vmem:[%s388 + $0x300] sm:$0xff]
                  %487 = vst [vmem:[%s389 + $0x180] sm:$0xff] %v486
                  %v488 = vld [vmem:[%s388 + $0x310] sm:$0xff]
                  %489 = vst [vmem:[%s389 + $0x188] sm:$0xff] %v488
                  %v490 = vld [vmem:[%s388 + $0x320] sm:$0xff]
                  %491 = vst [vmem:[%s389 + $0x190] sm:$0xff] %v490
                  %v492 = vld [vmem:[%s388 + $0x330] sm:$0xff]
                  %493 = vst [vmem:[%s389 + $0x198] sm:$0xff] %v492
                  %v494 = vld [vmem:[%s388 + $0x340] sm:$0xff]
                  %495 = vst [vmem:[%s389 + $0x1a0] sm:$0xff] %v494
                  %v496 = vld [vmem:[%s388 + $0x350] sm:$0xff]
                  %497 = vst [vmem:[%s389 + $0x1a8] sm:$0xff] %v496
                  %v498 = vld [vmem:[%s388 + $0x360] sm:$0xff]
                  %499 = vst [vmem:[%s389 + $0x1b0] sm:$0xff] %v498
                  %v500 = vld [vmem:[%s388 + $0x370] sm:$0xff]
                  %501 = vst [vmem:[%s389 + $0x1b8] sm:$0xff] %v500
                  %v502 = vld [vmem:[%s388 + $0x380] sm:$0xff]
                  %503 = vst [vmem:[%s389 + $0x1c0] sm:$0xff] %v502
                  %v504 = vld [vmem:[%s388 + $0x390] sm:$0xff]
                  %505 = vst [vmem:[%s389 + $0x1c8] sm:$0xff] %v504
                  %v506 = vld [vmem:[%s388 + $0x3a0] sm:$0xff]
                  %507 = vst [vmem:[%s389 + $0x1d0] sm:$0xff] %v506
                  %v508 = vld [vmem:[%s388 + $0x3b0] sm:$0xff]
                  %509 = vst [vmem:[%s389 + $0x1d8] sm:$0xff] %v508
                  %v510 = vld [vmem:[%s388 + $0x3c0] sm:$0xff]
                  %511 = vst [vmem:[%s389 + $0x1e0] sm:$0xff] %v510
                  %v512 = vld [vmem:[%s388 + $0x3d0] sm:$0xff]
                  %513 = vst [vmem:[%s389 + $0x1e8] sm:$0xff] %v512
                  %v514 = vld [vmem:[%s388 + $0x3e0] sm:$0xff]
                  %515 = vst [vmem:[%s389 + $0x1f0] sm:$0xff] %v514
                  %v516 = vld [vmem:[%s388 + $0x3f0] sm:$0xff]
                  %517 = vst [vmem:[%s389 + $0x1f8] sm:$0xff] %v516
                $region52: #{resnet_forward.26} parent=46 // loop_footer
                  %s387 = sadd.s32 1, %s383
                $region53: #{resnet_forward.26} parent=46 // loop_footer_branch
                  %382 = sbr.rel target = $region49
                $region54: #{resnet_forward.26} parent=46 // loop_exit
                  _
              $region47: #{resnet_forward.26} parent=31 // pred_fallthru
                _
              // Predicated region
              $region55: #{resnet_forward.26} parent=31 // pred_check
                _
              $region56: #{resnet_forward.26} parent=31 // pred_check_branch
                %519 = sbr.rel target = $region58
              $region57: #{resnet_forward.26} parent=31 // pred_region
                _
              $region58: #{resnet_forward.26} parent=31 // pred_fallthru
                _
            $region32: #{resnet_forward.26} parent=27 // pred_fallthru
              _
            // Predicated region
            $region33: #{resnet_forward.26} parent=27 // pred_check
              _
            $region34: #{resnet_forward.26} parent=27 // pred_check_branch
              %241 = sbr.rel target = $region36
            $region35: #{resnet_forward.26} parent=27 // pred_region
              %s243 = ssub.s32 256, 1
              loop: start=0, step=1, limit=1
              $region37: #{resnet_forward.26} parent=35 // loop_pre_header
                _
              $region38: #{resnet_forward.26} parent=35 // loop_header
                %s245 = sphi 0, %s249
                %p246 = scmp.ge.s32.totalorder %s245, 1
                %s250 = sphi %s235, %s235
                %s251 = sphi %s230, %s230
              $region39: #{resnet_forward.26} parent=35 // loop_header_branch
                %248 = sbr.rel (%p246) target = $region43
              $region40: #{resnet_forward.26} parent=35 // loop_body
                %v252 = vld [vmem:[%s250] sm:%s243]
                %253 = vst [vmem:[%s251] sm:%s243] %v252
                %v254 = vld [vmem:[%s250 + $0x10] sm:%s243]
                %255 = vst [vmem:[%s251 + $0x8] sm:%s243] %v254
                %v256 = vld [vmem:[%s250 + $0x20] sm:%s243]
                %257 = vst [vmem:[%s251 + $0x10] sm:%s243] %v256
                %v258 = vld [vmem:[%s250 + $0x30] sm:%s243]
                %259 = vst [vmem:[%s251 + $0x18] sm:%s243] %v258
                %v260 = vld [vmem:[%s250 + $0x40] sm:%s243]
                %261 = vst [vmem:[%s251 + $0x20] sm:%s243] %v260
                %v262 = vld [vmem:[%s250 + $0x50] sm:%s243]
                %263 = vst [vmem:[%s251 + $0x28] sm:%s243] %v262
                %v264 = vld [vmem:[%s250 + $0x60] sm:%s243]
                %265 = vst [vmem:[%s251 + $0x30] sm:%s243] %v264
                %v266 = vld [vmem:[%s250 + $0x70] sm:%s243]
                %267 = vst [vmem:[%s251 + $0x38] sm:%s243] %v266
                %v268 = vld [vmem:[%s250 + $0x80] sm:%s243]
                %269 = vst [vmem:[%s251 + $0x40] sm:%s243] %v268
                %v270 = vld [vmem:[%s250 + $0x90] sm:%s243]
                %271 = vst [vmem:[%s251 + $0x48] sm:%s243] %v270
                %v272 = vld [vmem:[%s250 + $0xa0] sm:%s243]
                %273 = vst [vmem:[%s251 + $0x50] sm:%s243] %v272
                %v274 = vld [vmem:[%s250 + $0xb0] sm:%s243]
                %275 = vst [vmem:[%s251 + $0x58] sm:%s243] %v274
                %v276 = vld [vmem:[%s250 + $0xc0] sm:%s243]
                %277 = vst [vmem:[%s251 + $0x60] sm:%s243] %v276
                %v278 = vld [vmem:[%s250 + $0xd0] sm:%s243]
                %279 = vst [vmem:[%s251 + $0x68] sm:%s243] %v278
                %v280 = vld [vmem:[%s250 + $0xe0] sm:%s243]
                %281 = vst [vmem:[%s251 + $0x70] sm:%s243] %v280
                %v282 = vld [vmem:[%s250 + $0xf0] sm:%s243]
                %283 = vst [vmem:[%s251 + $0x78] sm:%s243] %v282
                %v284 = vld [vmem:[%s250 + $0x100] sm:%s243]
                %285 = vst [vmem:[%s251 + $0x80] sm:%s243] %v284
                %v286 = vld [vmem:[%s250 + $0x110] sm:%s243]
                %287 = vst [vmem:[%s251 + $0x88] sm:%s243] %v286
                %v288 = vld [vmem:[%s250 + $0x120] sm:%s243]
                %289 = vst [vmem:[%s251 + $0x90] sm:%s243] %v288
                %v290 = vld [vmem:[%s250 + $0x130] sm:%s243]
                %291 = vst [vmem:[%s251 + $0x98] sm:%s243] %v290
                %v292 = vld [vmem:[%s250 + $0x140] sm:%s243]
                %293 = vst [vmem:[%s251 + $0xa0] sm:%s243] %v292
                %v294 = vld [vmem:[%s250 + $0x150] sm:%s243]
                %295 = vst [vmem:[%s251 + $0xa8] sm:%s243] %v294
                %v296 = vld [vmem:[%s250 + $0x160] sm:%s243]
                %297 = vst [vmem:[%s251 + $0xb0] sm:%s243] %v296
                %v298 = vld [vmem:[%s250 + $0x170] sm:%s243]
                %299 = vst [vmem:[%s251 + $0xb8] sm:%s243] %v298
                %v300 = vld [vmem:[%s250 + $0x180] sm:%s243]
                %301 = vst [vmem:[%s251 + $0xc0] sm:%s243] %v300
                %v302 = vld [vmem:[%s250 + $0x190] sm:%s243]
                %303 = vst [vmem:[%s251 + $0xc8] sm:%s243] %v302
                %v304 = vld [vmem:[%s250 + $0x1a0] sm:%s243]
                %305 = vst [vmem:[%s251 + $0xd0] sm:%s243] %v304
                %v306 = vld [vmem:[%s250 + $0x1b0] sm:%s243]
                %307 = vst [vmem:[%s251 + $0xd8] sm:%s243] %v306
                %v308 = vld [vmem:[%s250 + $0x1c0] sm:%s243]
                %309 = vst [vmem:[%s251 + $0xe0] sm:%s243] %v308
                %v310 = vld [vmem:[%s250 + $0x1d0] sm:%s243]
                %311 = vst [vmem:[%s251 + $0xe8] sm:%s243] %v310
                %v312 = vld [vmem:[%s250 + $0x1e0] sm:%s243]
                %313 = vst [vmem:[%s251 + $0xf0] sm:%s243] %v312
                %v314 = vld [vmem:[%s250 + $0x1f0] sm:%s243]
                %315 = vst [vmem:[%s251 + $0xf8] sm:%s243] %v314
                %v316 = vld [vmem:[%s250 + $0x200] sm:%s243]
                %317 = vst [vmem:[%s251 + $0x100] sm:%s243] %v316
                %v318 = vld [vmem:[%s250 + $0x210] sm:%s243]
                %319 = vst [vmem:[%s251 + $0x108] sm:%s243] %v318
                %v320 = vld [vmem:[%s250 + $0x220] sm:%s243]
                %321 = vst [vmem:[%s251 + $0x110] sm:%s243] %v320
                %v322 = vld [vmem:[%s250 + $0x230] sm:%s243]
                %323 = vst [vmem:[%s251 + $0x118] sm:%s243] %v322
                %v324 = vld [vmem:[%s250 + $0x240] sm:%s243]
                %325 = vst [vmem:[%s251 + $0x120] sm:%s243] %v324
                %v326 = vld [vmem:[%s250 + $0x250] sm:%s243]
                %327 = vst [vmem:[%s251 + $0x128] sm:%s243] %v326
                %v328 = vld [vmem:[%s250 + $0x260] sm:%s243]
                %329 = vst [vmem:[%s251 + $0x130] sm:%s243] %v328
                %v330 = vld [vmem:[%s250 + $0x270] sm:%s243]
                %331 = vst [vmem:[%s251 + $0x138] sm:%s243] %v330
                %v332 = vld [vmem:[%s250 + $0x280] sm:%s243]
                %333 = vst [vmem:[%s251 + $0x140] sm:%s243] %v332
                %v334 = vld [vmem:[%s250 + $0x290] sm:%s243]
                %335 = vst [vmem:[%s251 + $0x148] sm:%s243] %v334
                %v336 = vld [vmem:[%s250 + $0x2a0] sm:%s243]
                %337 = vst [vmem:[%s251 + $0x150] sm:%s243] %v336
                %v338 = vld [vmem:[%s250 + $0x2b0] sm:%s243]
                %339 = vst [vmem:[%s251 + $0x158] sm:%s243] %v338
                %v340 = vld [vmem:[%s250 + $0x2c0] sm:%s243]
                %341 = vst [vmem:[%s251 + $0x160] sm:%s243] %v340
                %v342 = vld [vmem:[%s250 + $0x2d0] sm:%s243]
                %343 = vst [vmem:[%s251 + $0x168] sm:%s243] %v342
                %v344 = vld [vmem:[%s250 + $0x2e0] sm:%s243]
                %345 = vst [vmem:[%s251 + $0x170] sm:%s243] %v344
                %v346 = vld [vmem:[%s250 + $0x2f0] sm:%s243]
                %347 = vst [vmem:[%s251 + $0x178] sm:%s243] %v346
                %v348 = vld [vmem:[%s250 + $0x300] sm:%s243]
                %349 = vst [vmem:[%s251 + $0x180] sm:%s243] %v348
                %v350 = vld [vmem:[%s250 + $0x310] sm:%s243]
                %351 = vst [vmem:[%s251 + $0x188] sm:%s243] %v350
                %v352 = vld [vmem:[%s250 + $0x320] sm:%s243]
                %353 = vst [vmem:[%s251 + $0x190] sm:%s243] %v352
                %v354 = vld [vmem:[%s250 + $0x330] sm:%s243]
                %355 = vst [vmem:[%s251 + $0x198] sm:%s243] %v354
                %v356 = vld [vmem:[%s250 + $0x340] sm:%s243]
                %357 = vst [vmem:[%s251 + $0x1a0] sm:%s243] %v356
                %v358 = vld [vmem:[%s250 + $0x350] sm:%s243]
                %359 = vst [vmem:[%s251 + $0x1a8] sm:%s243] %v358
                %v360 = vld [vmem:[%s250 + $0x360] sm:%s243]
                %361 = vst [vmem:[%s251 + $0x1b0] sm:%s243] %v360
                %v362 = vld [vmem:[%s250 + $0x370] sm:%s243]
                %363 = vst [vmem:[%s251 + $0x1b8] sm:%s243] %v362
                %v364 = vld [vmem:[%s250 + $0x380] sm:%s243]
                %365 = vst [vmem:[%s251 + $0x1c0] sm:%s243] %v364
                %v366 = vld [vmem:[%s250 + $0x390] sm:%s243]
                %367 = vst [vmem:[%s251 + $0x1c8] sm:%s243] %v366
                %v368 = vld [vmem:[%s250 + $0x3a0] sm:%s243]
                %369 = vst [vmem:[%s251 + $0x1d0] sm:%s243] %v368
                %v370 = vld [vmem:[%s250 + $0x3b0] sm:%s243]
                %371 = vst [vmem:[%s251 + $0x1d8] sm:%s243] %v370
                %v372 = vld [vmem:[%s250 + $0x3c0] sm:%s243]
                %373 = vst [vmem:[%s251 + $0x1e0] sm:%s243] %v372
                %v374 = vld [vmem:[%s250 + $0x3d0] sm:%s243]
                %375 = vst [vmem:[%s251 + $0x1e8] sm:%s243] %v374
                %v376 = vld [vmem:[%s250 + $0x3e0] sm:%s243]
                %377 = vst [vmem:[%s251 + $0x1f0] sm:%s243] %v376
                %v378 = vld [vmem:[%s250 + $0x3f0] sm:%s243]
                %379 = vst [vmem:[%s251 + $0x1f8] sm:%s243] %v378
              $region41: #{resnet_forward.26} parent=35 // loop_footer
                %s249 = sadd.s32 1, %s245
              $region42: #{resnet_forward.26} parent=35 // loop_footer_branch
                %244 = sbr.rel target = $region38
              $region43: #{resnet_forward.26} parent=35 // loop_exit
                _
            $region36: #{resnet_forward.26} parent=27 // pred_fallthru
              _
          $region28: #{resnet_forward.26} parent=23 // pred_fallthru
            _
          %520 = vnop
        $region24: #{resnet_forward.26} parent=15 // pred_fallthru
          _
        // Predicated region
        $region59: #{resnet_forward.26} parent=15 // pred_check
          %p521 = pneg %p106
        $region60: #{resnet_forward.26} parent=15 // pred_check_branch
          %523 = sbr.rel (%p521) target = $region62
        $region61: #{resnet_forward.26} parent=15 // pred_region
          %s524 = smul.u32 2, %s19
          %p525 = scmp.lt.s32.totalorder %s524, 3
          %s526 = scalar_select %p525, %s524, 3
          %s527 = scalar_lea.vmem %s2, %s526
          %s528 = smul.u32 2, %s19
        $region62: #{resnet_forward.26} parent=15 // pred_fallthru
          _
        // Predicated region
        $region63: #{resnet_forward.26} parent=15 // pred_check
          %p529 = pneg %p132
        $region64: #{resnet_forward.26} parent=15 // pred_check_branch
          %531 = sbr.rel (%p529) target = $region66
        $region65: #{resnet_forward.26} parent=15 // pred_region
          %s532 = smul.u32 2, %s19
          %p533 = scmp.lt.s32.totalorder %s532, 3
          %s534 = scalar_select %p533, %s532, 3
          %s535 = scalar_lea.vmem %s3, %s534
          %s536 = smul.u32 2, %s19
        $region66: #{resnet_forward.26} parent=15 // pred_fallthru
          _
        // Predicated region
        $region67: #{resnet_forward.26} parent=15 // pred_check
          %p537 = pneg %p160
        $region68: #{resnet_forward.26} parent=15 // pred_check_branch
          %539 = sbr.rel (%p537) target = $region70
        $region69: #{resnet_forward.26} parent=15 // pred_region
          %s540 = smul.u32 2, %s19
          %p541 = scmp.lt.s32.totalorder %s18, 0
          %s542 = scalar_select %p541, %s18, 0
          %p543 = scmp.lt.s32.totalorder %s540, 3
          %s544 = scalar_select %p543, %s540, 3
          %s545 = smul.addr %s542, 4
          %s546 = sadd.s32 %s544, %s545
          %s547 = scalar_lea.vmem %s4, %s546
          %s548 = smul.u32 2, %s19
        $region70: #{resnet_forward.26} parent=15 // pred_fallthru
          _
      $region16: #{resnet_forward.26} parent=5 // pred_fallthru
        _
      %p549 = scmp.le.s32.totalorder 1, %s11
      %p550 = scmp.lt.s32.totalorder %s11, 19
      %p551 = pnand %p549, %p550
      %p552 = pneg %p551
      // Predicated region
      $region71: #{resnet_forward.26} parent=5 // pred_check
        _
      $region72: #{resnet_forward.26} parent=5 // pred_check_branch
        %554 = sbr.rel (%p551) target = $region74
      $region73: #{resnet_forward.26} parent=5 // pred_region
        %s555 = ssub.s32 %s11, 1
        %s556 = sand.u32 %s73, 1
        %s557 = sand.u32 %s73, 1
        %s558 = smul.addr %s557, 512
        %s559 = scalar_lea.vmem [#allocation3], %s558
        // Predicated region
        $region75: #{resnet_forward.26} parent=73 // pred_check
          %p560 = pneg %p86
        $region76: #{resnet_forward.26} parent=73 // pred_check_branch
          %562 = sbr.rel (%p560) target = $region78
        $region77: #{resnet_forward.26} parent=73 // pred_region
          _
        $region78: #{resnet_forward.26} parent=73 // pred_fallthru
          _
        %p563 = scmp.lt.s32.totalorder %s23, 8
        %s564 = scalar_select %p563, %s23, 8
        %p565 = scmp.lt.s32.totalorder %s21, 0
        %s566 = scalar_select %p565, %s21, 0
        %s567 = smul.addr %s566, 4
        %s568 = smul.addr %s564, 4
        %s569 = sadd.s32 %s567, %s568
        %s570 = scalar_lea.vmem %s0, %s569
        %p571 = pneg %p58
        %p572 = pneg %p55
        %s573 = sand.u32 %s73, 1
        %s574 = sand.u32 %s73, 1
        %s575 = smul.addr %s574, 512
        %s576 = scalar_lea.vmem [#allocation3], %s575
        %p577 = pneg %p86
        %p578 = pneg %p83
        %s579 = smul.u32 2, %s22
        %p580 = scmp.lt.s32.totalorder %s579, 3
        %s581 = scalar_select %p580, %s579, 3
        %s582 = scalar_lea.vmem %s2, %s581
        %p583 = pneg %p112
        %p584 = pneg %p109
        %s585 = smul.u32 2, %s22
        %p586 = scmp.lt.s32.totalorder %s585, 3
        %s587 = scalar_select %p586, %s585, 3
        %s588 = scalar_lea.vmem %s3, %s587
        %p589 = pneg %p138
        %p590 = pneg %p135
        %s591 = smul.u32 2, %s22
        %p592 = scmp.lt.s32.totalorder %s21, 0
        %s593 = scalar_select %p592, %s21, 0
        %p594 = scmp.lt.s32.totalorder %s591, 3
        %s595 = scalar_select %p594, %s591, 3
        %s596 = smul.addr %s593, 4
        %s597 = sadd.s32 %s595, %s596
        %s598 = scalar_lea.vmem %s4, %s597
        %p599 = pneg %p166
        %p600 = pneg %p163
        %p601 = pneg %p194
        %p602 = pneg %p191
        %s603 = smul.u32 2, %s22
        %p604 = scmp.lt.s32.totalorder %s21, 0
        %s605 = scalar_select %p604, %s21, 0
        %p606 = scmp.lt.s32.totalorder %s603, 3
        %s607 = scalar_select %p606, %s603, 3
        %s608 = smul.addr %s605, 4
        %s609 = sadd.s32 %s607, %s608
        %s610 = scalar_lea.vmem %s5, %s609
        %p611 = scmp.lt.s32.totalorder %s23, 8
        %s612 = scalar_select %p611, %s23, 8
        %p613 = scmp.lt.s32.totalorder %s21, 0
        %s614 = scalar_select %p613, %s21, 0
        %s615 = smul.addr %s614, 4
        %s616 = smul.addr %s612, 4
        %s617 = sadd.s32 %s615, %s616
        %s618 = scalar_lea.vmem %s0, %s617
        %s619 = smul.u32 2, %s22
        %s620 = smul.u32 2, %s22
        %p621 = scmp.lt.s32.totalorder %s620, 3
        %s622 = scalar_select %p621, %s620, 3
        %s623 = scalar_lea.vmem %s2, %s622
        %s624 = smul.u32 2, %s22
        %s625 = smul.u32 2, %s22
        %p626 = scmp.lt.s32.totalorder %s625, 3
        %s627 = scalar_select %p626, %s625, 3
        %s628 = scalar_lea.vmem %s3, %s627
        %s629 = smul.u32 2, %s22
        %s630 = smul.u32 2, %s22
        %p631 = scmp.lt.s32.totalorder %s21, 0
        %s632 = scalar_select %p631, %s21, 0
        %p633 = scmp.lt.s32.totalorder %s630, 3
        %s634 = scalar_select %p633, %s630, 3
        %s635 = smul.addr %s632, 4
        %s636 = sadd.s32 %s634, %s635
        %s637 = scalar_lea.vmem %s4, %s636
        %s638 = smul.u32 2, %s22
        %s639 = smul.u32 2, %s22
        %p640 = scmp.lt.s32.totalorder %s21, 0
        %s641 = scalar_select %p640, %s21, 0
        %p642 = scmp.lt.s32.totalorder %s639, 3
        %s643 = scalar_select %p642, %s639, 3
        %s644 = smul.addr %s641, 4
        %s645 = sadd.s32 %s643, %s644
        %s646 = scalar_lea.vmem %s5, %s645
        %s647 = smul.u32 2, %s22
        %p648 = scmp.eq.s32.totalorder %s23, 0
        // Predicated region
        $region79: #{resnet_forward.26} parent=73 // pred_check
          %p649 = pneg %p648
        $region80: #{resnet_forward.26} parent=73 // pred_check_branch
          %651 = sbr.rel (%p649) target = $region82
        $region81: #{resnet_forward.26} parent=73 // pred_region
          %652 = vst [vmem:[#allocation2] sm:$0xf] 0.0
        $region82: #{resnet_forward.26} parent=73 // pred_fallthru
          _
        %v653 = vld [vmem:[#allocation2] sm:$0xf]
        %v654 = vld [vmem:[%s618] sm:$0xf]
        %v655 = vld [vmem:[%s559] sm:$0xff]
        %v656 = vld [vmem:[%s559 + $0x8] sm:$0xff]
        %v657 = vld [vmem:[%s559 + $0x10] sm:$0xff]
        %v658 = vld [vmem:[%s559 + $0x18] sm:$0xff]
        %v659 = vld [vmem:[%s559 + $0x20] sm:$0xff]
        %v660 = vld [vmem:[%s559 + $0x28] sm:$0xff]
        %v661 = vld [vmem:[%s559 + $0x30] sm:$0xff]
        %v662 = vld [vmem:[%s559 + $0x38] sm:$0xff]
        %v663 = vld [vmem:[%s559 + $0x40] sm:$0xff]
        %v664 = vld [vmem:[%s559 + $0x48] sm:$0xff]
        %v665 = vld [vmem:[%s559 + $0x50] sm:$0xff]
        %v666 = vld [vmem:[%s559 + $0x58] sm:$0xff]
        %v667 = vld [vmem:[%s559 + $0x60] sm:$0xff]
        %v668 = vld [vmem:[%s559 + $0x68] sm:$0xff]
        %v669 = vld [vmem:[%s559 + $0x70] sm:$0xff]
        %v670 = vld [vmem:[%s559 + $0x78] sm:$0xff]
        %v671 = vld [vmem:[%s559 + $0x80] sm:$0xff]
        %v672 = vld [vmem:[%s559 + $0x88] sm:$0xff]
        %v673 = vld [vmem:[%s559 + $0x90] sm:$0xff]
        %v674 = vld [vmem:[%s559 + $0x98] sm:$0xff]
        %v675 = vld [vmem:[%s559 + $0xa0] sm:$0xff]
        %v676 = vld [vmem:[%s559 + $0xa8] sm:$0xff]
        %v677 = vld [vmem:[%s559 + $0xb0] sm:$0xff]
        %v678 = vld [vmem:[%s559 + $0xb8] sm:$0xff]
        %v679 = vld [vmem:[%s559 + $0xc0] sm:$0xff]
        %v680 = vld [vmem:[%s559 + $0xc8] sm:$0xff]
        %v681 = vld [vmem:[%s559 + $0xd0] sm:$0xff]
        %v682 = vld [vmem:[%s559 + $0xd8] sm:$0xff]
        %v683 = vld [vmem:[%s559 + $0xe0] sm:$0xff]
        %v684 = vld [vmem:[%s559 + $0xe8] sm:$0xff]
        %v685 = vld [vmem:[%s559 + $0xf0] sm:$0xff]
        %v686 = vld [vmem:[%s559 + $0xf8] sm:$0xff]
        %v687 = vld [vmem:[%s559 + $0x100] sm:$0xff]
        %v688 = vld [vmem:[%s559 + $0x108] sm:$0xff]
        %v689 = vld [vmem:[%s559 + $0x110] sm:$0xff]
        %v690 = vld [vmem:[%s559 + $0x118] sm:$0xff]
        %v691 = vld [vmem:[%s559 + $0x120] sm:$0xff]
        %v692 = vld [vmem:[%s559 + $0x128] sm:$0xff]
        %v693 = vld [vmem:[%s559 + $0x130] sm:$0xff]
        %v694 = vld [vmem:[%s559 + $0x138] sm:$0xff]
        %v695 = vld [vmem:[%s559 + $0x140] sm:$0xff]
        %v696 = vld [vmem:[%s559 + $0x148] sm:$0xff]
        %v697 = vld [vmem:[%s559 + $0x150] sm:$0xff]
        %v698 = vld [vmem:[%s559 + $0x158] sm:$0xff]
        %v699 = vld [vmem:[%s559 + $0x160] sm:$0xff]
        %v700 = vld [vmem:[%s559 + $0x168] sm:$0xff]
        %v701 = vld [vmem:[%s559 + $0x170] sm:$0xff]
        %v702 = vld [vmem:[%s559 + $0x178] sm:$0xff]
        %v703 = vld [vmem:[%s559 + $0x180] sm:$0xff]
        %v704 = vld [vmem:[%s559 + $0x188] sm:$0xff]
        %v705 = vld [vmem:[%s559 + $0x190] sm:$0xff]
        %v706 = vld [vmem:[%s559 + $0x198] sm:$0xff]
        %v707 = vld [vmem:[%s559 + $0x1a0] sm:$0xff]
        %v708 = vld [vmem:[%s559 + $0x1a8] sm:$0xff]
        %v709 = vld [vmem:[%s559 + $0x1b0] sm:$0xff]
        %v710 = vld [vmem:[%s559 + $0x1b8] sm:$0xff]
        %v711 = vld [vmem:[%s559 + $0x1c0] sm:$0xff]
        %v712 = vld [vmem:[%s559 + $0x1c8] sm:$0xff]
        %v713 = vld [vmem:[%s559 + $0x1d0] sm:$0xff]
        %v714 = vld [vmem:[%s559 + $0x1d8] sm:$0xff]
        %v715 = vld [vmem:[%s559 + $0x1e0] sm:$0xff]
        %v716 = vld [vmem:[%s559 + $0x1e8] sm:$0xff]
        %v717 = vld [vmem:[%s559 + $0x1f0] sm:$0xff]
        %v718 = vld [vmem:[%s559 + $0x1f8] sm:$0xff]
        %720 = vst [vmem:[#allocation1] ss:$9 sm:$0xff] %v654
        %v721 = vld [vmem:[#allocation1] sm:$0xff]
        %v722 = vld [vmem:[#allocation1 + $0x9] sm:$0xff]
        %v723 = vld [vmem:[#allocation1 + $0x12] sm:$0xff]
        %v724 = vld [vmem:[#allocation1 + $0x1b] sm:$0xff]
        %v793 = vunpack.c.l.b16 %v655
        %v794 = vunpack.c.h.b16 %v655
        %v795 = vunpack.c.l.b16 %v656
        %v796 = vunpack.c.h.b16 %v656
        %v797 = vunpack.c.l.b16 %v657
        %v798 = vunpack.c.h.b16 %v657
        %v799 = vunpack.c.l.b16 %v658
        %v800 = vunpack.c.h.b16 %v658
        %v801 = vunpack.c.l.b16 %v659
        %v802 = vunpack.c.h.b16 %v659
        %v803 = vunpack.c.l.b16 %v660
        %v804 = vunpack.c.h.b16 %v660
        %v805 = vunpack.c.l.b16 %v661
        %v806 = vunpack.c.h.b16 %v661
        %v807 = vunpack.c.l.b16 %v662
        %v808 = vunpack.c.h.b16 %v662
        %v809 = vunpack.c.l.b16 %v663
        %v810 = vunpack.c.h.b16 %v663
        %v811 = vunpack.c.l.b16 %v664
        %v812 = vunpack.c.h.b16 %v664
        %v813 = vunpack.c.l.b16 %v665
        %v814 = vunpack.c.h.b16 %v665
        %v815 = vunpack.c.l.b16 %v666
        %v816 = vunpack.c.h.b16 %v666
        %v817 = vunpack.c.l.b16 %v667
        %v818 = vunpack.c.h.b16 %v667
        %v819 = vunpack.c.l.b16 %v668
        %v820 = vunpack.c.h.b16 %v668
        %v821 = vunpack.c.l.b16 %v669
        %v822 = vunpack.c.h.b16 %v669
        %v823 = vunpack.c.l.b16 %v670
        %v824 = vunpack.c.h.b16 %v670
        %v825 = vunpack.c.l.b16 %v671
        %v826 = vunpack.c.h.b16 %v671
        %v827 = vunpack.c.l.b16 %v672
        %v828 = vunpack.c.h.b16 %v672
        %v829 = vunpack.c.l.b16 %v673
        %v830 = vunpack.c.h.b16 %v673
        %v831 = vunpack.c.l.b16 %v674
        %v832 = vunpack.c.h.b16 %v674
        %v833 = vunpack.c.l.b16 %v675
        %v834 = vunpack.c.h.b16 %v675
        %v835 = vunpack.c.l.b16 %v676
        %v836 = vunpack.c.h.b16 %v676
        %v837 = vunpack.c.l.b16 %v677
        %v838 = vunpack.c.h.b16 %v677
        %v839 = vunpack.c.l.b16 %v678
        %v840 = vunpack.c.h.b16 %v678
        %v841 = vunpack.c.l.b16 %v679
        %v842 = vunpack.c.h.b16 %v679
        %v843 = vunpack.c.l.b16 %v680
        %v844 = vunpack.c.h.b16 %v680
        %v845 = vunpack.c.l.b16 %v681
        %v846 = vunpack.c.h.b16 %v681
        %v847 = vunpack.c.l.b16 %v682
        %v848 = vunpack.c.h.b16 %v682
        %v849 = vunpack.c.l.b16 %v683
        %v850 = vunpack.c.h.b16 %v683
        %v851 = vunpack.c.l.b16 %v684
        %v852 = vunpack.c.h.b16 %v684
        %v853 = vunpack.c.l.b16 %v685
        %v854 = vunpack.c.h.b16 %v685
        %v855 = vunpack.c.l.b16 %v686
        %v856 = vunpack.c.h.b16 %v686
        %v857 = vunpack.c.l.b16 %v687
        %v858 = vunpack.c.h.b16 %v687
        %v859 = vunpack.c.l.b16 %v688
        %v860 = vunpack.c.h.b16 %v688
        %v861 = vunpack.c.l.b16 %v689
        %v862 = vunpack.c.h.b16 %v689
        %v863 = vunpack.c.l.b16 %v690
        %v864 = vunpack.c.h.b16 %v690
        %v865 = vunpack.c.l.b16 %v691
        %v866 = vunpack.c.h.b16 %v691
        %v867 = vunpack.c.l.b16 %v692
        %v868 = vunpack.c.h.b16 %v692
        %v869 = vunpack.c.l.b16 %v693
        %v870 = vunpack.c.h.b16 %v693
        %v871 = vunpack.c.l.b16 %v694
        %v872 = vunpack.c.h.b16 %v694
        %v873 = vunpack.c.l.b16 %v695
        %v874 = vunpack.c.h.b16 %v695
        %v875 = vunpack.c.l.b16 %v696
        %v876 = vunpack.c.h.b16 %v696
        %v877 = vunpack.c.l.b16 %v697
        %v878 = vunpack.c.h.b16 %v697
        %v879 = vunpack.c.l.b16 %v698
        %v880 = vunpack.c.h.b16 %v698
        %v881 = vunpack.c.l.b16 %v699
        %v882 = vunpack.c.h.b16 %v699
        %v883 = vunpack.c.l.b16 %v700
        %v884 = vunpack.c.h.b16 %v700
        %v885 = vunpack.c.l.b16 %v701
        %v886 = vunpack.c.h.b16 %v701
        %v887 = vunpack.c.l.b16 %v702
        %v888 = vunpack.c.h.b16 %v702
        %v889 = vunpack.c.l.b16 %v703
        %v890 = vunpack.c.h.b16 %v703
        %v891 = vunpack.c.l.b16 %v704
        %v892 = vunpack.c.h.b16 %v704
        %v893 = vunpack.c.l.b16 %v705
        %v894 = vunpack.c.h.b16 %v705
        %v895 = vunpack.c.l.b16 %v706
        %v896 = vunpack.c.h.b16 %v706
        %v897 = vunpack.c.l.b16 %v707
        %v898 = vunpack.c.h.b16 %v707
        %v899 = vunpack.c.l.b16 %v708
        %v900 = vunpack.c.h.b16 %v708
        %v901 = vunpack.c.l.b16 %v709
        %v902 = vunpack.c.h.b16 %v709
        %v903 = vunpack.c.l.b16 %v710
        %v904 = vunpack.c.h.b16 %v710
        %v905 = vunpack.c.l.b16 %v711
        %v906 = vunpack.c.h.b16 %v711
        %v907 = vunpack.c.l.b16 %v712
        %v908 = vunpack.c.h.b16 %v712
        %v909 = vunpack.c.l.b16 %v713
        %v910 = vunpack.c.h.b16 %v713
        %v911 = vunpack.c.l.b16 %v714
        %v912 = vunpack.c.h.b16 %v714
        %v913 = vunpack.c.l.b16 %v715
        %v914 = vunpack.c.h.b16 %v715
        %v915 = vunpack.c.l.b16 %v716
        %v916 = vunpack.c.h.b16 %v716
        %v917 = vunpack.c.l.b16 %v717
        %v918 = vunpack.c.h.b16 %v717
        %v919 = vunpack.c.l.b16 %v718
        %v920 = vunpack.c.h.b16 %v718
        %v921 = vpack.c.b16 %v795, %v793
        %v922 = vpack.c.b16 %v796, %v794
        %v923 = vpack.c.b16 %v799, %v797
        %v924 = vpack.c.b16 %v800, %v798
        %v925 = vpack.c.b16 %v803, %v801
        %v926 = vpack.c.b16 %v804, %v802
        %v927 = vpack.c.b16 %v807, %v805
        %v928 = vpack.c.b16 %v808, %v806
        %v929 = vpack.c.b16 %v811, %v809
        %v930 = vpack.c.b16 %v812, %v810
        %v931 = vpack.c.b16 %v815, %v813
        %v932 = vpack.c.b16 %v816, %v814
        %v933 = vpack.c.b16 %v819, %v817
        %v934 = vpack.c.b16 %v820, %v818
        %v935 = vpack.c.b16 %v823, %v821
        %v936 = vpack.c.b16 %v824, %v822
        %v937 = vpack.c.b16 %v827, %v825
        %v938 = vpack.c.b16 %v828, %v826
        %v939 = vpack.c.b16 %v831, %v829
        %v940 = vpack.c.b16 %v832, %v830
        %v941 = vpack.c.b16 %v835, %v833
        %v942 = vpack.c.b16 %v836, %v834
        %v943 = vpack.c.b16 %v839, %v837
        %v944 = vpack.c.b16 %v840, %v838
        %v945 = vpack.c.b16 %v843, %v841
        %v946 = vpack.c.b16 %v844, %v842
        %v947 = vpack.c.b16 %v847, %v845
        %v948 = vpack.c.b16 %v848, %v846
        %v949 = vpack.c.b16 %v851, %v849
        %v950 = vpack.c.b16 %v852, %v850
        %v951 = vpack.c.b16 %v855, %v853
        %v952 = vpack.c.b16 %v856, %v854
        %v953 = vpack.c.b16 %v859, %v857
        %v954 = vpack.c.b16 %v860, %v858
        %v955 = vpack.c.b16 %v863, %v861
        %v956 = vpack.c.b16 %v864, %v862
        %v957 = vpack.c.b16 %v867, %v865
        %v958 = vpack.c.b16 %v868, %v866
        %v959 = vpack.c.b16 %v871, %v869
        %v960 = vpack.c.b16 %v872, %v870
        %v961 = vpack.c.b16 %v875, %v873
        %v962 = vpack.c.b16 %v876, %v874
        %v963 = vpack.c.b16 %v879, %v877
        %v964 = vpack.c.b16 %v880, %v878
        %v965 = vpack.c.b16 %v883, %v881
        %v966 = vpack.c.b16 %v884, %v882
        %v967 = vpack.c.b16 %v887, %v885
        %v968 = vpack.c.b16 %v888, %v886
        %v969 = vpack.c.b16 %v891, %v889
        %v970 = vpack.c.b16 %v892, %v890
        %v971 = vpack.c.b16 %v895, %v893
        %v972 = vpack.c.b16 %v896, %v894
        %v973 = vpack.c.b16 %v899, %v897
        %v974 = vpack.c.b16 %v900, %v898
        %v975 = vpack.c.b16 %v903, %v901
        %v976 = vpack.c.b16 %v904, %v902
        %v977 = vpack.c.b16 %v907, %v905
        %v978 = vpack.c.b16 %v908, %v906
        %v979 = vpack.c.b16 %v911, %v909
        %v980 = vpack.c.b16 %v912, %v910
        %v981 = vpack.c.b16 %v915, %v913
        %v982 = vpack.c.b16 %v916, %v914
        %v983 = vpack.c.b16 %v919, %v917
        %v984 = vpack.c.b16 %v920, %v918
        %1049 = vmatpush.bf16.msra.mxu0 %v935
        %1050 = vmatpush.bf16.msra.mxu0 %v933
        %1051 = vmatpush.bf16.msra.mxu0 %v931
        %1052 = vmatpush.bf16.msra.mxu0 %v929
        %1053 = vmatpush.bf16.msra.mxu0 %v927
        %1054 = vmatpush.bf16.msra.mxu0 %v925
        %1055 = vmatpush.bf16.msra.mxu0 %v923
        %1056 = vmatpush.bf16.msra.mxu0 %v921
        %1057 = vmatmul.bf16.gmra.mxu0 %v721
        %v1058 = vpop.f32.mrf.mxu0
        %v1059 = vadd.f32 0.0, %v1058
        %v1060 = vpop.f32.mrf.mxu0
        %1061 = vdwg.mxu0
        %1062 = vmatpush.bf16.msra.mxu0 %v951
        %1063 = vmatpush.bf16.msra.mxu0 %v949
        %1064 = vmatpush.bf16.msra.mxu0 %v947
        %1065 = vmatpush.bf16.msra.mxu0 %v945
        %1066 = vmatpush.bf16.msra.mxu0 %v943
        %1067 = vmatpush.bf16.msra.mxu0 %v941
        %1068 = vmatpush.bf16.msra.mxu0 %v939
        %1069 = vmatpush.bf16.msra.mxu0 %v937
        %1070 = vmatmul.bf16.gmra.mxu0 %v722
        %v1071 = vpop.f32.mrf.mxu0
        %v1072 = vadd.f32 %v1059, %v1071
        %v1073 = vpop.f32.mrf.mxu0
        %1074 = vdwg.mxu0
        %1075 = vmatpush.bf16.msra.mxu0 %v967
        %1076 = vmatpush.bf16.msra.mxu0 %v965
        %1077 = vmatpush.bf16.msra.mxu0 %v963
        %1078 = vmatpush.bf16.msra.mxu0 %v961
        %1079 = vmatpush.bf16.msra.mxu0 %v959
        %1080 = vmatpush.bf16.msra.mxu0 %v957
        %1081 = vmatpush.bf16.msra.mxu0 %v955
        %1082 = vmatpush.bf16.msra.mxu0 %v953
        %1083 = vmatmul.bf16.gmra.mxu0 %v723
        %v1084 = vpop.f32.mrf.mxu0
        %v1085 = vadd.f32 %v1072, %v1084
        %v1086 = vpop.f32.mrf.mxu0
        %1087 = vdwg.mxu0
        %1088 = vmatpush.bf16.msra.mxu0 %v983
        %1089 = vmatpush.bf16.msra.mxu0 %v981
        %1090 = vmatpush.bf16.msra.mxu0 %v979
        %1091 = vmatpush.bf16.msra.mxu0 %v977
        %1092 = vmatpush.bf16.msra.mxu0 %v975
        %1093 = vmatpush.bf16.msra.mxu0 %v973
        %1094 = vmatpush.bf16.msra.mxu0 %v971
        %1095 = vmatpush.bf16.msra.mxu0 %v969
        %1096 = vmatmul.bf16.gmra.mxu0 %v724
        %v1097 = vpop.f32.mrf.mxu0
        %v1098 = vadd.f32 %v1085, %v1097
        %v1099 = vpop.f32.mrf.mxu0
        %1100 = vdwg.mxu0
        %1101 = vmatpush.bf16.msra.mxu0 %v936
        %1102 = vmatpush.bf16.msra.mxu0 %v934
        %1103 = vmatpush.bf16.msra.mxu0 %v932
        %1104 = vmatpush.bf16.msra.mxu0 %v930
        %1105 = vmatpush.bf16.msra.mxu0 %v928
        %1106 = vmatpush.bf16.msra.mxu0 %v926
        %1107 = vmatpush.bf16.msra.mxu0 %v924
        %1108 = vmatpush.bf16.msra.mxu0 %v922
        %1109 = vmatmul.bf16.gmra.mxu0 %v721
        %v1110 = vpop.f32.mrf.mxu0
        %v1111 = vadd.f32 0.0, %v1110
        %v1112 = vpop.f32.mrf.mxu0
        %1113 = vdwg.mxu0
        %1114 = vmatpush.bf16.msra.mxu0 %v952
        %1115 = vmatpush.bf16.msra.mxu0 %v950
        %1116 = vmatpush.bf16.msra.mxu0 %v948
        %1117 = vmatpush.bf16.msra.mxu0 %v946
        %1118 = vmatpush.bf16.msra.mxu0 %v944
        %1119 = vmatpush.bf16.msra.mxu0 %v942
        %1120 = vmatpush.bf16.msra.mxu0 %v940
        %1121 = vmatpush.bf16.msra.mxu0 %v938
        %1122 = vmatmul.bf16.gmra.mxu0 %v722
        %v1123 = vpop.f32.mrf.mxu0
        %v1124 = vadd.f32 %v1111, %v1123
        %v1125 = vpop.f32.mrf.mxu0
        %1126 = vdwg.mxu0
        %1127 = vmatpush.bf16.msra.mxu0 %v968
        %1128 = vmatpush.bf16.msra.mxu0 %v966
        %1129 = vmatpush.bf16.msra.mxu0 %v964
        %1130 = vmatpush.bf16.msra.mxu0 %v962
        %1131 = vmatpush.bf16.msra.mxu0 %v960
        %1132 = vmatpush.bf16.msra.mxu0 %v958
        %1133 = vmatpush.bf16.msra.mxu0 %v956
        %1134 = vmatpush.bf16.msra.mxu0 %v954
        %1135 = vmatmul.bf16.gmra.mxu0 %v723
        %v1136 = vpop.f32.mrf.mxu0
        %v1137 = vadd.f32 %v1124, %v1136
        %v1138 = vpop.f32.mrf.mxu0
        %1139 = vdwg.mxu0
        %1140 = vmatpush.bf16.msra.mxu0 %v984
        %1141 = vmatpush.bf16.msra.mxu0 %v982
        %1142 = vmatpush.bf16.msra.mxu0 %v980
        %1143 = vmatpush.bf16.msra.mxu0 %v978
        %1144 = vmatpush.bf16.msra.mxu0 %v976
        %1145 = vmatpush.bf16.msra.mxu0 %v974
        %1146 = vmatpush.bf16.msra.mxu0 %v972
        %1147 = vmatpush.bf16.msra.mxu0 %v970
        %1148 = vmatmul.bf16.gmra.mxu0 %v724
        %v1149 = vpop.f32.mrf.mxu0
        %v1150 = vadd.f32 %v1137, %v1149
        %v1151 = vpop.f32.mrf.mxu0
        %1152 = vdwg.mxu0
        %v1155 = vrot.slane %v1150, 6
        %vm1156 = vcmask 1041408
        %v1157 = vsel %vm1156, %v1098, %v1155
        %v1159 = vadd.f32 %v653, %v1157
        %1160 = vst [vmem:[#allocation2] sm:$0xf] %v1159
        %p1161 = scmp.eq.s32.totalorder %s23, 8
        // Predicated region
        $region83: #{resnet_forward.26} parent=73 // pred_check
          %p1162 = pneg %p1161
        $region84: #{resnet_forward.26} parent=73 // pred_check_branch
          %1164 = sbr.rel (%p1162) target = $region86
        $region85: #{resnet_forward.26} parent=73 // pred_region
          %v1165 = vld [vmem:[#allocation2] sm:$0xf]
          %v1166 = vld [vmem:[%s623] sm:$0x3]
          %v1168 = vperm.slane %v1166, 0
          %v1169 = vperm.slane %v1166, 1
          %v1170 = vrot.slane %v1169, 6
          %v1171 = vsel %vm1156, %v1168, %v1170
          %v1173 = vmul.f32 %v1165, %v1171
          %v1174 = vld [vmem:[%s628] sm:$0x3]
          %v1176 = vperm.slane %v1174, 0
          %v1177 = vperm.slane %v1174, 1
          %v1178 = vrot.slane %v1177, 6
          %v1179 = vsel %vm1156, %v1176, %v1178
          %v1181 = vadd.f32 %v1173, %v1179
          %v1182 = vld [vmem:[%s637] sm:$0x3]
          %v1183 = vunpack.c.l.bf16 %v1182
          %v1184 = vadd.f32 %v1181, %v1183
          %v1185 = vmax.f32 %v1184, 0.0
          %1187 = vst [vmem:[#allocation1] ss:$4 sm:$0xff] %v1185
          %v1188 = vld.sshfl [vmem:[#allocation1] sm:$0xff pattern:$0x73625140]
          %v1189 = vld.sshfl [vmem:[#allocation1 + $0x8] sm:$0xff pattern:$0x73625140]
          %v1192 = vpack.c.bf16 %v1189, %v1188
          %v1194 = vrot.slane %v1192, 3
          %vm1195 = vcmask 1040384
          %v1198 = vsel %vm1195, %v1192, %v1194
          %1200 = vst [vmem:[%s646] sm:$0x3] %v1198
        $region86: #{resnet_forward.26} parent=73 // pred_fallthru
          _
        %s1201 = smul.u32 2, %s22
        %p1202 = scmp.lt.s32.totalorder %s21, 0
        %s1203 = scalar_select %p1202, %s21, 0
        %p1204 = scmp.lt.s32.totalorder %s1201, 3
        %s1205 = scalar_select %p1204, %s1201, 3
        %s1206 = smul.addr %s1203, 4
        %s1207 = sadd.s32 %s1205, %s1206
        %s1208 = scalar_lea.vmem %s5, %s1207
        // Predicated region
        $region87: #{resnet_forward.26} parent=73 // pred_check
          %p1209 = pneg %p191
        $region88: #{resnet_forward.26} parent=73 // pred_check_branch
          %1211 = sbr.rel (%p1209) target = $region90
        $region89: #{resnet_forward.26} parent=73 // pred_region
          %s1212 = smul.u32 2, %s22
        $region90: #{resnet_forward.26} parent=73 // pred_fallthru
          _
      $region74: #{resnet_forward.26} parent=5 // pred_fallthru
        _
      %p1213 = scmp.le.s32.totalorder 2, %s11
      // Predicated region
      $region91: #{resnet_forward.26} parent=5 // pred_check
        %p1214 = pneg %p1213
      $region92: #{resnet_forward.26} parent=5 // pred_check_branch
        %1216 = sbr.rel (%p1214) target = $region94
      $region93: #{resnet_forward.26} parent=5 // pred_region
        %s1217 = ssub.s32 %s11, 2
        // Predicated region
        $region95: #{resnet_forward.26} parent=93 // pred_check
          %p1218 = pneg %p197
        $region96: #{resnet_forward.26} parent=93 // pred_check_branch
          %1220 = sbr.rel (%p1218) target = $region98
        $region97: #{resnet_forward.26} parent=93 // pred_region
          %s1221 = smul.u32 2, %s25
          %p1222 = scmp.lt.s32.totalorder %s24, 0
          %s1223 = scalar_select %p1222, %s24, 0
          %p1224 = scmp.lt.s32.totalorder %s1221, 3
          %s1225 = scalar_select %p1224, %s1221, 3
          %s1226 = smul.addr %s1223, 4
          %s1227 = sadd.s32 %s1225, %s1226
          %s1228 = scalar_lea.vmem %s5, %s1227
        $region98: #{resnet_forward.26} parent=93 // pred_fallthru
          _
      $region94: #{resnet_forward.26} parent=5 // pred_fallthru
        _
    $region6: #{resnet_forward.26} parent=1 // loop_footer
      %s15 = sadd.s32 1, %s11
    $region7: #{resnet_forward.26} parent=1 // loop_footer_branch
      %10 = sbr.rel target = $region3
    $region8: #{resnet_forward.26} parent=1 // loop_exit
      _

</llo_original>
